<compile_context>
chip_gen: v7x
topology: tpu7x:2x2x1
jax: 0.10.0
libtpu: 0.0.40
codegen_flags: <defaults>
</compile_context>

<pallas_src>
import math

import jax
import jax.numpy as jnp
from jax.experimental import pallas as pl
from jax.experimental.pallas import tpu as pltpu

BN_EPS = 1e-3          # eps used by MobileNetV3's norm_layer
LAST_CHANNEL = 128     # classifier hidden width (small, synthetic)
NUM_CLASSES = 10
CPAD = 128             # lane padding for every channel dimension


def _make_divisible(ch, divisor=8, min_ch=None):
    if min_ch is None:
        min_ch = divisor
    new_ch = max(min_ch, int(ch + divisor / 2) // divisor * divisor)
    if new_ch < 0.9 * ch:
        new_ch += divisor
    return new_ch


def _adjust(c, width_multi=1.0):
    return _make_divisible(c * width_multi, 8)


# Small MobileNetV3 config (prefix of mobilenet_v3_small):
# (input_c, kernel, expanded_c, out_c, use_se, use_hs, stride)
CFGS = [
    (_adjust(16), 3, _adjust(16), _adjust(16), True, False, 2),
    (_adjust(16), 3, _adjust(72), _adjust(24), False, False, 2),
    (_adjust(24), 3, _adjust(88), _adjust(24), False, False, 1),
    (_adjust(24), 5, _adjust(96), _adjust(40), True, True, 2),
]


def _cpad(c):
    return ((c + CPAD - 1) // CPAD) * CPAD


def _out_hw(h, k, s):
    return (h + 2 * ((k - 1) // 2) - k) // s + 1


# ------------------------------------------------------------------ #
# activations (computed in f32 inside the kernels)
# ------------------------------------------------------------------ #
def _apply_act(x, act):
    if act == "identity":
        return x
    if act == "relu":
        return jnp.maximum(x, 0.0)
    if act == "hardswish":
        return x * jnp.clip(x + 3.0, 0.0, 6.0) * (1.0 / 6.0)
    if act == "hardsigmoid":
        return jnp.clip(x + 3.0, 0.0, 6.0) * (1.0 / 6.0)
    raise ValueError(act)


_PAR = pltpu.CompilerParams(dimension_semantics=("parallel",))


# ------------------------------------------------------------------ #
# in-kernel helpers
# ------------------------------------------------------------------ #
def _mm(v, w_ref, b_ref, act):
    """Whole-tile 1x1 conv / linear: (M, K) x (K, N) on the MXU, bf16 in, f32 acc."""
    r = jnp.dot(v.astype(jnp.bfloat16), w_ref[...],
                preferred_element_type=jnp.float32) + b_ref[...]
    return _apply_act(r, act)


def _se_scale(yf, w1, b1, w2, b2, hw):
    """Squeeze-excitation on a flat (HW, C) activation."""
    pooled = jnp.sum(yf, axis=0, keepdims=True) * (1.0 / hw)   # (1, C)
    s = _mm(pooled, w1, b1, "relu")
    s = _mm(s, w2, b2, "hardsigmoid")
    return yf * s


def _dw_stride2(x_ref, w_ref, b_ref, *, k, Ho, Wo, act):
    """Stride-2 depthwise conv from parity-split planes (1, 4, Hp2, Wp2, C).

    The k column (sublane) shifts are hoisted and reused across the k row taps;
    row taps are cheap leading-dim slices of the hoisted views.
    """
    acc = None
    for dw in range(k):
        wr, off = dw % 2, dw // 2
        cols = [x_ref[0, 2 * hr + wr, :, off:off + Wo, :].astype(jnp.float32)
                for hr in range(2)]
        for dh in range(k):
            tap = cols[dh % 2][dh // 2:dh // 2 + Ho]             # (Ho, Wo, C)
            t = tap * w_ref[dh * k + dw:dh * k + dw + 1, :]
            acc = t if acc is None else acc + t
    return _apply_act(acc + b_ref[...], act)


def _dw_stride1(xp_ref, w_ref, b_ref, *, k, Ho, Wo, act):
    """Stride-1 depthwise conv from a spatially padded VMEM scratch (Hp, Wp, C)."""
    acc = None
    for dw in range(k):
        col = xp_ref[:, dw:dw + Wo, :]                           # hoisted W shift
        for dh in range(k):
            tap = col[dh:dh + Ho]                                # (Ho, Wo, C)
            t = tap * w_ref[dh * k + dw:dh * k + dw + 1, :]
            acc = t if acc is None else acc + t
    return _apply_act(acc + b_ref[...], act)


def _flatten_rows(y, flat_ref, Ho, Wo):
    """Store a (Ho, Wo, C) value into a flat (Ho*Wo, C) VMEM scratch and reload."""
    for oh in range(Ho):
        flat_ref[oh * Wo:(oh + 1) * Wo, :] = y[oh]
    return flat_ref[...]


# ------------------------------------------------------------------ #
# kernels (one grid step = one image)
# ------------------------------------------------------------------ #
def _stem_kernel(p_ref, w_ref, b_ref, o_ref):
    # 3x3 stride-2 conv as one (256, 27) x (27, 128) matmul + folded BN + hardswish.
    acc = jnp.dot(p_ref[0].astype(jnp.bfloat16), w_ref[...],
                  preferred_element_type=jnp.float32)
    o_ref[0] = _apply_act(acc + b_ref[...], "hardswish").astype(o_ref.dtype)


def _block0_kernel(x_ref, wd, bd, sw1, sb1, sw2, sb2, pw, pb, ew, eb, o_ref, flat):
    # block 0: dw 3x3 s2 (+BN+relu) + SE + project 1x1 + block-1 expand 1x1 (relu)
    y = _dw_stride2(x_ref, wd, bd, k=3, Ho=8, Wo=8, act="relu")
    yf = _flatten_rows(y, flat, 8, 8)                            # (64, 128)
    yf = _se_scale(yf, sw1, sb1, sw2, sb2, 64.0)
    z = _mm(yf, pw, pb, "identity")                              # project -> 16
    z = _mm(z, ew, eb, "relu")                                   # block-1 expand -> 72
    o_ref[0] = z.astype(o_ref.dtype)


def _block12_kernel(x_ref, wd1, bd1, pw1, pb1, ew2, eb2, wd2, bd2, pw2, pb2,
                    ew3, eb3, o_ref, flat1, xpad, flat2):
    # ---- block 1: dw 3x3 s2 (+relu) + project, then block-2 expand (relu) ----
    y1 = _dw_stride2(x_ref, wd1, bd1, k=3, Ho=4, Wo=4, act="relu")
    y1f = _flatten_rows(y1, flat1, 4, 4)                         # (16, 128)
    z1 = _mm(y1f, pw1, pb1, "identity")                          # block-1 out (24ch)
    z2e = _mm(z1, ew2, eb2, "relu")                              # block-2 expand (88ch)
    # ---- block 2: zero-pad inside VMEM scratch, dw 3x3 s1 (+relu) ----
    xpad[...] = jnp.zeros_like(xpad)
    for h in range(4):
        xpad[h + 1, 1:5, :] = z2e[h * 4:(h + 1) * 4]
    y2 = _dw_stride1(xpad, wd2, bd2, k=3, Ho=4, Wo=4, act="relu")
    y2f = _flatten_rows(y2, flat2, 4, 4)
    z2 = _mm(y2f, pw2, pb2, "identity") + z1                     # project + residual (VMEM)
    z3e = _mm(z2, ew3, eb3, "hardswish")                         # block-3 expand (96ch)
    o_ref[0] = z3e.astype(o_ref.dtype)


def _block3_head_kernel(x_ref, wd, bd, sw1, sb1, sw2, sb2, pw, pb, lw, lb,
                        f1w, f1b, f2w, f2b, o_ref, flat):
    # block 3: dw 5x5 s2 (+hardswish) + SE + project, then last 1x1 conv (240ch),
    # global avg-pool and both classifier linears.
    y = _dw_stride2(x_ref, wd, bd, k=5, Ho=2, Wo=2, act="hardswish")
    yf = _flatten_rows(y, flat, 2, 2)                            # (4, 128)
    yf = _se_scale(yf, sw1, sb1, sw2, sb2, 4.0)
    z = _mm(yf, pw, pb, "identity")                              # project -> 40
    z = _mm(z, lw, lb, "hardswish")                              # last conv -> 240 (256 lanes)
    pooled = jnp.sum(z, axis=0, keepdims=True) * 0.25            # adaptive avg pool (2x2)
    h = _mm(pooled, f1w, f1b, "hardswish")                       # classifier fc1
    # TODO(synk): Dropout(p=0.2) is identity in eval mode only.
    h = _mm(h, f2w, f2b, "identity")                             # classifier fc2
    o_ref[0] = h.astype(o_ref.dtype)


# ------------------------------------------------------------------ #
# pallas_call runner: grid=(N,), batched first input / output, full weights
# ------------------------------------------------------------------ #
def _run(kernel, x, weights, out_shape, scratch_shapes=()):
    n = x.shape[0]

    def batched_spec(shape):
        nd = len(shape)
        return pl.BlockSpec((1,) + tuple(shape[1:]),
                            lambda b, _nd=nd: (b,) + (0,) * (_nd - 1))

    def full_spec(shape):
        nd = len(shape)
        return pl.BlockSpec(tuple(shape), lambda b, _nd=nd: (0,) * _nd)

    in_specs = [batched_spec(x.shape)] + [full_spec(w.shape) for w in weights]
    return pl.pallas_call(
        kernel,
        out_shape=out_shape,
        grid=(n,),                      # one image per step (parallel across TCs on v7x)
        in_specs=in_specs,
        out_specs=batched_spec(out_shape.shape),
        scratch_shapes=list(scratch_shapes),
        compiler_params=_PAR,
    )(x, *weights)


# ------------------------------------------------------------------ #
# wrapper-side XLA glue (tiny tensors): im2col for the 3-channel stem,
# spatial pad + parity split for stride-2 depthwise inputs
# ------------------------------------------------------------------ #
def _im2col(x, k, stride):
    n, h, w, c = x.shape
    p = (k - 1) // 2
    ho = _out_hw(h, k, stride)
    wo = _out_hw(w, k, stride)
    xp = jnp.pad(x, ((0, 0), (p, p), (p, p), (0, 0)))
    cols = []
    for dh in range(k):
        for dw in range(k):
            cols.append(xp[:, dh:dh + (ho - 1) * stride + 1:stride,
                            dw:dw + (wo - 1) * stride + 1:stride, :])
    patches = jnp.stack(cols, axis=3)              # (N, Ho, Wo, k*k, C)
    return patches.reshape(n, ho * wo, k * k * c), ho, wo


def _pad_and_split(y_flat, h, w, k):
    # (N, h*w, C) -> pad spatially and split into the 4 (row,col)-parity planes
    # so every stride-2 depthwise tap in the kernel is a static contiguous slice.
    n, _, c = y_flat.shape
    p = (k - 1) // 2
    assert (h + 2 * p) % 2 == 0 and (w + 2 * p) % 2 == 0
    x = y_flat.reshape(n, h, w, c)
    xp = jnp.pad(x, ((0, 0), (p, p), (p, p), (0, 0)))
    hp, wp = h + 2 * p, w + 2 * p
    xr = xp.reshape(n, hp // 2, 2, wp // 2, 2, c)
    xr = jnp.transpose(xr, (0, 2, 4, 1, 3, 5))
    return xr.reshape(n, 4, hp // 2, wp // 2, c)   # planes[q = 2*hr + wr]


# ------------------------------------------------------------------ #
# parameters: raw PyTorch-layout init, then packed for inference
# (BN folded, [K, N] matmul layout, channels zero-padded to 128, bf16 weights)
# ------------------------------------------------------------------ #
def _kaiming_conv(key, cout, cin, k):
    fan_out = cout * k * k
    std = math.sqrt(2.0 / fan_out)
    return std * jax.random.normal(key, (cout, cin, k, k), jnp.float32)


def build_params(key):
    keys = iter(jax.random.split(key, 64))
    params = {"first_w": _kaiming_conv(next(keys), CFGS[0][0], 3, 3)}
    blocks = []
    for (input_c, k, exp_c, out_c, use_se, use_hs, stride) in CFGS:
        bp = {}
        if exp_c != input_c:
            bp["expand_w"] = _kaiming_conv(next(keys), exp_c, input_c, 1)
        bp["dw_w"] = _kaiming_conv(next(keys), exp_c, 1, k)
        if use_se:
            csq = _make_divisible(exp_c // 4, 8)
            bp["se_w1"] = _kaiming_conv(next(keys), csq, exp_c, 1)
            bp["se_b1"] = jnp.zeros((csq,), jnp.float32)
            bp["se_w2"] = _kaiming_conv(next(keys), exp_c, csq, 1)
            bp["se_b2"] = jnp.zeros((exp_c,), jnp.float32)
        bp["project_w"] = _kaiming_conv(next(keys), out_c, exp_c, 1)
        blocks.append(bp)
    params["blocks"] = blocks
    last_in = CFGS[-1][3]
    last_out = 6 * last_in
    params["last_w"] = _kaiming_conv(next(keys), last_out, last_in, 1)
    params["fc1_w"] = 0.01 * jax.random.normal(next(keys), (LAST_CHANNEL, last_out), jnp.float32)
    params["fc1_b"] = jnp.zeros((LAST_CHANNEL,), jnp.float32)
    params["fc2_w"] = 0.01 * jax.random.normal(next(keys), (NUM_CLASSES, LAST_CHANNEL), jnp.float32)
    params["fc2_b"] = jnp.zeros((NUM_CLASSES,), jnp.float32)
    return params


def _bn_fold(w_kn, c_out):
    # BatchNorm2d at init, eval mode: gamma=1, beta=0, running_mean=0, running_var=1.
    gamma = jnp.ones((c_out,), jnp.float32)
    beta = jnp.zeros((c_out,), jnp.float32)
    mean = jnp.zeros((c_out,), jnp.float32)
    var = jnp.ones((c_out,), jnp.float32)
    s = gamma / jnp.sqrt(var + BN_EPS)
    return w_kn * s[None, :], beta - mean * s


def _pack_mm(w_kn, b_n, k_pad, n_pad, dtype=jnp.bfloat16):
    kk, nn = w_kn.shape
    w = jnp.pad(w_kn, ((0, k_pad - kk), (0, n_pad - nn))).astype(dtype)
    b = jnp.pad(b_n, (0, n_pad - nn)).reshape(1, n_pad).astype(jnp.float32)
    return w, b


def pack_params(raw):
    p = {}
    c0 = CFGS[0][0]
    w_kn = jnp.transpose(raw["first_w"], (2, 3, 1, 0)).reshape(9 * 3, c0)
    w_kn, b = _bn_fold(w_kn, c0)
    p["stem_w"], p["stem_b"] = _pack_mm(w_kn, b, 9 * 3, CPAD)

    blocks = []
    for cfg, bp in zip(CFGS, raw["blocks"]):
        input_c, k, exp_c, out_c, use_se, use_hs, stride = cfg
        q = {}
        if "expand_w" in bp:
            w_kn, b = _bn_fold(bp["expand_w"][:, :, 0, 0].T, exp_c)
            q["expand_w"], q["expand_b"] = _pack_mm(w_kn, b, CPAD, CPAD)
        wd, bd = _bn_fold(
            jnp.transpose(bp["dw_w"][:, 0], (1, 2, 0)).reshape(k * k, exp_c), exp_c)
        q["dw_w"] = jnp.pad(wd, ((0, 0), (0, CPAD - exp_c)))            # f32 (VPU path)
        q["dw_b"] = jnp.pad(bd, (0, CPAD - exp_c)).reshape(1, CPAD)
        if use_se:
            q["se_w1"], q["se_b1"] = _pack_mm(bp["se_w1"][:, :, 0, 0].T,
                                              bp["se_b1"], CPAD, CPAD)
            q["se_w2"], q["se_b2"] = _pack_mm(bp["se_w2"][:, :, 0, 0].T,
                                              bp["se_b2"], CPAD, CPAD)
        w_kn, b = _bn_fold(bp["project_w"][:, :, 0, 0].T, out_c)
        q["project_w"], q["project_b"] = _pack_mm(w_kn, b, CPAD, CPAD)
        blocks.append(q)
    p["blocks"] = blocks

    last_in = CFGS[-1][3]
    last_out = 6 * last_in
    w_kn, b = _bn_fold(raw["last_w"][:, :, 0, 0].T, last_out)
    p["last_w"], p["last_b"] = _pack_mm(w_kn, b, CPAD, _cpad(last_out))
    p["fc1_w"], p["fc1_b"] = _pack_mm(raw["fc1_w"].T, raw["fc1_b"],
                                      _cpad(last_out), _cpad(LAST_CHANNEL))
    p["fc2_w"], p["fc2_b"] = _pack_mm(raw["fc2_w"].T, raw["fc2_b"],
                                      _cpad(LAST_CHANNEL), _cpad(NUM_CLASSES))
    return p


# ------------------------------------------------------------------ #
# forward: 4 pallas_calls (stem, block0+expand1, blocks1+2+expand3, block3+head)
# ------------------------------------------------------------------ #
def mobilenet_v3_forward(params, x_nchw):
    x = jnp.transpose(x_nchw, (0, 2, 3, 1)).astype(jnp.float32)   # NCHW -> NHWC
    n = x.shape[0]
    blocks = params["blocks"]

    # ---- stem: 3x3 stride-2 conv + folded BN + hardswish (one matmul / image) ----
    patches, sh, sw = _im2col(x, 3, 2)                            # (N, 256, 27)
    stem = _run(_stem_kernel, patches, [params["stem_w"], params["stem_b"]],
                jax.ShapeDtypeStruct((n, sh * sw, CPAD), jnp.bfloat16))

    # ---- block 0 (dw+SE+project) fused with block 1's expand ----
    x0 = _pad_and_split(stem, sh, sw, 3)                          # (N, 4, 9, 9, 128)
    b0 = blocks[0]
    wl0 = [b0["dw_w"], b0["dw_b"], b0["se_w1"], b0["se_b1"], b0["se_w2"],
           b0["se_b2"], b0["project_w"], b0["project_b"],
           blocks[1]["expand_w"], blocks[1]["expand_b"]]
    h1, w1 = _out_hw(sh, 3, 2), _out_hw(sw, 3, 2)                 # 8, 8
    y1e = _run(_block0_kernel, x0, wl0,
               jax.ShapeDtypeStruct((n, h1 * w1, CPAD), jnp.bfloat16),
               [pltpu.VMEM((h1 * w1, CPAD), jnp.float32)])

    # ---- blocks 1 + 2 fused (residual kept in VMEM) + block 3's expand ----
    x1 = _pad_and_split(y1e, h1, w1, 3)                           # (N, 4, 5, 5, 128)
    b1, b2 = blocks[1], blocks[2]
    wl12 = [b1["dw_w"], b1["dw_b"], b1["project_w"], b1["project_b"],
            b2["expand_w"], b2["expand_b"], b2["dw_w"], b2["dw_b"],
            b2["project_w"], b2["project_b"],
            blocks[3]["expand_w"], blocks[3]["expand_b"]]
    h2, w2 = _out_hw(h1, 3, 2), _out_hw(w1, 3, 2)                 # 4, 4
    y3e = _run(_block12_kernel, x1, wl12,
               jax.ShapeDtypeStruct((n, h2 * w2, CPAD), jnp.bfloat16),
               [pltpu.VMEM((h2 * w2, CPAD), jnp.float32),
                pltpu.VMEM((h2 + 2, w2 + 2, CPAD), jnp.float32),
                pltpu.VMEM((h2 * w2, CPAD), jnp.float32)])

    # ---- block 3 + last 1x1 conv + global avg-pool + classifier ----
    x3 = _pad_and_split(y3e, h2, w2, 5)                           # (N, 4, 4, 4, 128)
    b3 = blocks[3]
    wl3 = [b3["dw_w"], b3["dw_b"], b3["se_w1"], b3["se_b1"], b3["se_w2"],
           b3["se_b2"], b3["project_w"], b3["project_b"],
           params["last_w"], params["last_b"],
           params["fc1_w"], params["fc1_b"], params["fc2_w"], params["fc2_b"]]
    h3, w3 = _out_hw(h2, 5, 2), _out_hw(w2, 5, 2)                 # 2, 2
    logits = _run(_block3_head_kernel, x3, wl3,
                  jax.ShapeDtypeStruct((n, 1, _cpad(NUM_CLASSES)), jnp.float32),
                  [pltpu.VMEM((h3 * w3, CPAD), jnp.float32)])
    return logits.reshape(n, _cpad(NUM_CLASSES))[:, :NUM_CLASSES]


if __name__ == "__main__":
    key = jax.random.PRNGKey(0)
    kp, kx = jax.random.split(key)
    raw = build_params(kp)
    params = pack_params(raw)
    x = jax.random.normal(kx, (2, 3, 32, 32), jnp.float32)        # NCHW, like PyTorch

    fwd = jax.jit(mobilenet_v3_forward)
    out = jax.block_until_ready(fwd(params, x))
    assert out.shape == (2, NUM_CLASSES)
    assert bool(jnp.all(jnp.isfinite(out)))
    print("KERNEL_OK")
</pallas_src>

<mosaic_0001>
module attributes {stable_mosaic.version = 11 : i64} {
  func.func @_stem_kernel(%arg0: i32, %arg1: memref<1x256x27xf32, #tpu.memory_space<vmem>>, %arg2: memref<27x128xbf16, #tpu.memory_space<vmem>>, %arg3: memref<1x128xf32, #tpu.memory_space<vmem>>, %arg4: memref<1x256x128xbf16, #tpu.memory_space<vmem>>) attributes {dimension_semantics = [#tpu.dimension_semantics<parallel>], iteration_bounds = array<i64: 2>, scalar_prefetch = 0 : i64, scratch_operands = 0 : i64, tpu.core_type = #tpu.core_type<tc>, window_params = [{transform_indices = @transform_0, window_bounds = array<i64: 1, 256, 27>}, {pipeline_mode = #tpu.pipeline_mode<synchronous>, transform_indices = @transform_1, window_bounds = array<i64: 27, 128>}, {pipeline_mode = #tpu.pipeline_mode<synchronous>, transform_indices = @transform_2, window_bounds = array<i64: 1, 128>}, {transform_indices = @transform_3, window_bounds = array<i64: 1, 256, 128>}]} {
    %c0 = arith.constant 0 : index
    %c0_0 = arith.constant 0 : index
    %c0_1 = arith.constant 0 : index
    %0 = vector.load %arg1[%c0, %c0_0, %c0_1] : memref<1x256x27xf32, #tpu.memory_space<vmem>>, vector<1x256x27xf32>
    %1 = vector.shape_cast %0 : vector<1x256x27xf32> to vector<256x27xf32>
    %2 = arith.truncf %1 : vector<256x27xf32> to vector<256x27xbf16>
    %c0_2 = arith.constant 0 : index
    %c0_3 = arith.constant 0 : index
    %3 = vector.load %arg2[%c0_2, %c0_3] : memref<27x128xbf16, #tpu.memory_space<vmem>>, vector<27x128xbf16>
    %cst = arith.constant dense<0.000000e+00> : vector<256x128xf32>
    %4 = tpu.matmul %2, %3, %cst {dimension_numbers = #tpu.dot_dimension_numbers<[1], [0], [0], [1], [0, 0, 1, 1], [], []>} : vector<256x27xbf16>, vector<27x128xbf16>, vector<256x128xf32> -> vector<256x128xf32>
    %c0_4 = arith.constant 0 : index
    %c0_5 = arith.constant 0 : index
    %5 = vector.load %arg3[%c0_4, %c0_5] : memref<1x128xf32, #tpu.memory_space<vmem>>, vector<1x128xf32>
    %6 = vector.broadcast %5 : vector<1x128xf32> to vector<256x128xf32>
    %7 = arith.addf %4, %6 : vector<256x128xf32>
    %cst_6 = arith.constant 3.000000e+00 : f32
    %8 = vector.broadcast %cst_6 : f32 to vector<256x128xf32>
    %9 = arith.addf %7, %8 : vector<256x128xf32>
    %cst_7 = arith.constant 0.000000e+00 : f32
    %cst_8 = arith.constant 6.000000e+00 : f32
    %10 = vector.broadcast %cst_7 : f32 to vector<256x128xf32>
    %11 = arith.maximumf %10, %9 : vector<256x128xf32>
    %12 = vector.broadcast %cst_8 : f32 to vector<256x128xf32>
    %13 = arith.minimumf %12, %11 : vector<256x128xf32>
    %14 = arith.mulf %7, %13 : vector<256x128xf32>
    %cst_9 = arith.constant 0.166666672 : f32
    %15 = vector.broadcast %cst_9 : f32 to vector<256x128xf32>
    %16 = arith.mulf %14, %15 : vector<256x128xf32>
    %17 = arith.truncf %16 : vector<256x128xf32> to vector<256x128xbf16>
    %c0_10 = arith.constant 0 : index
    %c0_11 = arith.constant 0 : index
    %c0_12 = arith.constant 0 : index
    %18 = vector.load %arg4[%c0_10, %c0_11, %c0_12] : memref<1x256x128xbf16, #tpu.memory_space<vmem>>, vector<1x256x128xbf16>
    %19 = vector.shape_cast %18 : vector<1x256x128xbf16> to vector<256x128xbf16>
    %20 = vector.shape_cast %17 : vector<256x128xbf16> to vector<1x256x128xbf16>
    tpu.vector_store %arg4[%c0_10, %c0_11, %c0_12], %20 {strides = array<i32>} : memref<1x256x128xbf16, #tpu.memory_space<vmem>>, vector<1x256x128xbf16>,
    return
  }
  func.func @transform_0(%arg0: i32) -> (i32, i32, i32) {
    %c0_i32 = arith.constant 0 : i32
    %c0_i32_0 = arith.constant 0 : i32
    %c0_i32_1 = arith.constant 0 : i32
    return %arg0, %c0_i32, %c0_i32_0 : i32, i32, i32
  }
  func.func @transform_1(%arg0: i32) -> (i32, i32) {
    %c0_i32 = arith.constant 0 : i32
    %c0_i32_0 = arith.constant 0 : i32
    %c0_i32_1 = arith.constant 0 : i32
    return %c0_i32, %c0_i32_0 : i32, i32
  }
  func.func @transform_2(%arg0: i32) -> (i32, i32) {
    %c0_i32 = arith.constant 0 : i32
    %c0_i32_0 = arith.constant 0 : i32
    %c0_i32_1 = arith.constant 0 : i32
    return %c0_i32, %c0_i32_0 : i32, i32
  }
  func.func @transform_3(%arg0: i32) -> (i32, i32, i32) {
    %c0_i32 = arith.constant 0 : i32
    %c0_i32_0 = arith.constant 0 : i32
    %c0_i32_1 = arith.constant 0 : i32
    return %arg0, %c0_i32, %c0_i32_0 : i32, i32, i32
  }
}

module attributes {stable_mosaic.version = 11 : i64} {
  func.func @_block0_kernel(%arg0: i32, %arg1: memref<1x4x9x9x128xbf16, #tpu.memory_space<vmem>>, %arg2: memref<9x128xf32, #tpu.memory_space<vmem>>, %arg3: memref<1x128xf32, #tpu.memory_space<vmem>>, %arg4: memref<128x128xbf16, #tpu.memory_space<vmem>>, %arg5: memref<1x128xf32, #tpu.memory_space<vmem>>, %arg6: memref<128x128xbf16, #tpu.memory_space<vmem>>, %arg7: memref<1x128xf32, #tpu.memory_space<vmem>>, %arg8: memref<128x128xbf16, #tpu.memory_space<vmem>>, %arg9: memref<1x128xf32, #tpu.memory_space<vmem>>, %arg10: memref<128x128xbf16, #tpu.memory_space<vmem>>, %arg11: memref<1x128xf32, #tpu.memory_space<vmem>>, %arg12: memref<1x64x128xbf16, #tpu.memory_space<vmem>>, %arg13: memref<64x128xf32, #tpu.memory_space<vmem>>) attributes {dimension_semantics = [#tpu.dimension_semantics<parallel>], iteration_bounds = array<i64: 2>, scalar_prefetch = 0 : i64, scratch_operands = 1 : i64, tpu.core_type = #tpu.core_type<tc>, window_params = [{transform_indices = @transform_0, window_bounds = array<i64: 1, 4, 9, 9, 128>}, {pipeline_mode = #tpu.pipeline_mode<synchronous>, transform_indices = @transform_1, window_bounds = array<i64: 9, 128>}, {pipeline_mode = #tpu.pipeline_mode<synchronous>, transform_indices = @transform_2, window_bounds = array<i64: 1, 128>}, {pipeline_mode = #tpu.pipeline_mode<synchronous>, transform_indices = @transform_3, window_bounds = array<i64: 128, 128>}, {pipeline_mode = #tpu.pipeline_mode<synchronous>, transform_indices = @transform_4, window_bounds = array<i64: 1, 128>}, {pipeline_mode = #tpu.pipeline_mode<synchronous>, transform_indices = @transform_5, window_bounds = array<i64: 128, 128>}, {pipeline_mode = #tpu.pipeline_mode<synchronous>, transform_indices = @transform_6, window_bounds = array<i64: 1, 128>}, {pipeline_mode = #tpu.pipeline_mode<synchronous>, transform_indices = @transform_7, window_bounds = array<i64: 128, 128>}, {pipeline_mode = #tpu.pipeline_mode<synchronous>, transform_indices = @transform_8, window_bounds = array<i64: 1, 128>}, {pipeline_mode = #tpu.pipeline_mode<synchronous>, transform_indices = @transform_9, window_bounds = array<i64: 128, 128>}, {pipeline_mode = #tpu.pipeline_mode<synchronous>, transform_indices = @transform_10, window_bounds = array<i64: 1, 128>}, {transform_indices = @transform_11, window_bounds = array<i64: 1, 64, 128>}]} {
    %c0 = arith.constant 0 : index
    %c0_0 = arith.constant 0 : index
    %c0_1 = arith.constant 0 : index
    %c0_2 = arith.constant 0 : index
    %c0_3 = arith.constant 0 : index
    %0 = vector.load %arg1[%c0, %c0_0, %c0_1, %c0_2, %c0_3] : memref<1x4x9x9x128xbf16, #tpu.memory_space<vmem>>, vector<1x1x9x8x128xbf16>
    %1 = vector.shape_cast %0 : vector<1x1x9x8x128xbf16> to vector<9x8x128xbf16>
    %2 = arith.extf %1 : vector<9x8x128xbf16> to vector<9x8x128xf32>
    %c0_4 = arith.constant 0 : index
    %c2 = arith.constant 2 : index
    %c0_5 = arith.constant 0 : index
    %c0_6 = arith.constant 0 : index
    %c0_7 = arith.constant 0 : index
    %3 = vector.load %arg1[%c0_4, %c2, %c0_5, %c0_6, %c0_7] : memref<1x4x9x9x128xbf16, #tpu.memory_space<vmem>>, vector<1x1x9x8x128xbf16>
    %4 = vector.shape_cast %3 : vector<1x1x9x8x128xbf16> to vector<9x8x128xbf16>
    %5 = arith.extf %4 : vector<9x8x128xbf16> to vector<9x8x128xf32>
    %6 = vector.extract_strided_slice %2 {offsets = [0, 0, 0], sizes = [8, 8, 128], strides = [1, 1, 1]} : vector<9x8x128xf32> to vector<8x8x128xf32>
    %c0_8 = arith.constant 0 : index
    %c0_9 = arith.constant 0 : index
    %7 = vector.load %arg2[%c0_8, %c0_9] : memref<9x128xf32, #tpu.memory_space<vmem>>, vector<1x128xf32>
    %8 = vector.shape_cast %7 : vector<1x128xf32> to vector<1x1x128xf32>
    %9 = vector.broadcast %8 : vector<1x1x128xf32> to vector<8x8x128xf32>
    %10 = arith.mulf %6, %9 : vector<8x8x128xf32>
    %11 = vector.extract_strided_slice %5 {offsets = [0, 0, 0], sizes = [8, 8, 128], strides = [1, 1, 1]} : vector<9x8x128xf32> to vector<8x8x128xf32>
    %c3 = arith.constant 3 : index
    %c0_10 = arith.constant 0 : index
    %12 = vector.load %arg2[%c3, %c0_10] : memref<9x128xf32, #tpu.memory_space<vmem>>, vector<1x128xf32>
    %13 = vector.shape_cast %12 : vector<1x128xf32> to vector<1x1x128xf32>
    %14 = vector.broadcast %13 : vector<1x1x128xf32> to vector<8x8x128xf32>
    %15 = arith.mulf %11, %14 : vector<8x8x128xf32>
    %16 = arith.addf %10, %15 : vector<8x8x128xf32>
    %17 = vector.extract_strided_slice %2 {offsets = [1, 0, 0], sizes = [8, 8, 128], strides = [1, 1, 1]} : vector<9x8x128xf32> to vector<8x8x128xf32>
    %c6 = arith.constant 6 : index
    %c0_11 = arith.constant 0 : index
    %18 = vector.load %arg2[%c6, %c0_11] : memref<9x128xf32, #tpu.memory_space<vmem>>, vector<1x128xf32>
    %19 = vector.shape_cast %18 : vector<1x128xf32> to vector<1x1x128xf32>
    %20 = vector.broadcast %19 : vector<1x1x128xf32> to vector<8x8x128xf32>
    %21 = arith.mulf %17, %20 : vector<8x8x128xf32>
    %22 = arith.addf %16, %21 : vector<8x8x128xf32>
    %c0_12 = arith.constant 0 : index
    %c1 = arith.constant 1 : index
    %c0_13 = arith.constant 0 : index
    %c0_14 = arith.constant 0 : index
    %c0_15 = arith.constant 0 : index
    %23 = vector.load %arg1[%c0_12, %c1, %c0_13, %c0_14, %c0_15] : memref<1x4x9x9x128xbf16, #tpu.memory_space<vmem>>, vector<1x1x9x8x128xbf16>
    %24 = vector.shape_cast %23 : vector<1x1x9x8x128xbf16> to vector<9x8x128xbf16>
    %25 = arith.extf %24 : vector<9x8x128xbf16> to vector<9x8x128xf32>
    %c0_16 = arith.constant 0 : index
    %c3_17 = arith.constant 3 : index
    %c0_18 = arith.constant 0 : index
    %c0_19 = arith.constant 0 : index
    %c0_20 = arith.constant 0 : index
    %26 = vector.load %arg1[%c0_16, %c3_17, %c0_18, %c0_19, %c0_20] : memref<1x4x9x9x128xbf16, #tpu.memory_space<vmem>>, vector<1x1x9x8x128xbf16>
    %27 = vector.shape_cast %26 : vector<1x1x9x8x128xbf16> to vector<9x8x128xbf16>
    %28 = arith.extf %27 : vector<9x8x128xbf16> to vector<9x8x128xf32>
    %29 = vector.extract_strided_slice %25 {offsets = [0, 0, 0], sizes = [8, 8, 128], strides = [1, 1, 1]} : vector<9x8x128xf32> to vector<8x8x128xf32>
    %c1_21 = arith.constant 1 : index
    %c0_22 = arith.constant 0 : index
    %30 = vector.load %arg2[%c1_21, %c0_22] : memref<9x128xf32, #tpu.memory_space<vmem>>, vector<1x128xf32>
    %31 = vector.shape_cast %30 : vector<1x128xf32> to vector<1x1x128xf32>
    %32 = vector.broadcast %31 : vector<1x1x128xf32> to vector<8x8x128xf32>
    %33 = arith.mulf %29, %32 : vector<8x8x128xf32>
    %34 = arith.addf %22, %33 : vector<8x8x128xf32>
    %35 = vector.extract_strided_slice %28 {offsets = [0, 0, 0], sizes = [8, 8, 128], strides = [1, 1, 1]} : vector<9x8x128xf32> to vector<8x8x128xf32>
    %c4 = arith.constant 4 : index
    %c0_23 = arith.constant 0 : index
    %36 = vector.load %arg2[%c4, %c0_23] : memref<9x128xf32, #tpu.memory_space<vmem>>, vector<1x128xf32>
    %37 = vector.shape_cast %36 : vector<1x128xf32> to vector<1x1x128xf32>
    %38 = vector.broadcast %37 : vector<1x1x128xf32> to vector<8x8x128xf32>
    %39 = arith.mulf %35, %38 : vector<8x8x128xf32>
    %40 = arith.addf %34, %39 : vector<8x8x128xf32>
    %41 = vector.extract_strided_slice %25 {offsets = [1, 0, 0], sizes = [8, 8, 128], strides = [1, 1, 1]} : vector<9x8x128xf32> to vector<8x8x128xf32>
    %c7 = arith.constant 7 : index
    %c0_24 = arith.constant 0 : index
    %42 = vector.load %arg2[%c7, %c0_24] : memref<9x128xf32, #tpu.memory_space<vmem>>, vector<1x128xf32>
    %43 = vector.shape_cast %42 : vector<1x128xf32> to vector<1x1x128xf32>
    %44 = vector.broadcast %43 : vector<1x1x128xf32> to vector<8x8x128xf32>
    %45 = arith.mulf %41, %44 : vector<8x8x128xf32>
    %46 = arith.addf %40, %45 : vector<8x8x128xf32>
    %c0_25 = arith.constant 0 : index
    %c0_26 = arith.constant 0 : index
    %c0_27 = arith.constant 0 : index
    %c1_28 = arith.constant 1 : index
    %c0_29 = arith.constant 0 : index
    %47 = vector.load %arg1[%c0_25, %c0_26, %c0_27, %c1_28, %c0_29] : memref<1x4x9x9x128xbf16, #tpu.memory_space<vmem>>, vector<1x1x9x8x128xbf16>
    %48 = vector.shape_cast %47 : vector<1x1x9x8x128xbf16> to vector<9x8x128xbf16>
    %49 = arith.extf %48 : vector<9x8x128xbf16> to vector<9x8x128xf32>
    %c0_30 = arith.constant 0 : index
    %c2_31 = arith.constant 2 : index
    %c0_32 = arith.constant 0 : index
    %c1_33 = arith.constant 1 : index
    %c0_34 = arith.constant 0 : index
    %50 = vector.load %arg1[%c0_30, %c2_31, %c0_32, %c1_33, %c0_34] : memref<1x4x9x9x128xbf16, #tpu.memory_space<vmem>>, vector<1x1x9x8x128xbf16>
    %51 = vector.shape_cast %50 : vector<1x1x9x8x128xbf16> to vector<9x8x128xbf16>
    %52 = arith.extf %51 : vector<9x8x128xbf16> to vector<9x8x128xf32>
    %53 = vector.extract_strided_slice %49 {offsets = [0, 0, 0], sizes = [8, 8, 128], strides = [1, 1, 1]} : vector<9x8x128xf32> to vector<8x8x128xf32>
    %c2_35 = arith.constant 2 : index
    %c0_36 = arith.constant 0 : index
    %54 = vector.load %arg2[%c2_35, %c0_36] : memref<9x128xf32, #tpu.memory_space<vmem>>, vector<1x128xf32>
    %55 = vector.shape_cast %54 : vector<1x128xf32> to vector<1x1x128xf32>
    %56 = vector.broadcast %55 : vector<1x1x128xf32> to vector<8x8x128xf32>
    %57 = arith.mulf %53, %56 : vector<8x8x128xf32>
    %58 = arith.addf %46, %57 : vector<8x8x128xf32>
    %59 = vector.extract_strided_slice %52 {offsets = [0, 0, 0], sizes = [8, 8, 128], strides = [1, 1, 1]} : vector<9x8x128xf32> to vector<8x8x128xf32>
    %c5 = arith.constant 5 : index
    %c0_37 = arith.constant 0 : index
    %60 = vector.load %arg2[%c5, %c0_37] : memref<9x128xf32, #tpu.memory_space<vmem>>, vector<1x128xf32>
    %61 = vector.shape_cast %60 : vector<1x128xf32> to vector<1x1x128xf32>
    %62 = vector.broadcast %61 : vector<1x1x128xf32> to vector<8x8x128xf32>
    %63 = arith.mulf %59, %62 : vector<8x8x128xf32>
    %64 = arith.addf %58, %63 : vector<8x8x128xf32>
    %65 = vector.extract_strided_slice %49 {offsets = [1, 0, 0], sizes = [8, 8, 128], strides = [1, 1, 1]} : vector<9x8x128xf32> to vector<8x8x128xf32>
    %c8 = arith.constant 8 : index
    %c0_38 = arith.constant 0 : index
    %66 = vector.load %arg2[%c8, %c0_38] : memref<9x128xf32, #tpu.memory_space<vmem>>, vector<1x128xf32>
    %67 = vector.shape_cast %66 : vector<1x128xf32> to vector<1x1x128xf32>
    %68 = vector.broadcast %67 : vector<1x1x128xf32> to vector<8x8x128xf32>
    %69 = arith.mulf %65, %68 : vector<8x8x128xf32>
    %70 = arith.addf %64, %69 : vector<8x8x128xf32>
    %c0_39 = arith.constant 0 : index
    %c0_40 = arith.constant 0 : index
    %71 = vector.load %arg3[%c0_39, %c0_40] : memref<1x128xf32, #tpu.memory_space<vmem>>, vector<1x128xf32>
    %72 = vector.shape_cast %71 : vector<1x128xf32> to vector<1x1x128xf32>
    %73 = vector.broadcast %72 : vector<1x1x128xf32> to vector<8x8x128xf32>
    %74 = arith.addf %70, %73 : vector<8x8x128xf32>
    %cst = arith.constant 0.000000e+00 : f32
    %75 = vector.broadcast %cst : f32 to vector<8x8x128xf32>
    %76 = arith.maximumf %74, %75 : vector<8x8x128xf32>
    %77 = vector.extract_strided_slice %76 {offsets = [0, 0, 0], sizes = [1, 8, 128], strides = [1, 1, 1]} : vector<8x8x128xf32> to vector<1x8x128xf32>
    %78 = vector.shape_cast %77 : vector<1x8x128xf32> to vector<8x128xf32>
    %c0_41 = arith.constant 0 : index
    %c0_42 = arith.constant 0 : index
    %79 = vector.load %arg13[%c0_41, %c0_42] : memref<64x128xf32, #tpu.memory_space<vmem>>, vector<8x128xf32>
    tpu.vector_store %arg13[%c0_41, %c0_42], %78 {strides = array<i32>} : memref<64x128xf32, #tpu.memory_space<vmem>>, vector<8x128xf32>,
    %80 = vector.extract_strided_slice %76 {offsets = [1, 0, 0], sizes = [1, 8, 128], strides = [1, 1, 1]} : vector<8x8x128xf32> to vector<1x8x128xf32>
    %81 = vector.shape_cast %80 : vector<1x8x128xf32> to vector<8x128xf32>
    %c8_43 = arith.constant 8 : index
    %c0_44 = arith.constant 0 : index
    %82 = vector.load %arg13[%c8_43, %c0_44] : memref<64x128xf32, #tpu.memory_space<vmem>>, vector<8x128xf32>
    tpu.vector_store %arg13[%c8_43, %c0_44], %81 {strides = array<i32>} : memref<64x128xf32, #tpu.memory_space<vmem>>, vector<8x128xf32>,
    %83 = vector.extract_strided_slice %76 {offsets = [2, 0, 0], sizes = [1, 8, 128], strides = [1, 1, 1]} : vector<8x8x128xf32> to vector<1x8x128xf32>
    %84 = vector.shape_cast %83 : vector<1x8x128xf32> to vector<8x128xf32>
    %c16 = arith.constant 16 : index
    %c0_45 = arith.constant 0 : index
    %85 = vector.load %arg13[%c16, %c0_45] : memref<64x128xf32, #tpu.memory_space<vmem>>, vector<8x128xf32>
    tpu.vector_store %arg13[%c16, %c0_45], %84 {strides = array<i32>} : memref<64x128xf32, #tpu.memory_space<vmem>>, vector<8x128xf32>,
    %86 = vector.extract_strided_slice %76 {offsets = [3, 0, 0], sizes = [1, 8, 128], strides = [1, 1, 1]} : vector<8x8x128xf32> to vector<1x8x128xf32>
    %87 = vector.shape_cast %86 : vector<1x8x128xf32> to vector<8x128xf32>
    %c24 = arith.constant 24 : index
    %c0_46 = arith.constant 0 : index
    %88 = vector.load %arg13[%c24, %c0_46] : memref<64x128xf32, #tpu.memory_space<vmem>>, vector<8x128xf32>
    tpu.vector_store %arg13[%c24, %c0_46], %87 {strides = array<i32>} : memref<64x128xf32, #tpu.memory_space<vmem>>, vector<8x128xf32>,
    %89 = vector.extract_strided_slice %76 {offsets = [4, 0, 0], sizes = [1, 8, 128], strides = [1, 1, 1]} : vector<8x8x128xf32> to vector<1x8x128xf32>
    %90 = vector.shape_cast %89 : vector<1x8x128xf32> to vector<8x128xf32>
    %c32 = arith.constant 32 : index
    %c0_47 = arith.constant 0 : index
    %91 = vector.load %arg13[%c32, %c0_47] : memref<64x128xf32, #tpu.memory_space<vmem>>, vector<8x128xf32>
    tpu.vector_store %arg13[%c32, %c0_47], %90 {strides = array<i32>} : memref<64x128xf32, #tpu.memory_space<vmem>>, vector<8x128xf32>,
    %92 = vector.extract_strided_slice %76 {offsets = [5, 0, 0], sizes = [1, 8, 128], strides = [1, 1, 1]} : vector<8x8x128xf32> to vector<1x8x128xf32>
    %93 = vector.shape_cast %92 : vector<1x8x128xf32> to vector<8x128xf32>
    %c40 = arith.constant 40 : index
    %c0_48 = arith.constant 0 : index
    %94 = vector.load %arg13[%c40, %c0_48] : memref<64x128xf32, #tpu.memory_space<vmem>>, vector<8x128xf32>
    tpu.vector_store %arg13[%c40, %c0_48], %93 {strides = array<i32>} : memref<64x128xf32, #tpu.memory_space<vmem>>, vector<8x128xf32>,
    %95 = vector.extract_strided_slice %76 {offsets = [6, 0, 0], sizes = [1, 8, 128], strides = [1, 1, 1]} : vector<8x8x128xf32> to vector<1x8x128xf32>
    %96 = vector.shape_cast %95 : vector<1x8x128xf32> to vector<8x128xf32>
    %c48 = arith.constant 48 : index
    %c0_49 = arith.constant 0 : index
    %97 = vector.load %arg13[%c48, %c0_49] : memref<64x128xf32, #tpu.memory_space<vmem>>, vector<8x128xf32>
    tpu.vector_store %arg13[%c48, %c0_49], %96 {strides = array<i32>} : memref<64x128xf32, #tpu.memory_space<vmem>>, vector<8x128xf32>,
    %98 = vector.extract_strided_slice %76 {offsets = [7, 0, 0], sizes = [1, 8, 128], strides = [1, 1, 1]} : vector<8x8x128xf32> to vector<1x8x128xf32>
    %99 = vector.shape_cast %98 : vector<1x8x128xf32> to vector<8x128xf32>
    %c56 = arith.constant 56 : index
    %c0_50 = arith.constant 0 : index
    %100 = vector.load %arg13[%c56, %c0_50] : memref<64x128xf32, #tpu.memory_space<vmem>>, vector<8x128xf32>
    tpu.vector_store %arg13[%c56, %c0_50], %99 {strides = array<i32>} : memref<64x128xf32, #tpu.memory_space<vmem>>, vector<8x128xf32>,
    %c0_51 = arith.constant 0 : index
    %c0_52 = arith.constant 0 : index
    %101 = vector.load %arg13[%c0_51, %c0_52] : memref<64x128xf32, #tpu.memory_space<vmem>>, vector<64x128xf32>
    %cst_53 = arith.constant dense<0.000000e+00> : vector<128xf32>
    %102 = vector.multi_reduction <add>, %101, %cst_53 [0] : vector<64x128xf32> to vector<128xf32>
    %103 = vector.shape_cast %102 : vector<128xf32> to vector<1x128xf32>
    %cst_54 = arith.constant 1.562500e-02 : f32
    %104 = vector.broadcast %cst_54 : f32 to vector<1x128xf32>
    %105 = arith.mulf %103, %104 : vector<1x128xf32>
    %106 = arith.truncf %105 : vector<1x128xf32> to vector<1x128xbf16>
    %c0_55 = arith.constant 0 : index
    %c0_56 = arith.constant 0 : index
    %107 = vector.load %arg4[%c0_55, %c0_56] : memref<128x128xbf16, #tpu.memory_space<vmem>>, vector<128x128xbf16>
    %cst_57 = arith.constant dense<0.000000e+00> : vector<1x128xf32>
    %108 = tpu.matmul %106, %107, %cst_57 {dimension_numbers = #tpu.dot_dimension_numbers<[1], [0], [0], [1], [0, 0, 1, 1], [], []>} : vector<1x128xbf16>, vector<128x128xbf16>, vector<1x128xf32> -> vector<1x128xf32>
    %c0_58 = arith.constant 0 : index
    %c0_59 = arith.constant 0 : index
    %109 = vector.load %arg5[%c0_58, %c0_59] : memref<1x128xf32, #tpu.memory_space<vmem>>, vector<1x128xf32>
    %110 = arith.addf %108, %109 : vector<1x128xf32>
    %cst_60 = arith.constant 0.000000e+00 : f32
    %111 = vector.broadcast %cst_60 : f32 to vector<1x128xf32>
    %112 = arith.maximumf %110, %111 : vector<1x128xf32>
    %113 = arith.truncf %112 : vector<1x128xf32> to vector<1x128xbf16>
    %c0_61 = arith.constant 0 : index
    %c0_62 = arith.constant 0 : index
    %114 = vector.load %arg6[%c0_61, %c0_62] : memref<128x128xbf16, #tpu.memory_space<vmem>>, vector<128x128xbf16>
    %cst_63 = arith.constant dense<0.000000e+00> : vector<1x128xf32>
    %115 = tpu.matmul %113, %114, %cst_63 {dimension_numbers = #tpu.dot_dimension_numbers<[1], [0], [0], [1], [0, 0, 1, 1], [], []>} : vector<1x128xbf16>, vector<128x128xbf16>, vector<1x128xf32> -> vector<1x128xf32>
    %c0_64 = arith.constant 0 : index
    %c0_65 = arith.constant 0 : index
    %116 = vector.load %arg7[%c0_64, %c0_65] : memref<1x128xf32, #tpu.memory_space<vmem>>, vector<1x128xf32>
    %117 = arith.addf %115, %116 : vector<1x128xf32>
    %cst_66 = arith.constant 3.000000e+00 : f32
    %118 = vector.broadcast %cst_66 : f32 to vector<1x128xf32>
    %119 = arith.addf %117, %118 : vector<1x128xf32>
    %cst_67 = arith.constant 0.000000e+00 : f32
    %cst_68 = arith.constant 6.000000e+00 : f32
    %120 = vector.broadcast %cst_67 : f32 to vector<1x128xf32>
    %121 = arith.maximumf %120, %119 : vector<1x128xf32>
    %122 = vector.broadcast %cst_68 : f32 to vector<1x128xf32>
    %123 = arith.minimumf %122, %121 : vector<1x128xf32>
    %cst_69 = arith.constant 0.166666672 : f32
    %124 = vector.broadcast %cst_69 : f32 to vector<1x128xf32>
    %125 = arith.mulf %123, %124 : vector<1x128xf32>
    %126 = vector.broadcast %125 : vector<1x128xf32> to vector<64x128xf32>
    %127 = arith.mulf %101, %126 : vector<64x128xf32>
    %128 = arith.truncf %127 : vector<64x128xf32> to vector<64x128xbf16>
    %c0_70 = arith.constant 0 : index
    %c0_71 = arith.constant 0 : index
    %129 = vector.load %arg8[%c0_70, %c0_71] : memref<128x128xbf16, #tpu.memory_space<vmem>>, vector<128x128xbf16>
    %cst_72 = arith.constant dense<0.000000e+00> : vector<64x128xf32>
    %130 = tpu.matmul %128, %129, %cst_72 {dimension_numbers = #tpu.dot_dimension_numbers<[1], [0], [0], [1], [0, 0, 1, 1], [], []>} : vector<64x128xbf16>, vector<128x128xbf16>, vector<64x128xf32> -> vector<64x128xf32>
    %c0_73 = arith.constant 0 : index
    %c0_74 = arith.constant 0 : index
    %131 = vector.load %arg9[%c0_73, %c0_74] : memref<1x128xf32, #tpu.memory_space<vmem>>, vector<1x128xf32>
    %132 = vector.broadcast %131 : vector<1x128xf32> to vector<64x128xf32>
    %133 = arith.addf %130, %132 : vector<64x128xf32>
    %134 = arith.truncf %133 : vector<64x128xf32> to vector<64x128xbf16>
    %c0_75 = arith.constant 0 : index
    %c0_76 = arith.constant 0 : index
    %135 = vector.load %arg10[%c0_75, %c0_76] : memref<128x128xbf16, #tpu.memory_space<vmem>>, vector<128x128xbf16>
    %cst_77 = arith.constant dense<0.000000e+00> : vector<64x128xf32>
    %136 = tpu.matmul %134, %135, %cst_77 {dimension_numbers = #tpu.dot_dimension_numbers<[1], [0], [0], [1], [0, 0, 1, 1], [], []>} : vector<64x128xbf16>, vector<128x128xbf16>, vector<64x128xf32> -> vector<64x128xf32>
    %c0_78 = arith.constant 0 : index
    %c0_79 = arith.constant 0 : index
    %137 = vector.load %arg11[%c0_78, %c0_79] : memref<1x128xf32, #tpu.memory_space<vmem>>, vector<1x128xf32>
    %138 = vector.broadcast %137 : vector<1x128xf32> to vector<64x128xf32>
    %139 = arith.addf %136, %138 : vector<64x128xf32>
    %cst_80 = arith.constant 0.000000e+00 : f32
    %140 = vector.broadcast %cst_80 : f32 to vector<64x128xf32>
    %141 = arith.maximumf %139, %140 : vector<64x128xf32>
    %142 = arith.truncf %141 : vector<64x128xf32> to vector<64x128xbf16>
    %c0_81 = arith.constant 0 : index
    %c0_82 = arith.constant 0 : index
    %c0_83 = arith.constant 0 : index
    %143 = vector.load %arg12[%c0_81, %c0_82, %c0_83] : memref<1x64x128xbf16, #tpu.memory_space<vmem>>, vector<1x64x128xbf16>
    %144 = vector.shape_cast %143 : vector<1x64x128xbf16> to vector<64x128xbf16>
    %145 = vector.shape_cast %142 : vector<64x128xbf16> to vector<1x64x128xbf16>
    tpu.vector_store %arg12[%c0_81, %c0_82, %c0_83], %145 {strides = array<i32>} : memref<1x64x128xbf16, #tpu.memory_space<vmem>>, vector<1x64x128xbf16>,
    return
  }
  func.func @transform_0(%arg0: i32) -> (i32, i32, i32, i32, i32) {
    %c0_i32 = arith.constant 0 : i32
    %c0_i32_0 = arith.constant 0 : i32
    %c0_i32_1 = arith.constant 0 : i32
    %c0_i32_2 = arith.constant 0 : i32
    %c0_i32_3 = arith.constant 0 : i32
    return %arg0, %c0_i32, %c0_i32_0, %c0_i32_1, %c0_i32_2 : i32, i32, i32, i32, i32
  }
  func.func @transform_1(%arg0: i32) -> (i32, i32) {
    %c0_i32 = arith.constant 0 : i32
    %c0_i32_0 = arith.constant 0 : i32
    %c0_i32_1 = arith.constant 0 : i32
    return %c0_i32, %c0_i32_0 : i32, i32
  }
  func.func @transform_2(%arg0: i32) -> (i32, i32) {
    %c0_i32 = arith.constant 0 : i32
    %c0_i32_0 = arith.constant 0 : i32
    %c0_i32_1 = arith.constant 0 : i32
    return %c0_i32, %c0_i32_0 : i32, i32
  }
  func.func @transform_3(%arg0: i32) -> (i32, i32) {
    %c0_i32 = arith.constant 0 : i32
    %c0_i32_0 = arith.constant 0 : i32
    %c0_i32_1 = arith.constant 0 : i32
    return %c0_i32, %c0_i32_0 : i32, i32
  }
  func.func @transform_4(%arg0: i32) -> (i32, i32) {
    %c0_i32 = arith.constant 0 : i32
    %c0_i32_0 = arith.constant 0 : i32
    %c0_i32_1 = arith.constant 0 : i32
    return %c0_i32, %c0_i32_0 : i32, i32
  }
  func.func @transform_5(%arg0: i32) -> (i32, i32) {
    %c0_i32 = arith.constant 0 : i32
    %c0_i32_0 = arith.constant 0 : i32
    %c0_i32_1 = arith.constant 0 : i32
    return %c0_i32, %c0_i32_0 : i32, i32
  }
  func.func @transform_6(%arg0: i32) -> (i32, i32) {
    %c0_i32 = arith.constant 0 : i32
    %c0_i32_0 = arith.constant 0 : i32
    %c0_i32_1 = arith.constant 0 : i32
    return %c0_i32, %c0_i32_0 : i32, i32
  }
  func.func @transform_7(%arg0: i32) -> (i32, i32) {
    %c0_i32 = arith.constant 0 : i32
    %c0_i32_0 = arith.constant 0 : i32
    %c0_i32_1 = arith.constant 0 : i32
    return %c0_i32, %c0_i32_0 : i32, i32
  }
  func.func @transform_8(%arg0: i32) -> (i32, i32) {
    %c0_i32 = arith.constant 0 : i32
    %c0_i32_0 = arith.constant 0 : i32
    %c0_i32_1 = arith.constant 0 : i32
    return %c0_i32, %c0_i32_0 : i32, i32
  }
  func.func @transform_9(%arg0: i32) -> (i32, i32) {
    %c0_i32 = arith.constant 0 : i32
    %c0_i32_0 = arith.constant 0 : i32
    %c0_i32_1 = arith.constant 0 : i32
    return %c0_i32, %c0_i32_0 : i32, i32
  }
  func.func @transform_10(%arg0: i32) -> (i32, i32) {
    %c0_i32 = arith.constant 0 : i32
    %c0_i32_0 = arith.constant 0 : i32
    %c0_i32_1 = arith.constant 0 : i32
    return %c0_i32, %c0_i32_0 : i32, i32
  }
  func.func @transform_11(%arg0: i32) -> (i32, i32, i32) {
    %c0_i32 = arith.constant 0 : i32
    %c0_i32_0 = arith.constant 0 : i32
    %c0_i32_1 = arith.constant 0 : i32
    return %arg0, %c0_i32, %c0_i32_0 : i32, i32, i32
  }
}

module attributes {stable_mosaic.version = 11 : i64} {
  func.func @_block12_kernel(%arg0: i32, %arg1: memref<1x4x5x5x128xbf16, #tpu.memory_space<vmem>>, %arg2: memref<9x128xf32, #tpu.memory_space<vmem>>, %arg3: memref<1x128xf32, #tpu.memory_space<vmem>>, %arg4: memref<128x128xbf16, #tpu.memory_space<vmem>>, %arg5: memref<1x128xf32, #tpu.memory_space<vmem>>, %arg6: memref<128x128xbf16, #tpu.memory_space<vmem>>, %arg7: memref<1x128xf32, #tpu.memory_space<vmem>>, %arg8: memref<9x128xf32, #tpu.memory_space<vmem>>, %arg9: memref<1x128xf32, #tpu.memory_space<vmem>>, %arg10: memref<128x128xbf16, #tpu.memory_space<vmem>>, %arg11: memref<1x128xf32, #tpu.memory_space<vmem>>, %arg12: memref<128x128xbf16, #tpu.memory_space<vmem>>, %arg13: memref<1x128xf32, #tpu.memory_space<vmem>>, %arg14: memref<1x16x128xbf16, #tpu.memory_space<vmem>>, %arg15: memref<16x128xf32, #tpu.memory_space<vmem>>, %arg16: memref<6x6x128xf32, #tpu.memory_space<vmem>>, %arg17: memref<16x128xf32, #tpu.memory_space<vmem>>) attributes {dimension_semantics = [#tpu.dimension_semantics<parallel>], iteration_bounds = array<i64: 2>, scalar_prefetch = 0 : i64, scratch_operands = 3 : i64, tpu.core_type = #tpu.core_type<tc>, window_params = [{transform_indices = @transform_0, window_bounds = array<i64: 1, 4, 5, 5, 128>}, {pipeline_mode = #tpu.pipeline_mode<synchronous>, transform_indices = @transform_1, window_bounds = array<i64: 9, 128>}, {pipeline_mode = #tpu.pipeline_mode<synchronous>, transform_indices = @transform_2, window_bounds = array<i64: 1, 128>}, {pipeline_mode = #tpu.pipeline_mode<synchronous>, transform_indices = @transform_3, window_bounds = array<i64: 128, 128>}, {pipeline_mode = #tpu.pipeline_mode<synchronous>, transform_indices = @transform_4, window_bounds = array<i64: 1, 128>}, {pipeline_mode = #tpu.pipeline_mode<synchronous>, transform_indices = @transform_5, window_bounds = array<i64: 128, 128>}, {pipeline_mode = #tpu.pipeline_mode<synchronous>, transform_indices = @transform_6, window_bounds = array<i64: 1, 128>}, {pipeline_mode = #tpu.pipeline_mode<synchronous>, transform_indices = @transform_7, window_bounds = array<i64: 9, 128>}, {pipeline_mode = #tpu.pipeline_mode<synchronous>, transform_indices = @transform_8, window_bounds = array<i64: 1, 128>}, {pipeline_mode = #tpu.pipeline_mode<synchronous>, transform_indices = @transform_9, window_bounds = array<i64: 128, 128>}, {pipeline_mode = #tpu.pipeline_mode<synchronous>, transform_indices = @transform_10, window_bounds = array<i64: 1, 128>}, {pipeline_mode = #tpu.pipeline_mode<synchronous>, transform_indices = @transform_11, window_bounds = array<i64: 128, 128>}, {pipeline_mode = #tpu.pipeline_mode<synchronous>, transform_indices = @transform_12, window_bounds = array<i64: 1, 128>}, {transform_indices = @transform_13, window_bounds = array<i64: 1, 16, 128>}]} {
    %c0 = arith.constant 0 : index
    %c0_0 = arith.constant 0 : index
    %c0_1 = arith.constant 0 : index
    %c0_2 = arith.constant 0 : index
    %c0_3 = arith.constant 0 : index
    %0 = vector.load %arg1[%c0, %c0_0, %c0_1, %c0_2, %c0_3] : memref<1x4x5x5x128xbf16, #tpu.memory_space<vmem>>, vector<1x1x5x4x128xbf16>
    %1 = vector.shape_cast %0 : vector<1x1x5x4x128xbf16> to vector<5x4x128xbf16>
    %2 = arith.extf %1 : vector<5x4x128xbf16> to vector<5x4x128xf32>
    %c0_4 = arith.constant 0 : index
    %c2 = arith.constant 2 : index
    %c0_5 = arith.constant 0 : index
    %c0_6 = arith.constant 0 : index
    %c0_7 = arith.constant 0 : index
    %3 = vector.load %arg1[%c0_4, %c2, %c0_5, %c0_6, %c0_7] : memref<1x4x5x5x128xbf16, #tpu.memory_space<vmem>>, vector<1x1x5x4x128xbf16>
    %4 = vector.shape_cast %3 : vector<1x1x5x4x128xbf16> to vector<5x4x128xbf16>
    %5 = arith.extf %4 : vector<5x4x128xbf16> to vector<5x4x128xf32>
    %6 = vector.extract_strided_slice %2 {offsets = [0, 0, 0], sizes = [4, 4, 128], strides = [1, 1, 1]} : vector<5x4x128xf32> to vector<4x4x128xf32>
    %c0_8 = arith.constant 0 : index
    %c0_9 = arith.constant 0 : index
    %7 = vector.load %arg2[%c0_8, %c0_9] : memref<9x128xf32, #tpu.memory_space<vmem>>, vector<1x128xf32>
    %8 = vector.shape_cast %7 : vector<1x128xf32> to vector<1x1x128xf32>
    %9 = vector.broadcast %8 : vector<1x1x128xf32> to vector<4x4x128xf32>
    %10 = arith.mulf %6, %9 : vector<4x4x128xf32>
    %11 = vector.extract_strided_slice %5 {offsets = [0, 0, 0], sizes = [4, 4, 128], strides = [1, 1, 1]} : vector<5x4x128xf32> to vector<4x4x128xf32>
    %c3 = arith.constant 3 : index
    %c0_10 = arith.constant 0 : index
    %12 = vector.load %arg2[%c3, %c0_10] : memref<9x128xf32, #tpu.memory_space<vmem>>, vector<1x128xf32>
    %13 = vector.shape_cast %12 : vector<1x128xf32> to vector<1x1x128xf32>
    %14 = vector.broadcast %13 : vector<1x1x128xf32> to vector<4x4x128xf32>
    %15 = arith.mulf %11, %14 : vector<4x4x128xf32>
    %16 = arith.addf %10, %15 : vector<4x4x128xf32>
    %17 = vector.extract_strided_slice %2 {offsets = [1, 0, 0], sizes = [4, 4, 128], strides = [1, 1, 1]} : vector<5x4x128xf32> to vector<4x4x128xf32>
    %c6 = arith.constant 6 : index
    %c0_11 = arith.constant 0 : index
    %18 = vector.load %arg2[%c6, %c0_11] : memref<9x128xf32, #tpu.memory_space<vmem>>, vector<1x128xf32>
    %19 = vector.shape_cast %18 : vector<1x128xf32> to vector<1x1x128xf32>
    %20 = vector.broadcast %19 : vector<1x1x128xf32> to vector<4x4x128xf32>
    %21 = arith.mulf %17, %20 : vector<4x4x128xf32>
    %22 = arith.addf %16, %21 : vector<4x4x128xf32>
    %c0_12 = arith.constant 0 : index
    %c1 = arith.constant 1 : index
    %c0_13 = arith.constant 0 : index
    %c0_14 = arith.constant 0 : index
    %c0_15 = arith.constant 0 : index
    %23 = vector.load %arg1[%c0_12, %c1, %c0_13, %c0_14, %c0_15] : memref<1x4x5x5x128xbf16, #tpu.memory_space<vmem>>, vector<1x1x5x4x128xbf16>
    %24 = vector.shape_cast %23 : vector<1x1x5x4x128xbf16> to vector<5x4x128xbf16>
    %25 = arith.extf %24 : vector<5x4x128xbf16> to vector<5x4x128xf32>
    %c0_16 = arith.constant 0 : index
    %c3_17 = arith.constant 3 : index
    %c0_18 = arith.constant 0 : index
    %c0_19 = arith.constant 0 : index
    %c0_20 = arith.constant 0 : index
    %26 = vector.load %arg1[%c0_16, %c3_17, %c0_18, %c0_19, %c0_20] : memref<1x4x5x5x128xbf16, #tpu.memory_space<vmem>>, vector<1x1x5x4x128xbf16>
    %27 = vector.shape_cast %26 : vector<1x1x5x4x128xbf16> to vector<5x4x128xbf16>
    %28 = arith.extf %27 : vector<5x4x128xbf16> to vector<5x4x128xf32>
    %29 = vector.extract_strided_slice %25 {offsets = [0, 0, 0], sizes = [4, 4, 128], strides = [1, 1, 1]} : vector<5x4x128xf32> to vector<4x4x128xf32>
    %c1_21 = arith.constant 1 : index
    %c0_22 = arith.constant 0 : index
    %30 = vector.load %arg2[%c1_21, %c0_22] : memref<9x128xf32, #tpu.memory_space<vmem>>, vector<1x128xf32>
    %31 = vector.shape_cast %30 : vector<1x128xf32> to vector<1x1x128xf32>
    %32 = vector.broadcast %31 : vector<1x1x128xf32> to vector<4x4x128xf32>
    %33 = arith.mulf %29, %32 : vector<4x4x128xf32>
    %34 = arith.addf %22, %33 : vector<4x4x128xf32>
    %35 = vector.extract_strided_slice %28 {offsets = [0, 0, 0], sizes = [4, 4, 128], strides = [1, 1, 1]} : vector<5x4x128xf32> to vector<4x4x128xf32>
    %c4 = arith.constant 4 : index
    %c0_23 = arith.constant 0 : index
    %36 = vector.load %arg2[%c4, %c0_23] : memref<9x128xf32, #tpu.memory_space<vmem>>, vector<1x128xf32>
    %37 = vector.shape_cast %36 : vector<1x128xf32> to vector<1x1x128xf32>
    %38 = vector.broadcast %37 : vector<1x1x128xf32> to vector<4x4x128xf32>
    %39 = arith.mulf %35, %38 : vector<4x4x128xf32>
    %40 = arith.addf %34, %39 : vector<4x4x128xf32>
    %41 = vector.extract_strided_slice %25 {offsets = [1, 0, 0], sizes = [4, 4, 128], strides = [1, 1, 1]} : vector<5x4x128xf32> to vector<4x4x128xf32>
    %c7 = arith.constant 7 : index
    %c0_24 = arith.constant 0 : index
    %42 = vector.load %arg2[%c7, %c0_24] : memref<9x128xf32, #tpu.memory_space<vmem>>, vector<1x128xf32>
    %43 = vector.shape_cast %42 : vector<1x128xf32> to vector<1x1x128xf32>
    %44 = vector.broadcast %43 : vector<1x1x128xf32> to vector<4x4x128xf32>
    %45 = arith.mulf %41, %44 : vector<4x4x128xf32>
    %46 = arith.addf %40, %45 : vector<4x4x128xf32>
    %c0_25 = arith.constant 0 : index
    %c0_26 = arith.constant 0 : index
    %c0_27 = arith.constant 0 : index
    %c1_28 = arith.constant 1 : index
    %c0_29 = arith.constant 0 : index
    %47 = vector.load %arg1[%c0_25, %c0_26, %c0_27, %c1_28, %c0_29] : memref<1x4x5x5x128xbf16, #tpu.memory_space<vmem>>, vector<1x1x5x4x128xbf16>
    %48 = vector.shape_cast %47 : vector<1x1x5x4x128xbf16> to vector<5x4x128xbf16>
    %49 = arith.extf %48 : vector<5x4x128xbf16> to vector<5x4x128xf32>
    %c0_30 = arith.constant 0 : index
    %c2_31 = arith.constant 2 : index
    %c0_32 = arith.constant 0 : index
    %c1_33 = arith.constant 1 : index
    %c0_34 = arith.constant 0 : index
    %50 = vector.load %arg1[%c0_30, %c2_31, %c0_32, %c1_33, %c0_34] : memref<1x4x5x5x128xbf16, #tpu.memory_space<vmem>>, vector<1x1x5x4x128xbf16>
    %51 = vector.shape_cast %50 : vector<1x1x5x4x128xbf16> to vector<5x4x128xbf16>
    %52 = arith.extf %51 : vector<5x4x128xbf16> to vector<5x4x128xf32>
    %53 = vector.extract_strided_slice %49 {offsets = [0, 0, 0], sizes = [4, 4, 128], strides = [1, 1, 1]} : vector<5x4x128xf32> to vector<4x4x128xf32>
    %c2_35 = arith.constant 2 : index
    %c0_36 = arith.constant 0 : index
    %54 = vector.load %arg2[%c2_35, %c0_36] : memref<9x128xf32, #tpu.memory_space<vmem>>, vector<1x128xf32>
    %55 = vector.shape_cast %54 : vector<1x128xf32> to vector<1x1x128xf32>
    %56 = vector.broadcast %55 : vector<1x1x128xf32> to vector<4x4x128xf32>
    %57 = arith.mulf %53, %56 : vector<4x4x128xf32>
    %58 = arith.addf %46, %57 : vector<4x4x128xf32>
    %59 = vector.extract_strided_slice %52 {offsets = [0, 0, 0], sizes = [4, 4, 128], strides = [1, 1, 1]} : vector<5x4x128xf32> to vector<4x4x128xf32>
    %c5 = arith.constant 5 : index
    %c0_37 = arith.constant 0 : index
    %60 = vector.load %arg2[%c5, %c0_37] : memref<9x128xf32, #tpu.memory_space<vmem>>, vector<1x128xf32>
    %61 = vector.shape_cast %60 : vector<1x128xf32> to vector<1x1x128xf32>
    %62 = vector.broadcast %61 : vector<1x1x128xf32> to vector<4x4x128xf32>
    %63 = arith.mulf %59, %62 : vector<4x4x128xf32>
    %64 = arith.addf %58, %63 : vector<4x4x128xf32>
    %65 = vector.extract_strided_slice %49 {offsets = [1, 0, 0], sizes = [4, 4, 128], strides = [1, 1, 1]} : vector<5x4x128xf32> to vector<4x4x128xf32>
    %c8 = arith.constant 8 : index
    %c0_38 = arith.constant 0 : index
    %66 = vector.load %arg2[%c8, %c0_38] : memref<9x128xf32, #tpu.memory_space<vmem>>, vector<1x128xf32>
    %67 = vector.shape_cast %66 : vector<1x128xf32> to vector<1x1x128xf32>
    %68 = vector.broadcast %67 : vector<1x1x128xf32> to vector<4x4x128xf32>
    %69 = arith.mulf %65, %68 : vector<4x4x128xf32>
    %70 = arith.addf %64, %69 : vector<4x4x128xf32>
    %c0_39 = arith.constant 0 : index
    %c0_40 = arith.constant 0 : index
    %71 = vector.load %arg3[%c0_39, %c0_40] : memref<1x128xf32, #tpu.memory_space<vmem>>, vector<1x128xf32>
    %72 = vector.shape_cast %71 : vector<1x128xf32> to vector<1x1x128xf32>
    %73 = vector.broadcast %72 : vector<1x1x128xf32> to vector<4x4x128xf32>
    %74 = arith.addf %70, %73 : vector<4x4x128xf32>
    %cst = arith.constant 0.000000e+00 : f32
    %75 = vector.broadcast %cst : f32 to vector<4x4x128xf32>
    %76 = arith.maximumf %74, %75 : vector<4x4x128xf32>
    %77 = vector.extract_strided_slice %76 {offsets = [0, 0, 0], sizes = [1, 4, 128], strides = [1, 1, 1]} : vector<4x4x128xf32> to vector<1x4x128xf32>
    %78 = vector.shape_cast %77 : vector<1x4x128xf32> to vector<4x128xf32>
    %c0_41 = arith.constant 0 : index
    %c0_42 = arith.constant 0 : index
    %79 = vector.load %arg15[%c0_41, %c0_42] : memref<16x128xf32, #tpu.memory_space<vmem>>, vector<4x128xf32>
    tpu.vector_store %arg15[%c0_41, %c0_42], %78 {strides = array<i32>} : memref<16x128xf32, #tpu.memory_space<vmem>>, vector<4x128xf32>,
    %80 = vector.extract_strided_slice %76 {offsets = [1, 0, 0], sizes = [1, 4, 128], strides = [1, 1, 1]} : vector<4x4x128xf32> to vector<1x4x128xf32>
    %81 = vector.shape_cast %80 : vector<1x4x128xf32> to vector<4x128xf32>
    %c4_43 = arith.constant 4 : index
    %c0_44 = arith.constant 0 : index
    %82 = vector.load %arg15[%c4_43, %c0_44] : memref<16x128xf32, #tpu.memory_space<vmem>>, vector<4x128xf32>
    tpu.vector_store %arg15[%c4_43, %c0_44], %81 {strides = array<i32>} : memref<16x128xf32, #tpu.memory_space<vmem>>, vector<4x128xf32>,
    %83 = vector.extract_strided_slice %76 {offsets = [2, 0, 0], sizes = [1, 4, 128], strides = [1, 1, 1]} : vector<4x4x128xf32> to vector<1x4x128xf32>
    %84 = vector.shape_cast %83 : vector<1x4x128xf32> to vector<4x128xf32>
    %c8_45 = arith.constant 8 : index
    %c0_46 = arith.constant 0 : index
    %85 = vector.load %arg15[%c8_45, %c0_46] : memref<16x128xf32, #tpu.memory_space<vmem>>, vector<4x128xf32>
    tpu.vector_store %arg15[%c8_45, %c0_46], %84 {strides = array<i32>} : memref<16x128xf32, #tpu.memory_space<vmem>>, vector<4x128xf32>,
    %86 = vector.extract_strided_slice %76 {offsets = [3, 0, 0], sizes = [1, 4, 128], strides = [1, 1, 1]} : vector<4x4x128xf32> to vector<1x4x128xf32>
    %87 = vector.shape_cast %86 : vector<1x4x128xf32> to vector<4x128xf32>
    %c12 = arith.constant 12 : index
    %c0_47 = arith.constant 0 : index
    %88 = vector.load %arg15[%c12, %c0_47] : memref<16x128xf32, #tpu.memory_space<vmem>>, vector<4x128xf32>
    tpu.vector_store %arg15[%c12, %c0_47], %87 {strides = array<i32>} : memref<16x128xf32, #tpu.memory_space<vmem>>, vector<4x128xf32>,
    %c0_48 = arith.constant 0 : index
    %c0_49 = arith.constant 0 : index
    %89 = vector.load %arg15[%c0_48, %c0_49] : memref<16x128xf32, #tpu.memory_space<vmem>>, vector<16x128xf32>
    %90 = arith.truncf %89 : vector<16x128xf32> to vector<16x128xbf16>
    %c0_50 = arith.constant 0 : index
    %c0_51 = arith.constant 0 : index
    %91 = vector.load %arg4[%c0_50, %c0_51] : memref<128x128xbf16, #tpu.memory_space<vmem>>, vector<128x128xbf16>
    %cst_52 = arith.constant dense<0.000000e+00> : vector<16x128xf32>
    %92 = tpu.matmul %90, %91, %cst_52 {dimension_numbers = #tpu.dot_dimension_numbers<[1], [0], [0], [1], [0, 0, 1, 1], [], []>} : vector<16x128xbf16>, vector<128x128xbf16>, vector<16x128xf32> -> vector<16x128xf32>
    %c0_53 = arith.constant 0 : index
    %c0_54 = arith.constant 0 : index
    %93 = vector.load %arg5[%c0_53, %c0_54] : memref<1x128xf32, #tpu.memory_space<vmem>>, vector<1x128xf32>
    %94 = vector.broadcast %93 : vector<1x128xf32> to vector<16x128xf32>
    %95 = arith.addf %92, %94 : vector<16x128xf32>
    %96 = arith.truncf %95 : vector<16x128xf32> to vector<16x128xbf16>
    %c0_55 = arith.constant 0 : index
    %c0_56 = arith.constant 0 : index
    %97 = vector.load %arg6[%c0_55, %c0_56] : memref<128x128xbf16, #tpu.memory_space<vmem>>, vector<128x128xbf16>
    %cst_57 = arith.constant dense<0.000000e+00> : vector<16x128xf32>
    %98 = tpu.matmul %96, %97, %cst_57 {dimension_numbers = #tpu.dot_dimension_numbers<[1], [0], [0], [1], [0, 0, 1, 1], [], []>} : vector<16x128xbf16>, vector<128x128xbf16>, vector<16x128xf32> -> vector<16x128xf32>
    %c0_58 = arith.constant 0 : index
    %c0_59 = arith.constant 0 : index
    %99 = vector.load %arg7[%c0_58, %c0_59] : memref<1x128xf32, #tpu.memory_space<vmem>>, vector<1x128xf32>
    %100 = vector.broadcast %99 : vector<1x128xf32> to vector<16x128xf32>
    %101 = arith.addf %98, %100 : vector<16x128xf32>
    %cst_60 = arith.constant 0.000000e+00 : f32
    %102 = vector.broadcast %cst_60 : f32 to vector<16x128xf32>
    %103 = arith.maximumf %101, %102 : vector<16x128xf32>
    %cst_61 = arith.constant 0.000000e+00 : f32
    %104 = vector.broadcast %cst_61 : f32 to vector<6x6x128xf32>
    %c0_62 = arith.constant 0 : index
    %c0_63 = arith.constant 0 : index
    %c0_64 = arith.constant 0 : index
    %105 = vector.load %arg16[%c0_62, %c0_63, %c0_64] : memref<6x6x128xf32, #tpu.memory_space<vmem>>, vector<6x6x128xf32>
    tpu.vector_store %arg16[%c0_62, %c0_63, %c0_64], %104 {strides = array<i32>} : memref<6x6x128xf32, #tpu.memory_space<vmem>>, vector<6x6x128xf32>,
    %106 = vector.extract_strided_slice %103 {offsets = [0, 0], sizes = [4, 128], strides = [1, 1]} : vector<16x128xf32> to vector<4x128xf32>
    %c1_65 = arith.constant 1 : index
    %c1_66 = arith.constant 1 : index
    %c0_67 = arith.constant 0 : index
    %107 = vector.load %arg16[%c1_65, %c1_66, %c0_67] : memref<6x6x128xf32, #tpu.memory_space<vmem>>, vector<1x4x128xf32>
    %108 = vector.shape_cast %107 : vector<1x4x128xf32> to vector<4x128xf32>
    %109 = vector.shape_cast %106 : vector<4x128xf32> to vector<1x4x128xf32>
    tpu.vector_store %arg16[%c1_65, %c1_66, %c0_67], %109 {strides = array<i32>} : memref<6x6x128xf32, #tpu.memory_space<vmem>>, vector<1x4x128xf32>,
    %110 = vector.extract_strided_slice %103 {offsets = [4, 0], sizes = [4, 128], strides = [1, 1]} : vector<16x128xf32> to vector<4x128xf32>
    %c2_68 = arith.constant 2 : index
    %c1_69 = arith.constant 1 : index
    %c0_70 = arith.constant 0 : index
    %111 = vector.load %arg16[%c2_68, %c1_69, %c0_70] : memref<6x6x128xf32, #tpu.memory_space<vmem>>, vector<1x4x128xf32>
    %112 = vector.shape_cast %111 : vector<1x4x128xf32> to vector<4x128xf32>
    %113 = vector.shape_cast %110 : vector<4x128xf32> to vector<1x4x128xf32>
    tpu.vector_store %arg16[%c2_68, %c1_69, %c0_70], %113 {strides = array<i32>} : memref<6x6x128xf32, #tpu.memory_space<vmem>>, vector<1x4x128xf32>,
    %114 = vector.extract_strided_slice %103 {offsets = [8, 0], sizes = [4, 128], strides = [1, 1]} : vector<16x128xf32> to vector<4x128xf32>
    %c3_71 = arith.constant 3 : index
    %c1_72 = arith.constant 1 : index
    %c0_73 = arith.constant 0 : index
    %115 = vector.load %arg16[%c3_71, %c1_72, %c0_73] : memref<6x6x128xf32, #tpu.memory_space<vmem>>, vector<1x4x128xf32>
    %116 = vector.shape_cast %115 : vector<1x4x128xf32> to vector<4x128xf32>
    %117 = vector.shape_cast %114 : vector<4x128xf32> to vector<1x4x128xf32>
    tpu.vector_store %arg16[%c3_71, %c1_72, %c0_73], %117 {strides = array<i32>} : memref<6x6x128xf32, #tpu.memory_space<vmem>>, vector<1x4x128xf32>,
    %118 = vector.extract_strided_slice %103 {offsets = [12, 0], sizes = [4, 128], strides = [1, 1]} : vector<16x128xf32> to vector<4x128xf32>
    %c4_74 = arith.constant 4 : index
    %c1_75 = arith.constant 1 : index
    %c0_76 = arith.constant 0 : index
    %119 = vector.load %arg16[%c4_74, %c1_75, %c0_76] : memref<6x6x128xf32, #tpu.memory_space<vmem>>, vector<1x4x128xf32>
    %120 = vector.shape_cast %119 : vector<1x4x128xf32> to vector<4x128xf32>
    %121 = vector.shape_cast %118 : vector<4x128xf32> to vector<1x4x128xf32>
    tpu.vector_store %arg16[%c4_74, %c1_75, %c0_76], %121 {strides = array<i32>} : memref<6x6x128xf32, #tpu.memory_space<vmem>>, vector<1x4x128xf32>,
    %c0_77 = arith.constant 0 : index
    %c0_78 = arith.constant 0 : index
    %c0_79 = arith.constant 0 : index
    %122 = vector.load %arg16[%c0_77, %c0_78, %c0_79] : memref<6x6x128xf32, #tpu.memory_space<vmem>>, vector<6x4x128xf32>
    %123 = vector.extract_strided_slice %122 {offsets = [0, 0, 0], sizes = [4, 4, 128], strides = [1, 1, 1]} : vector<6x4x128xf32> to vector<4x4x128xf32>
    %c0_80 = arith.constant 0 : index
    %c0_81 = arith.constant 0 : index
    %124 = vector.load %arg8[%c0_80, %c0_81] : memref<9x128xf32, #tpu.memory_space<vmem>>, vector<1x128xf32>
    %125 = vector.shape_cast %124 : vector<1x128xf32> to vector<1x1x128xf32>
    %126 = vector.broadcast %125 : vector<1x1x128xf32> to vector<4x4x128xf32>
    %127 = arith.mulf %123, %126 : vector<4x4x128xf32>
    %128 = vector.extract_strided_slice %122 {offsets = [1, 0, 0], sizes = [4, 4, 128], strides = [1, 1, 1]} : vector<6x4x128xf32> to vector<4x4x128xf32>
    %c3_82 = arith.constant 3 : index
    %c0_83 = arith.constant 0 : index
    %129 = vector.load %arg8[%c3_82, %c0_83] : memref<9x128xf32, #tpu.memory_space<vmem>>, vector<1x128xf32>
    %130 = vector.shape_cast %129 : vector<1x128xf32> to vector<1x1x128xf32>
    %131 = vector.broadcast %130 : vector<1x1x128xf32> to vector<4x4x128xf32>
    %132 = arith.mulf %128, %131 : vector<4x4x128xf32>
    %133 = arith.addf %127, %132 : vector<4x4x128xf32>
    %134 = vector.extract_strided_slice %122 {offsets = [2, 0, 0], sizes = [4, 4, 128], strides = [1, 1, 1]} : vector<6x4x128xf32> to vector<4x4x128xf32>
    %c6_84 = arith.constant 6 : index
    %c0_85 = arith.constant 0 : index
    %135 = vector.load %arg8[%c6_84, %c0_85] : memref<9x128xf32, #tpu.memory_space<vmem>>, vector<1x128xf32>
    %136 = vector.shape_cast %135 : vector<1x128xf32> to vector<1x1x128xf32>
    %137 = vector.broadcast %136 : vector<1x1x128xf32> to vector<4x4x128xf32>
    %138 = arith.mulf %134, %137 : vector<4x4x128xf32>
    %139 = arith.addf %133, %138 : vector<4x4x128xf32>
    %c0_86 = arith.constant 0 : index
    %c1_87 = arith.constant 1 : index
    %c0_88 = arith.constant 0 : index
    %140 = vector.load %arg16[%c0_86, %c1_87, %c0_88] : memref<6x6x128xf32, #tpu.memory_space<vmem>>, vector<6x4x128xf32>
    %141 = vector.extract_strided_slice %140 {offsets = [0, 0, 0], sizes = [4, 4, 128], strides = [1, 1, 1]} : vector<6x4x128xf32> to vector<4x4x128xf32>
    %c1_89 = arith.constant 1 : index
    %c0_90 = arith.constant 0 : index
    %142 = vector.load %arg8[%c1_89, %c0_90] : memref<9x128xf32, #tpu.memory_space<vmem>>, vector<1x128xf32>
    %143 = vector.shape_cast %142 : vector<1x128xf32> to vector<1x1x128xf32>
    %144 = vector.broadcast %143 : vector<1x1x128xf32> to vector<4x4x128xf32>
    %145 = arith.mulf %141, %144 : vector<4x4x128xf32>
    %146 = arith.addf %139, %145 : vector<4x4x128xf32>
    %147 = vector.extract_strided_slice %140 {offsets = [1, 0, 0], sizes = [4, 4, 128], strides = [1, 1, 1]} : vector<6x4x128xf32> to vector<4x4x128xf32>
    %c4_91 = arith.constant 4 : index
    %c0_92 = arith.constant 0 : index
    %148 = vector.load %arg8[%c4_91, %c0_92] : memref<9x128xf32, #tpu.memory_space<vmem>>, vector<1x128xf32>
    %149 = vector.shape_cast %148 : vector<1x128xf32> to vector<1x1x128xf32>
    %150 = vector.broadcast %149 : vector<1x1x128xf32> to vector<4x4x128xf32>
    %151 = arith.mulf %147, %150 : vector<4x4x128xf32>
    %152 = arith.addf %146, %151 : vector<4x4x128xf32>
    %153 = vector.extract_strided_slice %140 {offsets = [2, 0, 0], sizes = [4, 4, 128], strides = [1, 1, 1]} : vector<6x4x128xf32> to vector<4x4x128xf32>
    %c7_93 = arith.constant 7 : index
    %c0_94 = arith.constant 0 : index
    %154 = vector.load %arg8[%c7_93, %c0_94] : memref<9x128xf32, #tpu.memory_space<vmem>>, vector<1x128xf32>
    %155 = vector.shape_cast %154 : vector<1x128xf32> to vector<1x1x128xf32>
    %156 = vector.broadcast %155 : vector<1x1x128xf32> to vector<4x4x128xf32>
    %157 = arith.mulf %153, %156 : vector<4x4x128xf32>
    %158 = arith.addf %152, %157 : vector<4x4x128xf32>
    %c0_95 = arith.constant 0 : index
    %c2_96 = arith.constant 2 : index
    %c0_97 = arith.constant 0 : index
    %159 = vector.load %arg16[%c0_95, %c2_96, %c0_97] : memref<6x6x128xf32, #tpu.memory_space<vmem>>, vector<6x4x128xf32>
    %160 = vector.extract_strided_slice %159 {offsets = [0, 0, 0], sizes = [4, 4, 128], strides = [1, 1, 1]} : vector<6x4x128xf32> to vector<4x4x128xf32>
    %c2_98 = arith.constant 2 : index
    %c0_99 = arith.constant 0 : index
    %161 = vector.load %arg8[%c2_98, %c0_99] : memref<9x128xf32, #tpu.memory_space<vmem>>, vector<1x128xf32>
    %162 = vector.shape_cast %161 : vector<1x128xf32> to vector<1x1x128xf32>
    %163 = vector.broadcast %162 : vector<1x1x128xf32> to vector<4x4x128xf32>
    %164 = arith.mulf %160, %163 : vector<4x4x128xf32>
    %165 = arith.addf %158, %164 : vector<4x4x128xf32>
    %166 = vector.extract_strided_slice %159 {offsets = [1, 0, 0], sizes = [4, 4, 128], strides = [1, 1, 1]} : vector<6x4x128xf32> to vector<4x4x128xf32>
    %c5_100 = arith.constant 5 : index
    %c0_101 = arith.constant 0 : index
    %167 = vector.load %arg8[%c5_100, %c0_101] : memref<9x128xf32, #tpu.memory_space<vmem>>, vector<1x128xf32>
    %168 = vector.shape_cast %167 : vector<1x128xf32> to vector<1x1x128xf32>
    %169 = vector.broadcast %168 : vector<1x1x128xf32> to vector<4x4x128xf32>
    %170 = arith.mulf %166, %169 : vector<4x4x128xf32>
    %171 = arith.addf %165, %170 : vector<4x4x128xf32>
    %172 = vector.extract_strided_slice %159 {offsets = [2, 0, 0], sizes = [4, 4, 128], strides = [1, 1, 1]} : vector<6x4x128xf32> to vector<4x4x128xf32>
    %c8_102 = arith.constant 8 : index
    %c0_103 = arith.constant 0 : index
    %173 = vector.load %arg8[%c8_102, %c0_103] : memref<9x128xf32, #tpu.memory_space<vmem>>, vector<1x128xf32>
    %174 = vector.shape_cast %173 : vector<1x128xf32> to vector<1x1x128xf32>
    %175 = vector.broadcast %174 : vector<1x1x128xf32> to vector<4x4x128xf32>
    %176 = arith.mulf %172, %175 : vector<4x4x128xf32>
    %177 = arith.addf %171, %176 : vector<4x4x128xf32>
    %c0_104 = arith.constant 0 : index
    %c0_105 = arith.constant 0 : index
    %178 = vector.load %arg9[%c0_104, %c0_105] : memref<1x128xf32, #tpu.memory_space<vmem>>, vector<1x128xf32>
    %179 = vector.shape_cast %178 : vector<1x128xf32> to vector<1x1x128xf32>
    %180 = vector.broadcast %179 : vector<1x1x128xf32> to vector<4x4x128xf32>
    %181 = arith.addf %177, %180 : vector<4x4x128xf32>
    %cst_106 = arith.constant 0.000000e+00 : f32
    %182 = vector.broadcast %cst_106 : f32 to vector<4x4x128xf32>
    %183 = arith.maximumf %181, %182 : vector<4x4x128xf32>
    %184 = vector.extract_strided_slice %183 {offsets = [0, 0, 0], sizes = [1, 4, 128], strides = [1, 1, 1]} : vector<4x4x128xf32> to vector<1x4x128xf32>
    %185 = vector.shape_cast %184 : vector<1x4x128xf32> to vector<4x128xf32>
    %c0_107 = arith.constant 0 : index
    %c0_108 = arith.constant 0 : index
    %186 = vector.load %arg17[%c0_107, %c0_108] : memref<16x128xf32, #tpu.memory_space<vmem>>, vector<4x128xf32>
    tpu.vector_store %arg17[%c0_107, %c0_108], %185 {strides = array<i32>} : memref<16x128xf32, #tpu.memory_space<vmem>>, vector<4x128xf32>,
    %187 = vector.extract_strided_slice %183 {offsets = [1, 0, 0], sizes = [1, 4, 128], strides = [1, 1, 1]} : vector<4x4x128xf32> to vector<1x4x128xf32>
    %188 = vector.shape_cast %187 : vector<1x4x128xf32> to vector<4x128xf32>
    %c4_109 = arith.constant 4 : index
    %c0_110 = arith.constant 0 : index
    %189 = vector.load %arg17[%c4_109, %c0_110] : memref<16x128xf32, #tpu.memory_space<vmem>>, vector<4x128xf32>
    tpu.vector_store %arg17[%c4_109, %c0_110], %188 {strides = array<i32>} : memref<16x128xf32, #tpu.memory_space<vmem>>, vector<4x128xf32>,
    %190 = vector.extract_strided_slice %183 {offsets = [2, 0, 0], sizes = [1, 4, 128], strides = [1, 1, 1]} : vector<4x4x128xf32> to vector<1x4x128xf32>
    %191 = vector.shape_cast %190 : vector<1x4x128xf32> to vector<4x128xf32>
    %c8_111 = arith.constant 8 : index
    %c0_112 = arith.constant 0 : index
    %192 = vector.load %arg17[%c8_111, %c0_112] : memref<16x128xf32, #tpu.memory_space<vmem>>, vector<4x128xf32>
    tpu.vector_store %arg17[%c8_111, %c0_112], %191 {strides = array<i32>} : memref<16x128xf32, #tpu.memory_space<vmem>>, vector<4x128xf32>,
    %193 = vector.extract_strided_slice %183 {offsets = [3, 0, 0], sizes = [1, 4, 128], strides = [1, 1, 1]} : vector<4x4x128xf32> to vector<1x4x128xf32>
    %194 = vector.shape_cast %193 : vector<1x4x128xf32> to vector<4x128xf32>
    %c12_113 = arith.constant 12 : index
    %c0_114 = arith.constant 0 : index
    %195 = vector.load %arg17[%c12_113, %c0_114] : memref<16x128xf32, #tpu.memory_space<vmem>>, vector<4x128xf32>
    tpu.vector_store %arg17[%c12_113, %c0_114], %194 {strides = array<i32>} : memref<16x128xf32, #tpu.memory_space<vmem>>, vector<4x128xf32>,
    %c0_115 = arith.constant 0 : index
    %c0_116 = arith.constant 0 : index
    %196 = vector.load %arg17[%c0_115, %c0_116] : memref<16x128xf32, #tpu.memory_space<vmem>>, vector<16x128xf32>
    %197 = arith.truncf %196 : vector<16x128xf32> to vector<16x128xbf16>
    %c0_117 = arith.constant 0 : index
    %c0_118 = arith.constant 0 : index
    %198 = vector.load %arg10[%c0_117, %c0_118] : memref<128x128xbf16, #tpu.memory_space<vmem>>, vector<128x128xbf16>
    %cst_119 = arith.constant dense<0.000000e+00> : vector<16x128xf32>
    %199 = tpu.matmul %197, %198, %cst_119 {dimension_numbers = #tpu.dot_dimension_numbers<[1], [0], [0], [1], [0, 0, 1, 1], [], []>} : vector<16x128xbf16>, vector<128x128xbf16>, vector<16x128xf32> -> vector<16x128xf32>
    %c0_120 = arith.constant 0 : index
    %c0_121 = arith.constant 0 : index
    %200 = vector.load %arg11[%c0_120, %c0_121] : memref<1x128xf32, #tpu.memory_space<vmem>>, vector<1x128xf32>
    %201 = vector.broadcast %200 : vector<1x128xf32> to vector<16x128xf32>
    %202 = arith.addf %199, %201 : vector<16x128xf32>
    %203 = arith.addf %202, %95 : vector<16x128xf32>
    %204 = arith.truncf %203 : vector<16x128xf32> to vector<16x128xbf16>
    %c0_122 = arith.constant 0 : index
    %c0_123 = arith.constant 0 : index
    %205 = vector.load %arg12[%c0_122, %c0_123] : memref<128x128xbf16, #tpu.memory_space<vmem>>, vector<128x128xbf16>
    %cst_124 = arith.constant dense<0.000000e+00> : vector<16x128xf32>
    %206 = tpu.matmul %204, %205, %cst_124 {dimension_numbers = #tpu.dot_dimension_numbers<[1], [0], [0], [1], [0, 0, 1, 1], [], []>} : vector<16x128xbf16>, vector<128x128xbf16>, vector<16x128xf32> -> vector<16x128xf32>
    %c0_125 = arith.constant 0 : index
    %c0_126 = arith.constant 0 : index
    %207 = vector.load %arg13[%c0_125, %c0_126] : memref<1x128xf32, #tpu.memory_space<vmem>>, vector<1x128xf32>
    %208 = vector.broadcast %207 : vector<1x128xf32> to vector<16x128xf32>
    %209 = arith.addf %206, %208 : vector<16x128xf32>
    %cst_127 = arith.constant 3.000000e+00 : f32
    %210 = vector.broadcast %cst_127 : f32 to vector<16x128xf32>
    %211 = arith.addf %209, %210 : vector<16x128xf32>
    %cst_128 = arith.constant 0.000000e+00 : f32
    %cst_129 = arith.constant 6.000000e+00 : f32
    %212 = vector.broadcast %cst_128 : f32 to vector<16x128xf32>
    %213 = arith.maximumf %212, %211 : vector<16x128xf32>
    %214 = vector.broadcast %cst_129 : f32 to vector<16x128xf32>
    %215 = arith.minimumf %214, %213 : vector<16x128xf32>
    %216 = arith.mulf %209, %215 : vector<16x128xf32>
    %cst_130 = arith.constant 0.166666672 : f32
    %217 = vector.broadcast %cst_130 : f32 to vector<16x128xf32>
    %218 = arith.mulf %216, %217 : vector<16x128xf32>
    %219 = arith.truncf %218 : vector<16x128xf32> to vector<16x128xbf16>
    %c0_131 = arith.constant 0 : index
    %c0_132 = arith.constant 0 : index
    %c0_133 = arith.constant 0 : index
    %220 = vector.load %arg14[%c0_131, %c0_132, %c0_133] : memref<1x16x128xbf16, #tpu.memory_space<vmem>>, vector<1x16x128xbf16>
    %221 = vector.shape_cast %220 : vector<1x16x128xbf16> to vector<16x128xbf16>
    %222 = vector.shape_cast %219 : vector<16x128xbf16> to vector<1x16x128xbf16>
    tpu.vector_store %arg14[%c0_131, %c0_132, %c0_133], %222 {strides = array<i32>} : memref<1x16x128xbf16, #tpu.memory_space<vmem>>, vector<1x16x128xbf16>,
    return
  }
  func.func @transform_0(%arg0: i32) -> (i32, i32, i32, i32, i32) {
    %c0_i32 = arith.constant 0 : i32
    %c0_i32_0 = arith.constant 0 : i32
    %c0_i32_1 = arith.constant 0 : i32
    %c0_i32_2 = arith.constant 0 : i32
    %c0_i32_3 = arith.constant 0 : i32
    return %arg0, %c0_i32, %c0_i32_0, %c0_i32_1, %c0_i32_2 : i32, i32, i32, i32, i32
  }
  func.func @transform_1(%arg0: i32) -> (i32, i32) {
    %c0_i32 = arith.constant 0 : i32
    %c0_i32_0 = arith.constant 0 : i32
    %c0_i32_1 = arith.constant 0 : i32
    return %c0_i32, %c0_i32_0 : i32, i32
  }
  func.func @transform_2(%arg0: i32) -> (i32, i32) {
    %c0_i32 = arith.constant 0 : i32
    %c0_i32_0 = arith.constant 0 : i32
    %c0_i32_1 = arith.constant 0 : i32
    return %c0_i32, %c0_i32_0 : i32, i32
  }
  func.func @transform_3(%arg0: i32) -> (i32, i32) {
    %c0_i32 = arith.constant 0 : i32
    %c0_i32_0 = arith.constant 0 : i32
    %c0_i32_1 = arith.constant 0 : i32
    return %c0_i32, %c0_i32_0 : i32, i32
  }
  func.func @transform_4(%arg0: i32) -> (i32, i32) {
    %c0_i32 = arith.constant 0 : i32
    %c0_i32_0 = arith.constant 0 : i32
    %c0_i32_1 = arith.constant 0 : i32
    return %c0_i32, %c0_i32_0 : i32, i32
  }
  func.func @transform_5(%arg0: i32) -> (i32, i32) {
    %c0_i32 = arith.constant 0 : i32
    %c0_i32_0 = arith.constant 0 : i32
    %c0_i32_1 = arith.constant 0 : i32
    return %c0_i32, %c0_i32_0 : i32, i32
  }
  func.func @transform_6(%arg0: i32) -> (i32, i32) {
    %c0_i32 = arith.constant 0 : i32
    %c0_i32_0 = arith.constant 0 : i32
    %c0_i32_1 = arith.constant 0 : i32
    return %c0_i32, %c0_i32_0 : i32, i32
  }
  func.func @transform_7(%arg0: i32) -> (i32, i32) {
    %c0_i32 = arith.constant 0 : i32
    %c0_i32_0 = arith.constant 0 : i32
    %c0_i32_1 = arith.constant 0 : i32
    return %c0_i32, %c0_i32_0 : i32, i32
  }
  func.func @transform_8(%arg0: i32) -> (i32, i32) {
    %c0_i32 = arith.constant 0 : i32
    %c0_i32_0 = arith.constant 0 : i32
    %c0_i32_1 = arith.constant 0 : i32
    return %c0_i32, %c0_i32_0 : i32, i32
  }
  func.func @transform_9(%arg0: i32) -> (i32, i32) {
    %c0_i32 = arith.constant 0 : i32
    %c0_i32_0 = arith.constant 0 : i32
    %c0_i32_1 = arith.constant 0 : i32
    return %c0_i32, %c0_i32_0 : i32, i32
  }
  func.func @transform_10(%arg0: i32) -> (i32, i32) {
    %c0_i32 = arith.constant 0 : i32
    %c0_i32_0 = arith.constant 0 : i32
    %c0_i32_1 = arith.constant 0 : i32
    return %c0_i32, %c0_i32_0 : i32, i32
  }
  func.func @transform_11(%arg0: i32) -> (i32, i32) {
    %c0_i32 = arith.constant 0 : i32
    %c0_i32_0 = arith.constant 0 : i32
    %c0_i32_1 = arith.constant 0 : i32
    return %c0_i32, %c0_i32_0 : i32, i32
  }
  func.func @transform_12(%arg0: i32) -> (i32, i32) {
    %c0_i32 = arith.constant 0 : i32
    %c0_i32_0 = arith.constant 0 : i32
    %c0_i32_1 = arith.constant 0 : i32
    return %c0_i32, %c0_i32_0 : i32, i32
  }
  func.func @transform_13(%arg0: i32) -> (i32, i32, i32) {
    %c0_i32 = arith.constant 0 : i32
    %c0_i32_0 = arith.constant 0 : i32
    %c0_i32_1 = arith.constant 0 : i32
    return %arg0, %c0_i32, %c0_i32_0 : i32, i32, i32
  }
}

module attributes {stable_mosaic.version = 11 : i64} {
  func.func @_block3_head_kernel(%arg0: i32, %arg1: memref<1x4x4x4x128xbf16, #tpu.memory_space<vmem>>, %arg2: memref<25x128xf32, #tpu.memory_space<vmem>>, %arg3: memref<1x128xf32, #tpu.memory_space<vmem>>, %arg4: memref<128x128xbf16, #tpu.memory_space<vmem>>, %arg5: memref<1x128xf32, #tpu.memory_space<vmem>>, %arg6: memref<128x128xbf16, #tpu.memory_space<vmem>>, %arg7: memref<1x128xf32, #tpu.memory_space<vmem>>, %arg8: memref<128x128xbf16, #tpu.memory_space<vmem>>, %arg9: memref<1x128xf32, #tpu.memory_space<vmem>>, %arg10: memref<128x256xbf16, #tpu.memory_space<vmem>>, %arg11: memref<1x256xf32, #tpu.memory_space<vmem>>, %arg12: memref<256x128xbf16, #tpu.memory_space<vmem>>, %arg13: memref<1x128xf32, #tpu.memory_space<vmem>>, %arg14: memref<128x128xbf16, #tpu.memory_space<vmem>>, %arg15: memref<1x128xf32, #tpu.memory_space<vmem>>, %arg16: memref<1x1x128xf32, #tpu.memory_space<vmem>>, %arg17: memref<4x128xf32, #tpu.memory_space<vmem>>) attributes {dimension_semantics = [#tpu.dimension_semantics<parallel>], iteration_bounds = array<i64: 2>, scalar_prefetch = 0 : i64, scratch_operands = 1 : i64, tpu.core_type = #tpu.core_type<tc>, window_params = [{transform_indices = @transform_0, window_bounds = array<i64: 1, 4, 4, 4, 128>}, {pipeline_mode = #tpu.pipeline_mode<synchronous>, transform_indices = @transform_1, window_bounds = array<i64: 25, 128>}, {pipeline_mode = #tpu.pipeline_mode<synchronous>, transform_indices = @transform_2, window_bounds = array<i64: 1, 128>}, {pipeline_mode = #tpu.pipeline_mode<synchronous>, transform_indices = @transform_3, window_bounds = array<i64: 128, 128>}, {pipeline_mode = #tpu.pipeline_mode<synchronous>, transform_indices = @transform_4, window_bounds = array<i64: 1, 128>}, {pipeline_mode = #tpu.pipeline_mode<synchronous>, transform_indices = @transform_5, window_bounds = array<i64: 128, 128>}, {pipeline_mode = #tpu.pipeline_mode<synchronous>, transform_indices = @transform_6, window_bounds = array<i64: 1, 128>}, {pipeline_mode = #tpu.pipeline_mode<synchronous>, transform_indices = @transform_7, window_bounds = array<i64: 128, 128>}, {pipeline_mode = #tpu.pipeline_mode<synchronous>, transform_indices = @transform_8, window_bounds = array<i64: 1, 128>}, {pipeline_mode = #tpu.pipeline_mode<synchronous>, transform_indices = @transform_9, window_bounds = array<i64: 128, 256>}, {pipeline_mode = #tpu.pipeline_mode<synchronous>, transform_indices = @transform_10, window_bounds = array<i64: 1, 256>}, {pipeline_mode = #tpu.pipeline_mode<synchronous>, transform_indices = @transform_11, window_bounds = array<i64: 256, 128>}, {pipeline_mode = #tpu.pipeline_mode<synchronous>, transform_indices = @transform_12, window_bounds = array<i64: 1, 128>}, {pipeline_mode = #tpu.pipeline_mode<synchronous>, transform_indices = @transform_13, window_bounds = array<i64: 128, 128>}, {pipeline_mode = #tpu.pipeline_mode<synchronous>, transform_indices = @transform_14, window_bounds = array<i64: 1, 128>}, {transform_indices = @transform_15, window_bounds = array<i64: 1, 1, 128>}]} {
    %c0 = arith.constant 0 : index
    %c0_0 = arith.constant 0 : index
    %c0_1 = arith.constant 0 : index
    %c0_2 = arith.constant 0 : index
    %c0_3 = arith.constant 0 : index
    %0 = vector.load %arg1[%c0, %c0_0, %c0_1, %c0_2, %c0_3] : memref<1x4x4x4x128xbf16, #tpu.memory_space<vmem>>, vector<1x1x4x2x128xbf16>
    %1 = vector.shape_cast %0 : vector<1x1x4x2x128xbf16> to vector<4x2x128xbf16>
    %2 = arith.extf %1 : vector<4x2x128xbf16> to vector<4x2x128xf32>
    %c0_4 = arith.constant 0 : index
    %c2 = arith.constant 2 : index
    %c0_5 = arith.constant 0 : index
    %c0_6 = arith.constant 0 : index
    %c0_7 = arith.constant 0 : index
    %3 = vector.load %arg1[%c0_4, %c2, %c0_5, %c0_6, %c0_7] : memref<1x4x4x4x128xbf16, #tpu.memory_space<vmem>>, vector<1x1x4x2x128xbf16>
    %4 = vector.shape_cast %3 : vector<1x1x4x2x128xbf16> to vector<4x2x128xbf16>
    %5 = arith.extf %4 : vector<4x2x128xbf16> to vector<4x2x128xf32>
    %6 = vector.extract_strided_slice %2 {offsets = [0, 0, 0], sizes = [2, 2, 128], strides = [1, 1, 1]} : vector<4x2x128xf32> to vector<2x2x128xf32>
    %c0_8 = arith.constant 0 : index
    %c0_9 = arith.constant 0 : index
    %7 = vector.load %arg2[%c0_8, %c0_9] : memref<25x128xf32, #tpu.memory_space<vmem>>, vector<1x128xf32>
    %8 = vector.shape_cast %7 : vector<1x128xf32> to vector<1x1x128xf32>
    %9 = vector.broadcast %8 : vector<1x1x128xf32> to vector<2x2x128xf32>
    %10 = arith.mulf %6, %9 : vector<2x2x128xf32>
    %11 = vector.extract_strided_slice %5 {offsets = [0, 0, 0], sizes = [2, 2, 128], strides = [1, 1, 1]} : vector<4x2x128xf32> to vector<2x2x128xf32>
    %c5 = arith.constant 5 : index
    %c0_10 = arith.constant 0 : index
    %12 = vector.load %arg2[%c5, %c0_10] : memref<25x128xf32, #tpu.memory_space<vmem>>, vector<1x128xf32>
    %13 = vector.shape_cast %12 : vector<1x128xf32> to vector<1x1x128xf32>
    %14 = vector.broadcast %13 : vector<1x1x128xf32> to vector<2x2x128xf32>
    %15 = arith.mulf %11, %14 : vector<2x2x128xf32>
    %16 = arith.addf %10, %15 : vector<2x2x128xf32>
    %17 = vector.extract_strided_slice %2 {offsets = [1, 0, 0], sizes = [2, 2, 128], strides = [1, 1, 1]} : vector<4x2x128xf32> to vector<2x2x128xf32>
    %c10 = arith.constant 10 : index
    %c0_11 = arith.constant 0 : index
    %18 = vector.load %arg2[%c10, %c0_11] : memref<25x128xf32, #tpu.memory_space<vmem>>, vector<1x128xf32>
    %19 = vector.shape_cast %18 : vector<1x128xf32> to vector<1x1x128xf32>
    %20 = vector.broadcast %19 : vector<1x1x128xf32> to vector<2x2x128xf32>
    %21 = arith.mulf %17, %20 : vector<2x2x128xf32>
    %22 = arith.addf %16, %21 : vector<2x2x128xf32>
    %23 = vector.extract_strided_slice %5 {offsets = [1, 0, 0], sizes = [2, 2, 128], strides = [1, 1, 1]} : vector<4x2x128xf32> to vector<2x2x128xf32>
    %c15 = arith.constant 15 : index
    %c0_12 = arith.constant 0 : index
    %24 = vector.load %arg2[%c15, %c0_12] : memref<25x128xf32, #tpu.memory_space<vmem>>, vector<1x128xf32>
    %25 = vector.shape_cast %24 : vector<1x128xf32> to vector<1x1x128xf32>
    %26 = vector.broadcast %25 : vector<1x1x128xf32> to vector<2x2x128xf32>
    %27 = arith.mulf %23, %26 : vector<2x2x128xf32>
    %28 = arith.addf %22, %27 : vector<2x2x128xf32>
    %29 = vector.extract_strided_slice %2 {offsets = [2, 0, 0], sizes = [2, 2, 128], strides = [1, 1, 1]} : vector<4x2x128xf32> to vector<2x2x128xf32>
    %c20 = arith.constant 20 : index
    %c0_13 = arith.constant 0 : index
    %30 = vector.load %arg2[%c20, %c0_13] : memref<25x128xf32, #tpu.memory_space<vmem>>, vector<1x128xf32>
    %31 = vector.shape_cast %30 : vector<1x128xf32> to vector<1x1x128xf32>
    %32 = vector.broadcast %31 : vector<1x1x128xf32> to vector<2x2x128xf32>
    %33 = arith.mulf %29, %32 : vector<2x2x128xf32>
    %34 = arith.addf %28, %33 : vector<2x2x128xf32>
    %c0_14 = arith.constant 0 : index
    %c1 = arith.constant 1 : index
    %c0_15 = arith.constant 0 : index
    %c0_16 = arith.constant 0 : index
    %c0_17 = arith.constant 0 : index
    %35 = vector.load %arg1[%c0_14, %c1, %c0_15, %c0_16, %c0_17] : memref<1x4x4x4x128xbf16, #tpu.memory_space<vmem>>, vector<1x1x4x2x128xbf16>
    %36 = vector.shape_cast %35 : vector<1x1x4x2x128xbf16> to vector<4x2x128xbf16>
    %37 = arith.extf %36 : vector<4x2x128xbf16> to vector<4x2x128xf32>
    %c0_18 = arith.constant 0 : index
    %c3 = arith.constant 3 : index
    %c0_19 = arith.constant 0 : index
    %c0_20 = arith.constant 0 : index
    %c0_21 = arith.constant 0 : index
    %38 = vector.load %arg1[%c0_18, %c3, %c0_19, %c0_20, %c0_21] : memref<1x4x4x4x128xbf16, #tpu.memory_space<vmem>>, vector<1x1x4x2x128xbf16>
    %39 = vector.shape_cast %38 : vector<1x1x4x2x128xbf16> to vector<4x2x128xbf16>
    %40 = arith.extf %39 : vector<4x2x128xbf16> to vector<4x2x128xf32>
    %41 = vector.extract_strided_slice %37 {offsets = [0, 0, 0], sizes = [2, 2, 128], strides = [1, 1, 1]} : vector<4x2x128xf32> to vector<2x2x128xf32>
    %c1_22 = arith.constant 1 : index
    %c0_23 = arith.constant 0 : index
    %42 = vector.load %arg2[%c1_22, %c0_23] : memref<25x128xf32, #tpu.memory_space<vmem>>, vector<1x128xf32>
    %43 = vector.shape_cast %42 : vector<1x128xf32> to vector<1x1x128xf32>
    %44 = vector.broadcast %43 : vector<1x1x128xf32> to vector<2x2x128xf32>
    %45 = arith.mulf %41, %44 : vector<2x2x128xf32>
    %46 = arith.addf %34, %45 : vector<2x2x128xf32>
    %47 = vector.extract_strided_slice %40 {offsets = [0, 0, 0], sizes = [2, 2, 128], strides = [1, 1, 1]} : vector<4x2x128xf32> to vector<2x2x128xf32>
    %c6 = arith.constant 6 : index
    %c0_24 = arith.constant 0 : index
    %48 = vector.load %arg2[%c6, %c0_24] : memref<25x128xf32, #tpu.memory_space<vmem>>, vector<1x128xf32>
    %49 = vector.shape_cast %48 : vector<1x128xf32> to vector<1x1x128xf32>
    %50 = vector.broadcast %49 : vector<1x1x128xf32> to vector<2x2x128xf32>
    %51 = arith.mulf %47, %50 : vector<2x2x128xf32>
    %52 = arith.addf %46, %51 : vector<2x2x128xf32>
    %53 = vector.extract_strided_slice %37 {offsets = [1, 0, 0], sizes = [2, 2, 128], strides = [1, 1, 1]} : vector<4x2x128xf32> to vector<2x2x128xf32>
    %c11 = arith.constant 11 : index
    %c0_25 = arith.constant 0 : index
    %54 = vector.load %arg2[%c11, %c0_25] : memref<25x128xf32, #tpu.memory_space<vmem>>, vector<1x128xf32>
    %55 = vector.shape_cast %54 : vector<1x128xf32> to vector<1x1x128xf32>
    %56 = vector.broadcast %55 : vector<1x1x128xf32> to vector<2x2x128xf32>
    %57 = arith.mulf %53, %56 : vector<2x2x128xf32>
    %58 = arith.addf %52, %57 : vector<2x2x128xf32>
    %59 = vector.extract_strided_slice %40 {offsets = [1, 0, 0], sizes = [2, 2, 128], strides = [1, 1, 1]} : vector<4x2x128xf32> to vector<2x2x128xf32>
    %c16 = arith.constant 16 : index
    %c0_26 = arith.constant 0 : index
    %60 = vector.load %arg2[%c16, %c0_26] : memref<25x128xf32, #tpu.memory_space<vmem>>, vector<1x128xf32>
    %61 = vector.shape_cast %60 : vector<1x128xf32> to vector<1x1x128xf32>
    %62 = vector.broadcast %61 : vector<1x1x128xf32> to vector<2x2x128xf32>
    %63 = arith.mulf %59, %62 : vector<2x2x128xf32>
    %64 = arith.addf %58, %63 : vector<2x2x128xf32>
    %65 = vector.extract_strided_slice %37 {offsets = [2, 0, 0], sizes = [2, 2, 128], strides = [1, 1, 1]} : vector<4x2x128xf32> to vector<2x2x128xf32>
    %c21 = arith.constant 21 : index
    %c0_27 = arith.constant 0 : index
    %66 = vector.load %arg2[%c21, %c0_27] : memref<25x128xf32, #tpu.memory_space<vmem>>, vector<1x128xf32>
    %67 = vector.shape_cast %66 : vector<1x128xf32> to vector<1x1x128xf32>
    %68 = vector.broadcast %67 : vector<1x1x128xf32> to vector<2x2x128xf32>
    %69 = arith.mulf %65, %68 : vector<2x2x128xf32>
    %70 = arith.addf %64, %69 : vector<2x2x128xf32>
    %c0_28 = arith.constant 0 : index
    %c0_29 = arith.constant 0 : index
    %c0_30 = arith.constant 0 : index
    %c1_31 = arith.constant 1 : index
    %c0_32 = arith.constant 0 : index
    %71 = vector.load %arg1[%c0_28, %c0_29, %c0_30, %c1_31, %c0_32] : memref<1x4x4x4x128xbf16, #tpu.memory_space<vmem>>, vector<1x1x4x2x128xbf16>
    %72 = vector.shape_cast %71 : vector<1x1x4x2x128xbf16> to vector<4x2x128xbf16>
    %73 = arith.extf %72 : vector<4x2x128xbf16> to vector<4x2x128xf32>
    %c0_33 = arith.constant 0 : index
    %c2_34 = arith.constant 2 : index
    %c0_35 = arith.constant 0 : index
    %c1_36 = arith.constant 1 : index
    %c0_37 = arith.constant 0 : index
    %74 = vector.load %arg1[%c0_33, %c2_34, %c0_35, %c1_36, %c0_37] : memref<1x4x4x4x128xbf16, #tpu.memory_space<vmem>>, vector<1x1x4x2x128xbf16>
    %75 = vector.shape_cast %74 : vector<1x1x4x2x128xbf16> to vector<4x2x128xbf16>
    %76 = arith.extf %75 : vector<4x2x128xbf16> to vector<4x2x128xf32>
    %77 = vector.extract_strided_slice %73 {offsets = [0, 0, 0], sizes = [2, 2, 128], strides = [1, 1, 1]} : vector<4x2x128xf32> to vector<2x2x128xf32>
    %c2_38 = arith.constant 2 : index
    %c0_39 = arith.constant 0 : index
    %78 = vector.load %arg2[%c2_38, %c0_39] : memref<25x128xf32, #tpu.memory_space<vmem>>, vector<1x128xf32>
    %79 = vector.shape_cast %78 : vector<1x128xf32> to vector<1x1x128xf32>
    %80 = vector.broadcast %79 : vector<1x1x128xf32> to vector<2x2x128xf32>
    %81 = arith.mulf %77, %80 : vector<2x2x128xf32>
    %82 = arith.addf %70, %81 : vector<2x2x128xf32>
    %83 = vector.extract_strided_slice %76 {offsets = [0, 0, 0], sizes = [2, 2, 128], strides = [1, 1, 1]} : vector<4x2x128xf32> to vector<2x2x128xf32>
    %c7 = arith.constant 7 : index
    %c0_40 = arith.constant 0 : index
    %84 = vector.load %arg2[%c7, %c0_40] : memref<25x128xf32, #tpu.memory_space<vmem>>, vector<1x128xf32>
    %85 = vector.shape_cast %84 : vector<1x128xf32> to vector<1x1x128xf32>
    %86 = vector.broadcast %85 : vector<1x1x128xf32> to vector<2x2x128xf32>
    %87 = arith.mulf %83, %86 : vector<2x2x128xf32>
    %88 = arith.addf %82, %87 : vector<2x2x128xf32>
    %89 = vector.extract_strided_slice %73 {offsets = [1, 0, 0], sizes = [2, 2, 128], strides = [1, 1, 1]} : vector<4x2x128xf32> to vector<2x2x128xf32>
    %c12 = arith.constant 12 : index
    %c0_41 = arith.constant 0 : index
    %90 = vector.load %arg2[%c12, %c0_41] : memref<25x128xf32, #tpu.memory_space<vmem>>, vector<1x128xf32>
    %91 = vector.shape_cast %90 : vector<1x128xf32> to vector<1x1x128xf32>
    %92 = vector.broadcast %91 : vector<1x1x128xf32> to vector<2x2x128xf32>
    %93 = arith.mulf %89, %92 : vector<2x2x128xf32>
    %94 = arith.addf %88, %93 : vector<2x2x128xf32>
    %95 = vector.extract_strided_slice %76 {offsets = [1, 0, 0], sizes = [2, 2, 128], strides = [1, 1, 1]} : vector<4x2x128xf32> to vector<2x2x128xf32>
    %c17 = arith.constant 17 : index
    %c0_42 = arith.constant 0 : index
    %96 = vector.load %arg2[%c17, %c0_42] : memref<25x128xf32, #tpu.memory_space<vmem>>, vector<1x128xf32>
    %97 = vector.shape_cast %96 : vector<1x128xf32> to vector<1x1x128xf32>
    %98 = vector.broadcast %97 : vector<1x1x128xf32> to vector<2x2x128xf32>
    %99 = arith.mulf %95, %98 : vector<2x2x128xf32>
    %100 = arith.addf %94, %99 : vector<2x2x128xf32>
    %101 = vector.extract_strided_slice %73 {offsets = [2, 0, 0], sizes = [2, 2, 128], strides = [1, 1, 1]} : vector<4x2x128xf32> to vector<2x2x128xf32>
    %c22 = arith.constant 22 : index
    %c0_43 = arith.constant 0 : index
    %102 = vector.load %arg2[%c22, %c0_43] : memref<25x128xf32, #tpu.memory_space<vmem>>, vector<1x128xf32>
    %103 = vector.shape_cast %102 : vector<1x128xf32> to vector<1x1x128xf32>
    %104 = vector.broadcast %103 : vector<1x1x128xf32> to vector<2x2x128xf32>
    %105 = arith.mulf %101, %104 : vector<2x2x128xf32>
    %106 = arith.addf %100, %105 : vector<2x2x128xf32>
    %c0_44 = arith.constant 0 : index
    %c1_45 = arith.constant 1 : index
    %c0_46 = arith.constant 0 : index
    %c1_47 = arith.constant 1 : index
    %c0_48 = arith.constant 0 : index
    %107 = vector.load %arg1[%c0_44, %c1_45, %c0_46, %c1_47, %c0_48] : memref<1x4x4x4x128xbf16, #tpu.memory_space<vmem>>, vector<1x1x4x2x128xbf16>
    %108 = vector.shape_cast %107 : vector<1x1x4x2x128xbf16> to vector<4x2x128xbf16>
    %109 = arith.extf %108 : vector<4x2x128xbf16> to vector<4x2x128xf32>
    %c0_49 = arith.constant 0 : index
    %c3_50 = arith.constant 3 : index
    %c0_51 = arith.constant 0 : index
    %c1_52 = arith.constant 1 : index
    %c0_53 = arith.constant 0 : index
    %110 = vector.load %arg1[%c0_49, %c3_50, %c0_51, %c1_52, %c0_53] : memref<1x4x4x4x128xbf16, #tpu.memory_space<vmem>>, vector<1x1x4x2x128xbf16>
    %111 = vector.shape_cast %110 : vector<1x1x4x2x128xbf16> to vector<4x2x128xbf16>
    %112 = arith.extf %111 : vector<4x2x128xbf16> to vector<4x2x128xf32>
    %113 = vector.extract_strided_slice %109 {offsets = [0, 0, 0], sizes = [2, 2, 128], strides = [1, 1, 1]} : vector<4x2x128xf32> to vector<2x2x128xf32>
    %c3_54 = arith.constant 3 : index
    %c0_55 = arith.constant 0 : index
    %114 = vector.load %arg2[%c3_54, %c0_55] : memref<25x128xf32, #tpu.memory_space<vmem>>, vector<1x128xf32>
    %115 = vector.shape_cast %114 : vector<1x128xf32> to vector<1x1x128xf32>
    %116 = vector.broadcast %115 : vector<1x1x128xf32> to vector<2x2x128xf32>
    %117 = arith.mulf %113, %116 : vector<2x2x128xf32>
    %118 = arith.addf %106, %117 : vector<2x2x128xf32>
    %119 = vector.extract_strided_slice %112 {offsets = [0, 0, 0], sizes = [2, 2, 128], strides = [1, 1, 1]} : vector<4x2x128xf32> to vector<2x2x128xf32>
    %c8 = arith.constant 8 : index
    %c0_56 = arith.constant 0 : index
    %120 = vector.load %arg2[%c8, %c0_56] : memref<25x128xf32, #tpu.memory_space<vmem>>, vector<1x128xf32>
    %121 = vector.shape_cast %120 : vector<1x128xf32> to vector<1x1x128xf32>
    %122 = vector.broadcast %121 : vector<1x1x128xf32> to vector<2x2x128xf32>
    %123 = arith.mulf %119, %122 : vector<2x2x128xf32>
    %124 = arith.addf %118, %123 : vector<2x2x128xf32>
    %125 = vector.extract_strided_slice %109 {offsets = [1, 0, 0], sizes = [2, 2, 128], strides = [1, 1, 1]} : vector<4x2x128xf32> to vector<2x2x128xf32>
    %c13 = arith.constant 13 : index
    %c0_57 = arith.constant 0 : index
    %126 = vector.load %arg2[%c13, %c0_57] : memref<25x128xf32, #tpu.memory_space<vmem>>, vector<1x128xf32>
    %127 = vector.shape_cast %126 : vector<1x128xf32> to vector<1x1x128xf32>
    %128 = vector.broadcast %127 : vector<1x1x128xf32> to vector<2x2x128xf32>
    %129 = arith.mulf %125, %128 : vector<2x2x128xf32>
    %130 = arith.addf %124, %129 : vector<2x2x128xf32>
    %131 = vector.extract_strided_slice %112 {offsets = [1, 0, 0], sizes = [2, 2, 128], strides = [1, 1, 1]} : vector<4x2x128xf32> to vector<2x2x128xf32>
    %c18 = arith.constant 18 : index
    %c0_58 = arith.constant 0 : index
    %132 = vector.load %arg2[%c18, %c0_58] : memref<25x128xf32, #tpu.memory_space<vmem>>, vector<1x128xf32>
    %133 = vector.shape_cast %132 : vector<1x128xf32> to vector<1x1x128xf32>
    %134 = vector.broadcast %133 : vector<1x1x128xf32> to vector<2x2x128xf32>
    %135 = arith.mulf %131, %134 : vector<2x2x128xf32>
    %136 = arith.addf %130, %135 : vector<2x2x128xf32>
    %137 = vector.extract_strided_slice %109 {offsets = [2, 0, 0], sizes = [2, 2, 128], strides = [1, 1, 1]} : vector<4x2x128xf32> to vector<2x2x128xf32>
    %c23 = arith.constant 23 : index
    %c0_59 = arith.constant 0 : index
    %138 = vector.load %arg2[%c23, %c0_59] : memref<25x128xf32, #tpu.memory_space<vmem>>, vector<1x128xf32>
    %139 = vector.shape_cast %138 : vector<1x128xf32> to vector<1x1x128xf32>
    %140 = vector.broadcast %139 : vector<1x1x128xf32> to vector<2x2x128xf32>
    %141 = arith.mulf %137, %140 : vector<2x2x128xf32>
    %142 = arith.addf %136, %141 : vector<2x2x128xf32>
    %c0_60 = arith.constant 0 : index
    %c0_61 = arith.constant 0 : index
    %c0_62 = arith.constant 0 : index
    %c2_63 = arith.constant 2 : index
    %c0_64 = arith.constant 0 : index
    %143 = vector.load %arg1[%c0_60, %c0_61, %c0_62, %c2_63, %c0_64] : memref<1x4x4x4x128xbf16, #tpu.memory_space<vmem>>, vector<1x1x4x2x128xbf16>
    %144 = vector.shape_cast %143 : vector<1x1x4x2x128xbf16> to vector<4x2x128xbf16>
    %145 = arith.extf %144 : vector<4x2x128xbf16> to vector<4x2x128xf32>
    %c0_65 = arith.constant 0 : index
    %c2_66 = arith.constant 2 : index
    %c0_67 = arith.constant 0 : index
    %c2_68 = arith.constant 2 : index
    %c0_69 = arith.constant 0 : index
    %146 = vector.load %arg1[%c0_65, %c2_66, %c0_67, %c2_68, %c0_69] : memref<1x4x4x4x128xbf16, #tpu.memory_space<vmem>>, vector<1x1x4x2x128xbf16>
    %147 = vector.shape_cast %146 : vector<1x1x4x2x128xbf16> to vector<4x2x128xbf16>
    %148 = arith.extf %147 : vector<4x2x128xbf16> to vector<4x2x128xf32>
    %149 = vector.extract_strided_slice %145 {offsets = [0, 0, 0], sizes = [2, 2, 128], strides = [1, 1, 1]} : vector<4x2x128xf32> to vector<2x2x128xf32>
    %c4 = arith.constant 4 : index
    %c0_70 = arith.constant 0 : index
    %150 = vector.load %arg2[%c4, %c0_70] : memref<25x128xf32, #tpu.memory_space<vmem>>, vector<1x128xf32>
    %151 = vector.shape_cast %150 : vector<1x128xf32> to vector<1x1x128xf32>
    %152 = vector.broadcast %151 : vector<1x1x128xf32> to vector<2x2x128xf32>
    %153 = arith.mulf %149, %152 : vector<2x2x128xf32>
    %154 = arith.addf %142, %153 : vector<2x2x128xf32>
    %155 = vector.extract_strided_slice %148 {offsets = [0, 0, 0], sizes = [2, 2, 128], strides = [1, 1, 1]} : vector<4x2x128xf32> to vector<2x2x128xf32>
    %c9 = arith.constant 9 : index
    %c0_71 = arith.constant 0 : index
    %156 = vector.load %arg2[%c9, %c0_71] : memref<25x128xf32, #tpu.memory_space<vmem>>, vector<1x128xf32>
    %157 = vector.shape_cast %156 : vector<1x128xf32> to vector<1x1x128xf32>
    %158 = vector.broadcast %157 : vector<1x1x128xf32> to vector<2x2x128xf32>
    %159 = arith.mulf %155, %158 : vector<2x2x128xf32>
    %160 = arith.addf %154, %159 : vector<2x2x128xf32>
    %161 = vector.extract_strided_slice %145 {offsets = [1, 0, 0], sizes = [2, 2, 128], strides = [1, 1, 1]} : vector<4x2x128xf32> to vector<2x2x128xf32>
    %c14 = arith.constant 14 : index
    %c0_72 = arith.constant 0 : index
    %162 = vector.load %arg2[%c14, %c0_72] : memref<25x128xf32, #tpu.memory_space<vmem>>, vector<1x128xf32>
    %163 = vector.shape_cast %162 : vector<1x128xf32> to vector<1x1x128xf32>
    %164 = vector.broadcast %163 : vector<1x1x128xf32> to vector<2x2x128xf32>
    %165 = arith.mulf %161, %164 : vector<2x2x128xf32>
    %166 = arith.addf %160, %165 : vector<2x2x128xf32>
    %167 = vector.extract_strided_slice %148 {offsets = [1, 0, 0], sizes = [2, 2, 128], strides = [1, 1, 1]} : vector<4x2x128xf32> to vector<2x2x128xf32>
    %c19 = arith.constant 19 : index
    %c0_73 = arith.constant 0 : index
    %168 = vector.load %arg2[%c19, %c0_73] : memref<25x128xf32, #tpu.memory_space<vmem>>, vector<1x128xf32>
    %169 = vector.shape_cast %168 : vector<1x128xf32> to vector<1x1x128xf32>
    %170 = vector.broadcast %169 : vector<1x1x128xf32> to vector<2x2x128xf32>
    %171 = arith.mulf %167, %170 : vector<2x2x128xf32>
    %172 = arith.addf %166, %171 : vector<2x2x128xf32>
    %173 = vector.extract_strided_slice %145 {offsets = [2, 0, 0], sizes = [2, 2, 128], strides = [1, 1, 1]} : vector<4x2x128xf32> to vector<2x2x128xf32>
    %c24 = arith.constant 24 : index
    %c0_74 = arith.constant 0 : index
    %174 = vector.load %arg2[%c24, %c0_74] : memref<25x128xf32, #tpu.memory_space<vmem>>, vector<1x128xf32>
    %175 = vector.shape_cast %174 : vector<1x128xf32> to vector<1x1x128xf32>
    %176 = vector.broadcast %175 : vector<1x1x128xf32> to vector<2x2x128xf32>
    %177 = arith.mulf %173, %176 : vector<2x2x128xf32>
    %178 = arith.addf %172, %177 : vector<2x2x128xf32>
    %c0_75 = arith.constant 0 : index
    %c0_76 = arith.constant 0 : index
    %179 = vector.load %arg3[%c0_75, %c0_76] : memref<1x128xf32, #tpu.memory_space<vmem>>, vector<1x128xf32>
    %180 = vector.shape_cast %179 : vector<1x128xf32> to vector<1x1x128xf32>
    %181 = vector.broadcast %180 : vector<1x1x128xf32> to vector<2x2x128xf32>
    %182 = arith.addf %178, %181 : vector<2x2x128xf32>
    %cst = arith.constant 3.000000e+00 : f32
    %183 = vector.broadcast %cst : f32 to vector<2x2x128xf32>
    %184 = arith.addf %182, %183 : vector<2x2x128xf32>
    %cst_77 = arith.constant 0.000000e+00 : f32
    %cst_78 = arith.constant 6.000000e+00 : f32
    %185 = vector.broadcast %cst_77 : f32 to vector<2x2x128xf32>
    %186 = arith.maximumf %185, %184 : vector<2x2x128xf32>
    %187 = vector.broadcast %cst_78 : f32 to vector<2x2x128xf32>
    %188 = arith.minimumf %187, %186 : vector<2x2x128xf32>
    %189 = arith.mulf %182, %188 : vector<2x2x128xf32>
    %cst_79 = arith.constant 0.166666672 : f32
    %190 = vector.broadcast %cst_79 : f32 to vector<2x2x128xf32>
    %191 = arith.mulf %189, %190 : vector<2x2x128xf32>
    %192 = vector.extract_strided_slice %191 {offsets = [0, 0, 0], sizes = [1, 2, 128], strides = [1, 1, 1]} : vector<2x2x128xf32> to vector<1x2x128xf32>
    %193 = vector.shape_cast %192 : vector<1x2x128xf32> to vector<2x128xf32>
    %c0_80 = arith.constant 0 : index
    %c0_81 = arith.constant 0 : index
    %194 = vector.load %arg17[%c0_80, %c0_81] : memref<4x128xf32, #tpu.memory_space<vmem>>, vector<2x128xf32>
    tpu.vector_store %arg17[%c0_80, %c0_81], %193 {strides = array<i32>} : memref<4x128xf32, #tpu.memory_space<vmem>>, vector<2x128xf32>,
    %195 = vector.extract_strided_slice %191 {offsets = [1, 0, 0], sizes = [1, 2, 128], strides = [1, 1, 1]} : vector<2x2x128xf32> to vector<1x2x128xf32>
    %196 = vector.shape_cast %195 : vector<1x2x128xf32> to vector<2x128xf32>
    %c2_82 = arith.constant 2 : index
    %c0_83 = arith.constant 0 : index
    %197 = vector.load %arg17[%c2_82, %c0_83] : memref<4x128xf32, #tpu.memory_space<vmem>>, vector<2x128xf32>
    tpu.vector_store %arg17[%c2_82, %c0_83], %196 {strides = array<i32>} : memref<4x128xf32, #tpu.memory_space<vmem>>, vector<2x128xf32>,
    %c0_84 = arith.constant 0 : index
    %c0_85 = arith.constant 0 : index
    %198 = vector.load %arg17[%c0_84, %c0_85] : memref<4x128xf32, #tpu.memory_space<vmem>>, vector<4x128xf32>
    %cst_86 = arith.constant dense<0.000000e+00> : vector<128xf32>
    %199 = vector.multi_reduction <add>, %198, %cst_86 [0] : vector<4x128xf32> to vector<128xf32>
    %200 = vector.shape_cast %199 : vector<128xf32> to vector<1x128xf32>
    %cst_87 = arith.constant 2.500000e-01 : f32
    %201 = vector.broadcast %cst_87 : f32 to vector<1x128xf32>
    %202 = arith.mulf %200, %201 : vector<1x128xf32>
    %203 = arith.truncf %202 : vector<1x128xf32> to vector<1x128xbf16>
    %c0_88 = arith.constant 0 : index
    %c0_89 = arith.constant 0 : index
    %204 = vector.load %arg4[%c0_88, %c0_89] : memref<128x128xbf16, #tpu.memory_space<vmem>>, vector<128x128xbf16>
    %cst_90 = arith.constant dense<0.000000e+00> : vector<1x128xf32>
    %205 = tpu.matmul %203, %204, %cst_90 {dimension_numbers = #tpu.dot_dimension_numbers<[1], [0], [0], [1], [0, 0, 1, 1], [], []>} : vector<1x128xbf16>, vector<128x128xbf16>, vector<1x128xf32> -> vector<1x128xf32>
    %c0_91 = arith.constant 0 : index
    %c0_92 = arith.constant 0 : index
    %206 = vector.load %arg5[%c0_91, %c0_92] : memref<1x128xf32, #tpu.memory_space<vmem>>, vector<1x128xf32>
    %207 = arith.addf %205, %206 : vector<1x128xf32>
    %cst_93 = arith.constant 0.000000e+00 : f32
    %208 = vector.broadcast %cst_93 : f32 to vector<1x128xf32>
    %209 = arith.maximumf %207, %208 : vector<1x128xf32>
    %210 = arith.truncf %209 : vector<1x128xf32> to vector<1x128xbf16>
    %c0_94 = arith.constant 0 : index
    %c0_95 = arith.constant 0 : index
    %211 = vector.load %arg6[%c0_94, %c0_95] : memref<128x128xbf16, #tpu.memory_space<vmem>>, vector<128x128xbf16>
    %cst_96 = arith.constant dense<0.000000e+00> : vector<1x128xf32>
    %212 = tpu.matmul %210, %211, %cst_96 {dimension_numbers = #tpu.dot_dimension_numbers<[1], [0], [0], [1], [0, 0, 1, 1], [], []>} : vector<1x128xbf16>, vector<128x128xbf16>, vector<1x128xf32> -> vector<1x128xf32>
    %c0_97 = arith.constant 0 : index
    %c0_98 = arith.constant 0 : index
    %213 = vector.load %arg7[%c0_97, %c0_98] : memref<1x128xf32, #tpu.memory_space<vmem>>, vector<1x128xf32>
    %214 = arith.addf %212, %213 : vector<1x128xf32>
    %cst_99 = arith.constant 3.000000e+00 : f32
    %215 = vector.broadcast %cst_99 : f32 to vector<1x128xf32>
    %216 = arith.addf %214, %215 : vector<1x128xf32>
    %cst_100 = arith.constant 0.000000e+00 : f32
    %cst_101 = arith.constant 6.000000e+00 : f32
    %217 = vector.broadcast %cst_100 : f32 to vector<1x128xf32>
    %218 = arith.maximumf %217, %216 : vector<1x128xf32>
    %219 = vector.broadcast %cst_101 : f32 to vector<1x128xf32>
    %220 = arith.minimumf %219, %218 : vector<1x128xf32>
    %cst_102 = arith.constant 0.166666672 : f32
    %221 = vector.broadcast %cst_102 : f32 to vector<1x128xf32>
    %222 = arith.mulf %220, %221 : vector<1x128xf32>
    %223 = vector.broadcast %222 : vector<1x128xf32> to vector<4x128xf32>
    %224 = arith.mulf %198, %223 : vector<4x128xf32>
    %225 = arith.truncf %224 : vector<4x128xf32> to vector<4x128xbf16>
    %c0_103 = arith.constant 0 : index
    %c0_104 = arith.constant 0 : index
    %226 = vector.load %arg8[%c0_103, %c0_104] : memref<128x128xbf16, #tpu.memory_space<vmem>>, vector<128x128xbf16>
    %cst_105 = arith.constant dense<0.000000e+00> : vector<4x128xf32>
    %227 = tpu.matmul %225, %226, %cst_105 {dimension_numbers = #tpu.dot_dimension_numbers<[1], [0], [0], [1], [0, 0, 1, 1], [], []>} : vector<4x128xbf16>, vector<128x128xbf16>, vector<4x128xf32> -> vector<4x128xf32>
    %c0_106 = arith.constant 0 : index
    %c0_107 = arith.constant 0 : index
    %228 = vector.load %arg9[%c0_106, %c0_107] : memref<1x128xf32, #tpu.memory_space<vmem>>, vector<1x128xf32>
    %229 = vector.broadcast %228 : vector<1x128xf32> to vector<4x128xf32>
    %230 = arith.addf %227, %229 : vector<4x128xf32>
    %231 = arith.truncf %230 : vector<4x128xf32> to vector<4x128xbf16>
    %c0_108 = arith.constant 0 : index
    %c0_109 = arith.constant 0 : index
    %232 = vector.load %arg10[%c0_108, %c0_109] : memref<128x256xbf16, #tpu.memory_space<vmem>>, vector<128x256xbf16>
    %cst_110 = arith.constant dense<0.000000e+00> : vector<4x256xf32>
    %233 = tpu.matmul %231, %232, %cst_110 {dimension_numbers = #tpu.dot_dimension_numbers<[1], [0], [0], [1], [0, 0, 1, 1], [], []>} : vector<4x128xbf16>, vector<128x256xbf16>, vector<4x256xf32> -> vector<4x256xf32>
    %c0_111 = arith.constant 0 : index
    %c0_112 = arith.constant 0 : index
    %234 = vector.load %arg11[%c0_111, %c0_112] : memref<1x256xf32, #tpu.memory_space<vmem>>, vector<1x256xf32>
    %235 = vector.broadcast %234 : vector<1x256xf32> to vector<4x256xf32>
    %236 = arith.addf %233, %235 : vector<4x256xf32>
    %cst_113 = arith.constant 3.000000e+00 : f32
    %237 = vector.broadcast %cst_113 : f32 to vector<4x256xf32>
    %238 = arith.addf %236, %237 : vector<4x256xf32>
    %cst_114 = arith.constant 0.000000e+00 : f32
    %cst_115 = arith.constant 6.000000e+00 : f32
    %239 = vector.broadcast %cst_114 : f32 to vector<4x256xf32>
    %240 = arith.maximumf %239, %238 : vector<4x256xf32>
    %241 = vector.broadcast %cst_115 : f32 to vector<4x256xf32>
    %242 = arith.minimumf %241, %240 : vector<4x256xf32>
    %243 = arith.mulf %236, %242 : vector<4x256xf32>
    %cst_116 = arith.constant 0.166666672 : f32
    %244 = vector.broadcast %cst_116 : f32 to vector<4x256xf32>
    %245 = arith.mulf %243, %244 : vector<4x256xf32>
    %cst_117 = arith.constant dense<0.000000e+00> : vector<256xf32>
    %246 = vector.multi_reduction <add>, %245, %cst_117 [0] : vector<4x256xf32> to vector<256xf32>
    %247 = vector.shape_cast %246 : vector<256xf32> to vector<1x256xf32>
    %cst_118 = arith.constant 2.500000e-01 : f32
    %248 = vector.broadcast %cst_118 : f32 to vector<1x256xf32>
    %249 = arith.mulf %247, %248 : vector<1x256xf32>
    %250 = arith.truncf %249 : vector<1x256xf32> to vector<1x256xbf16>
    %c0_119 = arith.constant 0 : index
    %c0_120 = arith.constant 0 : index
    %251 = vector.load %arg12[%c0_119, %c0_120] : memref<256x128xbf16, #tpu.memory_space<vmem>>, vector<256x128xbf16>
    %cst_121 = arith.constant dense<0.000000e+00> : vector<1x128xf32>
    %252 = tpu.matmul %250, %251, %cst_121 {dimension_numbers = #tpu.dot_dimension_numbers<[1], [0], [0], [1], [0, 0, 1, 1], [], []>} : vector<1x256xbf16>, vector<256x128xbf16>, vector<1x128xf32> -> vector<1x128xf32>
    %c0_122 = arith.constant 0 : index
    %c0_123 = arith.constant 0 : index
    %253 = vector.load %arg13[%c0_122, %c0_123] : memref<1x128xf32, #tpu.memory_space<vmem>>, vector<1x128xf32>
    %254 = arith.addf %252, %253 : vector<1x128xf32>
    %cst_124 = arith.constant 3.000000e+00 : f32
    %255 = vector.broadcast %cst_124 : f32 to vector<1x128xf32>
    %256 = arith.addf %254, %255 : vector<1x128xf32>
    %cst_125 = arith.constant 0.000000e+00 : f32
    %cst_126 = arith.constant 6.000000e+00 : f32
    %257 = vector.broadcast %cst_125 : f32 to vector<1x128xf32>
    %258 = arith.maximumf %257, %256 : vector<1x128xf32>
    %259 = vector.broadcast %cst_126 : f32 to vector<1x128xf32>
    %260 = arith.minimumf %259, %258 : vector<1x128xf32>
    %261 = arith.mulf %254, %260 : vector<1x128xf32>
    %cst_127 = arith.constant 0.166666672 : f32
    %262 = vector.broadcast %cst_127 : f32 to vector<1x128xf32>
    %263 = arith.mulf %261, %262 : vector<1x128xf32>
    %264 = arith.truncf %263 : vector<1x128xf32> to vector<1x128xbf16>
    %c0_128 = arith.constant 0 : index
    %c0_129 = arith.constant 0 : index
    %265 = vector.load %arg14[%c0_128, %c0_129] : memref<128x128xbf16, #tpu.memory_space<vmem>>, vector<128x128xbf16>
    %cst_130 = arith.constant dense<0.000000e+00> : vector<1x128xf32>
    %266 = tpu.matmul %264, %265, %cst_130 {dimension_numbers = #tpu.dot_dimension_numbers<[1], [0], [0], [1], [0, 0, 1, 1], [], []>} : vector<1x128xbf16>, vector<128x128xbf16>, vector<1x128xf32> -> vector<1x128xf32>
    %c0_131 = arith.constant 0 : index
    %c0_132 = arith.constant 0 : index
    %267 = vector.load %arg15[%c0_131, %c0_132] : memref<1x128xf32, #tpu.memory_space<vmem>>, vector<1x128xf32>
    %268 = arith.addf %266, %267 : vector<1x128xf32>
    %c0_133 = arith.constant 0 : index
    %c0_134 = arith.constant 0 : index
    %c0_135 = arith.constant 0 : index
    %269 = vector.load %arg16[%c0_133, %c0_134, %c0_135] : memref<1x1x128xf32, #tpu.memory_space<vmem>>, vector<1x1x128xf32>
    %270 = vector.shape_cast %269 : vector<1x1x128xf32> to vector<1x128xf32>
    %271 = vector.shape_cast %268 : vector<1x128xf32> to vector<1x1x128xf32>
    tpu.vector_store %arg16[%c0_133, %c0_134, %c0_135], %271 {strides = array<i32>} : memref<1x1x128xf32, #tpu.memory_space<vmem>>, vector<1x1x128xf32>,
    return
  }
  func.func @transform_0(%arg0: i32) -> (i32, i32, i32, i32, i32) {
    %c0_i32 = arith.constant 0 : i32
    %c0_i32_0 = arith.constant 0 : i32
    %c0_i32_1 = arith.constant 0 : i32
    %c0_i32_2 = arith.constant 0 : i32
    %c0_i32_3 = arith.constant 0 : i32
    return %arg0, %c0_i32, %c0_i32_0, %c0_i32_1, %c0_i32_2 : i32, i32, i32, i32, i32
  }
  func.func @transform_1(%arg0: i32) -> (i32, i32) {
    %c0_i32 = arith.constant 0 : i32
    %c0_i32_0 = arith.constant 0 : i32
    %c0_i32_1 = arith.constant 0 : i32
    return %c0_i32, %c0_i32_0 : i32, i32
  }
  func.func @transform_2(%arg0: i32) -> (i32, i32) {
    %c0_i32 = arith.constant 0 : i32
    %c0_i32_0 = arith.constant 0 : i32
    %c0_i32_1 = arith.constant 0 : i32
    return %c0_i32, %c0_i32_0 : i32, i32
  }
  func.func @transform_3(%arg0: i32) -> (i32, i32) {
    %c0_i32 = arith.constant 0 : i32
    %c0_i32_0 = arith.constant 0 : i32
    %c0_i32_1 = arith.constant 0 : i32
    return %c0_i32, %c0_i32_0 : i32, i32
  }
  func.func @transform_4(%arg0: i32) -> (i32, i32) {
    %c0_i32 = arith.constant 0 : i32
    %c0_i32_0 = arith.constant 0 : i32
    %c0_i32_1 = arith.constant 0 : i32
    return %c0_i32, %c0_i32_0 : i32, i32
  }
  func.func @transform_5(%arg0: i32) -> (i32, i32) {
    %c0_i32 = arith.constant 0 : i32
    %c0_i32_0 = arith.constant 0 : i32
    %c0_i32_1 = arith.constant 0 : i32
    return %c0_i32, %c0_i32_0 : i32, i32
  }
  func.func @transform_6(%arg0: i32) -> (i32, i32) {
    %c0_i32 = arith.constant 0 : i32
    %c0_i32_0 = arith.constant 0 : i32
    %c0_i32_1 = arith.constant 0 : i32
    return %c0_i32, %c0_i32_0 : i32, i32
  }
  func.func @transform_7(%arg0: i32) -> (i32, i32) {
    %c0_i32 = arith.constant 0 : i32
    %c0_i32_0 = arith.constant 0 : i32
    %c0_i32_1 = arith.constant 0 : i32
    return %c0_i32, %c0_i32_0 : i32, i32
  }
  func.func @transform_8(%arg0: i32) -> (i32, i32) {
    %c0_i32 = arith.constant 0 : i32
    %c0_i32_0 = arith.constant 0 : i32
    %c0_i32_1 = arith.constant 0 : i32
    return %c0_i32, %c0_i32_0 : i32, i32
  }
  func.func @transform_9(%arg0: i32) -> (i32, i32) {
    %c0_i32 = arith.constant 0 : i32
    %c0_i32_0 = arith.constant 0 : i32
    %c0_i32_1 = arith.constant 0 : i32
    return %c0_i32, %c0_i32_0 : i32, i32
  }
  func.func @transform_10(%arg0: i32) -> (i32, i32) {
    %c0_i32 = arith.constant 0 : i32
    %c0_i32_0 = arith.constant 0 : i32
    %c0_i32_1 = arith.constant 0 : i32
    return %c0_i32, %c0_i32_0 : i32, i32
  }
  func.func @transform_11(%arg0: i32) -> (i32, i32) {
    %c0_i32 = arith.constant 0 : i32
    %c0_i32_0 = arith.constant 0 : i32
    %c0_i32_1 = arith.constant 0 : i32
    return %c0_i32, %c0_i32_0 : i32, i32
  }
  func.func @transform_12(%arg0: i32) -> (i32, i32) {
    %c0_i32 = arith.constant 0 : i32
    %c0_i32_0 = arith.constant 0 : i32
    %c0_i32_1 = arith.constant 0 : i32
    return %c0_i32, %c0_i32_0 : i32, i32
  }
  func.func @transform_13(%arg0: i32) -> (i32, i32) {
    %c0_i32 = arith.constant 0 : i32
    %c0_i32_0 = arith.constant 0 : i32
    %c0_i32_1 = arith.constant 0 : i32
    return %c0_i32, %c0_i32_0 : i32, i32
  }
  func.func @transform_14(%arg0: i32) -> (i32, i32) {
    %c0_i32 = arith.constant 0 : i32
    %c0_i32_0 = arith.constant 0 : i32
    %c0_i32_1 = arith.constant 0 : i32
    return %c0_i32, %c0_i32_0 : i32, i32
  }
  func.func @transform_15(%arg0: i32) -> (i32, i32, i32) {
    %c0_i32 = arith.constant 0 : i32
    %c0_i32_0 = arith.constant 0 : i32
    %c0_i32_1 = arith.constant 0 : i32
    return %arg0, %c0_i32, %c0_i32_0 : i32, i32, i32
  }
}

</mosaic_0001>

<llo_original>
// kernel: mobilenet_v3_forward.4
$region0: #{mobilenet_v3_forward.4}
  #allocation0 [shape = 'u32[]', space=smem, size = 0x4, offset = 0x4, fixed_abs, tag = 'smem constant byte address 0x4 - core index']
  #allocation1 [shape = 'u32[144,128]{1,0:T(1,128)}', space=vmem, size = 0x12000, scoped, tag = 'internal scratch']
  %s0 = inlined_call_operand.vmem [shape: f32[2,256,27], index: 0, kind: input, shape index: {}]
  %s1 = inlined_call_operand.vmem [shape: bf16[27,128], index: 1, kind: input, shape index: {}]
  %s2 = inlined_call_operand.vmem [shape: f32[1,128], index: 2, kind: input, shape index: {}]
  %s3 = inlined_call_operand.vmem [shape: bf16[2,256,128], index: 3, kind: output, shape index: {}]
  %s4 = sld [smem:[#allocation0]]
  $region45: #{mobilenet_v3_forward.4} parent=0
    _
  %s6 = ssub.s32 1, %s4
  %s7 = scalar_select 0, %s6, %s4
  loop: start=0, step=1, limit=4
  $region2: #{mobilenet_v3_forward.4} parent=0 // loop_pre_header
    _
  $region3: #{mobilenet_v3_forward.4} parent=0 // loop_header
    %s9 = sphi 0, %s13
    %p10 = scmp.ge.s32.totalorder %s9, 4
    %s19 = sphi 0, %s21
    %s22 = sphi 0, %s19
    %s23 = sphi 0, %s22
    %s39 = sphi 0, %s23
    %s43 = sphi 0, %s43
    %s45 = sphi 0, %s43
    %s46 = sphi 0, %s45
    %s60 = sphi 0, %s46
    %s64 = sphi 0, %s64
    %s66 = sphi 0, %s64
    %s67 = sphi 0, %s66
    %s81 = sphi 0, %s67
    %s87 = sphi 0, %s89
    %s90 = sphi 0, %s87
    %s91 = sphi 0, %s90
    %s107 = sphi 0, %s91
  $region4: #{mobilenet_v3_forward.4} parent=0 // loop_header_branch
    %12 = sbr.rel (%p10) target = $region8
  $region5: #{mobilenet_v3_forward.4} parent=0 // loop_body
    %s14 = ssub.s32 %s9, 1
    %s15 = ssub.s32 %s9, 2
    %s16 = sadd.s32 %s9, 1
    %s17 = ssub.s32 %s9, %s16
    %p18 = scmp.eq.s32.totalorder %s17, 0
    %s20 = sadd.s32 %s19, 1
    %s21 = scalar_select %p18, %s19, %s20
    %p24 = pneg %p18
    %p25 = scmp.eq.s32.totalorder %s9, 1
    %p26 = por %p24, %p25
    %p27 = scmp.ne.s32.totalorder %s19, %s22
    %p28 = scmp.eq.s32.totalorder %s9, 0
    %p29 = por %p27, %p28
    %p30 = scmp.ne.s32.totalorder %s19, %s22
    %p31 = scmp.eq.s32.totalorder %s14, 1
    %p32 = por %p30, %p31
    %p33 = scmp.ne.s32.totalorder %s22, %s23
    %p34 = scmp.eq.s32.totalorder %s14, 0
    %p35 = por %p33, %p34
    %p36 = scmp.ne.s32.totalorder %s22, %s23
    %p37 = scmp.eq.s32.totalorder %s15, 1
    %p38 = por %p36, %p37
    %p40 = scmp.ne.s32.totalorder %s23, %s39
    %p41 = scmp.eq.s32.totalorder %s15, 0
    %p42 = por %p40, %p41
    %s44 = sadd.s32 %s43, 1
    %p47 = scmp.eq.s32.totalorder %s9, 1
    %p48 = scmp.ne.s32.totalorder %s43, %s45
    %p49 = scmp.eq.s32.totalorder %s9, 0
    %p50 = por %p48, %p49
    %p51 = scmp.ne.s32.totalorder %s43, %s45
    %p52 = scmp.eq.s32.totalorder %s14, 1
    %p53 = por %p51, %p52
    %p54 = scmp.ne.s32.totalorder %s45, %s46
    %p55 = scmp.eq.s32.totalorder %s14, 0
    %p56 = por %p54, %p55
    %p57 = scmp.ne.s32.totalorder %s45, %s46
    %p58 = scmp.eq.s32.totalorder %s15, 1
    %p59 = por %p57, %p58
    %p61 = scmp.ne.s32.totalorder %s46, %s60
    %p62 = scmp.eq.s32.totalorder %s15, 0
    %p63 = por %p61, %p62
    %s65 = sadd.s32 %s64, 1
    %p68 = scmp.eq.s32.totalorder %s9, 1
    %p69 = scmp.ne.s32.totalorder %s64, %s66
    %p70 = scmp.eq.s32.totalorder %s9, 0
    %p71 = por %p69, %p70
    %p72 = scmp.ne.s32.totalorder %s64, %s66
    %p73 = scmp.eq.s32.totalorder %s14, 1
    %p74 = por %p72, %p73
    %p75 = scmp.ne.s32.totalorder %s66, %s67
    %p76 = scmp.eq.s32.totalorder %s14, 0
    %p77 = por %p75, %p76
    %p78 = scmp.ne.s32.totalorder %s66, %s67
    %p79 = scmp.eq.s32.totalorder %s15, 1
    %p80 = por %p78, %p79
    %p82 = scmp.ne.s32.totalorder %s67, %s81
    %p83 = scmp.eq.s32.totalorder %s15, 0
    %p84 = por %p82, %p83
    %s85 = ssub.s32 %s9, %s16
    %p86 = scmp.eq.s32.totalorder %s85, 0
    %s88 = sadd.s32 %s87, 1
    %s89 = scalar_select %p86, %s87, %s88
    %p92 = pneg %p86
    %p93 = scmp.eq.s32.totalorder %s9, 1
    %p94 = por %p92, %p93
    %p95 = scmp.ne.s32.totalorder %s87, %s90
    %p96 = scmp.eq.s32.totalorder %s9, 0
    %p97 = por %p95, %p96
    %p98 = scmp.ne.s32.totalorder %s87, %s90
    %p99 = scmp.eq.s32.totalorder %s14, 1
    %p100 = por %p98, %p99
    %p101 = scmp.ne.s32.totalorder %s90, %s91
    %p102 = scmp.eq.s32.totalorder %s14, 0
    %p103 = por %p101, %p102
    %p104 = scmp.ne.s32.totalorder %s90, %s91
    %p105 = scmp.eq.s32.totalorder %s15, 1
    %p106 = por %p104, %p105
    %p108 = scmp.ne.s32.totalorder %s91, %s107
    %p109 = scmp.eq.s32.totalorder %s15, 0
    %p110 = por %p108, %p109
    %p111 = scmp.le.s32.totalorder 1, %s9
    %p112 = scmp.lt.s32.totalorder %s9, 3
    %p113 = pnand %p111, %p112
    %p114 = pneg %p113
    // Predicated region
    $region9: #{mobilenet_v3_forward.4} parent=5 // pred_check
      _
    $region10: #{mobilenet_v3_forward.4} parent=5 // pred_check_branch
      %116 = sbr.rel (%p113) target = $region12
    $region11: #{mobilenet_v3_forward.4} parent=5 // pred_region
      %s117 = ssub.s32 %s9, 1
      // Predicated region
      $region13: #{mobilenet_v3_forward.4} parent=11 // pred_check
        %p118 = pneg %p56
      $region14: #{mobilenet_v3_forward.4} parent=11 // pred_check_branch
        %120 = sbr.rel (%p118) target = $region16
      $region15: #{mobilenet_v3_forward.4} parent=11 // pred_region
        _
      $region16: #{mobilenet_v3_forward.4} parent=11 // pred_fallthru
        _
      // Predicated region
      $region17: #{mobilenet_v3_forward.4} parent=11 // pred_check
        %p121 = pneg %p77
      $region18: #{mobilenet_v3_forward.4} parent=11 // pred_check_branch
        %123 = sbr.rel (%p121) target = $region20
      $region19: #{mobilenet_v3_forward.4} parent=11 // pred_region
        _
      $region20: #{mobilenet_v3_forward.4} parent=11 // pred_fallthru
        _
    $region12: #{mobilenet_v3_forward.4} parent=5 // pred_fallthru
      _
    %p124 = scmp.lt.s32.totalorder %s9, 2
    // Predicated region
    $region21: #{mobilenet_v3_forward.4} parent=5 // pred_check
      %p125 = pneg %p124
    $region22: #{mobilenet_v3_forward.4} parent=5 // pred_check_branch
      %127 = sbr.rel (%p125) target = $region24
    $region23: #{mobilenet_v3_forward.4} parent=5 // pred_region
      // Predicated region
      $region25: #{mobilenet_v3_forward.4} parent=23 // pred_check
        %p128 = pneg %p29
      $region26: #{mobilenet_v3_forward.4} parent=23 // pred_check_branch
        %130 = sbr.rel (%p128) target = $region28
      $region27: #{mobilenet_v3_forward.4} parent=23 // pred_region
        %p131 = scmp.lt.s32.totalorder %s9, 1
        %s132 = scalar_select %p131, %s9, 1
        %s133 = smul.addr %s132, 32
        %s134 = smul.addr %s133, 8
        %s135 = scalar_lea.vmem %s0, %s134
      $region28: #{mobilenet_v3_forward.4} parent=23 // pred_fallthru
        _
    $region24: #{mobilenet_v3_forward.4} parent=5 // pred_fallthru
      _
    %p136 = scmp.le.s32.totalorder 1, %s9
    %p137 = scmp.lt.s32.totalorder %s9, 3
    %p138 = pnand %p136, %p137
    %p139 = pneg %p138
    // Predicated region
    $region29: #{mobilenet_v3_forward.4} parent=5 // pred_check
      _
    $region30: #{mobilenet_v3_forward.4} parent=5 // pred_check_branch
      %141 = sbr.rel (%p138) target = $region32
    $region31: #{mobilenet_v3_forward.4} parent=5 // pred_region
      %s142 = ssub.s32 %s9, 1
      %p143 = scmp.lt.s32.totalorder %s14, 1
      %s144 = scalar_select %p143, %s14, 1
      %s145 = smul.addr %s144, 32
      %s146 = smul.addr %s145, 8
      %s147 = scalar_lea.vmem %s0, %s146
      %p148 = pneg %p35
      %p149 = pneg %p32
      %p150 = pneg %p56
      %p151 = pneg %p53
      %p152 = pneg %p77
      %p153 = pneg %p74
      %p154 = pneg %p103
      %p155 = pneg %p100
      %p156 = scmp.lt.s32.totalorder %s14, 1
      %s157 = scalar_select %p156, %s14, 1
      %s158 = smul.addr %s157, 32
      %s159 = smul.addr %s158, 4
      %s160 = scalar_lea.vmem %s3, %s159
      %p161 = scmp.lt.s32.totalorder %s14, 1
      %s162 = scalar_select %p161, %s14, 1
      %s163 = smul.addr %s162, 32
      %s164 = smul.addr %s163, 8
      %s165 = scalar_lea.vmem %s0, %s164
      %p166 = scmp.lt.s32.totalorder %s14, 1
      %s167 = scalar_select %p166, %s14, 1
      %s168 = smul.addr %s167, 32
      %s169 = smul.addr %s168, 4
      %s170 = scalar_lea.vmem %s3, %s169
      %v172 = vld [vmem:[%s165] sm:$0xff]
      %v173 = vld [vmem:[%s165 + $0x8] sm:$0xff]
      %v174 = vld [vmem:[%s165 + $0x10] sm:$0xff]
      %v175 = vld [vmem:[%s165 + $0x18] sm:$0xff]
      %v176 = vld [vmem:[%s165 + $0x20] sm:$0xff]
      %v177 = vld [vmem:[%s165 + $0x28] sm:$0xff]
      %v178 = vld [vmem:[%s165 + $0x30] sm:$0xff]
      %v179 = vld [vmem:[%s165 + $0x38] sm:$0xff]
      %v180 = vld [vmem:[%s165 + $0x40] sm:$0xff]
      %v181 = vld [vmem:[%s165 + $0x48] sm:$0xff]
      %v182 = vld [vmem:[%s165 + $0x50] sm:$0xff]
      %v183 = vld [vmem:[%s165 + $0x58] sm:$0xff]
      %v184 = vld [vmem:[%s165 + $0x60] sm:$0xff]
      %v185 = vld [vmem:[%s165 + $0x68] sm:$0xff]
      %v186 = vld [vmem:[%s165 + $0x70] sm:$0xff]
      %v187 = vld [vmem:[%s165 + $0x78] sm:$0xff]
      %v188 = vld [vmem:[%s165 + $0x80] sm:$0xff]
      %v189 = vld [vmem:[%s165 + $0x88] sm:$0xff]
      %v190 = vld [vmem:[%s165 + $0x90] sm:$0xff]
      %v191 = vld [vmem:[%s165 + $0x98] sm:$0xff]
      %v192 = vld [vmem:[%s165 + $0xa0] sm:$0xff]
      %v193 = vld [vmem:[%s165 + $0xa8] sm:$0xff]
      %v194 = vld [vmem:[%s165 + $0xb0] sm:$0xff]
      %v195 = vld [vmem:[%s165 + $0xb8] sm:$0xff]
      %v196 = vld [vmem:[%s165 + $0xc0] sm:$0xff]
      %v197 = vld [vmem:[%s165 + $0xc8] sm:$0xff]
      %v198 = vld [vmem:[%s165 + $0xd0] sm:$0xff]
      %v199 = vld [vmem:[%s165 + $0xd8] sm:$0xff]
      %v200 = vld [vmem:[%s165 + $0xe0] sm:$0xff]
      %v201 = vld [vmem:[%s165 + $0xe8] sm:$0xff]
      %v202 = vld [vmem:[%s165 + $0xf0] sm:$0xff]
      %v203 = vld [vmem:[%s165 + $0xf8] sm:$0xff]
      %v204 = vpack.c.bf16 %v173, %v172
      %v205 = vpack.c.bf16 %v175, %v174
      %v206 = vpack.c.bf16 %v177, %v176
      %v207 = vpack.c.bf16 %v179, %v178
      %v208 = vpack.c.bf16 %v181, %v180
      %v209 = vpack.c.bf16 %v183, %v182
      %v210 = vpack.c.bf16 %v185, %v184
      %v211 = vpack.c.bf16 %v187, %v186
      %v212 = vpack.c.bf16 %v189, %v188
      %v213 = vpack.c.bf16 %v191, %v190
      %v214 = vpack.c.bf16 %v193, %v192
      %v215 = vpack.c.bf16 %v195, %v194
      %v216 = vpack.c.bf16 %v197, %v196
      %v217 = vpack.c.bf16 %v199, %v198
      %v218 = vpack.c.bf16 %v201, %v200
      %v219 = vpack.c.bf16 %v203, %v202
      %v220 = vld [vmem:[%s1] sm:$0xf]
      %v221 = vld [vmem:[%s1 + $0x4] sm:$0xf]
      %v222 = vld [vmem:[%s1 + $0x8] sm:$0xf]
      %v223 = vld [vmem:[%s1 + $0xc] sm:$0x3]
      %v224 = vld [vmem:[%s2] sm:$0x1]
      %v226 = vlaneseq
      %v227 = vshrl.u32 %v226, 7
      %v228 = vsub.s32 0, %v227
      %v229 = vrot.slane %v224, %v228
      %v235 = vunpack.c.l.b16 %v220
      %v236 = vunpack.c.l.b16 %v221
      %v237 = vunpack.c.l.b16 %v222
      %v238 = vunpack.c.l.b16 %v223
      %v239 = vpack.c.b16 %v236, %v235
      %v240 = vpack.c.b16 %v238, %v237
      %vm242 = vcmask 220160
      %v244 = vsel %vm242, %v204, 0
      %v247 = vsel %vm242, %v205, 0
      %v250 = vsel %vm242, %v206, 0
      %v253 = vsel %vm242, %v207, 0
      %v256 = vsel %vm242, %v208, 0
      %v259 = vsel %vm242, %v209, 0
      %v262 = vsel %vm242, %v210, 0
      %v265 = vsel %vm242, %v211, 0
      %v268 = vsel %vm242, %v212, 0
      %v271 = vsel %vm242, %v213, 0
      %v274 = vsel %vm242, %v214, 0
      %v277 = vsel %vm242, %v215, 0
      %v280 = vsel %vm242, %v216, 0
      %v283 = vsel %vm242, %v217, 0
      %v286 = vsel %vm242, %v218, 0
      %v289 = vsel %vm242, %v219, 0
      %vm291 = vcmask 1044480
      %vm292 = vcmask 1045504
      %v293 = vsel %vm291, 4294967295, 65535
      %v294 = vsel %vm292, %v293, 0
      %v296 = vand.u32 %v240, %v294
      %298 = vmatprep.subr.bf16.mxu0 0
      %299 = vmatpush1.bf16.msra.mxu0 %v239
      %300 = vmatprep.subr.bf16.mxu0 0
      %301 = vmatpush1.bf16.msra.mxu0 %v296
      %302 = vmatprep.subr.bf16.mxu0 0
      %303 = vmatpush1.bf16.msra.mxu0 0
      %304 = vmatprep.subr.bf16.mxu0 0
      %305 = vmatpush1.bf16.msra.mxu0 0
      %306 = vmatprep.subr.bf16.mxu0 0
      %307 = vmatpush1.bf16.msra.mxu0 0
      %308 = vmatprep.subr.bf16.mxu0 0
      %309 = vmatpush1.bf16.msra.mxu0 0
      %310 = vmatprep.subr.bf16.mxu0 0
      %311 = vmatpush1.bf16.msra.mxu0 0
      %312 = vmatprep.subr.bf16.mxu0 0
      %313 = vmatpush1.bf16.msra.mxu0 0
      %314 = vmatprep.subr.bf16.mxu0 0
      %315 = vmatpush1.bf16.msra.mxu0 0
      %316 = vmatprep.subr.bf16.mxu0 0
      %317 = vmatpush1.bf16.msra.mxu0 0
      %318 = vmatprep.subr.bf16.mxu0 0
      %319 = vmatpush1.bf16.msra.mxu0 0
      %320 = vmatprep.subr.bf16.mxu0 0
      %321 = vmatpush1.bf16.msra.mxu0 0
      %322 = vmatprep.subr.bf16.mxu0 0
      %323 = vmatpush1.bf16.msra.mxu0 0
      %324 = vmatprep.subr.bf16.mxu0 0
      %325 = vmatpush1.bf16.msra.mxu0 0
      %326 = vmatprep.subr.bf16.mxu0 0
      %327 = vmatpush1.bf16.msra.mxu0 0
      %328 = vmatprep.subr.bf16.mxu0 0
      %329 = vmatpush1.bf16.msra.mxu0 0
      %330 = vmatprep.mubr.bf16.mxu0 0
      %331 = vmatmul.mubr.bf16.gmra.mrb[0].mxu0 %v244
      %v332 = vpop.f32.mrb[0].mxu0
      %v333 = vadd.f32 %v229, %v332
      %v334 = vpop.f32.mrb[0].mxu0
      %v335 = vpop.f32.mrb[0].mxu0
      %v336 = vadd.f32 %v229, %v335
      %v337 = vpop.f32.mrb[0].mxu0
      %338 = vmatprep.mubr.bf16.mxu0 0
      %339 = vmatmul.mubr.bf16.gmra.mrb[0].mxu0 %v247
      %v340 = vpop.f32.mrb[0].mxu0
      %v341 = vadd.f32 %v229, %v340
      %v342 = vpop.f32.mrb[0].mxu0
      %v343 = vpop.f32.mrb[0].mxu0
      %v344 = vadd.f32 %v229, %v343
      %v345 = vpop.f32.mrb[0].mxu0
      %346 = vmatprep.mubr.bf16.mxu0 0
      %347 = vmatmul.mubr.bf16.gmra.mrb[0].mxu0 %v250
      %v348 = vpop.f32.mrb[0].mxu0
      %v349 = vadd.f32 %v229, %v348
      %v350 = vpop.f32.mrb[0].mxu0
      %v351 = vpop.f32.mrb[0].mxu0
      %v352 = vadd.f32 %v229, %v351
      %v353 = vpop.f32.mrb[0].mxu0
      %354 = vmatprep.mubr.bf16.mxu0 0
      %355 = vmatmul.mubr.bf16.gmra.mrb[0].mxu0 %v253
      %v356 = vpop.f32.mrb[0].mxu0
      %v357 = vadd.f32 %v229, %v356
      %v358 = vpop.f32.mrb[0].mxu0
      %v359 = vpop.f32.mrb[0].mxu0
      %v360 = vadd.f32 %v229, %v359
      %v361 = vpop.f32.mrb[0].mxu0
      %362 = vmatprep.mubr.bf16.mxu0 0
      %363 = vmatmul.mubr.bf16.gmra.mrb[0].mxu0 %v256
      %v364 = vpop.f32.mrb[0].mxu0
      %v365 = vadd.f32 %v229, %v364
      %v366 = vpop.f32.mrb[0].mxu0
      %v367 = vpop.f32.mrb[0].mxu0
      %v368 = vadd.f32 %v229, %v367
      %v369 = vpop.f32.mrb[0].mxu0
      %370 = vmatprep.mubr.bf16.mxu0 0
      %371 = vmatmul.mubr.bf16.gmra.mrb[0].mxu0 %v259
      %v372 = vpop.f32.mrb[0].mxu0
      %v373 = vadd.f32 %v229, %v372
      %v374 = vpop.f32.mrb[0].mxu0
      %v375 = vpop.f32.mrb[0].mxu0
      %v376 = vadd.f32 %v229, %v375
      %v377 = vpop.f32.mrb[0].mxu0
      %378 = vmatprep.mubr.bf16.mxu0 0
      %379 = vmatmul.mubr.bf16.gmra.mrb[0].mxu0 %v262
      %v380 = vpop.f32.mrb[0].mxu0
      %v381 = vadd.f32 %v229, %v380
      %v382 = vpop.f32.mrb[0].mxu0
      %v383 = vpop.f32.mrb[0].mxu0
      %v384 = vadd.f32 %v229, %v383
      %v385 = vpop.f32.mrb[0].mxu0
      %386 = vmatprep.mubr.bf16.mxu0 0
      %387 = vmatmul.mubr.bf16.gmra.mrb[0].mxu0 %v265
      %v388 = vpop.f32.mrb[0].mxu0
      %v389 = vadd.f32 %v229, %v388
      %v390 = vpop.f32.mrb[0].mxu0
      %v391 = vpop.f32.mrb[0].mxu0
      %v392 = vadd.f32 %v229, %v391
      %v393 = vpop.f32.mrb[0].mxu0
      %394 = vmatprep.mubr.bf16.mxu0 0
      %395 = vmatmul.mubr.bf16.gmra.mrb[0].mxu0 %v268
      %v396 = vpop.f32.mrb[0].mxu0
      %v397 = vadd.f32 %v229, %v396
      %v398 = vpop.f32.mrb[0].mxu0
      %v399 = vpop.f32.mrb[0].mxu0
      %v400 = vadd.f32 %v229, %v399
      %v401 = vpop.f32.mrb[0].mxu0
      %402 = vmatprep.mubr.bf16.mxu0 0
      %403 = vmatmul.mubr.bf16.gmra.mrb[0].mxu0 %v271
      %v404 = vpop.f32.mrb[0].mxu0
      %v405 = vadd.f32 %v229, %v404
      %v406 = vpop.f32.mrb[0].mxu0
      %v407 = vpop.f32.mrb[0].mxu0
      %v408 = vadd.f32 %v229, %v407
      %v409 = vpop.f32.mrb[0].mxu0
      %410 = vmatprep.mubr.bf16.mxu0 0
      %411 = vmatmul.mubr.bf16.gmra.mrb[0].mxu0 %v274
      %v412 = vpop.f32.mrb[0].mxu0
      %v413 = vadd.f32 %v229, %v412
      %v414 = vpop.f32.mrb[0].mxu0
      %v415 = vpop.f32.mrb[0].mxu0
      %v416 = vadd.f32 %v229, %v415
      %v417 = vpop.f32.mrb[0].mxu0
      %418 = vmatprep.mubr.bf16.mxu0 0
      %419 = vmatmul.mubr.bf16.gmra.mrb[0].mxu0 %v277
      %v420 = vpop.f32.mrb[0].mxu0
      %v421 = vadd.f32 %v229, %v420
      %v422 = vpop.f32.mrb[0].mxu0
      %v423 = vpop.f32.mrb[0].mxu0
      %v424 = vadd.f32 %v229, %v423
      %v425 = vpop.f32.mrb[0].mxu0
      %426 = vmatprep.mubr.bf16.mxu0 0
      %427 = vmatmul.mubr.bf16.gmra.mrb[0].mxu0 %v280
      %v428 = vpop.f32.mrb[0].mxu0
      %v429 = vadd.f32 %v229, %v428
      %v430 = vpop.f32.mrb[0].mxu0
      %v431 = vpop.f32.mrb[0].mxu0
      %v432 = vadd.f32 %v229, %v431
      %v433 = vpop.f32.mrb[0].mxu0
      %434 = vmatprep.mubr.bf16.mxu0 0
      %435 = vmatmul.mubr.bf16.gmra.mrb[0].mxu0 %v283
      %v436 = vpop.f32.mrb[0].mxu0
      %v437 = vadd.f32 %v229, %v436
      %v438 = vpop.f32.mrb[0].mxu0
      %v439 = vpop.f32.mrb[0].mxu0
      %v440 = vadd.f32 %v229, %v439
      %v441 = vpop.f32.mrb[0].mxu0
      %442 = vmatprep.mubr.bf16.mxu0 0
      %443 = vmatmul.mubr.bf16.gmra.mrb[0].mxu0 %v286
      %v444 = vpop.f32.mrb[0].mxu0
      %v445 = vadd.f32 %v229, %v444
      %v446 = vpop.f32.mrb[0].mxu0
      %v447 = vpop.f32.mrb[0].mxu0
      %v448 = vadd.f32 %v229, %v447
      %v449 = vpop.f32.mrb[0].mxu0
      %450 = vmatprep.mubr.bf16.mxu0 0
      %451 = vmatmul.mubr.bf16.gmra.mrb[0].mxu0 %v289
      %v452 = vpop.f32.mrb[0].mxu0
      %v453 = vadd.f32 %v229, %v452
      %v454 = vpop.f32.mrb[0].mxu0
      %v455 = vpop.f32.mrb[0].mxu0
      %v456 = vadd.f32 %v229, %v455
      %v457 = vpop.f32.mrb[0].mxu0
      %458 = vdwg.mxu0
      %v459 = vadd.f32 %v333, 3.0
      %v460 = vadd.f32 %v336, 3.0
      %v461 = vadd.f32 %v341, 3.0
      %v462 = vadd.f32 %v344, 3.0
      %v463 = vadd.f32 %v349, 3.0
      %v464 = vadd.f32 %v352, 3.0
      %v465 = vadd.f32 %v357, 3.0
      %v466 = vadd.f32 %v360, 3.0
      %v467 = vadd.f32 %v365, 3.0
      %v468 = vadd.f32 %v368, 3.0
      %v469 = vadd.f32 %v373, 3.0
      %v470 = vadd.f32 %v376, 3.0
      %v471 = vadd.f32 %v381, 3.0
      %v472 = vadd.f32 %v384, 3.0
      %v473 = vadd.f32 %v389, 3.0
      %v474 = vadd.f32 %v392, 3.0
      %v475 = vadd.f32 %v397, 3.0
      %v476 = vadd.f32 %v400, 3.0
      %v477 = vadd.f32 %v405, 3.0
      %v478 = vadd.f32 %v408, 3.0
      %v479 = vadd.f32 %v413, 3.0
      %v480 = vadd.f32 %v416, 3.0
      %v481 = vadd.f32 %v421, 3.0
      %v482 = vadd.f32 %v424, 3.0
      %v483 = vadd.f32 %v429, 3.0
      %v484 = vadd.f32 %v432, 3.0
      %v485 = vadd.f32 %v437, 3.0
      %v486 = vadd.f32 %v440, 3.0
      %v487 = vadd.f32 %v445, 3.0
      %v488 = vadd.f32 %v448, 3.0
      %v489 = vadd.f32 %v453, 3.0
      %v490 = vadd.f32 %v456, 3.0
      %v491 = vmax.f32 %v459, 0.0
      %v492 = vmax.f32 %v460, 0.0
      %v493 = vmax.f32 %v461, 0.0
      %v494 = vmax.f32 %v462, 0.0
      %v495 = vmax.f32 %v463, 0.0
      %v496 = vmax.f32 %v464, 0.0
      %v497 = vmax.f32 %v465, 0.0
      %v498 = vmax.f32 %v466, 0.0
      %v499 = vmax.f32 %v467, 0.0
      %v500 = vmax.f32 %v468, 0.0
      %v501 = vmax.f32 %v469, 0.0
      %v502 = vmax.f32 %v470, 0.0
      %v503 = vmax.f32 %v471, 0.0
      %v504 = vmax.f32 %v472, 0.0
      %v505 = vmax.f32 %v473, 0.0
      %v506 = vmax.f32 %v474, 0.0
      %v507 = vmax.f32 %v475, 0.0
      %v508 = vmax.f32 %v476, 0.0
      %v509 = vmax.f32 %v477, 0.0
      %v510 = vmax.f32 %v478, 0.0
      %v511 = vmax.f32 %v479, 0.0
      %v512 = vmax.f32 %v480, 0.0
      %v513 = vmax.f32 %v481, 0.0
      %v514 = vmax.f32 %v482, 0.0
      %v515 = vmax.f32 %v483, 0.0
      %v516 = vmax.f32 %v484, 0.0
      %v517 = vmax.f32 %v485, 0.0
      %v518 = vmax.f32 %v486, 0.0
      %v519 = vmax.f32 %v487, 0.0
      %v520 = vmax.f32 %v488, 0.0
      %v521 = vmax.f32 %v489, 0.0
      %v522 = vmax.f32 %v490, 0.0
      %v523 = vmin.f32 %v491, 6.0
      %v524 = vmin.f32 %v492, 6.0
      %v525 = vmin.f32 %v493, 6.0
      %v526 = vmin.f32 %v494, 6.0
      %v527 = vmin.f32 %v495, 6.0
      %v528 = vmin.f32 %v496, 6.0
      %v529 = vmin.f32 %v497, 6.0
      %v530 = vmin.f32 %v498, 6.0
      %v531 = vmin.f32 %v499, 6.0
      %v532 = vmin.f32 %v500, 6.0
      %v533 = vmin.f32 %v501, 6.0
      %v534 = vmin.f32 %v502, 6.0
      %v535 = vmin.f32 %v503, 6.0
      %v536 = vmin.f32 %v504, 6.0
      %v537 = vmin.f32 %v505, 6.0
      %v538 = vmin.f32 %v506, 6.0
      %v539 = vmin.f32 %v507, 6.0
      %v540 = vmin.f32 %v508, 6.0
      %v541 = vmin.f32 %v509, 6.0
      %v542 = vmin.f32 %v510, 6.0
      %v543 = vmin.f32 %v511, 6.0
      %v544 = vmin.f32 %v512, 6.0
      %v545 = vmin.f32 %v513, 6.0
      %v546 = vmin.f32 %v514, 6.0
      %v547 = vmin.f32 %v515, 6.0
      %v548 = vmin.f32 %v516, 6.0
      %v549 = vmin.f32 %v517, 6.0
      %v550 = vmin.f32 %v518, 6.0
      %v551 = vmin.f32 %v519, 6.0
      %v552 = vmin.f32 %v520, 6.0
      %v553 = vmin.f32 %v521, 6.0
      %v554 = vmin.f32 %v522, 6.0
      %v555 = vmul.f32 %v333, %v523
      %v556 = vmul.f32 %v336, %v524
      %v557 = vmul.f32 %v341, %v525
      %v558 = vmul.f32 %v344, %v526
      %v559 = vmul.f32 %v349, %v527
      %v560 = vmul.f32 %v352, %v528
      %v561 = vmul.f32 %v357, %v529
      %v562 = vmul.f32 %v360, %v530
      %v563 = vmul.f32 %v365, %v531
      %v564 = vmul.f32 %v368, %v532
      %v565 = vmul.f32 %v373, %v533
      %v566 = vmul.f32 %v376, %v534
      %v567 = vmul.f32 %v381, %v535
      %v568 = vmul.f32 %v384, %v536
      %v569 = vmul.f32 %v389, %v537
      %v570 = vmul.f32 %v392, %v538
      %v571 = vmul.f32 %v397, %v539
      %v572 = vmul.f32 %v400, %v540
      %v573 = vmul.f32 %v405, %v541
      %v574 = vmul.f32 %v408, %v542
      %v575 = vmul.f32 %v413, %v543
      %v576 = vmul.f32 %v416, %v544
      %v577 = vmul.f32 %v421, %v545
      %v578 = vmul.f32 %v424, %v546
      %v579 = vmul.f32 %v429, %v547
      %v580 = vmul.f32 %v432, %v548
      %v581 = vmul.f32 %v437, %v549
      %v582 = vmul.f32 %v440, %v550
      %v583 = vmul.f32 %v445, %v551
      %v584 = vmul.f32 %v448, %v552
      %v585 = vmul.f32 %v453, %v553
      %v586 = vmul.f32 %v456, %v554
      %v587 = vmul.f32 %v555, 0.16666667
      %v588 = vmul.f32 %v556, 0.16666667
      %v589 = vmul.f32 %v557, 0.16666667
      %v590 = vmul.f32 %v558, 0.16666667
      %v591 = vmul.f32 %v559, 0.16666667
      %v592 = vmul.f32 %v560, 0.16666667
      %v593 = vmul.f32 %v561, 0.16666667
      %v594 = vmul.f32 %v562, 0.16666667
      %v595 = vmul.f32 %v563, 0.16666667
      %v596 = vmul.f32 %v564, 0.16666667
      %v597 = vmul.f32 %v565, 0.16666667
      %v598 = vmul.f32 %v566, 0.16666667
      %v599 = vmul.f32 %v567, 0.16666667
      %v600 = vmul.f32 %v568, 0.16666667
      %v601 = vmul.f32 %v569, 0.16666667
      %v602 = vmul.f32 %v570, 0.16666667
      %v603 = vmul.f32 %v571, 0.16666667
      %v604 = vmul.f32 %v572, 0.16666667
      %v605 = vmul.f32 %v573, 0.16666667
      %v606 = vmul.f32 %v574, 0.16666667
      %v607 = vmul.f32 %v575, 0.16666667
      %v608 = vmul.f32 %v576, 0.16666667
      %v609 = vmul.f32 %v577, 0.16666667
      %v610 = vmul.f32 %v578, 0.16666667
      %v611 = vmul.f32 %v579, 0.16666667
      %v612 = vmul.f32 %v580, 0.16666667
      %v613 = vmul.f32 %v581, 0.16666667
      %v614 = vmul.f32 %v582, 0.16666667
      %v615 = vmul.f32 %v583, 0.16666667
      %v616 = vmul.f32 %v584, 0.16666667
      %v617 = vmul.f32 %v585, 0.16666667
      %v618 = vmul.f32 %v586, 0.16666667
      %v619 = vpack.c.bf16 %v588, %v587
      %v620 = vpack.c.bf16 %v590, %v589
      %v621 = vpack.c.bf16 %v592, %v591
      %v622 = vpack.c.bf16 %v594, %v593
      %v623 = vpack.c.bf16 %v596, %v595
      %v624 = vpack.c.bf16 %v598, %v597
      %v625 = vpack.c.bf16 %v600, %v599
      %v626 = vpack.c.bf16 %v602, %v601
      %v627 = vpack.c.bf16 %v604, %v603
      %v628 = vpack.c.bf16 %v606, %v605
      %v629 = vpack.c.bf16 %v608, %v607
      %v630 = vpack.c.bf16 %v610, %v609
      %v631 = vpack.c.bf16 %v612, %v611
      %v632 = vpack.c.bf16 %v614, %v613
      %v633 = vpack.c.bf16 %v616, %v615
      %v634 = vpack.c.bf16 %v618, %v617
      %v651 = vunpack.c.l.b16 %v619
      %v652 = vunpack.c.h.b16 %v619
      %v653 = vunpack.c.l.b16 %v620
      %v654 = vunpack.c.h.b16 %v620
      %v655 = vunpack.c.l.b16 %v621
      %v656 = vunpack.c.h.b16 %v621
      %v657 = vunpack.c.l.b16 %v622
      %v658 = vunpack.c.h.b16 %v622
      %v659 = vunpack.c.l.b16 %v623
      %v660 = vunpack.c.h.b16 %v623
      %v661 = vunpack.c.l.b16 %v624
      %v662 = vunpack.c.h.b16 %v624
      %v663 = vunpack.c.l.b16 %v625
      %v664 = vunpack.c.h.b16 %v625
      %v665 = vunpack.c.l.b16 %v626
      %v666 = vunpack.c.h.b16 %v626
      %v667 = vunpack.c.l.b16 %v627
      %v668 = vunpack.c.h.b16 %v627
      %v669 = vunpack.c.l.b16 %v628
      %v670 = vunpack.c.h.b16 %v628
      %v671 = vunpack.c.l.b16 %v629
      %v672 = vunpack.c.h.b16 %v629
      %v673 = vunpack.c.l.b16 %v630
      %v674 = vunpack.c.h.b16 %v630
      %v675 = vunpack.c.l.b16 %v631
      %v676 = vunpack.c.h.b16 %v631
      %v677 = vunpack.c.l.b16 %v632
      %v678 = vunpack.c.h.b16 %v632
      %v679 = vunpack.c.l.b16 %v633
      %v680 = vunpack.c.h.b16 %v633
      %v681 = vunpack.c.l.b16 %v634
      %v682 = vunpack.c.h.b16 %v634
      %v683 = vpack.c.b16 %v651, %v651
      %v684 = vpack.c.b16 %v652, %v652
      %v685 = vpack.c.b16 %v653, %v653
      %v686 = vpack.c.b16 %v654, %v654
      %v687 = vpack.c.b16 %v655, %v655
      %v688 = vpack.c.b16 %v656, %v656
      %v689 = vpack.c.b16 %v657, %v657
      %v690 = vpack.c.b16 %v658, %v658
      %v691 = vpack.c.b16 %v659, %v659
      %v692 = vpack.c.b16 %v660, %v660
      %v693 = vpack.c.b16 %v661, %v661
      %v694 = vpack.c.b16 %v662, %v662
      %v695 = vpack.c.b16 %v663, %v663
      %v696 = vpack.c.b16 %v664, %v664
      %v697 = vpack.c.b16 %v665, %v665
      %v698 = vpack.c.b16 %v666, %v666
      %v699 = vpack.c.b16 %v667, %v667
      %v700 = vpack.c.b16 %v668, %v668
      %v701 = vpack.c.b16 %v669, %v669
      %v702 = vpack.c.b16 %v670, %v670
      %v703 = vpack.c.b16 %v671, %v671
      %v704 = vpack.c.b16 %v672, %v672
      %v705 = vpack.c.b16 %v673, %v673
      %v706 = vpack.c.b16 %v674, %v674
      %v707 = vpack.c.b16 %v675, %v675
      %v708 = vpack.c.b16 %v676, %v676
      %v709 = vpack.c.b16 %v677, %v677
      %v710 = vpack.c.b16 %v678, %v678
      %v711 = vpack.c.b16 %v679, %v679
      %v712 = vpack.c.b16 %v680, %v680
      %v713 = vpack.c.b16 %v681, %v681
      %v714 = vpack.c.b16 %v682, %v682
      %747 = vst [vmem:[%s170] sm:$0xf] %v683
      %748 = vst [vmem:[%s170 + $0x4] sm:$0xf] %v684
      %749 = vst [vmem:[%s170 + $0x8] sm:$0xf] %v685
      %750 = vst [vmem:[%s170 + $0xc] sm:$0xf] %v686
      %751 = vst [vmem:[%s170 + $0x10] sm:$0xf] %v687
      %752 = vst [vmem:[%s170 + $0x14] sm:$0xf] %v688
      %753 = vst [vmem:[%s170 + $0x18] sm:$0xf] %v689
      %754 = vst [vmem:[%s170 + $0x1c] sm:$0xf] %v690
      %755 = vst [vmem:[%s170 + $0x20] sm:$0xf] %v691
      %756 = vst [vmem:[%s170 + $0x24] sm:$0xf] %v692
      %757 = vst [vmem:[%s170 + $0x28] sm:$0xf] %v693
      %758 = vst [vmem:[%s170 + $0x2c] sm:$0xf] %v694
      %759 = vst [vmem:[%s170 + $0x30] sm:$0xf] %v695
      %760 = vst [vmem:[%s170 + $0x34] sm:$0xf] %v696
      %761 = vst [vmem:[%s170 + $0x38] sm:$0xf] %v697
      %762 = vst [vmem:[%s170 + $0x3c] sm:$0xf] %v698
      %763 = vst [vmem:[%s170 + $0x40] sm:$0xf] %v699
      %764 = vst [vmem:[%s170 + $0x44] sm:$0xf] %v700
      %765 = vst [vmem:[%s170 + $0x48] sm:$0xf] %v701
      %766 = vst [vmem:[%s170 + $0x4c] sm:$0xf] %v702
      %767 = vst [vmem:[%s170 + $0x50] sm:$0xf] %v703
      %768 = vst [vmem:[%s170 + $0x54] sm:$0xf] %v704
      %769 = vst [vmem:[%s170 + $0x58] sm:$0xf] %v705
      %770 = vst [vmem:[%s170 + $0x5c] sm:$0xf] %v706
      %771 = vst [vmem:[%s170 + $0x60] sm:$0xf] %v707
      %772 = vst [vmem:[%s170 + $0x64] sm:$0xf] %v708
      %773 = vst [vmem:[%s170 + $0x68] sm:$0xf] %v709
      %774 = vst [vmem:[%s170 + $0x6c] sm:$0xf] %v710
      %775 = vst [vmem:[%s170 + $0x70] sm:$0xf] %v711
      %776 = vst [vmem:[%s170 + $0x74] sm:$0xf] %v712
      %777 = vst [vmem:[%s170 + $0x78] sm:$0xf] %v713
      %778 = vst [vmem:[%s170 + $0x7c] sm:$0xf] %v714
      %p779 = scmp.lt.s32.totalorder %s14, 1
      %s780 = scalar_select %p779, %s14, 1
      %s781 = smul.addr %s780, 32
      %s782 = smul.addr %s781, 4
      %s783 = scalar_lea.vmem %s3, %s782
      // Predicated region
      $region33: #{mobilenet_v3_forward.4} parent=31 // pred_check
        %p784 = pneg %p100
      $region34: #{mobilenet_v3_forward.4} parent=31 // pred_check_branch
        %786 = sbr.rel (%p784) target = $region36
      $region35: #{mobilenet_v3_forward.4} parent=31 // pred_region
        _
      $region36: #{mobilenet_v3_forward.4} parent=31 // pred_fallthru
        _
    $region32: #{mobilenet_v3_forward.4} parent=5 // pred_fallthru
      _
    %p787 = scmp.le.s32.totalorder 2, %s9
    // Predicated region
    $region37: #{mobilenet_v3_forward.4} parent=5 // pred_check
      %p788 = pneg %p787
    $region38: #{mobilenet_v3_forward.4} parent=5 // pred_check_branch
      %790 = sbr.rel (%p788) target = $region40
    $region39: #{mobilenet_v3_forward.4} parent=5 // pred_region
      %s791 = ssub.s32 %s9, 2
      // Predicated region
      $region41: #{mobilenet_v3_forward.4} parent=39 // pred_check
        %p792 = pneg %p106
      $region42: #{mobilenet_v3_forward.4} parent=39 // pred_check_branch
        %794 = sbr.rel (%p792) target = $region44
      $region43: #{mobilenet_v3_forward.4} parent=39 // pred_region
        %p795 = scmp.lt.s32.totalorder %s15, 1
        %s796 = scalar_select %p795, %s15, 1
        %s797 = smul.addr %s796, 32
        %s798 = smul.addr %s797, 4
        %s799 = scalar_lea.vmem %s3, %s798
      $region44: #{mobilenet_v3_forward.4} parent=39 // pred_fallthru
        _
    $region40: #{mobilenet_v3_forward.4} parent=5 // pred_fallthru
      _
  $region6: #{mobilenet_v3_forward.4} parent=0 // loop_footer
    %s13 = sadd.s32 1, %s9
  $region7: #{mobilenet_v3_forward.4} parent=0 // loop_footer_branch
    %8 = sbr.rel target = $region3
  $region8: #{mobilenet_v3_forward.4} parent=0 // loop_exit
    _

// kernel: mobilenet_v3_forward.5
$region0: #{mobilenet_v3_forward.5}
  #allocation0 [shape = 'u32[]', space=smem, size = 0x4, offset = 0x4, fixed_abs, tag = 'smem constant byte address 0x4 - core index']
  #allocation1 [shape = 'u32[144,128]{1,0:T(1,128)}', space=vmem, size = 0x12000, scoped, tag = 'internal scratch']
  #allocation2 [shape = 'f32[64,128]{1,0:T(8,128)}', space=vmem, size = 0x8000, scoped, tag = 'scratch operand']
  %s0 = inlined_call_operand.vmem [shape: bf16[2,4,9,9,128], index: 0, kind: input, shape index: {}]
  %s1 = inlined_call_operand.vmem [shape: f32[9,128], index: 1, kind: input, shape index: {}]
  %s2 = inlined_call_operand.vmem [shape: f32[1,128], index: 2, kind: input, shape index: {}]
  %s3 = inlined_call_operand.vmem [shape: bf16[128,128], index: 3, kind: input, shape index: {}]
  %s4 = inlined_call_operand.vmem [shape: f32[1,128], index: 4, kind: input, shape index: {}]
  %s5 = inlined_call_operand.vmem [shape: bf16[128,128], index: 5, kind: input, shape index: {}]
  %s6 = inlined_call_operand.vmem [shape: f32[1,128], index: 6, kind: input, shape index: {}]
  %s7 = inlined_call_operand.vmem [shape: bf16[128,128], index: 7, kind: input, shape index: {}]
  %s8 = inlined_call_operand.vmem [shape: f32[1,128], index: 8, kind: input, shape index: {}]
  %s9 = inlined_call_operand.vmem [shape: bf16[128,128], index: 9, kind: input, shape index: {}]
  %s10 = inlined_call_operand.vmem [shape: f32[1,128], index: 10, kind: input, shape index: {}]
  %s11 = inlined_call_operand.vmem [shape: bf16[2,64,128], index: 11, kind: output, shape index: {}]
  %s12 = sld [smem:[#allocation0]]
  $region77: #{mobilenet_v3_forward.5} parent=0
    _
  %s14 = ssub.s32 1, %s12
  %s15 = scalar_select 0, %s14, %s12
  loop: start=0, step=1, limit=4
  $region2: #{mobilenet_v3_forward.5} parent=0 // loop_pre_header
    _
  $region3: #{mobilenet_v3_forward.5} parent=0 // loop_header
    %s17 = sphi 0, %s21
    %p18 = scmp.ge.s32.totalorder %s17, 4
    %s27 = sphi 0, %s29
    %s30 = sphi 0, %s27
    %s31 = sphi 0, %s30
    %s47 = sphi 0, %s31
    %s51 = sphi 0, %s51
    %s53 = sphi 0, %s51
    %s54 = sphi 0, %s53
    %s68 = sphi 0, %s54
    %s72 = sphi 0, %s72
    %s74 = sphi 0, %s72
    %s75 = sphi 0, %s74
    %s89 = sphi 0, %s75
    %s93 = sphi 0, %s93
    %s95 = sphi 0, %s93
    %s96 = sphi 0, %s95
    %s110 = sphi 0, %s96
    %s114 = sphi 0, %s114
    %s116 = sphi 0, %s114
    %s117 = sphi 0, %s116
    %s131 = sphi 0, %s117
    %s135 = sphi 0, %s135
    %s137 = sphi 0, %s135
    %s138 = sphi 0, %s137
    %s152 = sphi 0, %s138
    %s156 = sphi 0, %s156
    %s158 = sphi 0, %s156
    %s159 = sphi 0, %s158
    %s173 = sphi 0, %s159
    %s177 = sphi 0, %s177
    %s179 = sphi 0, %s177
    %s180 = sphi 0, %s179
    %s194 = sphi 0, %s180
    %s198 = sphi 0, %s198
    %s200 = sphi 0, %s198
    %s201 = sphi 0, %s200
    %s215 = sphi 0, %s201
    %s219 = sphi 0, %s219
    %s221 = sphi 0, %s219
    %s222 = sphi 0, %s221
    %s236 = sphi 0, %s222
    %s240 = sphi 0, %s240
    %s242 = sphi 0, %s240
    %s243 = sphi 0, %s242
    %s257 = sphi 0, %s243
    %s263 = sphi 0, %s265
    %s266 = sphi 0, %s263
    %s267 = sphi 0, %s266
    %s283 = sphi 0, %s267
  $region4: #{mobilenet_v3_forward.5} parent=0 // loop_header_branch
    %20 = sbr.rel (%p18) target = $region8
  $region5: #{mobilenet_v3_forward.5} parent=0 // loop_body
    %s22 = ssub.s32 %s17, 1
    %s23 = ssub.s32 %s17, 2
    %s24 = sadd.s32 %s17, 1
    %s25 = ssub.s32 %s17, %s24
    %p26 = scmp.eq.s32.totalorder %s25, 0
    %s28 = sadd.s32 %s27, 1
    %s29 = scalar_select %p26, %s27, %s28
    %p32 = pneg %p26
    %p33 = scmp.eq.s32.totalorder %s17, 1
    %p34 = por %p32, %p33
    %p35 = scmp.ne.s32.totalorder %s27, %s30
    %p36 = scmp.eq.s32.totalorder %s17, 0
    %p37 = por %p35, %p36
    %p38 = scmp.ne.s32.totalorder %s27, %s30
    %p39 = scmp.eq.s32.totalorder %s22, 1
    %p40 = por %p38, %p39
    %p41 = scmp.ne.s32.totalorder %s30, %s31
    %p42 = scmp.eq.s32.totalorder %s22, 0
    %p43 = por %p41, %p42
    %p44 = scmp.ne.s32.totalorder %s30, %s31
    %p45 = scmp.eq.s32.totalorder %s23, 1
    %p46 = por %p44, %p45
    %p48 = scmp.ne.s32.totalorder %s31, %s47
    %p49 = scmp.eq.s32.totalorder %s23, 0
    %p50 = por %p48, %p49
    %s52 = sadd.s32 %s51, 1
    %p55 = scmp.eq.s32.totalorder %s17, 1
    %p56 = scmp.ne.s32.totalorder %s51, %s53
    %p57 = scmp.eq.s32.totalorder %s17, 0
    %p58 = por %p56, %p57
    %p59 = scmp.ne.s32.totalorder %s51, %s53
    %p60 = scmp.eq.s32.totalorder %s22, 1
    %p61 = por %p59, %p60
    %p62 = scmp.ne.s32.totalorder %s53, %s54
    %p63 = scmp.eq.s32.totalorder %s22, 0
    %p64 = por %p62, %p63
    %p65 = scmp.ne.s32.totalorder %s53, %s54
    %p66 = scmp.eq.s32.totalorder %s23, 1
    %p67 = por %p65, %p66
    %p69 = scmp.ne.s32.totalorder %s54, %s68
    %p70 = scmp.eq.s32.totalorder %s23, 0
    %p71 = por %p69, %p70
    %s73 = sadd.s32 %s72, 1
    %p76 = scmp.eq.s32.totalorder %s17, 1
    %p77 = scmp.ne.s32.totalorder %s72, %s74
    %p78 = scmp.eq.s32.totalorder %s17, 0
    %p79 = por %p77, %p78
    %p80 = scmp.ne.s32.totalorder %s72, %s74
    %p81 = scmp.eq.s32.totalorder %s22, 1
    %p82 = por %p80, %p81
    %p83 = scmp.ne.s32.totalorder %s74, %s75
    %p84 = scmp.eq.s32.totalorder %s22, 0
    %p85 = por %p83, %p84
    %p86 = scmp.ne.s32.totalorder %s74, %s75
    %p87 = scmp.eq.s32.totalorder %s23, 1
    %p88 = por %p86, %p87
    %p90 = scmp.ne.s32.totalorder %s75, %s89
    %p91 = scmp.eq.s32.totalorder %s23, 0
    %p92 = por %p90, %p91
    %s94 = sadd.s32 %s93, 1
    %p97 = scmp.eq.s32.totalorder %s17, 1
    %p98 = scmp.ne.s32.totalorder %s93, %s95
    %p99 = scmp.eq.s32.totalorder %s17, 0
    %p100 = por %p98, %p99
    %p101 = scmp.ne.s32.totalorder %s93, %s95
    %p102 = scmp.eq.s32.totalorder %s22, 1
    %p103 = por %p101, %p102
    %p104 = scmp.ne.s32.totalorder %s95, %s96
    %p105 = scmp.eq.s32.totalorder %s22, 0
    %p106 = por %p104, %p105
    %p107 = scmp.ne.s32.totalorder %s95, %s96
    %p108 = scmp.eq.s32.totalorder %s23, 1
    %p109 = por %p107, %p108
    %p111 = scmp.ne.s32.totalorder %s96, %s110
    %p112 = scmp.eq.s32.totalorder %s23, 0
    %p113 = por %p111, %p112
    %s115 = sadd.s32 %s114, 1
    %p118 = scmp.eq.s32.totalorder %s17, 1
    %p119 = scmp.ne.s32.totalorder %s114, %s116
    %p120 = scmp.eq.s32.totalorder %s17, 0
    %p121 = por %p119, %p120
    %p122 = scmp.ne.s32.totalorder %s114, %s116
    %p123 = scmp.eq.s32.totalorder %s22, 1
    %p124 = por %p122, %p123
    %p125 = scmp.ne.s32.totalorder %s116, %s117
    %p126 = scmp.eq.s32.totalorder %s22, 0
    %p127 = por %p125, %p126
    %p128 = scmp.ne.s32.totalorder %s116, %s117
    %p129 = scmp.eq.s32.totalorder %s23, 1
    %p130 = por %p128, %p129
    %p132 = scmp.ne.s32.totalorder %s117, %s131
    %p133 = scmp.eq.s32.totalorder %s23, 0
    %p134 = por %p132, %p133
    %s136 = sadd.s32 %s135, 1
    %p139 = scmp.eq.s32.totalorder %s17, 1
    %p140 = scmp.ne.s32.totalorder %s135, %s137
    %p141 = scmp.eq.s32.totalorder %s17, 0
    %p142 = por %p140, %p141
    %p143 = scmp.ne.s32.totalorder %s135, %s137
    %p144 = scmp.eq.s32.totalorder %s22, 1
    %p145 = por %p143, %p144
    %p146 = scmp.ne.s32.totalorder %s137, %s138
    %p147 = scmp.eq.s32.totalorder %s22, 0
    %p148 = por %p146, %p147
    %p149 = scmp.ne.s32.totalorder %s137, %s138
    %p150 = scmp.eq.s32.totalorder %s23, 1
    %p151 = por %p149, %p150
    %p153 = scmp.ne.s32.totalorder %s138, %s152
    %p154 = scmp.eq.s32.totalorder %s23, 0
    %p155 = por %p153, %p154
    %s157 = sadd.s32 %s156, 1
    %p160 = scmp.eq.s32.totalorder %s17, 1
    %p161 = scmp.ne.s32.totalorder %s156, %s158
    %p162 = scmp.eq.s32.totalorder %s17, 0
    %p163 = por %p161, %p162
    %p164 = scmp.ne.s32.totalorder %s156, %s158
    %p165 = scmp.eq.s32.totalorder %s22, 1
    %p166 = por %p164, %p165
    %p167 = scmp.ne.s32.totalorder %s158, %s159
    %p168 = scmp.eq.s32.totalorder %s22, 0
    %p169 = por %p167, %p168
    %p170 = scmp.ne.s32.totalorder %s158, %s159
    %p171 = scmp.eq.s32.totalorder %s23, 1
    %p172 = por %p170, %p171
    %p174 = scmp.ne.s32.totalorder %s159, %s173
    %p175 = scmp.eq.s32.totalorder %s23, 0
    %p176 = por %p174, %p175
    %s178 = sadd.s32 %s177, 1
    %p181 = scmp.eq.s32.totalorder %s17, 1
    %p182 = scmp.ne.s32.totalorder %s177, %s179
    %p183 = scmp.eq.s32.totalorder %s17, 0
    %p184 = por %p182, %p183
    %p185 = scmp.ne.s32.totalorder %s177, %s179
    %p186 = scmp.eq.s32.totalorder %s22, 1
    %p187 = por %p185, %p186
    %p188 = scmp.ne.s32.totalorder %s179, %s180
    %p189 = scmp.eq.s32.totalorder %s22, 0
    %p190 = por %p188, %p189
    %p191 = scmp.ne.s32.totalorder %s179, %s180
    %p192 = scmp.eq.s32.totalorder %s23, 1
    %p193 = por %p191, %p192
    %p195 = scmp.ne.s32.totalorder %s180, %s194
    %p196 = scmp.eq.s32.totalorder %s23, 0
    %p197 = por %p195, %p196
    %s199 = sadd.s32 %s198, 1
    %p202 = scmp.eq.s32.totalorder %s17, 1
    %p203 = scmp.ne.s32.totalorder %s198, %s200
    %p204 = scmp.eq.s32.totalorder %s17, 0
    %p205 = por %p203, %p204
    %p206 = scmp.ne.s32.totalorder %s198, %s200
    %p207 = scmp.eq.s32.totalorder %s22, 1
    %p208 = por %p206, %p207
    %p209 = scmp.ne.s32.totalorder %s200, %s201
    %p210 = scmp.eq.s32.totalorder %s22, 0
    %p211 = por %p209, %p210
    %p212 = scmp.ne.s32.totalorder %s200, %s201
    %p213 = scmp.eq.s32.totalorder %s23, 1
    %p214 = por %p212, %p213
    %p216 = scmp.ne.s32.totalorder %s201, %s215
    %p217 = scmp.eq.s32.totalorder %s23, 0
    %p218 = por %p216, %p217
    %s220 = sadd.s32 %s219, 1
    %p223 = scmp.eq.s32.totalorder %s17, 1
    %p224 = scmp.ne.s32.totalorder %s219, %s221
    %p225 = scmp.eq.s32.totalorder %s17, 0
    %p226 = por %p224, %p225
    %p227 = scmp.ne.s32.totalorder %s219, %s221
    %p228 = scmp.eq.s32.totalorder %s22, 1
    %p229 = por %p227, %p228
    %p230 = scmp.ne.s32.totalorder %s221, %s222
    %p231 = scmp.eq.s32.totalorder %s22, 0
    %p232 = por %p230, %p231
    %p233 = scmp.ne.s32.totalorder %s221, %s222
    %p234 = scmp.eq.s32.totalorder %s23, 1
    %p235 = por %p233, %p234
    %p237 = scmp.ne.s32.totalorder %s222, %s236
    %p238 = scmp.eq.s32.totalorder %s23, 0
    %p239 = por %p237, %p238
    %s241 = sadd.s32 %s240, 1
    %p244 = scmp.eq.s32.totalorder %s17, 1
    %p245 = scmp.ne.s32.totalorder %s240, %s242
    %p246 = scmp.eq.s32.totalorder %s17, 0
    %p247 = por %p245, %p246
    %p248 = scmp.ne.s32.totalorder %s240, %s242
    %p249 = scmp.eq.s32.totalorder %s22, 1
    %p250 = por %p248, %p249
    %p251 = scmp.ne.s32.totalorder %s242, %s243
    %p252 = scmp.eq.s32.totalorder %s22, 0
    %p253 = por %p251, %p252
    %p254 = scmp.ne.s32.totalorder %s242, %s243
    %p255 = scmp.eq.s32.totalorder %s23, 1
    %p256 = por %p254, %p255
    %p258 = scmp.ne.s32.totalorder %s243, %s257
    %p259 = scmp.eq.s32.totalorder %s23, 0
    %p260 = por %p258, %p259
    %s261 = ssub.s32 %s17, %s24
    %p262 = scmp.eq.s32.totalorder %s261, 0
    %s264 = sadd.s32 %s263, 1
    %s265 = scalar_select %p262, %s263, %s264
    %p268 = pneg %p262
    %p269 = scmp.eq.s32.totalorder %s17, 1
    %p270 = por %p268, %p269
    %p271 = scmp.ne.s32.totalorder %s263, %s266
    %p272 = scmp.eq.s32.totalorder %s17, 0
    %p273 = por %p271, %p272
    %p274 = scmp.ne.s32.totalorder %s263, %s266
    %p275 = scmp.eq.s32.totalorder %s22, 1
    %p276 = por %p274, %p275
    %p277 = scmp.ne.s32.totalorder %s266, %s267
    %p278 = scmp.eq.s32.totalorder %s22, 0
    %p279 = por %p277, %p278
    %p280 = scmp.ne.s32.totalorder %s266, %s267
    %p281 = scmp.eq.s32.totalorder %s23, 1
    %p282 = por %p280, %p281
    %p284 = scmp.ne.s32.totalorder %s267, %s283
    %p285 = scmp.eq.s32.totalorder %s23, 0
    %p286 = por %p284, %p285
    %p287 = scmp.le.s32.totalorder 1, %s17
    %p288 = scmp.lt.s32.totalorder %s17, 3
    %p289 = pnand %p287, %p288
    %p290 = pneg %p289
    // Predicated region
    $region9: #{mobilenet_v3_forward.5} parent=5 // pred_check
      _
    $region10: #{mobilenet_v3_forward.5} parent=5 // pred_check_branch
      %292 = sbr.rel (%p289) target = $region12
    $region11: #{mobilenet_v3_forward.5} parent=5 // pred_region
      %s293 = ssub.s32 %s17, 1
      // Predicated region
      $region13: #{mobilenet_v3_forward.5} parent=11 // pred_check
        %p294 = pneg %p64
      $region14: #{mobilenet_v3_forward.5} parent=11 // pred_check_branch
        %296 = sbr.rel (%p294) target = $region16
      $region15: #{mobilenet_v3_forward.5} parent=11 // pred_region
        _
      $region16: #{mobilenet_v3_forward.5} parent=11 // pred_fallthru
        _
      // Predicated region
      $region17: #{mobilenet_v3_forward.5} parent=11 // pred_check
        %p297 = pneg %p85
      $region18: #{mobilenet_v3_forward.5} parent=11 // pred_check_branch
        %299 = sbr.rel (%p297) target = $region20
      $region19: #{mobilenet_v3_forward.5} parent=11 // pred_region
        _
      $region20: #{mobilenet_v3_forward.5} parent=11 // pred_fallthru
        _
      // Predicated region
      $region21: #{mobilenet_v3_forward.5} parent=11 // pred_check
        %p300 = pneg %p106
      $region22: #{mobilenet_v3_forward.5} parent=11 // pred_check_branch
        %302 = sbr.rel (%p300) target = $region24
      $region23: #{mobilenet_v3_forward.5} parent=11 // pred_region
        _
      $region24: #{mobilenet_v3_forward.5} parent=11 // pred_fallthru
        _
      // Predicated region
      $region25: #{mobilenet_v3_forward.5} parent=11 // pred_check
        %p303 = pneg %p127
      $region26: #{mobilenet_v3_forward.5} parent=11 // pred_check_branch
        %305 = sbr.rel (%p303) target = $region28
      $region27: #{mobilenet_v3_forward.5} parent=11 // pred_region
        _
      $region28: #{mobilenet_v3_forward.5} parent=11 // pred_fallthru
        _
      // Predicated region
      $region29: #{mobilenet_v3_forward.5} parent=11 // pred_check
        %p306 = pneg %p148
      $region30: #{mobilenet_v3_forward.5} parent=11 // pred_check_branch
        %308 = sbr.rel (%p306) target = $region32
      $region31: #{mobilenet_v3_forward.5} parent=11 // pred_region
        _
      $region32: #{mobilenet_v3_forward.5} parent=11 // pred_fallthru
        _
      // Predicated region
      $region33: #{mobilenet_v3_forward.5} parent=11 // pred_check
        %p309 = pneg %p169
      $region34: #{mobilenet_v3_forward.5} parent=11 // pred_check_branch
        %311 = sbr.rel (%p309) target = $region36
      $region35: #{mobilenet_v3_forward.5} parent=11 // pred_region
        _
      $region36: #{mobilenet_v3_forward.5} parent=11 // pred_fallthru
        _
      // Predicated region
      $region37: #{mobilenet_v3_forward.5} parent=11 // pred_check
        %p312 = pneg %p190
      $region38: #{mobilenet_v3_forward.5} parent=11 // pred_check_branch
        %314 = sbr.rel (%p312) target = $region40
      $region39: #{mobilenet_v3_forward.5} parent=11 // pred_region
        _
      $region40: #{mobilenet_v3_forward.5} parent=11 // pred_fallthru
        _
      // Predicated region
      $region41: #{mobilenet_v3_forward.5} parent=11 // pred_check
        %p315 = pneg %p211
      $region42: #{mobilenet_v3_forward.5} parent=11 // pred_check_branch
        %317 = sbr.rel (%p315) target = $region44
      $region43: #{mobilenet_v3_forward.5} parent=11 // pred_region
        _
      $region44: #{mobilenet_v3_forward.5} parent=11 // pred_fallthru
        _
      // Predicated region
      $region45: #{mobilenet_v3_forward.5} parent=11 // pred_check
        %p318 = pneg %p232
      $region46: #{mobilenet_v3_forward.5} parent=11 // pred_check_branch
        %320 = sbr.rel (%p318) target = $region48
      $region47: #{mobilenet_v3_forward.5} parent=11 // pred_region
        _
      $region48: #{mobilenet_v3_forward.5} parent=11 // pred_fallthru
        _
      // Predicated region
      $region49: #{mobilenet_v3_forward.5} parent=11 // pred_check
        %p321 = pneg %p253
      $region50: #{mobilenet_v3_forward.5} parent=11 // pred_check_branch
        %323 = sbr.rel (%p321) target = $region52
      $region51: #{mobilenet_v3_forward.5} parent=11 // pred_region
        _
      $region52: #{mobilenet_v3_forward.5} parent=11 // pred_fallthru
        _
    $region12: #{mobilenet_v3_forward.5} parent=5 // pred_fallthru
      _
    %p324 = scmp.lt.s32.totalorder %s17, 2
    // Predicated region
    $region53: #{mobilenet_v3_forward.5} parent=5 // pred_check
      %p325 = pneg %p324
    $region54: #{mobilenet_v3_forward.5} parent=5 // pred_check_branch
      %327 = sbr.rel (%p325) target = $region56
    $region55: #{mobilenet_v3_forward.5} parent=5 // pred_region
      // Predicated region
      $region57: #{mobilenet_v3_forward.5} parent=55 // pred_check
        %p328 = pneg %p37
      $region58: #{mobilenet_v3_forward.5} parent=55 // pred_check_branch
        %330 = sbr.rel (%p328) target = $region60
      $region59: #{mobilenet_v3_forward.5} parent=55 // pred_region
        %p331 = scmp.lt.s32.totalorder %s17, 1
        %s332 = scalar_select %p331, %s17, 1
        %s333 = smul.addr %s332, 72
        %s334 = smul.addr %s333, 4
        %s335 = scalar_lea.vmem %s0, %s334
      $region60: #{mobilenet_v3_forward.5} parent=55 // pred_fallthru
        _
    $region56: #{mobilenet_v3_forward.5} parent=5 // pred_fallthru
      _
    %p336 = scmp.le.s32.totalorder 1, %s17
    %p337 = scmp.lt.s32.totalorder %s17, 3
    %p338 = pnand %p336, %p337
    %p339 = pneg %p338
    // Predicated region
    $region61: #{mobilenet_v3_forward.5} parent=5 // pred_check
      _
    $region62: #{mobilenet_v3_forward.5} parent=5 // pred_check_branch
      %341 = sbr.rel (%p338) target = $region64
    $region63: #{mobilenet_v3_forward.5} parent=5 // pred_region
      %s342 = ssub.s32 %s17, 1
      %p343 = scmp.lt.s32.totalorder %s22, 1
      %s344 = scalar_select %p343, %s22, 1
      %s345 = smul.addr %s344, 72
      %s346 = smul.addr %s345, 4
      %s347 = scalar_lea.vmem %s0, %s346
      %p348 = pneg %p43
      %p349 = pneg %p40
      %p350 = pneg %p64
      %p351 = pneg %p61
      %p352 = pneg %p85
      %p353 = pneg %p82
      %p354 = pneg %p106
      %p355 = pneg %p103
      %p356 = pneg %p127
      %p357 = pneg %p124
      %p358 = pneg %p148
      %p359 = pneg %p145
      %p360 = pneg %p169
      %p361 = pneg %p166
      %p362 = pneg %p190
      %p363 = pneg %p187
      %p364 = pneg %p211
      %p365 = pneg %p208
      %p366 = pneg %p232
      %p367 = pneg %p229
      %p368 = pneg %p253
      %p369 = pneg %p250
      %p370 = pneg %p279
      %p371 = pneg %p276
      %p372 = scmp.lt.s32.totalorder %s22, 1
      %s373 = scalar_select %p372, %s22, 1
      %s374 = smul.addr %s373, 8
      %s375 = smul.addr %s374, 4
      %s376 = scalar_lea.vmem %s11, %s375
      %p377 = scmp.lt.s32.totalorder %s22, 1
      %s378 = scalar_select %p377, %s22, 1
      %s379 = smul.addr %s378, 72
      %s380 = smul.addr %s379, 4
      %s381 = scalar_lea.vmem %s0, %s380
      %p382 = scmp.lt.s32.totalorder %s22, 1
      %s383 = scalar_select %p382, %s22, 1
      %s384 = smul.addr %s383, 8
      %s385 = smul.addr %s384, 4
      %s386 = scalar_lea.vmem %s11, %s385
      %v388 = vld [vmem:[%s381] sm:$0xf]
      %v389 = vld [vmem:[%s381 + $0x8] sm:$0xf]
      %v390 = vld [vmem:[%s381 + $0x10] sm:$0xf]
      %v391 = vld [vmem:[%s381 + $0x18] sm:$0xf]
      %v392 = vld [vmem:[%s381 + $0x20] sm:$0xf]
      %v393 = vld [vmem:[%s381 + $0x28] sm:$0xf]
      %v394 = vld [vmem:[%s381 + $0x30] sm:$0xf]
      %v395 = vld [vmem:[%s381 + $0x38] sm:$0xf]
      %v396 = vld [vmem:[%s381 + $0x40] sm:$0xf]
      %v397 = vunpack.c.l.bf16 %v388
      %v398 = vunpack.c.l.bf16 %v389
      %v399 = vunpack.c.l.bf16 %v390
      %v400 = vunpack.c.l.bf16 %v391
      %v401 = vunpack.c.l.bf16 %v392
      %v402 = vunpack.c.l.bf16 %v393
      %v403 = vunpack.c.l.bf16 %v394
      %v404 = vunpack.c.l.bf16 %v395
      %v405 = vunpack.c.l.bf16 %v396
      %s406 = scalar_lea.vmem %s381, 144
      %v407 = vld [vmem:[%s406] sm:$0xf]
      %v408 = vld [vmem:[%s406 + $0x8] sm:$0xf]
      %v409 = vld [vmem:[%s406 + $0x10] sm:$0xf]
      %v410 = vld [vmem:[%s406 + $0x18] sm:$0xf]
      %v411 = vld [vmem:[%s406 + $0x20] sm:$0xf]
      %v412 = vld [vmem:[%s406 + $0x28] sm:$0xf]
      %v413 = vld [vmem:[%s406 + $0x30] sm:$0xf]
      %v414 = vld [vmem:[%s406 + $0x38] sm:$0xf]
      %v415 = vunpack.c.l.bf16 %v407
      %v416 = vunpack.c.l.bf16 %v408
      %v417 = vunpack.c.l.bf16 %v409
      %v418 = vunpack.c.l.bf16 %v410
      %v419 = vunpack.c.l.bf16 %v411
      %v420 = vunpack.c.l.bf16 %v412
      %v421 = vunpack.c.l.bf16 %v413
      %v422 = vunpack.c.l.bf16 %v414
      %v423 = vld [vmem:[%s1] sm:$0x1]
      %v424 = vlaneseq
      %v425 = vshrl.u32 %v424, 7
      %v426 = vsub.s32 0, %v425
      %v427 = vrot.slane %v423, %v426
      %v428 = vmul.f32 %v397, %v427
      %v429 = vmul.f32 %v398, %v427
      %v430 = vmul.f32 %v399, %v427
      %v431 = vmul.f32 %v400, %v427
      %v432 = vmul.f32 %v401, %v427
      %v433 = vmul.f32 %v402, %v427
      %v434 = vmul.f32 %v403, %v427
      %v435 = vmul.f32 %v404, %v427
      %v436 = vld [vmem:[%s1 + $0x3] sm:$0x1]
      %v437 = vlaneseq
      %v438 = vshrl.u32 %v437, 7
      %v439 = vsub.s32 0, %v438
      %v440 = vrot.slane %v436, %v439
      %v441 = vmul.f32 %v415, %v440
      %v442 = vmul.f32 %v416, %v440
      %v443 = vmul.f32 %v417, %v440
      %v444 = vmul.f32 %v418, %v440
      %v445 = vmul.f32 %v419, %v440
      %v446 = vmul.f32 %v420, %v440
      %v447 = vmul.f32 %v421, %v440
      %v448 = vmul.f32 %v422, %v440
      %v449 = vadd.f32 %v428, %v441
      %v450 = vadd.f32 %v429, %v442
      %v451 = vadd.f32 %v430, %v443
      %v452 = vadd.f32 %v431, %v444
      %v453 = vadd.f32 %v432, %v445
      %v454 = vadd.f32 %v433, %v446
      %v455 = vadd.f32 %v434, %v447
      %v456 = vadd.f32 %v435, %v448
      %v457 = vld [vmem:[%s1 + $0x6] sm:$0x1]
      %v458 = vlaneseq
      %v459 = vshrl.u32 %v458, 7
      %v460 = vsub.s32 0, %v459
      %v461 = vrot.slane %v457, %v460
      %v462 = vmul.f32 %v398, %v461
      %v463 = vmul.f32 %v399, %v461
      %v464 = vmul.f32 %v400, %v461
      %v465 = vmul.f32 %v401, %v461
      %v466 = vmul.f32 %v402, %v461
      %v467 = vmul.f32 %v403, %v461
      %v468 = vmul.f32 %v404, %v461
      %v469 = vmul.f32 %v405, %v461
      %v470 = vadd.f32 %v449, %v462
      %v471 = vadd.f32 %v450, %v463
      %v472 = vadd.f32 %v451, %v464
      %v473 = vadd.f32 %v452, %v465
      %v474 = vadd.f32 %v453, %v466
      %v475 = vadd.f32 %v454, %v467
      %v476 = vadd.f32 %v455, %v468
      %v477 = vadd.f32 %v456, %v469
      %s478 = scalar_lea.vmem %s381, 72
      %v479 = vld [vmem:[%s478] sm:$0xf]
      %v480 = vld [vmem:[%s478 + $0x8] sm:$0xf]
      %v481 = vld [vmem:[%s478 + $0x10] sm:$0xf]
      %v482 = vld [vmem:[%s478 + $0x18] sm:$0xf]
      %v483 = vld [vmem:[%s478 + $0x20] sm:$0xf]
      %v484 = vld [vmem:[%s478 + $0x28] sm:$0xf]
      %v485 = vld [vmem:[%s478 + $0x30] sm:$0xf]
      %v486 = vld [vmem:[%s478 + $0x38] sm:$0xf]
      %v487 = vld [vmem:[%s478 + $0x40] sm:$0xf]
      %v488 = vunpack.c.l.bf16 %v479
      %v489 = vunpack.c.l.bf16 %v480
      %v490 = vunpack.c.l.bf16 %v481
      %v491 = vunpack.c.l.bf16 %v482
      %v492 = vunpack.c.l.bf16 %v483
      %v493 = vunpack.c.l.bf16 %v484
      %v494 = vunpack.c.l.bf16 %v485
      %v495 = vunpack.c.l.bf16 %v486
      %v496 = vunpack.c.l.bf16 %v487
      %s497 = scalar_lea.vmem %s381, 216
      %v498 = vld [vmem:[%s497] sm:$0xf]
      %v499 = vld [vmem:[%s497 + $0x8] sm:$0xf]
      %v500 = vld [vmem:[%s497 + $0x10] sm:$0xf]
      %v501 = vld [vmem:[%s497 + $0x18] sm:$0xf]
      %v502 = vld [vmem:[%s497 + $0x20] sm:$0xf]
      %v503 = vld [vmem:[%s497 + $0x28] sm:$0xf]
      %v504 = vld [vmem:[%s497 + $0x30] sm:$0xf]
      %v505 = vld [vmem:[%s497 + $0x38] sm:$0xf]
      %v506 = vunpack.c.l.bf16 %v498
      %v507 = vunpack.c.l.bf16 %v499
      %v508 = vunpack.c.l.bf16 %v500
      %v509 = vunpack.c.l.bf16 %v501
      %v510 = vunpack.c.l.bf16 %v502
      %v511 = vunpack.c.l.bf16 %v503
      %v512 = vunpack.c.l.bf16 %v504
      %v513 = vunpack.c.l.bf16 %v505
      %v514 = vld [vmem:[%s1 + $0x1] sm:$0x1]
      %v515 = vlaneseq
      %v516 = vshrl.u32 %v515, 7
      %v517 = vsub.s32 0, %v516
      %v518 = vrot.slane %v514, %v517
      %v519 = vmul.f32 %v488, %v518
      %v520 = vmul.f32 %v489, %v518
      %v521 = vmul.f32 %v490, %v518
      %v522 = vmul.f32 %v491, %v518
      %v523 = vmul.f32 %v492, %v518
      %v524 = vmul.f32 %v493, %v518
      %v525 = vmul.f32 %v494, %v518
      %v526 = vmul.f32 %v495, %v518
      %v527 = vadd.f32 %v470, %v519
      %v528 = vadd.f32 %v471, %v520
      %v529 = vadd.f32 %v472, %v521
      %v530 = vadd.f32 %v473, %v522
      %v531 = vadd.f32 %v474, %v523
      %v532 = vadd.f32 %v475, %v524
      %v533 = vadd.f32 %v476, %v525
      %v534 = vadd.f32 %v477, %v526
      %v535 = vld [vmem:[%s1 + $0x4] sm:$0x1]
      %v536 = vlaneseq
      %v537 = vshrl.u32 %v536, 7
      %v538 = vsub.s32 0, %v537
      %v539 = vrot.slane %v535, %v538
      %v540 = vmul.f32 %v506, %v539
      %v541 = vmul.f32 %v507, %v539
      %v542 = vmul.f32 %v508, %v539
      %v543 = vmul.f32 %v509, %v539
      %v544 = vmul.f32 %v510, %v539
      %v545 = vmul.f32 %v511, %v539
      %v546 = vmul.f32 %v512, %v539
      %v547 = vmul.f32 %v513, %v539
      %v548 = vadd.f32 %v527, %v540
      %v549 = vadd.f32 %v528, %v541
      %v550 = vadd.f32 %v529, %v542
      %v551 = vadd.f32 %v530, %v543
      %v552 = vadd.f32 %v531, %v544
      %v553 = vadd.f32 %v532, %v545
      %v554 = vadd.f32 %v533, %v546
      %v555 = vadd.f32 %v534, %v547
      %v556 = vld [vmem:[%s1 + $0x7] sm:$0x1]
      %v557 = vlaneseq
      %v558 = vshrl.u32 %v557, 7
      %v559 = vsub.s32 0, %v558
      %v560 = vrot.slane %v556, %v559
      %v561 = vmul.f32 %v489, %v560
      %v562 = vmul.f32 %v490, %v560
      %v563 = vmul.f32 %v491, %v560
      %v564 = vmul.f32 %v492, %v560
      %v565 = vmul.f32 %v493, %v560
      %v566 = vmul.f32 %v494, %v560
      %v567 = vmul.f32 %v495, %v560
      %v568 = vmul.f32 %v496, %v560
      %v569 = vadd.f32 %v548, %v561
      %v570 = vadd.f32 %v549, %v562
      %v571 = vadd.f32 %v550, %v563
      %v572 = vadd.f32 %v551, %v564
      %v573 = vadd.f32 %v552, %v565
      %v574 = vadd.f32 %v553, %v566
      %v575 = vadd.f32 %v554, %v567
      %v576 = vadd.f32 %v555, %v568
      %v577 = vld [vmem:[%s381 + $0x4] sm:$0x1]
      %v578 = vld [vmem:[%s381 + $0xc] sm:$0x1]
      %v579 = vld [vmem:[%s381 + $0x14] sm:$0x1]
      %v580 = vld [vmem:[%s381 + $0x1c] sm:$0x1]
      %v581 = vld [vmem:[%s381 + $0x24] sm:$0x1]
      %v582 = vld [vmem:[%s381 + $0x2c] sm:$0x1]
      %v583 = vld [vmem:[%s381 + $0x34] sm:$0x1]
      %v584 = vld [vmem:[%s381 + $0x3c] sm:$0x1]
      %v585 = vld [vmem:[%s381 + $0x44] sm:$0x1]
      %v586 = vunpack.c.l.bf16 %v577
      %v587 = vunpack.c.l.bf16 %v578
      %v588 = vunpack.c.l.bf16 %v579
      %v589 = vunpack.c.l.bf16 %v580
      %v590 = vunpack.c.l.bf16 %v581
      %v591 = vunpack.c.l.bf16 %v582
      %v592 = vunpack.c.l.bf16 %v583
      %v593 = vunpack.c.l.bf16 %v584
      %v594 = vunpack.c.l.bf16 %v585
      %v595 = vld [vmem:[%s406 + $0x4] sm:$0x1]
      %v596 = vld [vmem:[%s406 + $0xc] sm:$0x1]
      %v597 = vld [vmem:[%s406 + $0x14] sm:$0x1]
      %v598 = vld [vmem:[%s406 + $0x1c] sm:$0x1]
      %v599 = vld [vmem:[%s406 + $0x24] sm:$0x1]
      %v600 = vld [vmem:[%s406 + $0x2c] sm:$0x1]
      %v601 = vld [vmem:[%s406 + $0x34] sm:$0x1]
      %v602 = vld [vmem:[%s406 + $0x3c] sm:$0x1]
      %v603 = vunpack.c.l.bf16 %v595
      %v604 = vunpack.c.l.bf16 %v596
      %v605 = vunpack.c.l.bf16 %v597
      %v606 = vunpack.c.l.bf16 %v598
      %v607 = vunpack.c.l.bf16 %v599
      %v608 = vunpack.c.l.bf16 %v600
      %v609 = vunpack.c.l.bf16 %v601
      %v610 = vunpack.c.l.bf16 %v602
      %v611 = vld [vmem:[%s1 + $0x2] sm:$0x1]
      %v612 = vlaneseq
      %v613 = vshrl.u32 %v612, 7
      %v614 = vsub.s32 0, %v613
      %v615 = vrot.slane %v611, %v614
      %v616 = vmul.f32 %v397, %v615
      %v617 = vmul.f32 %v586, %v615
      %v618 = vmul.f32 %v398, %v615
      %v619 = vmul.f32 %v587, %v615
      %v620 = vmul.f32 %v399, %v615
      %v621 = vmul.f32 %v588, %v615
      %v622 = vmul.f32 %v400, %v615
      %v623 = vmul.f32 %v589, %v615
      %v624 = vmul.f32 %v401, %v615
      %v625 = vmul.f32 %v590, %v615
      %v626 = vmul.f32 %v402, %v615
      %v627 = vmul.f32 %v591, %v615
      %v628 = vmul.f32 %v403, %v615
      %v629 = vmul.f32 %v592, %v615
      %v630 = vmul.f32 %v404, %v615
      %v631 = vmul.f32 %v593, %v615
      %vm648 = vcmask 1046528
      %v649 = vrot.slane %v616, 1
      %v650 = vrot.slane %v617, 1
      %v651 = vsel %vm648, %v649, %v650
      %v652 = vrot.slane %v618, 1
      %v653 = vrot.slane %v619, 1
      %v654 = vsel %vm648, %v652, %v653
      %v655 = vrot.slane %v620, 1
      %v656 = vrot.slane %v621, 1
      %v657 = vsel %vm648, %v655, %v656
      %v658 = vrot.slane %v622, 1
      %v659 = vrot.slane %v623, 1
      %v660 = vsel %vm648, %v658, %v659
      %v661 = vrot.slane %v624, 1
      %v662 = vrot.slane %v625, 1
      %v663 = vsel %vm648, %v661, %v662
      %v664 = vrot.slane %v626, 1
      %v665 = vrot.slane %v627, 1
      %v666 = vsel %vm648, %v664, %v665
      %v667 = vrot.slane %v628, 1
      %v668 = vrot.slane %v629, 1
      %v669 = vsel %vm648, %v667, %v668
      %v670 = vrot.slane %v630, 1
      %v671 = vrot.slane %v631, 1
      %v672 = vsel %vm648, %v670, %v671
      %v681 = vadd.f32 %v569, %v651
      %v682 = vadd.f32 %v570, %v654
      %v683 = vadd.f32 %v571, %v657
      %v684 = vadd.f32 %v572, %v660
      %v685 = vadd.f32 %v573, %v663
      %v686 = vadd.f32 %v574, %v666
      %v687 = vadd.f32 %v575, %v669
      %v688 = vadd.f32 %v576, %v672
      %v689 = vld [vmem:[%s1 + $0x5] sm:$0x1]
      %v690 = vlaneseq
      %v691 = vshrl.u32 %v690, 7
      %v692 = vsub.s32 0, %v691
      %v693 = vrot.slane %v689, %v692
      %v694 = vmul.f32 %v415, %v693
      %v695 = vmul.f32 %v603, %v693
      %v696 = vmul.f32 %v416, %v693
      %v697 = vmul.f32 %v604, %v693
      %v698 = vmul.f32 %v417, %v693
      %v699 = vmul.f32 %v605, %v693
      %v700 = vmul.f32 %v418, %v693
      %v701 = vmul.f32 %v606, %v693
      %v702 = vmul.f32 %v419, %v693
      %v703 = vmul.f32 %v607, %v693
      %v704 = vmul.f32 %v420, %v693
      %v705 = vmul.f32 %v608, %v693
      %v706 = vmul.f32 %v421, %v693
      %v707 = vmul.f32 %v609, %v693
      %v708 = vmul.f32 %v422, %v693
      %v709 = vmul.f32 %v610, %v693
      %v726 = vrot.slane %v694, 1
      %v727 = vrot.slane %v695, 1
      %v728 = vsel %vm648, %v726, %v727
      %v729 = vrot.slane %v696, 1
      %v730 = vrot.slane %v697, 1
      %v731 = vsel %vm648, %v729, %v730
      %v732 = vrot.slane %v698, 1
      %v733 = vrot.slane %v699, 1
      %v734 = vsel %vm648, %v732, %v733
      %v735 = vrot.slane %v700, 1
      %v736 = vrot.slane %v701, 1
      %v737 = vsel %vm648, %v735, %v736
      %v738 = vrot.slane %v702, 1
      %v739 = vrot.slane %v703, 1
      %v740 = vsel %vm648, %v738, %v739
      %v741 = vrot.slane %v704, 1
      %v742 = vrot.slane %v705, 1
      %v743 = vsel %vm648, %v741, %v742
      %v744 = vrot.slane %v706, 1
      %v745 = vrot.slane %v707, 1
      %v746 = vsel %vm648, %v744, %v745
      %v747 = vrot.slane %v708, 1
      %v748 = vrot.slane %v709, 1
      %v749 = vsel %vm648, %v747, %v748
      %v758 = vadd.f32 %v681, %v728
      %v759 = vadd.f32 %v682, %v731
      %v760 = vadd.f32 %v683, %v734
      %v761 = vadd.f32 %v684, %v737
      %v762 = vadd.f32 %v685, %v740
      %v763 = vadd.f32 %v686, %v743
      %v764 = vadd.f32 %v687, %v746
      %v765 = vadd.f32 %v688, %v749
      %v766 = vld [vmem:[%s1 + $0x8] sm:$0x1]
      %v767 = vlaneseq
      %v768 = vshrl.u32 %v767, 7
      %v769 = vsub.s32 0, %v768
      %v770 = vrot.slane %v766, %v769
      %v771 = vmul.f32 %v398, %v770
      %v772 = vmul.f32 %v587, %v770
      %v773 = vmul.f32 %v399, %v770
      %v774 = vmul.f32 %v588, %v770
      %v775 = vmul.f32 %v400, %v770
      %v776 = vmul.f32 %v589, %v770
      %v777 = vmul.f32 %v401, %v770
      %v778 = vmul.f32 %v590, %v770
      %v779 = vmul.f32 %v402, %v770
      %v780 = vmul.f32 %v591, %v770
      %v781 = vmul.f32 %v403, %v770
      %v782 = vmul.f32 %v592, %v770
      %v783 = vmul.f32 %v404, %v770
      %v784 = vmul.f32 %v593, %v770
      %v785 = vmul.f32 %v405, %v770
      %v786 = vmul.f32 %v594, %v770
      %v803 = vrot.slane %v771, 1
      %v804 = vrot.slane %v772, 1
      %v805 = vsel %vm648, %v803, %v804
      %v806 = vrot.slane %v773, 1
      %v807 = vrot.slane %v774, 1
      %v808 = vsel %vm648, %v806, %v807
      %v809 = vrot.slane %v775, 1
      %v810 = vrot.slane %v776, 1
      %v811 = vsel %vm648, %v809, %v810
      %v812 = vrot.slane %v777, 1
      %v813 = vrot.slane %v778, 1
      %v814 = vsel %vm648, %v812, %v813
      %v815 = vrot.slane %v779, 1
      %v816 = vrot.slane %v780, 1
      %v817 = vsel %vm648, %v815, %v816
      %v818 = vrot.slane %v781, 1
      %v819 = vrot.slane %v782, 1
      %v820 = vsel %vm648, %v818, %v819
      %v821 = vrot.slane %v783, 1
      %v822 = vrot.slane %v784, 1
      %v823 = vsel %vm648, %v821, %v822
      %v824 = vrot.slane %v785, 1
      %v825 = vrot.slane %v786, 1
      %v826 = vsel %vm648, %v824, %v825
      %v835 = vadd.f32 %v758, %v805
      %v836 = vadd.f32 %v759, %v808
      %v837 = vadd.f32 %v760, %v811
      %v838 = vadd.f32 %v761, %v814
      %v839 = vadd.f32 %v762, %v817
      %v840 = vadd.f32 %v763, %v820
      %v841 = vadd.f32 %v764, %v823
      %v842 = vadd.f32 %v765, %v826
      %v843 = vld [vmem:[%s2] sm:$0x1]
      %v845 = vlaneseq
      %v846 = vshrl.u32 %v845, 7
      %v847 = vsub.s32 0, %v846
      %v848 = vrot.slane %v843, %v847
      %v850 = vadd.f32 %v835, %v848
      %v851 = vadd.f32 %v836, %v848
      %v852 = vadd.f32 %v837, %v848
      %v853 = vadd.f32 %v838, %v848
      %v854 = vadd.f32 %v839, %v848
      %v855 = vadd.f32 %v840, %v848
      %v856 = vadd.f32 %v841, %v848
      %v857 = vadd.f32 %v842, %v848
      %v858 = vmax.f32 %v850, 0.0
      %v859 = vmax.f32 %v851, 0.0
      %v860 = vmax.f32 %v852, 0.0
      %v861 = vmax.f32 %v853, 0.0
      %v862 = vmax.f32 %v854, 0.0
      %v863 = vmax.f32 %v855, 0.0
      %v864 = vmax.f32 %v856, 0.0
      %v865 = vmax.f32 %v857, 0.0
      %866 = vst [vmem:[#allocation2] sm:$0xff] %v858
      %867 = vst [vmem:[#allocation2 + $0x8] sm:$0xff] %v859
      %868 = vst [vmem:[#allocation2 + $0x10] sm:$0xff] %v860
      %869 = vst [vmem:[#allocation2 + $0x18] sm:$0xff] %v861
      %870 = vst [vmem:[#allocation2 + $0x20] sm:$0xff] %v862
      %871 = vst [vmem:[#allocation2 + $0x28] sm:$0xff] %v863
      %872 = vst [vmem:[#allocation2 + $0x30] sm:$0xff] %v864
      %873 = vst [vmem:[#allocation2 + $0x38] sm:$0xff] %v865
      %v874 = vld [vmem:[#allocation2] sm:$0xff]
      %v875 = vld [vmem:[#allocation2 + $0x8] sm:$0xff]
      %v876 = vld [vmem:[#allocation2 + $0x10] sm:$0xff]
      %v877 = vld [vmem:[#allocation2 + $0x18] sm:$0xff]
      %v878 = vld [vmem:[#allocation2 + $0x20] sm:$0xff]
      %v879 = vld [vmem:[#allocation2 + $0x28] sm:$0xff]
      %v880 = vld [vmem:[#allocation2 + $0x30] sm:$0xff]
      %v881 = vld [vmem:[#allocation2 + $0x38] sm:$0xff]
      %v882 = vadd.f32 %v874, %v875
      %v883 = vadd.f32 %v882, %v876
      %v884 = vadd.f32 %v883, %v877
      %v885 = vadd.f32 %v884, %v878
      %v886 = vadd.f32 %v885, %v879
      %v887 = vadd.f32 %v886, %v880
      %v888 = vadd.f32 %v887, %v881
      %v889 = vrot.slane %v888, 4
      %v890 = vadd.f32 %v888, %v889
      %v891 = vrot.slane %v890, 2
      %v892 = vadd.f32 %v890, %v891
      %v893 = vrot.slane %v892, 1
      %v894 = vadd.f32 %v892, %v893
      %v895 = vmul.f32 %v894, 0.015625
      %v896 = vpack.c.bf16 %v895, %v895
      %v897 = vld [vmem:[%s3] sm:$0xf]
      %v898 = vld [vmem:[%s3 + $0x4] sm:$0xf]
      %v899 = vld [vmem:[%s3 + $0x8] sm:$0xf]
      %v900 = vld [vmem:[%s3 + $0xc] sm:$0xf]
      %v901 = vld [vmem:[%s3 + $0x10] sm:$0xf]
      %v902 = vld [vmem:[%s3 + $0x14] sm:$0xf]
      %v903 = vld [vmem:[%s3 + $0x18] sm:$0xf]
      %v904 = vld [vmem:[%s3 + $0x1c] sm:$0xf]
      %v905 = vld [vmem:[%s3 + $0x20] sm:$0xf]
      %v906 = vld [vmem:[%s3 + $0x24] sm:$0xf]
      %v907 = vld [vmem:[%s3 + $0x28] sm:$0xf]
      %v908 = vld [vmem:[%s3 + $0x2c] sm:$0xf]
      %v909 = vld [vmem:[%s3 + $0x30] sm:$0xf]
      %v910 = vld [vmem:[%s3 + $0x34] sm:$0xf]
      %v911 = vld [vmem:[%s3 + $0x38] sm:$0xf]
      %v912 = vld [vmem:[%s3 + $0x3c] sm:$0xf]
      %v913 = vld [vmem:[%s4] sm:$0x1]
      %v930 = vunpack.c.l.b16 %v897
      %v931 = vunpack.c.l.b16 %v898
      %v932 = vunpack.c.l.b16 %v899
      %v933 = vunpack.c.l.b16 %v900
      %v934 = vunpack.c.l.b16 %v901
      %v935 = vunpack.c.l.b16 %v902
      %v936 = vunpack.c.l.b16 %v903
      %v937 = vunpack.c.l.b16 %v904
      %v938 = vunpack.c.l.b16 %v905
      %v939 = vunpack.c.l.b16 %v906
      %v940 = vunpack.c.l.b16 %v907
      %v941 = vunpack.c.l.b16 %v908
      %v942 = vunpack.c.l.b16 %v909
      %v943 = vunpack.c.l.b16 %v910
      %v944 = vunpack.c.l.b16 %v911
      %v945 = vunpack.c.l.b16 %v912
      %v946 = vpack.c.b16 %v931, %v930
      %v947 = vpack.c.b16 %v933, %v932
      %v948 = vpack.c.b16 %v935, %v934
      %v949 = vpack.c.b16 %v937, %v936
      %v950 = vpack.c.b16 %v939, %v938
      %v951 = vpack.c.b16 %v941, %v940
      %v952 = vpack.c.b16 %v943, %v942
      %v953 = vpack.c.b16 %v945, %v944
      %962 = vmatprep.subr.bf16.mxu0 0
      %963 = vmatpush1.bf16.msra.mxu0 %v946
      %964 = vmatprep.subr.bf16.mxu0 0
      %965 = vmatpush1.bf16.msra.mxu0 %v947
      %966 = vmatprep.subr.bf16.mxu0 0
      %967 = vmatpush1.bf16.msra.mxu0 %v948
      %968 = vmatprep.subr.bf16.mxu0 0
      %969 = vmatpush1.bf16.msra.mxu0 %v949
      %970 = vmatprep.subr.bf16.mxu0 0
      %971 = vmatpush1.bf16.msra.mxu0 %v950
      %972 = vmatprep.subr.bf16.mxu0 0
      %973 = vmatpush1.bf16.msra.mxu0 %v951
      %974 = vmatprep.subr.bf16.mxu0 0
      %975 = vmatpush1.bf16.msra.mxu0 %v952
      %976 = vmatprep.subr.bf16.mxu0 0
      %977 = vmatpush1.bf16.msra.mxu0 %v953
      %978 = vmatprep.subr.bf16.mxu0 0
      %979 = vmatpush1.bf16.msra.mxu0 0
      %980 = vmatprep.subr.bf16.mxu0 0
      %981 = vmatpush1.bf16.msra.mxu0 0
      %982 = vmatprep.subr.bf16.mxu0 0
      %983 = vmatpush1.bf16.msra.mxu0 0
      %984 = vmatprep.subr.bf16.mxu0 0
      %985 = vmatpush1.bf16.msra.mxu0 0
      %986 = vmatprep.subr.bf16.mxu0 0
      %987 = vmatpush1.bf16.msra.mxu0 0
      %988 = vmatprep.subr.bf16.mxu0 0
      %989 = vmatpush1.bf16.msra.mxu0 0
      %990 = vmatprep.subr.bf16.mxu0 0
      %991 = vmatpush1.bf16.msra.mxu0 0
      %992 = vmatprep.subr.bf16.mxu0 0
      %993 = vmatpush1.bf16.msra.mxu0 0
      %994 = vmatprep.mubr.bf16.mxu0 0
      %995 = vmatmul.mubr.bf16.gmra.mrb[0].mxu0 %v896
      %v996 = vpop.f32.mrb[0].mxu0
      %v997 = vadd.f32 %v913, %v996
      %v998 = vpop.f32.mrb[0].mxu0
      %v999 = vpop.f32.mrb[0].mxu0
      %v1000 = vpop.f32.mrb[0].mxu0
      %1001 = vdwg.mxu0
      %v1002 = vmax.f32 %v997, 0.0
      %v1003 = vpack.c.bf16 %v1002, %v1002
      %v1004 = vld [vmem:[%s5] sm:$0xf]
      %v1005 = vld [vmem:[%s5 + $0x4] sm:$0xf]
      %v1006 = vld [vmem:[%s5 + $0x8] sm:$0xf]
      %v1007 = vld [vmem:[%s5 + $0xc] sm:$0xf]
      %v1008 = vld [vmem:[%s5 + $0x10] sm:$0xf]
      %v1009 = vld [vmem:[%s5 + $0x14] sm:$0xf]
      %v1010 = vld [vmem:[%s5 + $0x18] sm:$0xf]
      %v1011 = vld [vmem:[%s5 + $0x1c] sm:$0xf]
      %v1012 = vld [vmem:[%s5 + $0x20] sm:$0xf]
      %v1013 = vld [vmem:[%s5 + $0x24] sm:$0xf]
      %v1014 = vld [vmem:[%s5 + $0x28] sm:$0xf]
      %v1015 = vld [vmem:[%s5 + $0x2c] sm:$0xf]
      %v1016 = vld [vmem:[%s5 + $0x30] sm:$0xf]
      %v1017 = vld [vmem:[%s5 + $0x34] sm:$0xf]
      %v1018 = vld [vmem:[%s5 + $0x38] sm:$0xf]
      %v1019 = vld [vmem:[%s5 + $0x3c] sm:$0xf]
      %v1020 = vld [vmem:[%s6] sm:$0x1]
      %v1037 = vunpack.c.l.b16 %v1004
      %v1038 = vunpack.c.l.b16 %v1005
      %v1039 = vunpack.c.l.b16 %v1006
      %v1040 = vunpack.c.l.b16 %v1007
      %v1041 = vunpack.c.l.b16 %v1008
      %v1042 = vunpack.c.l.b16 %v1009
      %v1043 = vunpack.c.l.b16 %v1010
      %v1044 = vunpack.c.l.b16 %v1011
      %v1045 = vunpack.c.l.b16 %v1012
      %v1046 = vunpack.c.l.b16 %v1013
      %v1047 = vunpack.c.l.b16 %v1014
      %v1048 = vunpack.c.l.b16 %v1015
      %v1049 = vunpack.c.l.b16 %v1016
      %v1050 = vunpack.c.l.b16 %v1017
      %v1051 = vunpack.c.l.b16 %v1018
      %v1052 = vunpack.c.l.b16 %v1019
      %v1053 = vpack.c.b16 %v1038, %v1037
      %v1054 = vpack.c.b16 %v1040, %v1039
      %v1055 = vpack.c.b16 %v1042, %v1041
      %v1056 = vpack.c.b16 %v1044, %v1043
      %v1057 = vpack.c.b16 %v1046, %v1045
      %v1058 = vpack.c.b16 %v1048, %v1047
      %v1059 = vpack.c.b16 %v1050, %v1049
      %v1060 = vpack.c.b16 %v1052, %v1051
      %1069 = vmatprep.subr.bf16.mxu0 0
      %1070 = vmatpush1.bf16.msra.mxu0 %v1053
      %1071 = vmatprep.subr.bf16.mxu0 0
      %1072 = vmatpush1.bf16.msra.mxu0 %v1054
      %1073 = vmatprep.subr.bf16.mxu0 0
      %1074 = vmatpush1.bf16.msra.mxu0 %v1055
      %1075 = vmatprep.subr.bf16.mxu0 0
      %1076 = vmatpush1.bf16.msra.mxu0 %v1056
      %1077 = vmatprep.subr.bf16.mxu0 0
      %1078 = vmatpush1.bf16.msra.mxu0 %v1057
      %1079 = vmatprep.subr.bf16.mxu0 0
      %1080 = vmatpush1.bf16.msra.mxu0 %v1058
      %1081 = vmatprep.subr.bf16.mxu0 0
      %1082 = vmatpush1.bf16.msra.mxu0 %v1059
      %1083 = vmatprep.subr.bf16.mxu0 0
      %1084 = vmatpush1.bf16.msra.mxu0 %v1060
      %1085 = vmatprep.subr.bf16.mxu0 0
      %1086 = vmatpush1.bf16.msra.mxu0 0
      %1087 = vmatprep.subr.bf16.mxu0 0
      %1088 = vmatpush1.bf16.msra.mxu0 0
      %1089 = vmatprep.subr.bf16.mxu0 0
      %1090 = vmatpush1.bf16.msra.mxu0 0
      %1091 = vmatprep.subr.bf16.mxu0 0
      %1092 = vmatpush1.bf16.msra.mxu0 0
      %1093 = vmatprep.subr.bf16.mxu0 0
      %1094 = vmatpush1.bf16.msra.mxu0 0
      %1095 = vmatprep.subr.bf16.mxu0 0
      %1096 = vmatpush1.bf16.msra.mxu0 0
      %1097 = vmatprep.subr.bf16.mxu0 0
      %1098 = vmatpush1.bf16.msra.mxu0 0
      %1099 = vmatprep.subr.bf16.mxu0 0
      %1100 = vmatpush1.bf16.msra.mxu0 0
      %1101 = vmatprep.mubr.bf16.mxu0 0
      %1102 = vmatmul.mubr.bf16.gmra.mrb[0].mxu0 %v1003
      %v1103 = vpop.f32.mrb[0].mxu0
      %v1104 = vadd.f32 %v1020, %v1103
      %v1105 = vpop.f32.mrb[0].mxu0
      %v1106 = vpop.f32.mrb[0].mxu0
      %v1107 = vpop.f32.mrb[0].mxu0
      %1108 = vdwg.mxu0
      %v1109 = vadd.f32 %v1104, 3.0
      %v1110 = vmax.f32 %v1109, 0.0
      %v1111 = vmin.f32 %v1110, 6.0
      %v1112 = vmul.f32 %v1111, 0.16666667
      %v1113 = vlaneseq
      %v1114 = vshrl.u32 %v1113, 7
      %v1115 = vsub.s32 0, %v1114
      %v1116 = vrot.slane %v1112, %v1115
      %v1117 = vmul.f32 %v874, %v1116
      %v1118 = vmul.f32 %v875, %v1116
      %v1119 = vmul.f32 %v876, %v1116
      %v1120 = vmul.f32 %v877, %v1116
      %v1121 = vmul.f32 %v878, %v1116
      %v1122 = vmul.f32 %v879, %v1116
      %v1123 = vmul.f32 %v880, %v1116
      %v1124 = vmul.f32 %v881, %v1116
      %v1125 = vpack.c.bf16 %v1118, %v1117
      %v1126 = vpack.c.bf16 %v1120, %v1119
      %v1127 = vpack.c.bf16 %v1122, %v1121
      %v1128 = vpack.c.bf16 %v1124, %v1123
      %v1129 = vld [vmem:[%s7] sm:$0xf]
      %v1130 = vld [vmem:[%s7 + $0x4] sm:$0xf]
      %v1131 = vld [vmem:[%s7 + $0x8] sm:$0xf]
      %v1132 = vld [vmem:[%s7 + $0xc] sm:$0xf]
      %v1133 = vld [vmem:[%s7 + $0x10] sm:$0xf]
      %v1134 = vld [vmem:[%s7 + $0x14] sm:$0xf]
      %v1135 = vld [vmem:[%s7 + $0x18] sm:$0xf]
      %v1136 = vld [vmem:[%s7 + $0x1c] sm:$0xf]
      %v1137 = vld [vmem:[%s7 + $0x20] sm:$0xf]
      %v1138 = vld [vmem:[%s7 + $0x24] sm:$0xf]
      %v1139 = vld [vmem:[%s7 + $0x28] sm:$0xf]
      %v1140 = vld [vmem:[%s7 + $0x2c] sm:$0xf]
      %v1141 = vld [vmem:[%s7 + $0x30] sm:$0xf]
      %v1142 = vld [vmem:[%s7 + $0x34] sm:$0xf]
      %v1143 = vld [vmem:[%s7 + $0x38] sm:$0xf]
      %v1144 = vld [vmem:[%s7 + $0x3c] sm:$0xf]
      %v1145 = vld [vmem:[%s8] sm:$0x1]
      %v1147 = vlaneseq
      %v1148 = vshrl.u32 %v1147, 7
      %v1149 = vsub.s32 0, %v1148
      %v1150 = vrot.slane %v1145, %v1149
      %v1168 = vunpack.c.l.b16 %v1129
      %v1169 = vunpack.c.l.b16 %v1130
      %v1170 = vunpack.c.l.b16 %v1131
      %v1171 = vunpack.c.l.b16 %v1132
      %v1172 = vunpack.c.l.b16 %v1133
      %v1173 = vunpack.c.l.b16 %v1134
      %v1174 = vunpack.c.l.b16 %v1135
      %v1175 = vunpack.c.l.b16 %v1136
      %v1176 = vunpack.c.l.b16 %v1137
      %v1177 = vunpack.c.l.b16 %v1138
      %v1178 = vunpack.c.l.b16 %v1139
      %v1179 = vunpack.c.l.b16 %v1140
      %v1180 = vunpack.c.l.b16 %v1141
      %v1181 = vunpack.c.l.b16 %v1142
      %v1182 = vunpack.c.l.b16 %v1143
      %v1183 = vunpack.c.l.b16 %v1144
      %v1184 = vpack.c.b16 %v1169, %v1168
      %v1185 = vpack.c.b16 %v1171, %v1170
      %v1186 = vpack.c.b16 %v1173, %v1172
      %v1187 = vpack.c.b16 %v1175, %v1174
      %v1188 = vpack.c.b16 %v1177, %v1176
      %v1189 = vpack.c.b16 %v1179, %v1178
      %v1190 = vpack.c.b16 %v1181, %v1180
      %v1191 = vpack.c.b16 %v1183, %v1182
      %1200 = vmatprep.subr.bf16.mxu0 0
      %1201 = vmatpush1.bf16.msra.mxu0 %v1184
      %1202 = vmatprep.subr.bf16.mxu0 0
      %1203 = vmatpush1.bf16.msra.mxu0 %v1185
      %1204 = vmatprep.subr.bf16.mxu0 0
      %1205 = vmatpush1.bf16.msra.mxu0 %v1186
      %1206 = vmatprep.subr.bf16.mxu0 0
      %1207 = vmatpush1.bf16.msra.mxu0 %v1187
      %1208 = vmatprep.subr.bf16.mxu0 0
      %1209 = vmatpush1.bf16.msra.mxu0 %v1188
      %1210 = vmatprep.subr.bf16.mxu0 0
      %1211 = vmatpush1.bf16.msra.mxu0 %v1189
      %1212 = vmatprep.subr.bf16.mxu0 0
      %1213 = vmatpush1.bf16.msra.mxu0 %v1190
      %1214 = vmatprep.subr.bf16.mxu0 0
      %1215 = vmatpush1.bf16.msra.mxu0 %v1191
      %1216 = vmatprep.subr.bf16.mxu0 0
      %1217 = vmatpush1.bf16.msra.mxu0 0
      %1218 = vmatprep.subr.bf16.mxu0 0
      %1219 = vmatpush1.bf16.msra.mxu0 0
      %1220 = vmatprep.subr.bf16.mxu0 0
      %1221 = vmatpush1.bf16.msra.mxu0 0
      %1222 = vmatprep.subr.bf16.mxu0 0
      %1223 = vmatpush1.bf16.msra.mxu0 0
      %1224 = vmatprep.subr.bf16.mxu0 0
      %1225 = vmatpush1.bf16.msra.mxu0 0
      %1226 = vmatprep.subr.bf16.mxu0 0
      %1227 = vmatpush1.bf16.msra.mxu0 0
      %1228 = vmatprep.subr.bf16.mxu0 0
      %1229 = vmatpush1.bf16.msra.mxu0 0
      %1230 = vmatprep.subr.bf16.mxu0 0
      %1231 = vmatpush1.bf16.msra.mxu0 0
      %1232 = vmatprep.mubr.bf16.mxu0 0
      %1233 = vmatmul.mubr.bf16.gmra.mrb[0].mxu0 %v1125
      %v1234 = vpop.f32.mrb[0].mxu0
      %v1235 = vadd.f32 %v1150, %v1234
      %v1236 = vpop.f32.mrb[0].mxu0
      %v1237 = vpop.f32.mrb[0].mxu0
      %v1238 = vadd.f32 %v1150, %v1237
      %v1239 = vpop.f32.mrb[0].mxu0
      %1240 = vmatprep.mubr.bf16.mxu0 0
      %1241 = vmatmul.mubr.bf16.gmra.mrb[0].mxu0 %v1126
      %v1242 = vpop.f32.mrb[0].mxu0
      %v1243 = vadd.f32 %v1150, %v1242
      %v1244 = vpop.f32.mrb[0].mxu0
      %v1245 = vpop.f32.mrb[0].mxu0
      %v1246 = vadd.f32 %v1150, %v1245
      %v1247 = vpop.f32.mrb[0].mxu0
      %1248 = vmatprep.mubr.bf16.mxu0 0
      %1249 = vmatmul.mubr.bf16.gmra.mrb[0].mxu0 %v1127
      %v1250 = vpop.f32.mrb[0].mxu0
      %v1251 = vadd.f32 %v1150, %v1250
      %v1252 = vpop.f32.mrb[0].mxu0
      %v1253 = vpop.f32.mrb[0].mxu0
      %v1254 = vadd.f32 %v1150, %v1253
      %v1255 = vpop.f32.mrb[0].mxu0
      %1256 = vmatprep.mubr.bf16.mxu0 0
      %1257 = vmatmul.mubr.bf16.gmra.mrb[0].mxu0 %v1128
      %v1258 = vpop.f32.mrb[0].mxu0
      %v1259 = vadd.f32 %v1150, %v1258
      %v1260 = vpop.f32.mrb[0].mxu0
      %v1261 = vpop.f32.mrb[0].mxu0
      %v1262 = vadd.f32 %v1150, %v1261
      %v1263 = vpop.f32.mrb[0].mxu0
      %1264 = vdwg.mxu0
      %v1265 = vpack.c.bf16 %v1238, %v1235
      %v1266 = vpack.c.bf16 %v1246, %v1243
      %v1267 = vpack.c.bf16 %v1254, %v1251
      %v1268 = vpack.c.bf16 %v1262, %v1259
      %v1269 = vld [vmem:[%s9] sm:$0xf]
      %v1270 = vld [vmem:[%s9 + $0x4] sm:$0xf]
      %v1271 = vld [vmem:[%s9 + $0x8] sm:$0xf]
      %v1272 = vld [vmem:[%s9 + $0xc] sm:$0xf]
      %v1273 = vld [vmem:[%s9 + $0x10] sm:$0xf]
      %v1274 = vld [vmem:[%s9 + $0x14] sm:$0xf]
      %v1275 = vld [vmem:[%s9 + $0x18] sm:$0xf]
      %v1276 = vld [vmem:[%s9 + $0x1c] sm:$0xf]
      %v1277 = vld [vmem:[%s9 + $0x20] sm:$0xf]
      %v1278 = vld [vmem:[%s9 + $0x24] sm:$0xf]
      %v1279 = vld [vmem:[%s9 + $0x28] sm:$0xf]
      %v1280 = vld [vmem:[%s9 + $0x2c] sm:$0xf]
      %v1281 = vld [vmem:[%s9 + $0x30] sm:$0xf]
      %v1282 = vld [vmem:[%s9 + $0x34] sm:$0xf]
      %v1283 = vld [vmem:[%s9 + $0x38] sm:$0xf]
      %v1284 = vld [vmem:[%s9 + $0x3c] sm:$0xf]
      %v1285 = vld [vmem:[%s10] sm:$0x1]
      %v1287 = vlaneseq
      %v1288 = vshrl.u32 %v1287, 7
      %v1289 = vsub.s32 0, %v1288
      %v1290 = vrot.slane %v1285, %v1289
      %v1308 = vunpack.c.l.b16 %v1269
      %v1309 = vunpack.c.l.b16 %v1270
      %v1310 = vunpack.c.l.b16 %v1271
      %v1311 = vunpack.c.l.b16 %v1272
      %v1312 = vunpack.c.l.b16 %v1273
      %v1313 = vunpack.c.l.b16 %v1274
      %v1314 = vunpack.c.l.b16 %v1275
      %v1315 = vunpack.c.l.b16 %v1276
      %v1316 = vunpack.c.l.b16 %v1277
      %v1317 = vunpack.c.l.b16 %v1278
      %v1318 = vunpack.c.l.b16 %v1279
      %v1319 = vunpack.c.l.b16 %v1280
      %v1320 = vunpack.c.l.b16 %v1281
      %v1321 = vunpack.c.l.b16 %v1282
      %v1322 = vunpack.c.l.b16 %v1283
      %v1323 = vunpack.c.l.b16 %v1284
      %v1324 = vpack.c.b16 %v1309, %v1308
      %v1325 = vpack.c.b16 %v1311, %v1310
      %v1326 = vpack.c.b16 %v1313, %v1312
      %v1327 = vpack.c.b16 %v1315, %v1314
      %v1328 = vpack.c.b16 %v1317, %v1316
      %v1329 = vpack.c.b16 %v1319, %v1318
      %v1330 = vpack.c.b16 %v1321, %v1320
      %v1331 = vpack.c.b16 %v1323, %v1322
      %1340 = vmatprep.subr.bf16.mxu0 0
      %1341 = vmatpush1.bf16.msra.mxu0 %v1324
      %1342 = vmatprep.subr.bf16.mxu0 0
      %1343 = vmatpush1.bf16.msra.mxu0 %v1325
      %1344 = vmatprep.subr.bf16.mxu0 0
      %1345 = vmatpush1.bf16.msra.mxu0 %v1326
      %1346 = vmatprep.subr.bf16.mxu0 0
      %1347 = vmatpush1.bf16.msra.mxu0 %v1327
      %1348 = vmatprep.subr.bf16.mxu0 0
      %1349 = vmatpush1.bf16.msra.mxu0 %v1328
      %1350 = vmatprep.subr.bf16.mxu0 0
      %1351 = vmatpush1.bf16.msra.mxu0 %v1329
      %1352 = vmatprep.subr.bf16.mxu0 0
      %1353 = vmatpush1.bf16.msra.mxu0 %v1330
      %1354 = vmatprep.subr.bf16.mxu0 0
      %1355 = vmatpush1.bf16.msra.mxu0 %v1331
      %1356 = vmatprep.subr.bf16.mxu0 0
      %1357 = vmatpush1.bf16.msra.mxu0 0
      %1358 = vmatprep.subr.bf16.mxu0 0
      %1359 = vmatpush1.bf16.msra.mxu0 0
      %1360 = vmatprep.subr.bf16.mxu0 0
      %1361 = vmatpush1.bf16.msra.mxu0 0
      %1362 = vmatprep.subr.bf16.mxu0 0
      %1363 = vmatpush1.bf16.msra.mxu0 0
      %1364 = vmatprep.subr.bf16.mxu0 0
      %1365 = vmatpush1.bf16.msra.mxu0 0
      %1366 = vmatprep.subr.bf16.mxu0 0
      %1367 = vmatpush1.bf16.msra.mxu0 0
      %1368 = vmatprep.subr.bf16.mxu0 0
      %1369 = vmatpush1.bf16.msra.mxu0 0
      %1370 = vmatprep.subr.bf16.mxu0 0
      %1371 = vmatpush1.bf16.msra.mxu0 0
      %1372 = vmatprep.mubr.bf16.mxu0 0
      %1373 = vmatmul.mubr.bf16.gmra.mrb[0].mxu0 %v1265
      %v1374 = vpop.f32.mrb[0].mxu0
      %v1375 = vadd.f32 %v1290, %v1374
      %v1376 = vpop.f32.mrb[0].mxu0
      %v1377 = vpop.f32.mrb[0].mxu0
      %v1378 = vadd.f32 %v1290, %v1377
      %v1379 = vpop.f32.mrb[0].mxu0
      %1380 = vmatprep.mubr.bf16.mxu0 0
      %1381 = vmatmul.mubr.bf16.gmra.mrb[0].mxu0 %v1266
      %v1382 = vpop.f32.mrb[0].mxu0
      %v1383 = vadd.f32 %v1290, %v1382
      %v1384 = vpop.f32.mrb[0].mxu0
      %v1385 = vpop.f32.mrb[0].mxu0
      %v1386 = vadd.f32 %v1290, %v1385
      %v1387 = vpop.f32.mrb[0].mxu0
      %1388 = vmatprep.mubr.bf16.mxu0 0
      %1389 = vmatmul.mubr.bf16.gmra.mrb[0].mxu0 %v1267
      %v1390 = vpop.f32.mrb[0].mxu0
      %v1391 = vadd.f32 %v1290, %v1390
      %v1392 = vpop.f32.mrb[0].mxu0
      %v1393 = vpop.f32.mrb[0].mxu0
      %v1394 = vadd.f32 %v1290, %v1393
      %v1395 = vpop.f32.mrb[0].mxu0
      %1396 = vmatprep.mubr.bf16.mxu0 0
      %1397 = vmatmul.mubr.bf16.gmra.mrb[0].mxu0 %v1268
      %v1398 = vpop.f32.mrb[0].mxu0
      %v1399 = vadd.f32 %v1290, %v1398
      %v1400 = vpop.f32.mrb[0].mxu0
      %v1401 = vpop.f32.mrb[0].mxu0
      %v1402 = vadd.f32 %v1290, %v1401
      %v1403 = vpop.f32.mrb[0].mxu0
      %1404 = vdwg.mxu0
      %v1405 = vmax.f32 %v1375, 0.0
      %v1406 = vmax.f32 %v1378, 0.0
      %v1407 = vmax.f32 %v1383, 0.0
      %v1408 = vmax.f32 %v1386, 0.0
      %v1409 = vmax.f32 %v1391, 0.0
      %v1410 = vmax.f32 %v1394, 0.0
      %v1411 = vmax.f32 %v1399, 0.0
      %v1412 = vmax.f32 %v1402, 0.0
      %v1413 = vpack.c.bf16 %v1406, %v1405
      %v1414 = vpack.c.bf16 %v1408, %v1407
      %v1415 = vpack.c.bf16 %v1410, %v1409
      %v1416 = vpack.c.bf16 %v1412, %v1411
      %v1421 = vunpack.c.l.b16 %v1413
      %v1422 = vunpack.c.h.b16 %v1413
      %v1423 = vunpack.c.l.b16 %v1414
      %v1424 = vunpack.c.h.b16 %v1414
      %v1425 = vunpack.c.l.b16 %v1415
      %v1426 = vunpack.c.h.b16 %v1415
      %v1427 = vunpack.c.l.b16 %v1416
      %v1428 = vunpack.c.h.b16 %v1416
      %v1429 = vpack.c.b16 %v1421, %v1421
      %v1430 = vpack.c.b16 %v1422, %v1422
      %v1431 = vpack.c.b16 %v1423, %v1423
      %v1432 = vpack.c.b16 %v1424, %v1424
      %v1433 = vpack.c.b16 %v1425, %v1425
      %v1434 = vpack.c.b16 %v1426, %v1426
      %v1435 = vpack.c.b16 %v1427, %v1427
      %v1436 = vpack.c.b16 %v1428, %v1428
      %1445 = vst [vmem:[%s386] sm:$0xf] %v1429
      %1446 = vst [vmem:[%s386 + $0x4] sm:$0xf] %v1430
      %1447 = vst [vmem:[%s386 + $0x8] sm:$0xf] %v1431
      %1448 = vst [vmem:[%s386 + $0xc] sm:$0xf] %v1432
      %1449 = vst [vmem:[%s386 + $0x10] sm:$0xf] %v1433
      %1450 = vst [vmem:[%s386 + $0x14] sm:$0xf] %v1434
      %1451 = vst [vmem:[%s386 + $0x18] sm:$0xf] %v1435
      %1452 = vst [vmem:[%s386 + $0x1c] sm:$0xf] %v1436
      %p1453 = scmp.lt.s32.totalorder %s22, 1
      %s1454 = scalar_select %p1453, %s22, 1
      %s1455 = smul.addr %s1454, 8
      %s1456 = smul.addr %s1455, 4
      %s1457 = scalar_lea.vmem %s11, %s1456
      // Predicated region
      $region65: #{mobilenet_v3_forward.5} parent=63 // pred_check
        %p1458 = pneg %p276
      $region66: #{mobilenet_v3_forward.5} parent=63 // pred_check_branch
        %1460 = sbr.rel (%p1458) target = $region68
      $region67: #{mobilenet_v3_forward.5} parent=63 // pred_region
        _
      $region68: #{mobilenet_v3_forward.5} parent=63 // pred_fallthru
        _
    $region64: #{mobilenet_v3_forward.5} parent=5 // pred_fallthru
      _
    %p1461 = scmp.le.s32.totalorder 2, %s17
    // Predicated region
    $region69: #{mobilenet_v3_forward.5} parent=5 // pred_check
      %p1462 = pneg %p1461
    $region70: #{mobilenet_v3_forward.5} parent=5 // pred_check_branch
      %1464 = sbr.rel (%p1462) target = $region72
    $region71: #{mobilenet_v3_forward.5} parent=5 // pred_region
      %s1465 = ssub.s32 %s17, 2
      // Predicated region
      $region73: #{mobilenet_v3_forward.5} parent=71 // pred_check
        %p1466 = pneg %p282
      $region74: #{mobilenet_v3_forward.5} parent=71 // pred_check_branch
        %1468 = sbr.rel (%p1466) target = $region76
      $region75: #{mobilenet_v3_forward.5} parent=71 // pred_region
        %p1469 = scmp.lt.s32.totalorder %s23, 1
        %s1470 = scalar_select %p1469, %s23, 1
        %s1471 = smul.addr %s1470, 8
        %s1472 = smul.addr %s1471, 4
        %s1473 = scalar_lea.vmem %s11, %s1472
      $region76: #{mobilenet_v3_forward.5} parent=71 // pred_fallthru
        _
    $region72: #{mobilenet_v3_forward.5} parent=5 // pred_fallthru
      _
  $region6: #{mobilenet_v3_forward.5} parent=0 // loop_footer
    %s21 = sadd.s32 1, %s17
  $region7: #{mobilenet_v3_forward.5} parent=0 // loop_footer_branch
    %16 = sbr.rel target = $region3
  $region8: #{mobilenet_v3_forward.5} parent=0 // loop_exit
    _

// kernel: mobilenet_v3_forward.6
$region0: #{mobilenet_v3_forward.6}
  #allocation0 [shape = 'u32[]', space=smem, size = 0x4, offset = 0x4, fixed_abs, tag = 'smem constant byte address 0x4 - core index']
  #allocation1 [shape = 'u32[144,128]{1,0:T(1,128)}', space=vmem, size = 0x12000, scoped, tag = 'internal scratch']
  #allocation2 [shape = 'f32[16,128]{1,0:T(8,128)}', space=vmem, size = 0x2000, scoped, tag = 'scratch operand']
  #allocation3 [shape = 'f32[6,6,128]{2,1,0:T(8,128)}', space=vmem, size = 0x6000, scoped, tag = 'scratch operand']
  #allocation4 [shape = 'f32[16,128]{1,0:T(8,128)}', space=vmem, size = 0x2000, scoped, tag = 'scratch operand']
  %s0 = inlined_call_operand.vmem [shape: bf16[2,4,5,5,128], index: 0, kind: input, shape index: {}]
  %s1 = inlined_call_operand.vmem [shape: f32[9,128], index: 1, kind: input, shape index: {}]
  %s2 = inlined_call_operand.vmem [shape: f32[1,128], index: 2, kind: input, shape index: {}]
  %s3 = inlined_call_operand.vmem [shape: bf16[128,128], index: 3, kind: input, shape index: {}]
  %s4 = inlined_call_operand.vmem [shape: f32[1,128], index: 4, kind: input, shape index: {}]
  %s5 = inlined_call_operand.vmem [shape: bf16[128,128], index: 5, kind: input, shape index: {}]
  %s6 = inlined_call_operand.vmem [shape: f32[1,128], index: 6, kind: input, shape index: {}]
  %s7 = inlined_call_operand.vmem [shape: f32[9,128], index: 7, kind: input, shape index: {}]
  %s8 = inlined_call_operand.vmem [shape: f32[1,128], index: 8, kind: input, shape index: {}]
  %s9 = inlined_call_operand.vmem [shape: bf16[128,128], index: 9, kind: input, shape index: {}]
  %s10 = inlined_call_operand.vmem [shape: f32[1,128], index: 10, kind: input, shape index: {}]
  %s11 = inlined_call_operand.vmem [shape: bf16[128,128], index: 11, kind: input, shape index: {}]
  %s12 = inlined_call_operand.vmem [shape: f32[1,128], index: 12, kind: input, shape index: {}]
  %s13 = inlined_call_operand.vmem [shape: bf16[2,16,128], index: 13, kind: output, shape index: {}]
  %s14 = sld [smem:[#allocation0]]
  $region85: #{mobilenet_v3_forward.6} parent=0
    _
  %s16 = ssub.s32 1, %s14
  %s17 = scalar_select 0, %s16, %s14
  loop: start=0, step=1, limit=4
  $region2: #{mobilenet_v3_forward.6} parent=0 // loop_pre_header
    _
  $region3: #{mobilenet_v3_forward.6} parent=0 // loop_header
    %s19 = sphi 0, %s23
    %p20 = scmp.ge.s32.totalorder %s19, 4
    %s29 = sphi 0, %s31
    %s32 = sphi 0, %s29
    %s33 = sphi 0, %s32
    %s49 = sphi 0, %s33
    %s53 = sphi 0, %s53
    %s55 = sphi 0, %s53
    %s56 = sphi 0, %s55
    %s70 = sphi 0, %s56
    %s74 = sphi 0, %s74
    %s76 = sphi 0, %s74
    %s77 = sphi 0, %s76
    %s91 = sphi 0, %s77
    %s95 = sphi 0, %s95
    %s97 = sphi 0, %s95
    %s98 = sphi 0, %s97
    %s112 = sphi 0, %s98
    %s116 = sphi 0, %s116
    %s118 = sphi 0, %s116
    %s119 = sphi 0, %s118
    %s133 = sphi 0, %s119
    %s137 = sphi 0, %s137
    %s139 = sphi 0, %s137
    %s140 = sphi 0, %s139
    %s154 = sphi 0, %s140
    %s158 = sphi 0, %s158
    %s160 = sphi 0, %s158
    %s161 = sphi 0, %s160
    %s175 = sphi 0, %s161
    %s179 = sphi 0, %s179
    %s181 = sphi 0, %s179
    %s182 = sphi 0, %s181
    %s196 = sphi 0, %s182
    %s200 = sphi 0, %s200
    %s202 = sphi 0, %s200
    %s203 = sphi 0, %s202
    %s217 = sphi 0, %s203
    %s221 = sphi 0, %s221
    %s223 = sphi 0, %s221
    %s224 = sphi 0, %s223
    %s238 = sphi 0, %s224
    %s242 = sphi 0, %s242
    %s244 = sphi 0, %s242
    %s245 = sphi 0, %s244
    %s259 = sphi 0, %s245
    %s263 = sphi 0, %s263
    %s265 = sphi 0, %s263
    %s266 = sphi 0, %s265
    %s280 = sphi 0, %s266
    %s284 = sphi 0, %s284
    %s286 = sphi 0, %s284
    %s287 = sphi 0, %s286
    %s301 = sphi 0, %s287
    %s307 = sphi 0, %s309
    %s310 = sphi 0, %s307
    %s311 = sphi 0, %s310
    %s327 = sphi 0, %s311
  $region4: #{mobilenet_v3_forward.6} parent=0 // loop_header_branch
    %22 = sbr.rel (%p20) target = $region8
  $region5: #{mobilenet_v3_forward.6} parent=0 // loop_body
    %s24 = ssub.s32 %s19, 1
    %s25 = ssub.s32 %s19, 2
    %s26 = sadd.s32 %s19, 1
    %s27 = ssub.s32 %s19, %s26
    %p28 = scmp.eq.s32.totalorder %s27, 0
    %s30 = sadd.s32 %s29, 1
    %s31 = scalar_select %p28, %s29, %s30
    %p34 = pneg %p28
    %p35 = scmp.eq.s32.totalorder %s19, 1
    %p36 = por %p34, %p35
    %p37 = scmp.ne.s32.totalorder %s29, %s32
    %p38 = scmp.eq.s32.totalorder %s19, 0
    %p39 = por %p37, %p38
    %p40 = scmp.ne.s32.totalorder %s29, %s32
    %p41 = scmp.eq.s32.totalorder %s24, 1
    %p42 = por %p40, %p41
    %p43 = scmp.ne.s32.totalorder %s32, %s33
    %p44 = scmp.eq.s32.totalorder %s24, 0
    %p45 = por %p43, %p44
    %p46 = scmp.ne.s32.totalorder %s32, %s33
    %p47 = scmp.eq.s32.totalorder %s25, 1
    %p48 = por %p46, %p47
    %p50 = scmp.ne.s32.totalorder %s33, %s49
    %p51 = scmp.eq.s32.totalorder %s25, 0
    %p52 = por %p50, %p51
    %s54 = sadd.s32 %s53, 1
    %p57 = scmp.eq.s32.totalorder %s19, 1
    %p58 = scmp.ne.s32.totalorder %s53, %s55
    %p59 = scmp.eq.s32.totalorder %s19, 0
    %p60 = por %p58, %p59
    %p61 = scmp.ne.s32.totalorder %s53, %s55
    %p62 = scmp.eq.s32.totalorder %s24, 1
    %p63 = por %p61, %p62
    %p64 = scmp.ne.s32.totalorder %s55, %s56
    %p65 = scmp.eq.s32.totalorder %s24, 0
    %p66 = por %p64, %p65
    %p67 = scmp.ne.s32.totalorder %s55, %s56
    %p68 = scmp.eq.s32.totalorder %s25, 1
    %p69 = por %p67, %p68
    %p71 = scmp.ne.s32.totalorder %s56, %s70
    %p72 = scmp.eq.s32.totalorder %s25, 0
    %p73 = por %p71, %p72
    %s75 = sadd.s32 %s74, 1
    %p78 = scmp.eq.s32.totalorder %s19, 1
    %p79 = scmp.ne.s32.totalorder %s74, %s76
    %p80 = scmp.eq.s32.totalorder %s19, 0
    %p81 = por %p79, %p80
    %p82 = scmp.ne.s32.totalorder %s74, %s76
    %p83 = scmp.eq.s32.totalorder %s24, 1
    %p84 = por %p82, %p83
    %p85 = scmp.ne.s32.totalorder %s76, %s77
    %p86 = scmp.eq.s32.totalorder %s24, 0
    %p87 = por %p85, %p86
    %p88 = scmp.ne.s32.totalorder %s76, %s77
    %p89 = scmp.eq.s32.totalorder %s25, 1
    %p90 = por %p88, %p89
    %p92 = scmp.ne.s32.totalorder %s77, %s91
    %p93 = scmp.eq.s32.totalorder %s25, 0
    %p94 = por %p92, %p93
    %s96 = sadd.s32 %s95, 1
    %p99 = scmp.eq.s32.totalorder %s19, 1
    %p100 = scmp.ne.s32.totalorder %s95, %s97
    %p101 = scmp.eq.s32.totalorder %s19, 0
    %p102 = por %p100, %p101
    %p103 = scmp.ne.s32.totalorder %s95, %s97
    %p104 = scmp.eq.s32.totalorder %s24, 1
    %p105 = por %p103, %p104
    %p106 = scmp.ne.s32.totalorder %s97, %s98
    %p107 = scmp.eq.s32.totalorder %s24, 0
    %p108 = por %p106, %p107
    %p109 = scmp.ne.s32.totalorder %s97, %s98
    %p110 = scmp.eq.s32.totalorder %s25, 1
    %p111 = por %p109, %p110
    %p113 = scmp.ne.s32.totalorder %s98, %s112
    %p114 = scmp.eq.s32.totalorder %s25, 0
    %p115 = por %p113, %p114
    %s117 = sadd.s32 %s116, 1
    %p120 = scmp.eq.s32.totalorder %s19, 1
    %p121 = scmp.ne.s32.totalorder %s116, %s118
    %p122 = scmp.eq.s32.totalorder %s19, 0
    %p123 = por %p121, %p122
    %p124 = scmp.ne.s32.totalorder %s116, %s118
    %p125 = scmp.eq.s32.totalorder %s24, 1
    %p126 = por %p124, %p125
    %p127 = scmp.ne.s32.totalorder %s118, %s119
    %p128 = scmp.eq.s32.totalorder %s24, 0
    %p129 = por %p127, %p128
    %p130 = scmp.ne.s32.totalorder %s118, %s119
    %p131 = scmp.eq.s32.totalorder %s25, 1
    %p132 = por %p130, %p131
    %p134 = scmp.ne.s32.totalorder %s119, %s133
    %p135 = scmp.eq.s32.totalorder %s25, 0
    %p136 = por %p134, %p135
    %s138 = sadd.s32 %s137, 1
    %p141 = scmp.eq.s32.totalorder %s19, 1
    %p142 = scmp.ne.s32.totalorder %s137, %s139
    %p143 = scmp.eq.s32.totalorder %s19, 0
    %p144 = por %p142, %p143
    %p145 = scmp.ne.s32.totalorder %s137, %s139
    %p146 = scmp.eq.s32.totalorder %s24, 1
    %p147 = por %p145, %p146
    %p148 = scmp.ne.s32.totalorder %s139, %s140
    %p149 = scmp.eq.s32.totalorder %s24, 0
    %p150 = por %p148, %p149
    %p151 = scmp.ne.s32.totalorder %s139, %s140
    %p152 = scmp.eq.s32.totalorder %s25, 1
    %p153 = por %p151, %p152
    %p155 = scmp.ne.s32.totalorder %s140, %s154
    %p156 = scmp.eq.s32.totalorder %s25, 0
    %p157 = por %p155, %p156
    %s159 = sadd.s32 %s158, 1
    %p162 = scmp.eq.s32.totalorder %s19, 1
    %p163 = scmp.ne.s32.totalorder %s158, %s160
    %p164 = scmp.eq.s32.totalorder %s19, 0
    %p165 = por %p163, %p164
    %p166 = scmp.ne.s32.totalorder %s158, %s160
    %p167 = scmp.eq.s32.totalorder %s24, 1
    %p168 = por %p166, %p167
    %p169 = scmp.ne.s32.totalorder %s160, %s161
    %p170 = scmp.eq.s32.totalorder %s24, 0
    %p171 = por %p169, %p170
    %p172 = scmp.ne.s32.totalorder %s160, %s161
    %p173 = scmp.eq.s32.totalorder %s25, 1
    %p174 = por %p172, %p173
    %p176 = scmp.ne.s32.totalorder %s161, %s175
    %p177 = scmp.eq.s32.totalorder %s25, 0
    %p178 = por %p176, %p177
    %s180 = sadd.s32 %s179, 1
    %p183 = scmp.eq.s32.totalorder %s19, 1
    %p184 = scmp.ne.s32.totalorder %s179, %s181
    %p185 = scmp.eq.s32.totalorder %s19, 0
    %p186 = por %p184, %p185
    %p187 = scmp.ne.s32.totalorder %s179, %s181
    %p188 = scmp.eq.s32.totalorder %s24, 1
    %p189 = por %p187, %p188
    %p190 = scmp.ne.s32.totalorder %s181, %s182
    %p191 = scmp.eq.s32.totalorder %s24, 0
    %p192 = por %p190, %p191
    %p193 = scmp.ne.s32.totalorder %s181, %s182
    %p194 = scmp.eq.s32.totalorder %s25, 1
    %p195 = por %p193, %p194
    %p197 = scmp.ne.s32.totalorder %s182, %s196
    %p198 = scmp.eq.s32.totalorder %s25, 0
    %p199 = por %p197, %p198
    %s201 = sadd.s32 %s200, 1
    %p204 = scmp.eq.s32.totalorder %s19, 1
    %p205 = scmp.ne.s32.totalorder %s200, %s202
    %p206 = scmp.eq.s32.totalorder %s19, 0
    %p207 = por %p205, %p206
    %p208 = scmp.ne.s32.totalorder %s200, %s202
    %p209 = scmp.eq.s32.totalorder %s24, 1
    %p210 = por %p208, %p209
    %p211 = scmp.ne.s32.totalorder %s202, %s203
    %p212 = scmp.eq.s32.totalorder %s24, 0
    %p213 = por %p211, %p212
    %p214 = scmp.ne.s32.totalorder %s202, %s203
    %p215 = scmp.eq.s32.totalorder %s25, 1
    %p216 = por %p214, %p215
    %p218 = scmp.ne.s32.totalorder %s203, %s217
    %p219 = scmp.eq.s32.totalorder %s25, 0
    %p220 = por %p218, %p219
    %s222 = sadd.s32 %s221, 1
    %p225 = scmp.eq.s32.totalorder %s19, 1
    %p226 = scmp.ne.s32.totalorder %s221, %s223
    %p227 = scmp.eq.s32.totalorder %s19, 0
    %p228 = por %p226, %p227
    %p229 = scmp.ne.s32.totalorder %s221, %s223
    %p230 = scmp.eq.s32.totalorder %s24, 1
    %p231 = por %p229, %p230
    %p232 = scmp.ne.s32.totalorder %s223, %s224
    %p233 = scmp.eq.s32.totalorder %s24, 0
    %p234 = por %p232, %p233
    %p235 = scmp.ne.s32.totalorder %s223, %s224
    %p236 = scmp.eq.s32.totalorder %s25, 1
    %p237 = por %p235, %p236
    %p239 = scmp.ne.s32.totalorder %s224, %s238
    %p240 = scmp.eq.s32.totalorder %s25, 0
    %p241 = por %p239, %p240
    %s243 = sadd.s32 %s242, 1
    %p246 = scmp.eq.s32.totalorder %s19, 1
    %p247 = scmp.ne.s32.totalorder %s242, %s244
    %p248 = scmp.eq.s32.totalorder %s19, 0
    %p249 = por %p247, %p248
    %p250 = scmp.ne.s32.totalorder %s242, %s244
    %p251 = scmp.eq.s32.totalorder %s24, 1
    %p252 = por %p250, %p251
    %p253 = scmp.ne.s32.totalorder %s244, %s245
    %p254 = scmp.eq.s32.totalorder %s24, 0
    %p255 = por %p253, %p254
    %p256 = scmp.ne.s32.totalorder %s244, %s245
    %p257 = scmp.eq.s32.totalorder %s25, 1
    %p258 = por %p256, %p257
    %p260 = scmp.ne.s32.totalorder %s245, %s259
    %p261 = scmp.eq.s32.totalorder %s25, 0
    %p262 = por %p260, %p261
    %s264 = sadd.s32 %s263, 1
    %p267 = scmp.eq.s32.totalorder %s19, 1
    %p268 = scmp.ne.s32.totalorder %s263, %s265
    %p269 = scmp.eq.s32.totalorder %s19, 0
    %p270 = por %p268, %p269
    %p271 = scmp.ne.s32.totalorder %s263, %s265
    %p272 = scmp.eq.s32.totalorder %s24, 1
    %p273 = por %p271, %p272
    %p274 = scmp.ne.s32.totalorder %s265, %s266
    %p275 = scmp.eq.s32.totalorder %s24, 0
    %p276 = por %p274, %p275
    %p277 = scmp.ne.s32.totalorder %s265, %s266
    %p278 = scmp.eq.s32.totalorder %s25, 1
    %p279 = por %p277, %p278
    %p281 = scmp.ne.s32.totalorder %s266, %s280
    %p282 = scmp.eq.s32.totalorder %s25, 0
    %p283 = por %p281, %p282
    %s285 = sadd.s32 %s284, 1
    %p288 = scmp.eq.s32.totalorder %s19, 1
    %p289 = scmp.ne.s32.totalorder %s284, %s286
    %p290 = scmp.eq.s32.totalorder %s19, 0
    %p291 = por %p289, %p290
    %p292 = scmp.ne.s32.totalorder %s284, %s286
    %p293 = scmp.eq.s32.totalorder %s24, 1
    %p294 = por %p292, %p293
    %p295 = scmp.ne.s32.totalorder %s286, %s287
    %p296 = scmp.eq.s32.totalorder %s24, 0
    %p297 = por %p295, %p296
    %p298 = scmp.ne.s32.totalorder %s286, %s287
    %p299 = scmp.eq.s32.totalorder %s25, 1
    %p300 = por %p298, %p299
    %p302 = scmp.ne.s32.totalorder %s287, %s301
    %p303 = scmp.eq.s32.totalorder %s25, 0
    %p304 = por %p302, %p303
    %s305 = ssub.s32 %s19, %s26
    %p306 = scmp.eq.s32.totalorder %s305, 0
    %s308 = sadd.s32 %s307, 1
    %s309 = scalar_select %p306, %s307, %s308
    %p312 = pneg %p306
    %p313 = scmp.eq.s32.totalorder %s19, 1
    %p314 = por %p312, %p313
    %p315 = scmp.ne.s32.totalorder %s307, %s310
    %p316 = scmp.eq.s32.totalorder %s19, 0
    %p317 = por %p315, %p316
    %p318 = scmp.ne.s32.totalorder %s307, %s310
    %p319 = scmp.eq.s32.totalorder %s24, 1
    %p320 = por %p318, %p319
    %p321 = scmp.ne.s32.totalorder %s310, %s311
    %p322 = scmp.eq.s32.totalorder %s24, 0
    %p323 = por %p321, %p322
    %p324 = scmp.ne.s32.totalorder %s310, %s311
    %p325 = scmp.eq.s32.totalorder %s25, 1
    %p326 = por %p324, %p325
    %p328 = scmp.ne.s32.totalorder %s311, %s327
    %p329 = scmp.eq.s32.totalorder %s25, 0
    %p330 = por %p328, %p329
    %p331 = scmp.le.s32.totalorder 1, %s19
    %p332 = scmp.lt.s32.totalorder %s19, 3
    %p333 = pnand %p331, %p332
    %p334 = pneg %p333
    // Predicated region
    $region9: #{mobilenet_v3_forward.6} parent=5 // pred_check
      _
    $region10: #{mobilenet_v3_forward.6} parent=5 // pred_check_branch
      %336 = sbr.rel (%p333) target = $region12
    $region11: #{mobilenet_v3_forward.6} parent=5 // pred_region
      %s337 = ssub.s32 %s19, 1
      // Predicated region
      $region13: #{mobilenet_v3_forward.6} parent=11 // pred_check
        %p338 = pneg %p66
      $region14: #{mobilenet_v3_forward.6} parent=11 // pred_check_branch
        %340 = sbr.rel (%p338) target = $region16
      $region15: #{mobilenet_v3_forward.6} parent=11 // pred_region
        _
      $region16: #{mobilenet_v3_forward.6} parent=11 // pred_fallthru
        _
      // Predicated region
      $region17: #{mobilenet_v3_forward.6} parent=11 // pred_check
        %p341 = pneg %p87
      $region18: #{mobilenet_v3_forward.6} parent=11 // pred_check_branch
        %343 = sbr.rel (%p341) target = $region20
      $region19: #{mobilenet_v3_forward.6} parent=11 // pred_region
        _
      $region20: #{mobilenet_v3_forward.6} parent=11 // pred_fallthru
        _
      // Predicated region
      $region21: #{mobilenet_v3_forward.6} parent=11 // pred_check
        %p344 = pneg %p108
      $region22: #{mobilenet_v3_forward.6} parent=11 // pred_check_branch
        %346 = sbr.rel (%p344) target = $region24
      $region23: #{mobilenet_v3_forward.6} parent=11 // pred_region
        _
      $region24: #{mobilenet_v3_forward.6} parent=11 // pred_fallthru
        _
      // Predicated region
      $region25: #{mobilenet_v3_forward.6} parent=11 // pred_check
        %p347 = pneg %p129
      $region26: #{mobilenet_v3_forward.6} parent=11 // pred_check_branch
        %349 = sbr.rel (%p347) target = $region28
      $region27: #{mobilenet_v3_forward.6} parent=11 // pred_region
        _
      $region28: #{mobilenet_v3_forward.6} parent=11 // pred_fallthru
        _
      // Predicated region
      $region29: #{mobilenet_v3_forward.6} parent=11 // pred_check
        %p350 = pneg %p150
      $region30: #{mobilenet_v3_forward.6} parent=11 // pred_check_branch
        %352 = sbr.rel (%p350) target = $region32
      $region31: #{mobilenet_v3_forward.6} parent=11 // pred_region
        _
      $region32: #{mobilenet_v3_forward.6} parent=11 // pred_fallthru
        _
      // Predicated region
      $region33: #{mobilenet_v3_forward.6} parent=11 // pred_check
        %p353 = pneg %p171
      $region34: #{mobilenet_v3_forward.6} parent=11 // pred_check_branch
        %355 = sbr.rel (%p353) target = $region36
      $region35: #{mobilenet_v3_forward.6} parent=11 // pred_region
        _
      $region36: #{mobilenet_v3_forward.6} parent=11 // pred_fallthru
        _
      // Predicated region
      $region37: #{mobilenet_v3_forward.6} parent=11 // pred_check
        %p356 = pneg %p192
      $region38: #{mobilenet_v3_forward.6} parent=11 // pred_check_branch
        %358 = sbr.rel (%p356) target = $region40
      $region39: #{mobilenet_v3_forward.6} parent=11 // pred_region
        _
      $region40: #{mobilenet_v3_forward.6} parent=11 // pred_fallthru
        _
      // Predicated region
      $region41: #{mobilenet_v3_forward.6} parent=11 // pred_check
        %p359 = pneg %p213
      $region42: #{mobilenet_v3_forward.6} parent=11 // pred_check_branch
        %361 = sbr.rel (%p359) target = $region44
      $region43: #{mobilenet_v3_forward.6} parent=11 // pred_region
        _
      $region44: #{mobilenet_v3_forward.6} parent=11 // pred_fallthru
        _
      // Predicated region
      $region45: #{mobilenet_v3_forward.6} parent=11 // pred_check
        %p362 = pneg %p234
      $region46: #{mobilenet_v3_forward.6} parent=11 // pred_check_branch
        %364 = sbr.rel (%p362) target = $region48
      $region47: #{mobilenet_v3_forward.6} parent=11 // pred_region
        _
      $region48: #{mobilenet_v3_forward.6} parent=11 // pred_fallthru
        _
      // Predicated region
      $region49: #{mobilenet_v3_forward.6} parent=11 // pred_check
        %p365 = pneg %p255
      $region50: #{mobilenet_v3_forward.6} parent=11 // pred_check_branch
        %367 = sbr.rel (%p365) target = $region52
      $region51: #{mobilenet_v3_forward.6} parent=11 // pred_region
        _
      $region52: #{mobilenet_v3_forward.6} parent=11 // pred_fallthru
        _
      // Predicated region
      $region53: #{mobilenet_v3_forward.6} parent=11 // pred_check
        %p368 = pneg %p276
      $region54: #{mobilenet_v3_forward.6} parent=11 // pred_check_branch
        %370 = sbr.rel (%p368) target = $region56
      $region55: #{mobilenet_v3_forward.6} parent=11 // pred_region
        _
      $region56: #{mobilenet_v3_forward.6} parent=11 // pred_fallthru
        _
      // Predicated region
      $region57: #{mobilenet_v3_forward.6} parent=11 // pred_check
        %p371 = pneg %p297
      $region58: #{mobilenet_v3_forward.6} parent=11 // pred_check_branch
        %373 = sbr.rel (%p371) target = $region60
      $region59: #{mobilenet_v3_forward.6} parent=11 // pred_region
        _
      $region60: #{mobilenet_v3_forward.6} parent=11 // pred_fallthru
        _
    $region12: #{mobilenet_v3_forward.6} parent=5 // pred_fallthru
      _
    %p374 = scmp.lt.s32.totalorder %s19, 2
    // Predicated region
    $region61: #{mobilenet_v3_forward.6} parent=5 // pred_check
      %p375 = pneg %p374
    $region62: #{mobilenet_v3_forward.6} parent=5 // pred_check_branch
      %377 = sbr.rel (%p375) target = $region64
    $region63: #{mobilenet_v3_forward.6} parent=5 // pred_region
      // Predicated region
      $region65: #{mobilenet_v3_forward.6} parent=63 // pred_check
        %p378 = pneg %p39
      $region66: #{mobilenet_v3_forward.6} parent=63 // pred_check_branch
        %380 = sbr.rel (%p378) target = $region68
      $region67: #{mobilenet_v3_forward.6} parent=63 // pred_region
        %p381 = scmp.lt.s32.totalorder %s19, 1
        %s382 = scalar_select %p381, %s19, 1
        %s383 = smul.addr %s382, 20
        %s384 = smul.addr %s383, 4
        %s385 = scalar_lea.vmem %s0, %s384
      $region68: #{mobilenet_v3_forward.6} parent=63 // pred_fallthru
        _
    $region64: #{mobilenet_v3_forward.6} parent=5 // pred_fallthru
      _
    %p386 = scmp.le.s32.totalorder 1, %s19
    %p387 = scmp.lt.s32.totalorder %s19, 3
    %p388 = pnand %p386, %p387
    %p389 = pneg %p388
    // Predicated region
    $region69: #{mobilenet_v3_forward.6} parent=5 // pred_check
      _
    $region70: #{mobilenet_v3_forward.6} parent=5 // pred_check_branch
      %391 = sbr.rel (%p388) target = $region72
    $region71: #{mobilenet_v3_forward.6} parent=5 // pred_region
      %s392 = ssub.s32 %s19, 1
      %p393 = scmp.lt.s32.totalorder %s24, 1
      %s394 = scalar_select %p393, %s24, 1
      %s395 = smul.addr %s394, 20
      %s396 = smul.addr %s395, 4
      %s397 = scalar_lea.vmem %s0, %s396
      %p398 = pneg %p45
      %p399 = pneg %p42
      %p400 = pneg %p66
      %p401 = pneg %p63
      %p402 = pneg %p87
      %p403 = pneg %p84
      %p404 = pneg %p108
      %p405 = pneg %p105
      %p406 = pneg %p129
      %p407 = pneg %p126
      %p408 = pneg %p150
      %p409 = pneg %p147
      %p410 = pneg %p171
      %p411 = pneg %p168
      %p412 = pneg %p192
      %p413 = pneg %p189
      %p414 = pneg %p213
      %p415 = pneg %p210
      %p416 = pneg %p234
      %p417 = pneg %p231
      %p418 = pneg %p255
      %p419 = pneg %p252
      %p420 = pneg %p276
      %p421 = pneg %p273
      %p422 = pneg %p297
      %p423 = pneg %p294
      %p424 = pneg %p323
      %p425 = pneg %p320
      %p426 = scmp.lt.s32.totalorder %s24, 1
      %s427 = scalar_select %p426, %s24, 1
      %s428 = smul.addr %s427, 2
      %s429 = smul.addr %s428, 4
      %s430 = scalar_lea.vmem %s13, %s429
      %p431 = scmp.lt.s32.totalorder %s24, 1
      %s432 = scalar_select %p431, %s24, 1
      %s433 = smul.addr %s432, 20
      %s434 = smul.addr %s433, 4
      %s435 = scalar_lea.vmem %s0, %s434
      %p436 = scmp.lt.s32.totalorder %s24, 1
      %s437 = scalar_select %p436, %s24, 1
      %s438 = smul.addr %s437, 2
      %s439 = smul.addr %s438, 4
      %s440 = scalar_lea.vmem %s13, %s439
      %v442 = vld [vmem:[%s435] sm:$0x3]
      %v443 = vld [vmem:[%s435 + $0x4] sm:$0x3]
      %v444 = vld [vmem:[%s435 + $0x8] sm:$0x3]
      %v445 = vld [vmem:[%s435 + $0xc] sm:$0x3]
      %v446 = vld [vmem:[%s435 + $0x10] sm:$0x3]
      %v447 = vunpack.c.l.bf16 %v442
      %v448 = vunpack.c.l.bf16 %v443
      %v449 = vunpack.c.l.bf16 %v444
      %v450 = vunpack.c.l.bf16 %v445
      %v451 = vunpack.c.l.bf16 %v446
      %s452 = scalar_lea.vmem %s435, 40
      %v453 = vld [vmem:[%s452] sm:$0x3]
      %v454 = vld [vmem:[%s452 + $0x4] sm:$0x3]
      %v455 = vld [vmem:[%s452 + $0x8] sm:$0x3]
      %v456 = vld [vmem:[%s452 + $0xc] sm:$0x3]
      %v457 = vunpack.c.l.bf16 %v453
      %v458 = vunpack.c.l.bf16 %v454
      %v459 = vunpack.c.l.bf16 %v455
      %v460 = vunpack.c.l.bf16 %v456
      %v461 = vld [vmem:[%s1] sm:$0x1]
      %v462 = vlaneseq
      %v463 = vshrl.u32 %v462, 7
      %v464 = vsub.s32 0, %v463
      %v465 = vrot.slane %v461, %v464
      %v466 = vmul.f32 %v447, %v465
      %v467 = vmul.f32 %v448, %v465
      %v468 = vmul.f32 %v449, %v465
      %v469 = vmul.f32 %v450, %v465
      %v470 = vld [vmem:[%s1 + $0x3] sm:$0x1]
      %v471 = vlaneseq
      %v472 = vshrl.u32 %v471, 7
      %v473 = vsub.s32 0, %v472
      %v474 = vrot.slane %v470, %v473
      %v475 = vmul.f32 %v457, %v474
      %v476 = vmul.f32 %v458, %v474
      %v477 = vmul.f32 %v459, %v474
      %v478 = vmul.f32 %v460, %v474
      %v479 = vadd.f32 %v466, %v475
      %v480 = vadd.f32 %v467, %v476
      %v481 = vadd.f32 %v468, %v477
      %v482 = vadd.f32 %v469, %v478
      %v483 = vld [vmem:[%s1 + $0x6] sm:$0x1]
      %v484 = vlaneseq
      %v485 = vshrl.u32 %v484, 7
      %v486 = vsub.s32 0, %v485
      %v487 = vrot.slane %v483, %v486
      %v488 = vmul.f32 %v448, %v487
      %v489 = vmul.f32 %v449, %v487
      %v490 = vmul.f32 %v450, %v487
      %v491 = vmul.f32 %v451, %v487
      %v492 = vadd.f32 %v479, %v488
      %v493 = vadd.f32 %v480, %v489
      %v494 = vadd.f32 %v481, %v490
      %v495 = vadd.f32 %v482, %v491
      %s496 = scalar_lea.vmem %s435, 20
      %v497 = vld [vmem:[%s496] sm:$0x3]
      %v498 = vld [vmem:[%s496 + $0x4] sm:$0x3]
      %v499 = vld [vmem:[%s496 + $0x8] sm:$0x3]
      %v500 = vld [vmem:[%s496 + $0xc] sm:$0x3]
      %v501 = vld [vmem:[%s496 + $0x10] sm:$0x3]
      %v502 = vunpack.c.l.bf16 %v497
      %v503 = vunpack.c.l.bf16 %v498
      %v504 = vunpack.c.l.bf16 %v499
      %v505 = vunpack.c.l.bf16 %v500
      %v506 = vunpack.c.l.bf16 %v501
      %s507 = scalar_lea.vmem %s435, 60
      %v508 = vld [vmem:[%s507] sm:$0x3]
      %v509 = vld [vmem:[%s507 + $0x4] sm:$0x3]
      %v510 = vld [vmem:[%s507 + $0x8] sm:$0x3]
      %v511 = vld [vmem:[%s507 + $0xc] sm:$0x3]
      %v512 = vunpack.c.l.bf16 %v508
      %v513 = vunpack.c.l.bf16 %v509
      %v514 = vunpack.c.l.bf16 %v510
      %v515 = vunpack.c.l.bf16 %v511
      %v516 = vld [vmem:[%s1 + $0x1] sm:$0x1]
      %v517 = vlaneseq
      %v518 = vshrl.u32 %v517, 7
      %v519 = vsub.s32 0, %v518
      %v520 = vrot.slane %v516, %v519
      %v521 = vmul.f32 %v502, %v520
      %v522 = vmul.f32 %v503, %v520
      %v523 = vmul.f32 %v504, %v520
      %v524 = vmul.f32 %v505, %v520
      %v525 = vadd.f32 %v492, %v521
      %v526 = vadd.f32 %v493, %v522
      %v527 = vadd.f32 %v494, %v523
      %v528 = vadd.f32 %v495, %v524
      %v529 = vld [vmem:[%s1 + $0x4] sm:$0x1]
      %v530 = vlaneseq
      %v531 = vshrl.u32 %v530, 7
      %v532 = vsub.s32 0, %v531
      %v533 = vrot.slane %v529, %v532
      %v534 = vmul.f32 %v512, %v533
      %v535 = vmul.f32 %v513, %v533
      %v536 = vmul.f32 %v514, %v533
      %v537 = vmul.f32 %v515, %v533
      %v538 = vadd.f32 %v525, %v534
      %v539 = vadd.f32 %v526, %v535
      %v540 = vadd.f32 %v527, %v536
      %v541 = vadd.f32 %v528, %v537
      %v542 = vld [vmem:[%s1 + $0x7] sm:$0x1]
      %v543 = vlaneseq
      %v544 = vshrl.u32 %v543, 7
      %v545 = vsub.s32 0, %v544
      %v546 = vrot.slane %v542, %v545
      %v547 = vmul.f32 %v503, %v546
      %v548 = vmul.f32 %v504, %v546
      %v549 = vmul.f32 %v505, %v546
      %v550 = vmul.f32 %v506, %v546
      %v551 = vadd.f32 %v538, %v547
      %v552 = vadd.f32 %v539, %v548
      %v553 = vadd.f32 %v540, %v549
      %v554 = vadd.f32 %v541, %v550
      %v555 = vld [vmem:[%s435] sm:$0x7]
      %v556 = vld [vmem:[%s435 + $0x4] sm:$0x7]
      %v557 = vld [vmem:[%s435 + $0x8] sm:$0x7]
      %v558 = vld [vmem:[%s435 + $0xc] sm:$0x7]
      %v559 = vld [vmem:[%s435 + $0x10] sm:$0x7]
      %v560 = vunpack.c.l.bf16 %v555
      %v561 = vunpack.c.l.bf16 %v556
      %v562 = vunpack.c.l.bf16 %v557
      %v563 = vunpack.c.l.bf16 %v558
      %v564 = vunpack.c.l.bf16 %v559
      %v565 = vld [vmem:[%s452] sm:$0x7]
      %v566 = vld [vmem:[%s452 + $0x4] sm:$0x7]
      %v567 = vld [vmem:[%s452 + $0x8] sm:$0x7]
      %v568 = vld [vmem:[%s452 + $0xc] sm:$0x7]
      %v569 = vunpack.c.l.bf16 %v565
      %v570 = vunpack.c.l.bf16 %v566
      %v571 = vunpack.c.l.bf16 %v567
      %v572 = vunpack.c.l.bf16 %v568
      %v573 = vld [vmem:[%s1 + $0x2] sm:$0x1]
      %v574 = vlaneseq
      %v575 = vshrl.u32 %v574, 7
      %v576 = vsub.s32 0, %v575
      %v577 = vrot.slane %v573, %v576
      %v578 = vmul.f32 %v560, %v577
      %v579 = vmul.f32 %v561, %v577
      %v580 = vmul.f32 %v562, %v577
      %v581 = vmul.f32 %v563, %v577
      %v586 = vrot.slane %v578, 1
      %v587 = vrot.slane %v579, 1
      %v588 = vrot.slane %v580, 1
      %v589 = vrot.slane %v581, 1
      %v594 = vadd.f32 %v551, %v586
      %v595 = vadd.f32 %v552, %v587
      %v596 = vadd.f32 %v553, %v588
      %v597 = vadd.f32 %v554, %v589
      %v598 = vld [vmem:[%s1 + $0x5] sm:$0x1]
      %v599 = vlaneseq
      %v600 = vshrl.u32 %v599, 7
      %v601 = vsub.s32 0, %v600
      %v602 = vrot.slane %v598, %v601
      %v603 = vmul.f32 %v569, %v602
      %v604 = vmul.f32 %v570, %v602
      %v605 = vmul.f32 %v571, %v602
      %v606 = vmul.f32 %v572, %v602
      %v611 = vrot.slane %v603, 1
      %v612 = vrot.slane %v604, 1
      %v613 = vrot.slane %v605, 1
      %v614 = vrot.slane %v606, 1
      %v619 = vadd.f32 %v594, %v611
      %v620 = vadd.f32 %v595, %v612
      %v621 = vadd.f32 %v596, %v613
      %v622 = vadd.f32 %v597, %v614
      %v623 = vld [vmem:[%s1 + $0x8] sm:$0x1]
      %v624 = vlaneseq
      %v625 = vshrl.u32 %v624, 7
      %v626 = vsub.s32 0, %v625
      %v627 = vrot.slane %v623, %v626
      %v628 = vmul.f32 %v561, %v627
      %v629 = vmul.f32 %v562, %v627
      %v630 = vmul.f32 %v563, %v627
      %v631 = vmul.f32 %v564, %v627
      %v636 = vrot.slane %v628, 1
      %v637 = vrot.slane %v629, 1
      %v638 = vrot.slane %v630, 1
      %v639 = vrot.slane %v631, 1
      %v644 = vadd.f32 %v619, %v636
      %v645 = vadd.f32 %v620, %v637
      %v646 = vadd.f32 %v621, %v638
      %v647 = vadd.f32 %v622, %v639
      %v648 = vld [vmem:[%s2] sm:$0x1]
      %v650 = vlaneseq
      %v651 = vshrl.u32 %v650, 7
      %v652 = vsub.s32 0, %v651
      %v653 = vrot.slane %v648, %v652
      %v655 = vadd.f32 %v644, %v653
      %v656 = vadd.f32 %v645, %v653
      %v657 = vadd.f32 %v646, %v653
      %v658 = vadd.f32 %v647, %v653
      %v659 = vmax.f32 %v655, 0.0
      %v660 = vmax.f32 %v656, 0.0
      %v661 = vmax.f32 %v657, 0.0
      %v662 = vmax.f32 %v658, 0.0
      %663 = vst [vmem:[#allocation2] sm:$0xf] %v659
      %664 = vst [vmem:[#allocation2 + $0x4] sm:$0xf] %v660
      %665 = vst [vmem:[#allocation2 + $0x8] sm:$0xf] %v661
      %666 = vst [vmem:[#allocation2 + $0xc] sm:$0xf] %v662
      %v667 = vld [vmem:[#allocation2] sm:$0xff]
      %v668 = vld [vmem:[#allocation2 + $0x8] sm:$0xff]
      %v669 = vpack.c.bf16 %v668, %v667
      %v670 = vld [vmem:[%s3] sm:$0xf]
      %v671 = vld [vmem:[%s3 + $0x4] sm:$0xf]
      %v672 = vld [vmem:[%s3 + $0x8] sm:$0xf]
      %v673 = vld [vmem:[%s3 + $0xc] sm:$0xf]
      %v674 = vld [vmem:[%s3 + $0x10] sm:$0xf]
      %v675 = vld [vmem:[%s3 + $0x14] sm:$0xf]
      %v676 = vld [vmem:[%s3 + $0x18] sm:$0xf]
      %v677 = vld [vmem:[%s3 + $0x1c] sm:$0xf]
      %v678 = vld [vmem:[%s3 + $0x20] sm:$0xf]
      %v679 = vld [vmem:[%s3 + $0x24] sm:$0xf]
      %v680 = vld [vmem:[%s3 + $0x28] sm:$0xf]
      %v681 = vld [vmem:[%s3 + $0x2c] sm:$0xf]
      %v682 = vld [vmem:[%s3 + $0x30] sm:$0xf]
      %v683 = vld [vmem:[%s3 + $0x34] sm:$0xf]
      %v684 = vld [vmem:[%s3 + $0x38] sm:$0xf]
      %v685 = vld [vmem:[%s3 + $0x3c] sm:$0xf]
      %v686 = vld [vmem:[%s4] sm:$0x1]
      %v688 = vlaneseq
      %v689 = vshrl.u32 %v688, 7
      %v690 = vsub.s32 0, %v689
      %v691 = vrot.slane %v686, %v690
      %v709 = vunpack.c.l.b16 %v670
      %v710 = vunpack.c.l.b16 %v671
      %v711 = vunpack.c.l.b16 %v672
      %v712 = vunpack.c.l.b16 %v673
      %v713 = vunpack.c.l.b16 %v674
      %v714 = vunpack.c.l.b16 %v675
      %v715 = vunpack.c.l.b16 %v676
      %v716 = vunpack.c.l.b16 %v677
      %v717 = vunpack.c.l.b16 %v678
      %v718 = vunpack.c.l.b16 %v679
      %v719 = vunpack.c.l.b16 %v680
      %v720 = vunpack.c.l.b16 %v681
      %v721 = vunpack.c.l.b16 %v682
      %v722 = vunpack.c.l.b16 %v683
      %v723 = vunpack.c.l.b16 %v684
      %v724 = vunpack.c.l.b16 %v685
      %v725 = vpack.c.b16 %v710, %v709
      %v726 = vpack.c.b16 %v712, %v711
      %v727 = vpack.c.b16 %v714, %v713
      %v728 = vpack.c.b16 %v716, %v715
      %v729 = vpack.c.b16 %v718, %v717
      %v730 = vpack.c.b16 %v720, %v719
      %v731 = vpack.c.b16 %v722, %v721
      %v732 = vpack.c.b16 %v724, %v723
      %741 = vmatprep.subr.bf16.mxu0 0
      %742 = vmatpush1.bf16.msra.mxu0 %v725
      %743 = vmatprep.subr.bf16.mxu0 0
      %744 = vmatpush1.bf16.msra.mxu0 %v726
      %745 = vmatprep.subr.bf16.mxu0 0
      %746 = vmatpush1.bf16.msra.mxu0 %v727
      %747 = vmatprep.subr.bf16.mxu0 0
      %748 = vmatpush1.bf16.msra.mxu0 %v728
      %749 = vmatprep.subr.bf16.mxu0 0
      %750 = vmatpush1.bf16.msra.mxu0 %v729
      %751 = vmatprep.subr.bf16.mxu0 0
      %752 = vmatpush1.bf16.msra.mxu0 %v730
      %753 = vmatprep.subr.bf16.mxu0 0
      %754 = vmatpush1.bf16.msra.mxu0 %v731
      %755 = vmatprep.subr.bf16.mxu0 0
      %756 = vmatpush1.bf16.msra.mxu0 %v732
      %757 = vmatprep.subr.bf16.mxu0 0
      %758 = vmatpush1.bf16.msra.mxu0 0
      %759 = vmatprep.subr.bf16.mxu0 0
      %760 = vmatpush1.bf16.msra.mxu0 0
      %761 = vmatprep.subr.bf16.mxu0 0
      %762 = vmatpush1.bf16.msra.mxu0 0
      %763 = vmatprep.subr.bf16.mxu0 0
      %764 = vmatpush1.bf16.msra.mxu0 0
      %765 = vmatprep.subr.bf16.mxu0 0
      %766 = vmatpush1.bf16.msra.mxu0 0
      %767 = vmatprep.subr.bf16.mxu0 0
      %768 = vmatpush1.bf16.msra.mxu0 0
      %769 = vmatprep.subr.bf16.mxu0 0
      %770 = vmatpush1.bf16.msra.mxu0 0
      %771 = vmatprep.subr.bf16.mxu0 0
      %772 = vmatpush1.bf16.msra.mxu0 0
      %773 = vmatprep.mubr.bf16.mxu0 0
      %774 = vmatmul.mubr.bf16.gmra.mrb[0].mxu0 %v669
      %v775 = vpop.f32.mrb[0].mxu0
      %v776 = vadd.f32 %v691, %v775
      %v777 = vpop.f32.mrb[0].mxu0
      %v778 = vpop.f32.mrb[0].mxu0
      %v779 = vadd.f32 %v691, %v778
      %v780 = vpop.f32.mrb[0].mxu0
      %781 = vdwg.mxu0
      %v782 = vpack.c.bf16 %v779, %v776
      %v783 = vld [vmem:[%s5] sm:$0xf]
      %v784 = vld [vmem:[%s5 + $0x4] sm:$0xf]
      %v785 = vld [vmem:[%s5 + $0x8] sm:$0xf]
      %v786 = vld [vmem:[%s5 + $0xc] sm:$0xf]
      %v787 = vld [vmem:[%s5 + $0x10] sm:$0xf]
      %v788 = vld [vmem:[%s5 + $0x14] sm:$0xf]
      %v789 = vld [vmem:[%s5 + $0x18] sm:$0xf]
      %v790 = vld [vmem:[%s5 + $0x1c] sm:$0xf]
      %v791 = vld [vmem:[%s5 + $0x20] sm:$0xf]
      %v792 = vld [vmem:[%s5 + $0x24] sm:$0xf]
      %v793 = vld [vmem:[%s5 + $0x28] sm:$0xf]
      %v794 = vld [vmem:[%s5 + $0x2c] sm:$0xf]
      %v795 = vld [vmem:[%s5 + $0x30] sm:$0xf]
      %v796 = vld [vmem:[%s5 + $0x34] sm:$0xf]
      %v797 = vld [vmem:[%s5 + $0x38] sm:$0xf]
      %v798 = vld [vmem:[%s5 + $0x3c] sm:$0xf]
      %v799 = vld [vmem:[%s6] sm:$0x1]
      %v801 = vlaneseq
      %v802 = vshrl.u32 %v801, 7
      %v803 = vsub.s32 0, %v802
      %v804 = vrot.slane %v799, %v803
      %v822 = vunpack.c.l.b16 %v783
      %v823 = vunpack.c.l.b16 %v784
      %v824 = vunpack.c.l.b16 %v785
      %v825 = vunpack.c.l.b16 %v786
      %v826 = vunpack.c.l.b16 %v787
      %v827 = vunpack.c.l.b16 %v788
      %v828 = vunpack.c.l.b16 %v789
      %v829 = vunpack.c.l.b16 %v790
      %v830 = vunpack.c.l.b16 %v791
      %v831 = vunpack.c.l.b16 %v792
      %v832 = vunpack.c.l.b16 %v793
      %v833 = vunpack.c.l.b16 %v794
      %v834 = vunpack.c.l.b16 %v795
      %v835 = vunpack.c.l.b16 %v796
      %v836 = vunpack.c.l.b16 %v797
      %v837 = vunpack.c.l.b16 %v798
      %v838 = vpack.c.b16 %v823, %v822
      %v839 = vpack.c.b16 %v825, %v824
      %v840 = vpack.c.b16 %v827, %v826
      %v841 = vpack.c.b16 %v829, %v828
      %v842 = vpack.c.b16 %v831, %v830
      %v843 = vpack.c.b16 %v833, %v832
      %v844 = vpack.c.b16 %v835, %v834
      %v845 = vpack.c.b16 %v837, %v836
      %854 = vmatprep.subr.bf16.mxu0 0
      %855 = vmatpush1.bf16.msra.mxu0 %v838
      %856 = vmatprep.subr.bf16.mxu0 0
      %857 = vmatpush1.bf16.msra.mxu0 %v839
      %858 = vmatprep.subr.bf16.mxu0 0
      %859 = vmatpush1.bf16.msra.mxu0 %v840
      %860 = vmatprep.subr.bf16.mxu0 0
      %861 = vmatpush1.bf16.msra.mxu0 %v841
      %862 = vmatprep.subr.bf16.mxu0 0
      %863 = vmatpush1.bf16.msra.mxu0 %v842
      %864 = vmatprep.subr.bf16.mxu0 0
      %865 = vmatpush1.bf16.msra.mxu0 %v843
      %866 = vmatprep.subr.bf16.mxu0 0
      %867 = vmatpush1.bf16.msra.mxu0 %v844
      %868 = vmatprep.subr.bf16.mxu0 0
      %869 = vmatpush1.bf16.msra.mxu0 %v845
      %870 = vmatprep.subr.bf16.mxu0 0
      %871 = vmatpush1.bf16.msra.mxu0 0
      %872 = vmatprep.subr.bf16.mxu0 0
      %873 = vmatpush1.bf16.msra.mxu0 0
      %874 = vmatprep.subr.bf16.mxu0 0
      %875 = vmatpush1.bf16.msra.mxu0 0
      %876 = vmatprep.subr.bf16.mxu0 0
      %877 = vmatpush1.bf16.msra.mxu0 0
      %878 = vmatprep.subr.bf16.mxu0 0
      %879 = vmatpush1.bf16.msra.mxu0 0
      %880 = vmatprep.subr.bf16.mxu0 0
      %881 = vmatpush1.bf16.msra.mxu0 0
      %882 = vmatprep.subr.bf16.mxu0 0
      %883 = vmatpush1.bf16.msra.mxu0 0
      %884 = vmatprep.subr.bf16.mxu0 0
      %885 = vmatpush1.bf16.msra.mxu0 0
      %886 = vmatprep.mubr.bf16.mxu0 0
      %887 = vmatmul.mubr.bf16.gmra.mrb[0].mxu0 %v782
      %v888 = vpop.f32.mrb[0].mxu0
      %v889 = vadd.f32 %v804, %v888
      %v890 = vpop.f32.mrb[0].mxu0
      %v891 = vpop.f32.mrb[0].mxu0
      %v892 = vadd.f32 %v804, %v891
      %v893 = vpop.f32.mrb[0].mxu0
      %894 = vdwg.mxu0
      %v895 = vmax.f32 %v889, 0.0
      %v896 = vmax.f32 %v892, 0.0
      %897 = vst [vmem:[#allocation3] sm:$0x3f] 0.0
      %898 = vst [vmem:[#allocation3 + $0x8] sm:$0x3f] 0.0
      %899 = vst [vmem:[#allocation3 + $0x10] sm:$0x3f] 0.0
      %900 = vst [vmem:[#allocation3 + $0x18] sm:$0x3f] 0.0
      %901 = vst [vmem:[#allocation3 + $0x20] sm:$0x3f] 0.0
      %902 = vst [vmem:[#allocation3 + $0x28] sm:$0x3f] 0.0
      %s903 = scalar_lea.vmem [#allocation3], 8
      %904 = vst [vmem:[%s903 + $0x1] sm:$0xf] %v895
      %s905 = scalar_lea.vmem [#allocation3], 16
      %906 = vst [vmem:[%s905 - $0x3] sm:$0xf0] %v895
      %s907 = scalar_lea.vmem [#allocation3], 24
      %908 = vst [vmem:[%s907 + $0x1] sm:$0xf] %v896
      %s909 = scalar_lea.vmem [#allocation3], 32
      %910 = vst [vmem:[%s909 - $0x3] sm:$0xf0] %v896
      %v911 = vld [vmem:[#allocation3] sm:$0xf]
      %v912 = vld [vmem:[#allocation3 + $0x8] sm:$0xf]
      %v913 = vld [vmem:[#allocation3 + $0x10] sm:$0xf]
      %v914 = vld [vmem:[#allocation3 + $0x18] sm:$0xf]
      %v915 = vld [vmem:[#allocation3 + $0x20] sm:$0xf]
      %v916 = vld [vmem:[#allocation3 + $0x28] sm:$0xf]
      %v917 = vld [vmem:[%s7] sm:$0x1]
      %v918 = vlaneseq
      %v919 = vshrl.u32 %v918, 7
      %v920 = vsub.s32 0, %v919
      %v921 = vrot.slane %v917, %v920
      %v922 = vmul.f32 %v911, %v921
      %v923 = vmul.f32 %v912, %v921
      %v924 = vmul.f32 %v913, %v921
      %v925 = vmul.f32 %v914, %v921
      %v926 = vld [vmem:[%s7 + $0x3] sm:$0x1]
      %v927 = vlaneseq
      %v928 = vshrl.u32 %v927, 7
      %v929 = vsub.s32 0, %v928
      %v930 = vrot.slane %v926, %v929
      %v931 = vmul.f32 %v912, %v930
      %v932 = vmul.f32 %v913, %v930
      %v933 = vmul.f32 %v914, %v930
      %v934 = vmul.f32 %v915, %v930
      %v935 = vadd.f32 %v922, %v931
      %v936 = vadd.f32 %v923, %v932
      %v937 = vadd.f32 %v924, %v933
      %v938 = vadd.f32 %v925, %v934
      %v939 = vld [vmem:[%s7 + $0x6] sm:$0x1]
      %v940 = vlaneseq
      %v941 = vshrl.u32 %v940, 7
      %v942 = vsub.s32 0, %v941
      %v943 = vrot.slane %v939, %v942
      %v944 = vmul.f32 %v913, %v943
      %v945 = vmul.f32 %v914, %v943
      %v946 = vmul.f32 %v915, %v943
      %v947 = vmul.f32 %v916, %v943
      %v948 = vadd.f32 %v935, %v944
      %v949 = vadd.f32 %v936, %v945
      %v950 = vadd.f32 %v937, %v946
      %v951 = vadd.f32 %v938, %v947
      %v952 = vld [vmem:[#allocation3 + $0x1] sm:$0xf]
      %v953 = vld [vmem:[#allocation3 + $0x9] sm:$0xf]
      %v954 = vld [vmem:[#allocation3 + $0x11] sm:$0xf]
      %v955 = vld [vmem:[#allocation3 + $0x19] sm:$0xf]
      %v956 = vld [vmem:[#allocation3 + $0x21] sm:$0xf]
      %v957 = vld [vmem:[#allocation3 + $0x29] sm:$0xf]
      %v958 = vld [vmem:[%s7 + $0x1] sm:$0x1]
      %v959 = vlaneseq
      %v960 = vshrl.u32 %v959, 7
      %v961 = vsub.s32 0, %v960
      %v962 = vrot.slane %v958, %v961
      %v963 = vmul.f32 %v952, %v962
      %v964 = vmul.f32 %v953, %v962
      %v965 = vmul.f32 %v954, %v962
      %v966 = vmul.f32 %v955, %v962
      %v967 = vadd.f32 %v948, %v963
      %v968 = vadd.f32 %v949, %v964
      %v969 = vadd.f32 %v950, %v965
      %v970 = vadd.f32 %v951, %v966
      %v971 = vld [vmem:[%s7 + $0x4] sm:$0x1]
      %v972 = vlaneseq
      %v973 = vshrl.u32 %v972, 7
      %v974 = vsub.s32 0, %v973
      %v975 = vrot.slane %v971, %v974
      %v976 = vmul.f32 %v953, %v975
      %v977 = vmul.f32 %v954, %v975
      %v978 = vmul.f32 %v955, %v975
      %v979 = vmul.f32 %v956, %v975
      %v980 = vadd.f32 %v967, %v976
      %v981 = vadd.f32 %v968, %v977
      %v982 = vadd.f32 %v969, %v978
      %v983 = vadd.f32 %v970, %v979
      %v984 = vld [vmem:[%s7 + $0x7] sm:$0x1]
      %v985 = vlaneseq
      %v986 = vshrl.u32 %v985, 7
      %v987 = vsub.s32 0, %v986
      %v988 = vrot.slane %v984, %v987
      %v989 = vmul.f32 %v954, %v988
      %v990 = vmul.f32 %v955, %v988
      %v991 = vmul.f32 %v956, %v988
      %v992 = vmul.f32 %v957, %v988
      %v993 = vadd.f32 %v980, %v989
      %v994 = vadd.f32 %v981, %v990
      %v995 = vadd.f32 %v982, %v991
      %v996 = vadd.f32 %v983, %v992
      %v997 = vld [vmem:[#allocation3 + $0x2] sm:$0xf]
      %v998 = vld [vmem:[#allocation3 + $0xa] sm:$0xf]
      %v999 = vld [vmem:[#allocation3 + $0x12] sm:$0xf]
      %v1000 = vld [vmem:[#allocation3 + $0x1a] sm:$0xf]
      %v1001 = vld [vmem:[#allocation3 + $0x22] sm:$0xf]
      %v1002 = vld [vmem:[#allocation3 + $0x2a] sm:$0xf]
      %v1003 = vld [vmem:[%s7 + $0x2] sm:$0x1]
      %v1004 = vlaneseq
      %v1005 = vshrl.u32 %v1004, 7
      %v1006 = vsub.s32 0, %v1005
      %v1007 = vrot.slane %v1003, %v1006
      %v1008 = vmul.f32 %v997, %v1007
      %v1009 = vmul.f32 %v998, %v1007
      %v1010 = vmul.f32 %v999, %v1007
      %v1011 = vmul.f32 %v1000, %v1007
      %v1012 = vadd.f32 %v993, %v1008
      %v1013 = vadd.f32 %v994, %v1009
      %v1014 = vadd.f32 %v995, %v1010
      %v1015 = vadd.f32 %v996, %v1011
      %v1016 = vld [vmem:[%s7 + $0x5] sm:$0x1]
      %v1017 = vlaneseq
      %v1018 = vshrl.u32 %v1017, 7
      %v1019 = vsub.s32 0, %v1018
      %v1020 = vrot.slane %v1016, %v1019
      %v1021 = vmul.f32 %v998, %v1020
      %v1022 = vmul.f32 %v999, %v1020
      %v1023 = vmul.f32 %v1000, %v1020
      %v1024 = vmul.f32 %v1001, %v1020
      %v1025 = vadd.f32 %v1012, %v1021
      %v1026 = vadd.f32 %v1013, %v1022
      %v1027 = vadd.f32 %v1014, %v1023
      %v1028 = vadd.f32 %v1015, %v1024
      %v1029 = vld [vmem:[%s7 + $0x8] sm:$0x1]
      %v1030 = vlaneseq
      %v1031 = vshrl.u32 %v1030, 7
      %v1032 = vsub.s32 0, %v1031
      %v1033 = vrot.slane %v1029, %v1032
      %v1034 = vmul.f32 %v999, %v1033
      %v1035 = vmul.f32 %v1000, %v1033
      %v1036 = vmul.f32 %v1001, %v1033
      %v1037 = vmul.f32 %v1002, %v1033
      %v1038 = vadd.f32 %v1025, %v1034
      %v1039 = vadd.f32 %v1026, %v1035
      %v1040 = vadd.f32 %v1027, %v1036
      %v1041 = vadd.f32 %v1028, %v1037
      %v1042 = vld [vmem:[%s8] sm:$0x1]
      %v1044 = vlaneseq
      %v1045 = vshrl.u32 %v1044, 7
      %v1046 = vsub.s32 0, %v1045
      %v1047 = vrot.slane %v1042, %v1046
      %v1049 = vadd.f32 %v1038, %v1047
      %v1050 = vadd.f32 %v1039, %v1047
      %v1051 = vadd.f32 %v1040, %v1047
      %v1052 = vadd.f32 %v1041, %v1047
      %v1053 = vmax.f32 %v1049, 0.0
      %v1054 = vmax.f32 %v1050, 0.0
      %v1055 = vmax.f32 %v1051, 0.0
      %v1056 = vmax.f32 %v1052, 0.0
      %1057 = vst [vmem:[#allocation4] sm:$0xf] %v1053
      %1058 = vst [vmem:[#allocation4 + $0x4] sm:$0xf] %v1054
      %1059 = vst [vmem:[#allocation4 + $0x8] sm:$0xf] %v1055
      %1060 = vst [vmem:[#allocation4 + $0xc] sm:$0xf] %v1056
      %v1061 = vld [vmem:[#allocation4] sm:$0xff]
      %v1062 = vld [vmem:[#allocation4 + $0x8] sm:$0xff]
      %v1063 = vpack.c.bf16 %v1062, %v1061
      %v1064 = vld [vmem:[%s9] sm:$0xf]
      %v1065 = vld [vmem:[%s9 + $0x4] sm:$0xf]
      %v1066 = vld [vmem:[%s9 + $0x8] sm:$0xf]
      %v1067 = vld [vmem:[%s9 + $0xc] sm:$0xf]
      %v1068 = vld [vmem:[%s9 + $0x10] sm:$0xf]
      %v1069 = vld [vmem:[%s9 + $0x14] sm:$0xf]
      %v1070 = vld [vmem:[%s9 + $0x18] sm:$0xf]
      %v1071 = vld [vmem:[%s9 + $0x1c] sm:$0xf]
      %v1072 = vld [vmem:[%s9 + $0x20] sm:$0xf]
      %v1073 = vld [vmem:[%s9 + $0x24] sm:$0xf]
      %v1074 = vld [vmem:[%s9 + $0x28] sm:$0xf]
      %v1075 = vld [vmem:[%s9 + $0x2c] sm:$0xf]
      %v1076 = vld [vmem:[%s9 + $0x30] sm:$0xf]
      %v1077 = vld [vmem:[%s9 + $0x34] sm:$0xf]
      %v1078 = vld [vmem:[%s9 + $0x38] sm:$0xf]
      %v1079 = vld [vmem:[%s9 + $0x3c] sm:$0xf]
      %v1080 = vld [vmem:[%s10] sm:$0x1]
      %v1082 = vlaneseq
      %v1083 = vshrl.u32 %v1082, 7
      %v1084 = vsub.s32 0, %v1083
      %v1085 = vrot.slane %v1080, %v1084
      %v1103 = vunpack.c.l.b16 %v1064
      %v1104 = vunpack.c.l.b16 %v1065
      %v1105 = vunpack.c.l.b16 %v1066
      %v1106 = vunpack.c.l.b16 %v1067
      %v1107 = vunpack.c.l.b16 %v1068
      %v1108 = vunpack.c.l.b16 %v1069
      %v1109 = vunpack.c.l.b16 %v1070
      %v1110 = vunpack.c.l.b16 %v1071
      %v1111 = vunpack.c.l.b16 %v1072
      %v1112 = vunpack.c.l.b16 %v1073
      %v1113 = vunpack.c.l.b16 %v1074
      %v1114 = vunpack.c.l.b16 %v1075
      %v1115 = vunpack.c.l.b16 %v1076
      %v1116 = vunpack.c.l.b16 %v1077
      %v1117 = vunpack.c.l.b16 %v1078
      %v1118 = vunpack.c.l.b16 %v1079
      %v1119 = vpack.c.b16 %v1104, %v1103
      %v1120 = vpack.c.b16 %v1106, %v1105
      %v1121 = vpack.c.b16 %v1108, %v1107
      %v1122 = vpack.c.b16 %v1110, %v1109
      %v1123 = vpack.c.b16 %v1112, %v1111
      %v1124 = vpack.c.b16 %v1114, %v1113
      %v1125 = vpack.c.b16 %v1116, %v1115
      %v1126 = vpack.c.b16 %v1118, %v1117
      %1135 = vmatprep.subr.bf16.mxu0 0
      %1136 = vmatpush1.bf16.msra.mxu0 %v1119
      %1137 = vmatprep.subr.bf16.mxu0 0
      %1138 = vmatpush1.bf16.msra.mxu0 %v1120
      %1139 = vmatprep.subr.bf16.mxu0 0
      %1140 = vmatpush1.bf16.msra.mxu0 %v1121
      %1141 = vmatprep.subr.bf16.mxu0 0
      %1142 = vmatpush1.bf16.msra.mxu0 %v1122
      %1143 = vmatprep.subr.bf16.mxu0 0
      %1144 = vmatpush1.bf16.msra.mxu0 %v1123
      %1145 = vmatprep.subr.bf16.mxu0 0
      %1146 = vmatpush1.bf16.msra.mxu0 %v1124
      %1147 = vmatprep.subr.bf16.mxu0 0
      %1148 = vmatpush1.bf16.msra.mxu0 %v1125
      %1149 = vmatprep.subr.bf16.mxu0 0
      %1150 = vmatpush1.bf16.msra.mxu0 %v1126
      %1151 = vmatprep.subr.bf16.mxu0 0
      %1152 = vmatpush1.bf16.msra.mxu0 0
      %1153 = vmatprep.subr.bf16.mxu0 0
      %1154 = vmatpush1.bf16.msra.mxu0 0
      %1155 = vmatprep.subr.bf16.mxu0 0
      %1156 = vmatpush1.bf16.msra.mxu0 0
      %1157 = vmatprep.subr.bf16.mxu0 0
      %1158 = vmatpush1.bf16.msra.mxu0 0
      %1159 = vmatprep.subr.bf16.mxu0 0
      %1160 = vmatpush1.bf16.msra.mxu0 0
      %1161 = vmatprep.subr.bf16.mxu0 0
      %1162 = vmatpush1.bf16.msra.mxu0 0
      %1163 = vmatprep.subr.bf16.mxu0 0
      %1164 = vmatpush1.bf16.msra.mxu0 0
      %1165 = vmatprep.subr.bf16.mxu0 0
      %1166 = vmatpush1.bf16.msra.mxu0 0
      %1167 = vmatprep.mubr.bf16.mxu0 0
      %1168 = vmatmul.mubr.bf16.gmra.mrb[0].mxu0 %v1063
      %v1169 = vpop.f32.mrb[0].mxu0
      %v1170 = vadd.f32 %v1085, %v1169
      %v1171 = vpop.f32.mrb[0].mxu0
      %v1172 = vpop.f32.mrb[0].mxu0
      %v1173 = vadd.f32 %v1085, %v1172
      %v1174 = vpop.f32.mrb[0].mxu0
      %1175 = vdwg.mxu0
      %v1176 = vadd.f32 %v1170, %v776
      %v1177 = vadd.f32 %v1173, %v779
      %v1178 = vpack.c.bf16 %v1177, %v1176
      %v1179 = vld [vmem:[%s11] sm:$0xf]
      %v1180 = vld [vmem:[%s11 + $0x4] sm:$0xf]
      %v1181 = vld [vmem:[%s11 + $0x8] sm:$0xf]
      %v1182 = vld [vmem:[%s11 + $0xc] sm:$0xf]
      %v1183 = vld [vmem:[%s11 + $0x10] sm:$0xf]
      %v1184 = vld [vmem:[%s11 + $0x14] sm:$0xf]
      %v1185 = vld [vmem:[%s11 + $0x18] sm:$0xf]
      %v1186 = vld [vmem:[%s11 + $0x1c] sm:$0xf]
      %v1187 = vld [vmem:[%s11 + $0x20] sm:$0xf]
      %v1188 = vld [vmem:[%s11 + $0x24] sm:$0xf]
      %v1189 = vld [vmem:[%s11 + $0x28] sm:$0xf]
      %v1190 = vld [vmem:[%s11 + $0x2c] sm:$0xf]
      %v1191 = vld [vmem:[%s11 + $0x30] sm:$0xf]
      %v1192 = vld [vmem:[%s11 + $0x34] sm:$0xf]
      %v1193 = vld [vmem:[%s11 + $0x38] sm:$0xf]
      %v1194 = vld [vmem:[%s11 + $0x3c] sm:$0xf]
      %v1195 = vld [vmem:[%s12] sm:$0x1]
      %v1197 = vlaneseq
      %v1198 = vshrl.u32 %v1197, 7
      %v1199 = vsub.s32 0, %v1198
      %v1200 = vrot.slane %v1195, %v1199
      %v1218 = vunpack.c.l.b16 %v1179
      %v1219 = vunpack.c.l.b16 %v1180
      %v1220 = vunpack.c.l.b16 %v1181
      %v1221 = vunpack.c.l.b16 %v1182
      %v1222 = vunpack.c.l.b16 %v1183
      %v1223 = vunpack.c.l.b16 %v1184
      %v1224 = vunpack.c.l.b16 %v1185
      %v1225 = vunpack.c.l.b16 %v1186
      %v1226 = vunpack.c.l.b16 %v1187
      %v1227 = vunpack.c.l.b16 %v1188
      %v1228 = vunpack.c.l.b16 %v1189
      %v1229 = vunpack.c.l.b16 %v1190
      %v1230 = vunpack.c.l.b16 %v1191
      %v1231 = vunpack.c.l.b16 %v1192
      %v1232 = vunpack.c.l.b16 %v1193
      %v1233 = vunpack.c.l.b16 %v1194
      %v1234 = vpack.c.b16 %v1219, %v1218
      %v1235 = vpack.c.b16 %v1221, %v1220
      %v1236 = vpack.c.b16 %v1223, %v1222
      %v1237 = vpack.c.b16 %v1225, %v1224
      %v1238 = vpack.c.b16 %v1227, %v1226
      %v1239 = vpack.c.b16 %v1229, %v1228
      %v1240 = vpack.c.b16 %v1231, %v1230
      %v1241 = vpack.c.b16 %v1233, %v1232
      %1250 = vmatprep.subr.bf16.mxu0 0
      %1251 = vmatpush1.bf16.msra.mxu0 %v1234
      %1252 = vmatprep.subr.bf16.mxu0 0
      %1253 = vmatpush1.bf16.msra.mxu0 %v1235
      %1254 = vmatprep.subr.bf16.mxu0 0
      %1255 = vmatpush1.bf16.msra.mxu0 %v1236
      %1256 = vmatprep.subr.bf16.mxu0 0
      %1257 = vmatpush1.bf16.msra.mxu0 %v1237
      %1258 = vmatprep.subr.bf16.mxu0 0
      %1259 = vmatpush1.bf16.msra.mxu0 %v1238
      %1260 = vmatprep.subr.bf16.mxu0 0
      %1261 = vmatpush1.bf16.msra.mxu0 %v1239
      %1262 = vmatprep.subr.bf16.mxu0 0
      %1263 = vmatpush1.bf16.msra.mxu0 %v1240
      %1264 = vmatprep.subr.bf16.mxu0 0
      %1265 = vmatpush1.bf16.msra.mxu0 %v1241
      %1266 = vmatprep.subr.bf16.mxu0 0
      %1267 = vmatpush1.bf16.msra.mxu0 0
      %1268 = vmatprep.subr.bf16.mxu0 0
      %1269 = vmatpush1.bf16.msra.mxu0 0
      %1270 = vmatprep.subr.bf16.mxu0 0
      %1271 = vmatpush1.bf16.msra.mxu0 0
      %1272 = vmatprep.subr.bf16.mxu0 0
      %1273 = vmatpush1.bf16.msra.mxu0 0
      %1274 = vmatprep.subr.bf16.mxu0 0
      %1275 = vmatpush1.bf16.msra.mxu0 0
      %1276 = vmatprep.subr.bf16.mxu0 0
      %1277 = vmatpush1.bf16.msra.mxu0 0
      %1278 = vmatprep.subr.bf16.mxu0 0
      %1279 = vmatpush1.bf16.msra.mxu0 0
      %1280 = vmatprep.subr.bf16.mxu0 0
      %1281 = vmatpush1.bf16.msra.mxu0 0
      %1282 = vmatprep.mubr.bf16.mxu0 0
      %1283 = vmatmul.mubr.bf16.gmra.mrb[0].mxu0 %v1178
      %v1284 = vpop.f32.mrb[0].mxu0
      %v1285 = vadd.f32 %v1200, %v1284
      %v1286 = vpop.f32.mrb[0].mxu0
      %v1287 = vpop.f32.mrb[0].mxu0
      %v1288 = vadd.f32 %v1200, %v1287
      %v1289 = vpop.f32.mrb[0].mxu0
      %1290 = vdwg.mxu0
      %v1291 = vadd.f32 %v1285, 3.0
      %v1292 = vadd.f32 %v1288, 3.0
      %v1293 = vmax.f32 %v1291, 0.0
      %v1294 = vmax.f32 %v1292, 0.0
      %v1295 = vmin.f32 %v1293, 6.0
      %v1296 = vmin.f32 %v1294, 6.0
      %v1297 = vmul.f32 %v1285, %v1295
      %v1298 = vmul.f32 %v1288, %v1296
      %v1299 = vmul.f32 %v1297, 0.16666667
      %v1300 = vmul.f32 %v1298, 0.16666667
      %v1301 = vpack.c.bf16 %v1300, %v1299
      %v1303 = vunpack.c.l.b16 %v1301
      %v1304 = vunpack.c.h.b16 %v1301
      %v1305 = vpack.c.b16 %v1303, %v1303
      %v1306 = vpack.c.b16 %v1304, %v1304
      %1309 = vst [vmem:[%s440] sm:$0xf] %v1305
      %1310 = vst [vmem:[%s440 + $0x4] sm:$0xf] %v1306
      %p1311 = scmp.lt.s32.totalorder %s24, 1
      %s1312 = scalar_select %p1311, %s24, 1
      %s1313 = smul.addr %s1312, 2
      %s1314 = smul.addr %s1313, 4
      %s1315 = scalar_lea.vmem %s13, %s1314
      // Predicated region
      $region73: #{mobilenet_v3_forward.6} parent=71 // pred_check
        %p1316 = pneg %p320
      $region74: #{mobilenet_v3_forward.6} parent=71 // pred_check_branch
        %1318 = sbr.rel (%p1316) target = $region76
      $region75: #{mobilenet_v3_forward.6} parent=71 // pred_region
        _
      $region76: #{mobilenet_v3_forward.6} parent=71 // pred_fallthru
        _
    $region72: #{mobilenet_v3_forward.6} parent=5 // pred_fallthru
      _
    %p1319 = scmp.le.s32.totalorder 2, %s19
    // Predicated region
    $region77: #{mobilenet_v3_forward.6} parent=5 // pred_check
      %p1320 = pneg %p1319
    $region78: #{mobilenet_v3_forward.6} parent=5 // pred_check_branch
      %1322 = sbr.rel (%p1320) target = $region80
    $region79: #{mobilenet_v3_forward.6} parent=5 // pred_region
      %s1323 = ssub.s32 %s19, 2
      // Predicated region
      $region81: #{mobilenet_v3_forward.6} parent=79 // pred_check
        %p1324 = pneg %p326
      $region82: #{mobilenet_v3_forward.6} parent=79 // pred_check_branch
        %1326 = sbr.rel (%p1324) target = $region84
      $region83: #{mobilenet_v3_forward.6} parent=79 // pred_region
        %p1327 = scmp.lt.s32.totalorder %s25, 1
        %s1328 = scalar_select %p1327, %s25, 1
        %s1329 = smul.addr %s1328, 2
        %s1330 = smul.addr %s1329, 4
        %s1331 = scalar_lea.vmem %s13, %s1330
      $region84: #{mobilenet_v3_forward.6} parent=79 // pred_fallthru
        _
    $region80: #{mobilenet_v3_forward.6} parent=5 // pred_fallthru
      _
  $region6: #{mobilenet_v3_forward.6} parent=0 // loop_footer
    %s23 = sadd.s32 1, %s19
  $region7: #{mobilenet_v3_forward.6} parent=0 // loop_footer_branch
    %18 = sbr.rel target = $region3
  $region8: #{mobilenet_v3_forward.6} parent=0 // loop_exit
    _

// kernel: mobilenet_v3_forward.7
$region0: #{mobilenet_v3_forward.7}
  #allocation0 [shape = 'u32[]', space=smem, size = 0x4, offset = 0x4, fixed_abs, tag = 'smem constant byte address 0x4 - core index']
  #allocation1 [shape = 'u32[144,128]{1,0:T(1,128)}', space=vmem, size = 0x12000, scoped, tag = 'internal scratch']
  #allocation2 [shape = 'f32[4,128]{1,0:T(4,128)}', space=vmem, size = 0x800, scoped, tag = 'scratch operand']
  %s0 = inlined_call_operand.vmem [shape: bf16[2,4,4,4,128], index: 0, kind: input, shape index: {}]
  %s1 = inlined_call_operand.vmem [shape: f32[25,128], index: 1, kind: input, shape index: {}]
  %s2 = inlined_call_operand.vmem [shape: f32[1,128], index: 2, kind: input, shape index: {}]
  %s3 = inlined_call_operand.vmem [shape: bf16[128,128], index: 3, kind: input, shape index: {}]
  %s4 = inlined_call_operand.vmem [shape: f32[1,128], index: 4, kind: input, shape index: {}]
  %s5 = inlined_call_operand.vmem [shape: bf16[128,128], index: 5, kind: input, shape index: {}]
  %s6 = inlined_call_operand.vmem [shape: f32[1,128], index: 6, kind: input, shape index: {}]
  %s7 = inlined_call_operand.vmem [shape: bf16[128,128], index: 7, kind: input, shape index: {}]
  %s8 = inlined_call_operand.vmem [shape: f32[1,128], index: 8, kind: input, shape index: {}]
  %s9 = inlined_call_operand.vmem [shape: bf16[128,256], index: 9, kind: input, shape index: {}]
  %s10 = inlined_call_operand.vmem [shape: f32[1,256], index: 10, kind: input, shape index: {}]
  %s11 = inlined_call_operand.vmem [shape: bf16[256,128], index: 11, kind: input, shape index: {}]
  %s12 = inlined_call_operand.vmem [shape: f32[1,128], index: 12, kind: input, shape index: {}]
  %s13 = inlined_call_operand.vmem [shape: bf16[128,128], index: 13, kind: input, shape index: {}]
  %s14 = inlined_call_operand.vmem [shape: f32[1,128], index: 14, kind: input, shape index: {}]
  %s15 = inlined_call_operand.hbm [shape: f32[2,1,128], index: 15, kind: output, shape index: {}]
  %s16 = sld [smem:[#allocation0]]
  $region93: #{mobilenet_v3_forward.7} parent=0
    _
  %s18 = ssub.s32 1, %s16
  %s19 = scalar_select 0, %s18, %s16
  $region1: #{mobilenet_v3_forward.7} parent=0
    #allocation3 [shape = 'u8[1024]{0}', space=vmem, size = 0x400, scoped, tag = 'output window, operand 0']
    #allocation4 [shape = 's32[2]{0}', space=sflag, size = 0x8, scoped, tag = 'scoped memory for mobilenet_v3_forward.7']
    %20 = vsyncpa [#allocation4], 0
    %s21 = scalar_lea.sflag [#allocation4], 1
    %22 = vsyncpa %s21, 0
    loop: start=0, step=1, limit=4
    $region2: #{mobilenet_v3_forward.7} parent=1 // loop_pre_header
      _
    $region3: #{mobilenet_v3_forward.7} parent=1 // loop_header
      %s24 = sphi 0, %s28
      %p25 = scmp.ge.s32.totalorder %s24, 4
      %s34 = sphi 0, %s36
      %s37 = sphi 0, %s34
      %s38 = sphi 0, %s37
      %s54 = sphi 0, %s38
      %s58 = sphi 0, %s58
      %s60 = sphi 0, %s58
      %s61 = sphi 0, %s60
      %s75 = sphi 0, %s61
      %s79 = sphi 0, %s79
      %s81 = sphi 0, %s79
      %s82 = sphi 0, %s81
      %s96 = sphi 0, %s82
      %s100 = sphi 0, %s100
      %s102 = sphi 0, %s100
      %s103 = sphi 0, %s102
      %s117 = sphi 0, %s103
      %s121 = sphi 0, %s121
      %s123 = sphi 0, %s121
      %s124 = sphi 0, %s123
      %s138 = sphi 0, %s124
      %s142 = sphi 0, %s142
      %s144 = sphi 0, %s142
      %s145 = sphi 0, %s144
      %s159 = sphi 0, %s145
      %s163 = sphi 0, %s163
      %s165 = sphi 0, %s163
      %s166 = sphi 0, %s165
      %s180 = sphi 0, %s166
      %s184 = sphi 0, %s184
      %s186 = sphi 0, %s184
      %s187 = sphi 0, %s186
      %s201 = sphi 0, %s187
      %s205 = sphi 0, %s205
      %s207 = sphi 0, %s205
      %s208 = sphi 0, %s207
      %s222 = sphi 0, %s208
      %s226 = sphi 0, %s226
      %s228 = sphi 0, %s226
      %s229 = sphi 0, %s228
      %s243 = sphi 0, %s229
      %s247 = sphi 0, %s247
      %s249 = sphi 0, %s247
      %s250 = sphi 0, %s249
      %s264 = sphi 0, %s250
      %s268 = sphi 0, %s268
      %s270 = sphi 0, %s268
      %s271 = sphi 0, %s270
      %s285 = sphi 0, %s271
      %s289 = sphi 0, %s289
      %s291 = sphi 0, %s289
      %s292 = sphi 0, %s291
      %s306 = sphi 0, %s292
      %s310 = sphi 0, %s310
      %s312 = sphi 0, %s310
      %s313 = sphi 0, %s312
      %s327 = sphi 0, %s313
      %s331 = sphi 0, %s331
      %s333 = sphi 0, %s331
      %s334 = sphi 0, %s333
      %s348 = sphi 0, %s334
      %s354 = sphi 0, %s356
      %s357 = sphi 0, %s354
      %s358 = sphi 0, %s357
      %s374 = sphi 0, %s358
    $region4: #{mobilenet_v3_forward.7} parent=1 // loop_header_branch
      %27 = sbr.rel (%p25) target = $region8
    $region5: #{mobilenet_v3_forward.7} parent=1 // loop_body
      %s29 = ssub.s32 %s24, 1
      %s30 = ssub.s32 %s24, 2
      %s31 = sadd.s32 %s24, 1
      %s32 = ssub.s32 %s24, %s31
      %p33 = scmp.eq.s32.totalorder %s32, 0
      %s35 = sadd.s32 %s34, 1
      %s36 = scalar_select %p33, %s34, %s35
      %p39 = pneg %p33
      %p40 = scmp.eq.s32.totalorder %s24, 1
      %p41 = por %p39, %p40
      %p42 = scmp.ne.s32.totalorder %s34, %s37
      %p43 = scmp.eq.s32.totalorder %s24, 0
      %p44 = por %p42, %p43
      %p45 = scmp.ne.s32.totalorder %s34, %s37
      %p46 = scmp.eq.s32.totalorder %s29, 1
      %p47 = por %p45, %p46
      %p48 = scmp.ne.s32.totalorder %s37, %s38
      %p49 = scmp.eq.s32.totalorder %s29, 0
      %p50 = por %p48, %p49
      %p51 = scmp.ne.s32.totalorder %s37, %s38
      %p52 = scmp.eq.s32.totalorder %s30, 1
      %p53 = por %p51, %p52
      %p55 = scmp.ne.s32.totalorder %s38, %s54
      %p56 = scmp.eq.s32.totalorder %s30, 0
      %p57 = por %p55, %p56
      %s59 = sadd.s32 %s58, 1
      %p62 = scmp.eq.s32.totalorder %s24, 1
      %p63 = scmp.ne.s32.totalorder %s58, %s60
      %p64 = scmp.eq.s32.totalorder %s24, 0
      %p65 = por %p63, %p64
      %p66 = scmp.ne.s32.totalorder %s58, %s60
      %p67 = scmp.eq.s32.totalorder %s29, 1
      %p68 = por %p66, %p67
      %p69 = scmp.ne.s32.totalorder %s60, %s61
      %p70 = scmp.eq.s32.totalorder %s29, 0
      %p71 = por %p69, %p70
      %p72 = scmp.ne.s32.totalorder %s60, %s61
      %p73 = scmp.eq.s32.totalorder %s30, 1
      %p74 = por %p72, %p73
      %p76 = scmp.ne.s32.totalorder %s61, %s75
      %p77 = scmp.eq.s32.totalorder %s30, 0
      %p78 = por %p76, %p77
      %s80 = sadd.s32 %s79, 1
      %p83 = scmp.eq.s32.totalorder %s24, 1
      %p84 = scmp.ne.s32.totalorder %s79, %s81
      %p85 = scmp.eq.s32.totalorder %s24, 0
      %p86 = por %p84, %p85
      %p87 = scmp.ne.s32.totalorder %s79, %s81
      %p88 = scmp.eq.s32.totalorder %s29, 1
      %p89 = por %p87, %p88
      %p90 = scmp.ne.s32.totalorder %s81, %s82
      %p91 = scmp.eq.s32.totalorder %s29, 0
      %p92 = por %p90, %p91
      %p93 = scmp.ne.s32.totalorder %s81, %s82
      %p94 = scmp.eq.s32.totalorder %s30, 1
      %p95 = por %p93, %p94
      %p97 = scmp.ne.s32.totalorder %s82, %s96
      %p98 = scmp.eq.s32.totalorder %s30, 0
      %p99 = por %p97, %p98
      %s101 = sadd.s32 %s100, 1
      %p104 = scmp.eq.s32.totalorder %s24, 1
      %p105 = scmp.ne.s32.totalorder %s100, %s102
      %p106 = scmp.eq.s32.totalorder %s24, 0
      %p107 = por %p105, %p106
      %p108 = scmp.ne.s32.totalorder %s100, %s102
      %p109 = scmp.eq.s32.totalorder %s29, 1
      %p110 = por %p108, %p109
      %p111 = scmp.ne.s32.totalorder %s102, %s103
      %p112 = scmp.eq.s32.totalorder %s29, 0
      %p113 = por %p111, %p112
      %p114 = scmp.ne.s32.totalorder %s102, %s103
      %p115 = scmp.eq.s32.totalorder %s30, 1
      %p116 = por %p114, %p115
      %p118 = scmp.ne.s32.totalorder %s103, %s117
      %p119 = scmp.eq.s32.totalorder %s30, 0
      %p120 = por %p118, %p119
      %s122 = sadd.s32 %s121, 1
      %p125 = scmp.eq.s32.totalorder %s24, 1
      %p126 = scmp.ne.s32.totalorder %s121, %s123
      %p127 = scmp.eq.s32.totalorder %s24, 0
      %p128 = por %p126, %p127
      %p129 = scmp.ne.s32.totalorder %s121, %s123
      %p130 = scmp.eq.s32.totalorder %s29, 1
      %p131 = por %p129, %p130
      %p132 = scmp.ne.s32.totalorder %s123, %s124
      %p133 = scmp.eq.s32.totalorder %s29, 0
      %p134 = por %p132, %p133
      %p135 = scmp.ne.s32.totalorder %s123, %s124
      %p136 = scmp.eq.s32.totalorder %s30, 1
      %p137 = por %p135, %p136
      %p139 = scmp.ne.s32.totalorder %s124, %s138
      %p140 = scmp.eq.s32.totalorder %s30, 0
      %p141 = por %p139, %p140
      %s143 = sadd.s32 %s142, 1
      %p146 = scmp.eq.s32.totalorder %s24, 1
      %p147 = scmp.ne.s32.totalorder %s142, %s144
      %p148 = scmp.eq.s32.totalorder %s24, 0
      %p149 = por %p147, %p148
      %p150 = scmp.ne.s32.totalorder %s142, %s144
      %p151 = scmp.eq.s32.totalorder %s29, 1
      %p152 = por %p150, %p151
      %p153 = scmp.ne.s32.totalorder %s144, %s145
      %p154 = scmp.eq.s32.totalorder %s29, 0
      %p155 = por %p153, %p154
      %p156 = scmp.ne.s32.totalorder %s144, %s145
      %p157 = scmp.eq.s32.totalorder %s30, 1
      %p158 = por %p156, %p157
      %p160 = scmp.ne.s32.totalorder %s145, %s159
      %p161 = scmp.eq.s32.totalorder %s30, 0
      %p162 = por %p160, %p161
      %s164 = sadd.s32 %s163, 1
      %p167 = scmp.eq.s32.totalorder %s24, 1
      %p168 = scmp.ne.s32.totalorder %s163, %s165
      %p169 = scmp.eq.s32.totalorder %s24, 0
      %p170 = por %p168, %p169
      %p171 = scmp.ne.s32.totalorder %s163, %s165
      %p172 = scmp.eq.s32.totalorder %s29, 1
      %p173 = por %p171, %p172
      %p174 = scmp.ne.s32.totalorder %s165, %s166
      %p175 = scmp.eq.s32.totalorder %s29, 0
      %p176 = por %p174, %p175
      %p177 = scmp.ne.s32.totalorder %s165, %s166
      %p178 = scmp.eq.s32.totalorder %s30, 1
      %p179 = por %p177, %p178
      %p181 = scmp.ne.s32.totalorder %s166, %s180
      %p182 = scmp.eq.s32.totalorder %s30, 0
      %p183 = por %p181, %p182
      %s185 = sadd.s32 %s184, 1
      %p188 = scmp.eq.s32.totalorder %s24, 1
      %p189 = scmp.ne.s32.totalorder %s184, %s186
      %p190 = scmp.eq.s32.totalorder %s24, 0
      %p191 = por %p189, %p190
      %p192 = scmp.ne.s32.totalorder %s184, %s186
      %p193 = scmp.eq.s32.totalorder %s29, 1
      %p194 = por %p192, %p193
      %p195 = scmp.ne.s32.totalorder %s186, %s187
      %p196 = scmp.eq.s32.totalorder %s29, 0
      %p197 = por %p195, %p196
      %p198 = scmp.ne.s32.totalorder %s186, %s187
      %p199 = scmp.eq.s32.totalorder %s30, 1
      %p200 = por %p198, %p199
      %p202 = scmp.ne.s32.totalorder %s187, %s201
      %p203 = scmp.eq.s32.totalorder %s30, 0
      %p204 = por %p202, %p203
      %s206 = sadd.s32 %s205, 1
      %p209 = scmp.eq.s32.totalorder %s24, 1
      %p210 = scmp.ne.s32.totalorder %s205, %s207
      %p211 = scmp.eq.s32.totalorder %s24, 0
      %p212 = por %p210, %p211
      %p213 = scmp.ne.s32.totalorder %s205, %s207
      %p214 = scmp.eq.s32.totalorder %s29, 1
      %p215 = por %p213, %p214
      %p216 = scmp.ne.s32.totalorder %s207, %s208
      %p217 = scmp.eq.s32.totalorder %s29, 0
      %p218 = por %p216, %p217
      %p219 = scmp.ne.s32.totalorder %s207, %s208
      %p220 = scmp.eq.s32.totalorder %s30, 1
      %p221 = por %p219, %p220
      %p223 = scmp.ne.s32.totalorder %s208, %s222
      %p224 = scmp.eq.s32.totalorder %s30, 0
      %p225 = por %p223, %p224
      %s227 = sadd.s32 %s226, 1
      %p230 = scmp.eq.s32.totalorder %s24, 1
      %p231 = scmp.ne.s32.totalorder %s226, %s228
      %p232 = scmp.eq.s32.totalorder %s24, 0
      %p233 = por %p231, %p232
      %p234 = scmp.ne.s32.totalorder %s226, %s228
      %p235 = scmp.eq.s32.totalorder %s29, 1
      %p236 = por %p234, %p235
      %p237 = scmp.ne.s32.totalorder %s228, %s229
      %p238 = scmp.eq.s32.totalorder %s29, 0
      %p239 = por %p237, %p238
      %p240 = scmp.ne.s32.totalorder %s228, %s229
      %p241 = scmp.eq.s32.totalorder %s30, 1
      %p242 = por %p240, %p241
      %p244 = scmp.ne.s32.totalorder %s229, %s243
      %p245 = scmp.eq.s32.totalorder %s30, 0
      %p246 = por %p244, %p245
      %s248 = sadd.s32 %s247, 1
      %p251 = scmp.eq.s32.totalorder %s24, 1
      %p252 = scmp.ne.s32.totalorder %s247, %s249
      %p253 = scmp.eq.s32.totalorder %s24, 0
      %p254 = por %p252, %p253
      %p255 = scmp.ne.s32.totalorder %s247, %s249
      %p256 = scmp.eq.s32.totalorder %s29, 1
      %p257 = por %p255, %p256
      %p258 = scmp.ne.s32.totalorder %s249, %s250
      %p259 = scmp.eq.s32.totalorder %s29, 0
      %p260 = por %p258, %p259
      %p261 = scmp.ne.s32.totalorder %s249, %s250
      %p262 = scmp.eq.s32.totalorder %s30, 1
      %p263 = por %p261, %p262
      %p265 = scmp.ne.s32.totalorder %s250, %s264
      %p266 = scmp.eq.s32.totalorder %s30, 0
      %p267 = por %p265, %p266
      %s269 = sadd.s32 %s268, 1
      %p272 = scmp.eq.s32.totalorder %s24, 1
      %p273 = scmp.ne.s32.totalorder %s268, %s270
      %p274 = scmp.eq.s32.totalorder %s24, 0
      %p275 = por %p273, %p274
      %p276 = scmp.ne.s32.totalorder %s268, %s270
      %p277 = scmp.eq.s32.totalorder %s29, 1
      %p278 = por %p276, %p277
      %p279 = scmp.ne.s32.totalorder %s270, %s271
      %p280 = scmp.eq.s32.totalorder %s29, 0
      %p281 = por %p279, %p280
      %p282 = scmp.ne.s32.totalorder %s270, %s271
      %p283 = scmp.eq.s32.totalorder %s30, 1
      %p284 = por %p282, %p283
      %p286 = scmp.ne.s32.totalorder %s271, %s285
      %p287 = scmp.eq.s32.totalorder %s30, 0
      %p288 = por %p286, %p287
      %s290 = sadd.s32 %s289, 1
      %p293 = scmp.eq.s32.totalorder %s24, 1
      %p294 = scmp.ne.s32.totalorder %s289, %s291
      %p295 = scmp.eq.s32.totalorder %s24, 0
      %p296 = por %p294, %p295
      %p297 = scmp.ne.s32.totalorder %s289, %s291
      %p298 = scmp.eq.s32.totalorder %s29, 1
      %p299 = por %p297, %p298
      %p300 = scmp.ne.s32.totalorder %s291, %s292
      %p301 = scmp.eq.s32.totalorder %s29, 0
      %p302 = por %p300, %p301
      %p303 = scmp.ne.s32.totalorder %s291, %s292
      %p304 = scmp.eq.s32.totalorder %s30, 1
      %p305 = por %p303, %p304
      %p307 = scmp.ne.s32.totalorder %s292, %s306
      %p308 = scmp.eq.s32.totalorder %s30, 0
      %p309 = por %p307, %p308
      %s311 = sadd.s32 %s310, 1
      %p314 = scmp.eq.s32.totalorder %s24, 1
      %p315 = scmp.ne.s32.totalorder %s310, %s312
      %p316 = scmp.eq.s32.totalorder %s24, 0
      %p317 = por %p315, %p316
      %p318 = scmp.ne.s32.totalorder %s310, %s312
      %p319 = scmp.eq.s32.totalorder %s29, 1
      %p320 = por %p318, %p319
      %p321 = scmp.ne.s32.totalorder %s312, %s313
      %p322 = scmp.eq.s32.totalorder %s29, 0
      %p323 = por %p321, %p322
      %p324 = scmp.ne.s32.totalorder %s312, %s313
      %p325 = scmp.eq.s32.totalorder %s30, 1
      %p326 = por %p324, %p325
      %p328 = scmp.ne.s32.totalorder %s313, %s327
      %p329 = scmp.eq.s32.totalorder %s30, 0
      %p330 = por %p328, %p329
      %s332 = sadd.s32 %s331, 1
      %p335 = scmp.eq.s32.totalorder %s24, 1
      %p336 = scmp.ne.s32.totalorder %s331, %s333
      %p337 = scmp.eq.s32.totalorder %s24, 0
      %p338 = por %p336, %p337
      %p339 = scmp.ne.s32.totalorder %s331, %s333
      %p340 = scmp.eq.s32.totalorder %s29, 1
      %p341 = por %p339, %p340
      %p342 = scmp.ne.s32.totalorder %s333, %s334
      %p343 = scmp.eq.s32.totalorder %s29, 0
      %p344 = por %p342, %p343
      %p345 = scmp.ne.s32.totalorder %s333, %s334
      %p346 = scmp.eq.s32.totalorder %s30, 1
      %p347 = por %p345, %p346
      %p349 = scmp.ne.s32.totalorder %s334, %s348
      %p350 = scmp.eq.s32.totalorder %s30, 0
      %p351 = por %p349, %p350
      %s352 = ssub.s32 %s24, %s31
      %p353 = scmp.eq.s32.totalorder %s352, 0
      %s355 = sadd.s32 %s354, 1
      %s356 = scalar_select %p353, %s354, %s355
      %p359 = pneg %p353
      %p360 = scmp.eq.s32.totalorder %s24, 1
      %p361 = por %p359, %p360
      %p362 = scmp.ne.s32.totalorder %s354, %s357
      %p363 = scmp.eq.s32.totalorder %s24, 0
      %p364 = por %p362, %p363
      %p365 = scmp.ne.s32.totalorder %s354, %s357
      %p366 = scmp.eq.s32.totalorder %s29, 1
      %p367 = por %p365, %p366
      %p368 = scmp.ne.s32.totalorder %s357, %s358
      %p369 = scmp.eq.s32.totalorder %s29, 0
      %p370 = por %p368, %p369
      %p371 = scmp.ne.s32.totalorder %s357, %s358
      %p372 = scmp.eq.s32.totalorder %s30, 1
      %p373 = por %p371, %p372
      %p375 = scmp.ne.s32.totalorder %s358, %s374
      %p376 = scmp.eq.s32.totalorder %s30, 0
      %p377 = por %p375, %p376
      %p378 = scmp.le.s32.totalorder 1, %s24
      %p379 = scmp.lt.s32.totalorder %s24, 3
      %p380 = pnand %p378, %p379
      %p381 = pneg %p380
      // Predicated region
      $region9: #{mobilenet_v3_forward.7} parent=5 // pred_check
        _
      $region10: #{mobilenet_v3_forward.7} parent=5 // pred_check_branch
        %383 = sbr.rel (%p380) target = $region12
      $region11: #{mobilenet_v3_forward.7} parent=5 // pred_region
        %s384 = ssub.s32 %s24, 1
        // Predicated region
        $region13: #{mobilenet_v3_forward.7} parent=11 // pred_check
          %p385 = pneg %p71
        $region14: #{mobilenet_v3_forward.7} parent=11 // pred_check_branch
          %387 = sbr.rel (%p385) target = $region16
        $region15: #{mobilenet_v3_forward.7} parent=11 // pred_region
          _
        $region16: #{mobilenet_v3_forward.7} parent=11 // pred_fallthru
          _
        // Predicated region
        $region17: #{mobilenet_v3_forward.7} parent=11 // pred_check
          %p388 = pneg %p92
        $region18: #{mobilenet_v3_forward.7} parent=11 // pred_check_branch
          %390 = sbr.rel (%p388) target = $region20
        $region19: #{mobilenet_v3_forward.7} parent=11 // pred_region
          _
        $region20: #{mobilenet_v3_forward.7} parent=11 // pred_fallthru
          _
        // Predicated region
        $region21: #{mobilenet_v3_forward.7} parent=11 // pred_check
          %p391 = pneg %p113
        $region22: #{mobilenet_v3_forward.7} parent=11 // pred_check_branch
          %393 = sbr.rel (%p391) target = $region24
        $region23: #{mobilenet_v3_forward.7} parent=11 // pred_region
          _
        $region24: #{mobilenet_v3_forward.7} parent=11 // pred_fallthru
          _
        // Predicated region
        $region25: #{mobilenet_v3_forward.7} parent=11 // pred_check
          %p394 = pneg %p134
        $region26: #{mobilenet_v3_forward.7} parent=11 // pred_check_branch
          %396 = sbr.rel (%p394) target = $region28
        $region27: #{mobilenet_v3_forward.7} parent=11 // pred_region
          _
        $region28: #{mobilenet_v3_forward.7} parent=11 // pred_fallthru
          _
        // Predicated region
        $region29: #{mobilenet_v3_forward.7} parent=11 // pred_check
          %p397 = pneg %p155
        $region30: #{mobilenet_v3_forward.7} parent=11 // pred_check_branch
          %399 = sbr.rel (%p397) target = $region32
        $region31: #{mobilenet_v3_forward.7} parent=11 // pred_region
          _
        $region32: #{mobilenet_v3_forward.7} parent=11 // pred_fallthru
          _
        // Predicated region
        $region33: #{mobilenet_v3_forward.7} parent=11 // pred_check
          %p400 = pneg %p176
        $region34: #{mobilenet_v3_forward.7} parent=11 // pred_check_branch
          %402 = sbr.rel (%p400) target = $region36
        $region35: #{mobilenet_v3_forward.7} parent=11 // pred_region
          _
        $region36: #{mobilenet_v3_forward.7} parent=11 // pred_fallthru
          _
        // Predicated region
        $region37: #{mobilenet_v3_forward.7} parent=11 // pred_check
          %p403 = pneg %p197
        $region38: #{mobilenet_v3_forward.7} parent=11 // pred_check_branch
          %405 = sbr.rel (%p403) target = $region40
        $region39: #{mobilenet_v3_forward.7} parent=11 // pred_region
          _
        $region40: #{mobilenet_v3_forward.7} parent=11 // pred_fallthru
          _
        // Predicated region
        $region41: #{mobilenet_v3_forward.7} parent=11 // pred_check
          %p406 = pneg %p218
        $region42: #{mobilenet_v3_forward.7} parent=11 // pred_check_branch
          %408 = sbr.rel (%p406) target = $region44
        $region43: #{mobilenet_v3_forward.7} parent=11 // pred_region
          _
        $region44: #{mobilenet_v3_forward.7} parent=11 // pred_fallthru
          _
        // Predicated region
        $region45: #{mobilenet_v3_forward.7} parent=11 // pred_check
          %p409 = pneg %p239
        $region46: #{mobilenet_v3_forward.7} parent=11 // pred_check_branch
          %411 = sbr.rel (%p409) target = $region48
        $region47: #{mobilenet_v3_forward.7} parent=11 // pred_region
          _
        $region48: #{mobilenet_v3_forward.7} parent=11 // pred_fallthru
          _
        // Predicated region
        $region49: #{mobilenet_v3_forward.7} parent=11 // pred_check
          %p412 = pneg %p260
        $region50: #{mobilenet_v3_forward.7} parent=11 // pred_check_branch
          %414 = sbr.rel (%p412) target = $region52
        $region51: #{mobilenet_v3_forward.7} parent=11 // pred_region
          _
        $region52: #{mobilenet_v3_forward.7} parent=11 // pred_fallthru
          _
        // Predicated region
        $region53: #{mobilenet_v3_forward.7} parent=11 // pred_check
          %p415 = pneg %p281
        $region54: #{mobilenet_v3_forward.7} parent=11 // pred_check_branch
          %417 = sbr.rel (%p415) target = $region56
        $region55: #{mobilenet_v3_forward.7} parent=11 // pred_region
          _
        $region56: #{mobilenet_v3_forward.7} parent=11 // pred_fallthru
          _
        // Predicated region
        $region57: #{mobilenet_v3_forward.7} parent=11 // pred_check
          %p418 = pneg %p302
        $region58: #{mobilenet_v3_forward.7} parent=11 // pred_check_branch
          %420 = sbr.rel (%p418) target = $region60
        $region59: #{mobilenet_v3_forward.7} parent=11 // pred_region
          _
        $region60: #{mobilenet_v3_forward.7} parent=11 // pred_fallthru
          _
        // Predicated region
        $region61: #{mobilenet_v3_forward.7} parent=11 // pred_check
          %p421 = pneg %p323
        $region62: #{mobilenet_v3_forward.7} parent=11 // pred_check_branch
          %423 = sbr.rel (%p421) target = $region64
        $region63: #{mobilenet_v3_forward.7} parent=11 // pred_region
          _
        $region64: #{mobilenet_v3_forward.7} parent=11 // pred_fallthru
          _
        // Predicated region
        $region65: #{mobilenet_v3_forward.7} parent=11 // pred_check
          %p424 = pneg %p344
        $region66: #{mobilenet_v3_forward.7} parent=11 // pred_check_branch
          %426 = sbr.rel (%p424) target = $region68
        $region67: #{mobilenet_v3_forward.7} parent=11 // pred_region
          _
        $region68: #{mobilenet_v3_forward.7} parent=11 // pred_fallthru
          _
      $region12: #{mobilenet_v3_forward.7} parent=5 // pred_fallthru
        _
      %p427 = scmp.lt.s32.totalorder %s24, 2
      // Predicated region
      $region69: #{mobilenet_v3_forward.7} parent=5 // pred_check
        %p428 = pneg %p427
      $region70: #{mobilenet_v3_forward.7} parent=5 // pred_check_branch
        %430 = sbr.rel (%p428) target = $region72
      $region71: #{mobilenet_v3_forward.7} parent=5 // pred_region
        // Predicated region
        $region73: #{mobilenet_v3_forward.7} parent=71 // pred_check
          %p431 = pneg %p44
        $region74: #{mobilenet_v3_forward.7} parent=71 // pred_check_branch
          %433 = sbr.rel (%p431) target = $region76
        $region75: #{mobilenet_v3_forward.7} parent=71 // pred_region
          %p434 = scmp.lt.s32.totalorder %s24, 1
          %s435 = scalar_select %p434, %s24, 1
          %s436 = smul.addr %s435, 16
          %s437 = smul.addr %s436, 2
          %s438 = scalar_lea.vmem %s0, %s437
        $region76: #{mobilenet_v3_forward.7} parent=71 // pred_fallthru
          _
      $region72: #{mobilenet_v3_forward.7} parent=5 // pred_fallthru
        _
      %p439 = scmp.le.s32.totalorder 1, %s24
      %p440 = scmp.lt.s32.totalorder %s24, 3
      %p441 = pnand %p439, %p440
      %p442 = pneg %p441
      // Predicated region
      $region77: #{mobilenet_v3_forward.7} parent=5 // pred_check
        _
      $region78: #{mobilenet_v3_forward.7} parent=5 // pred_check_branch
        %444 = sbr.rel (%p441) target = $region80
      $region79: #{mobilenet_v3_forward.7} parent=5 // pred_region
        %s445 = ssub.s32 %s24, 1
        %p446 = scmp.lt.s32.totalorder %s29, 1
        %s447 = scalar_select %p446, %s29, 1
        %s448 = smul.addr %s447, 16
        %s449 = smul.addr %s448, 2
        %s450 = scalar_lea.vmem %s0, %s449
        %p451 = pneg %p50
        %p452 = pneg %p47
        %p453 = pneg %p71
        %p454 = pneg %p68
        %p455 = pneg %p92
        %p456 = pneg %p89
        %p457 = pneg %p113
        %p458 = pneg %p110
        %p459 = pneg %p134
        %p460 = pneg %p131
        %p461 = pneg %p155
        %p462 = pneg %p152
        %p463 = pneg %p176
        %p464 = pneg %p173
        %p465 = pneg %p197
        %p466 = pneg %p194
        %p467 = pneg %p218
        %p468 = pneg %p215
        %p469 = pneg %p239
        %p470 = pneg %p236
        %p471 = pneg %p260
        %p472 = pneg %p257
        %p473 = pneg %p281
        %p474 = pneg %p278
        %p475 = pneg %p302
        %p476 = pneg %p299
        %p477 = pneg %p323
        %p478 = pneg %p320
        %p479 = pneg %p344
        %p480 = pneg %p341
        %p481 = pneg %p370
        %p482 = pneg %p367
        %s483 = sand.u32 %s357, 1
        %s484 = scalar_lea.sflag [#allocation4], %s483
        %s485 = sand.u32 %s357, 1
        %s486 = scalar_lea.vmem [#allocation3], %s485
        %p487 = scmp.lt.s32.totalorder %s29, 1
        %s488 = scalar_select %p487, %s29, 1
        %s489 = smul.addr %s488, 16
        %s490 = smul.addr %s489, 2
        %s491 = scalar_lea.vmem %s0, %s490
        %v493 = vld [vmem:[%s491] sm:$0x1]
        %v494 = vld [vmem:[%s491 + $0x2] sm:$0x1]
        %v495 = vld [vmem:[%s491 + $0x4] sm:$0x1]
        %v496 = vld [vmem:[%s491 + $0x6] sm:$0x1]
        %v497 = vunpack.c.l.bf16 %v493
        %v498 = vunpack.c.l.bf16 %v494
        %v499 = vunpack.c.l.bf16 %v495
        %v500 = vunpack.c.l.bf16 %v496
        %s501 = scalar_lea.vmem %s491, 16
        %v502 = vld [vmem:[%s501] sm:$0x1]
        %v503 = vld [vmem:[%s501 + $0x2] sm:$0x1]
        %v504 = vld [vmem:[%s501 + $0x4] sm:$0x1]
        %v505 = vunpack.c.l.bf16 %v502
        %v506 = vunpack.c.l.bf16 %v503
        %v507 = vunpack.c.l.bf16 %v504
        %v508 = vld [vmem:[%s1] sm:$0x1]
        %v509 = vlaneseq
        %v510 = vshrl.u32 %v509, 7
        %v511 = vsub.s32 0, %v510
        %v512 = vrot.slane %v508, %v511
        %v513 = vmul.f32 %v497, %v512
        %v514 = vmul.f32 %v498, %v512
        %v515 = vld [vmem:[%s1 + $0x5] sm:$0x1]
        %v516 = vlaneseq
        %v517 = vshrl.u32 %v516, 7
        %v518 = vsub.s32 0, %v517
        %v519 = vrot.slane %v515, %v518
        %v520 = vmul.f32 %v505, %v519
        %v521 = vmul.f32 %v506, %v519
        %v522 = vadd.f32 %v513, %v520
        %v523 = vadd.f32 %v514, %v521
        %v524 = vld [vmem:[%s1 + $0xa] sm:$0x1]
        %v525 = vlaneseq
        %v526 = vshrl.u32 %v525, 7
        %v527 = vsub.s32 0, %v526
        %v528 = vrot.slane %v524, %v527
        %v529 = vmul.f32 %v498, %v528
        %v530 = vmul.f32 %v499, %v528
        %v531 = vadd.f32 %v522, %v529
        %v532 = vadd.f32 %v523, %v530
        %v533 = vld [vmem:[%s1 + $0xf] sm:$0x1]
        %v534 = vlaneseq
        %v535 = vshrl.u32 %v534, 7
        %v536 = vsub.s32 0, %v535
        %v537 = vrot.slane %v533, %v536
        %v538 = vmul.f32 %v506, %v537
        %v539 = vmul.f32 %v507, %v537
        %v540 = vadd.f32 %v531, %v538
        %v541 = vadd.f32 %v532, %v539
        %v542 = vld [vmem:[%s1 + $0x14] sm:$0x1]
        %v543 = vlaneseq
        %v544 = vshrl.u32 %v543, 7
        %v545 = vsub.s32 0, %v544
        %v546 = vrot.slane %v542, %v545
        %v547 = vmul.f32 %v499, %v546
        %v548 = vmul.f32 %v500, %v546
        %v549 = vadd.f32 %v540, %v547
        %v550 = vadd.f32 %v541, %v548
        %s551 = scalar_lea.vmem %s491, 8
        %v552 = vld [vmem:[%s551] sm:$0x1]
        %v553 = vld [vmem:[%s551 + $0x2] sm:$0x1]
        %v554 = vld [vmem:[%s551 + $0x4] sm:$0x1]
        %v555 = vld [vmem:[%s551 + $0x6] sm:$0x1]
        %v556 = vunpack.c.l.bf16 %v552
        %v557 = vunpack.c.l.bf16 %v553
        %v558 = vunpack.c.l.bf16 %v554
        %v559 = vunpack.c.l.bf16 %v555
        %s560 = scalar_lea.vmem %s491, 24
        %v561 = vld [vmem:[%s560] sm:$0x1]
        %v562 = vld [vmem:[%s560 + $0x2] sm:$0x1]
        %v563 = vld [vmem:[%s560 + $0x4] sm:$0x1]
        %v564 = vunpack.c.l.bf16 %v561
        %v565 = vunpack.c.l.bf16 %v562
        %v566 = vunpack.c.l.bf16 %v563
        %v567 = vld [vmem:[%s1 + $0x1] sm:$0x1]
        %v568 = vlaneseq
        %v569 = vshrl.u32 %v568, 7
        %v570 = vsub.s32 0, %v569
        %v571 = vrot.slane %v567, %v570
        %v572 = vmul.f32 %v556, %v571
        %v573 = vmul.f32 %v557, %v571
        %v574 = vadd.f32 %v549, %v572
        %v575 = vadd.f32 %v550, %v573
        %v576 = vld [vmem:[%s1 + $0x6] sm:$0x1]
        %v577 = vlaneseq
        %v578 = vshrl.u32 %v577, 7
        %v579 = vsub.s32 0, %v578
        %v580 = vrot.slane %v576, %v579
        %v581 = vmul.f32 %v564, %v580
        %v582 = vmul.f32 %v565, %v580
        %v583 = vadd.f32 %v574, %v581
        %v584 = vadd.f32 %v575, %v582
        %v585 = vld [vmem:[%s1 + $0xb] sm:$0x1]
        %v586 = vlaneseq
        %v587 = vshrl.u32 %v586, 7
        %v588 = vsub.s32 0, %v587
        %v589 = vrot.slane %v585, %v588
        %v590 = vmul.f32 %v557, %v589
        %v591 = vmul.f32 %v558, %v589
        %v592 = vadd.f32 %v583, %v590
        %v593 = vadd.f32 %v584, %v591
        %v594 = vld [vmem:[%s1 + $0x10] sm:$0x1]
        %v595 = vlaneseq
        %v596 = vshrl.u32 %v595, 7
        %v597 = vsub.s32 0, %v596
        %v598 = vrot.slane %v594, %v597
        %v599 = vmul.f32 %v565, %v598
        %v600 = vmul.f32 %v566, %v598
        %v601 = vadd.f32 %v592, %v599
        %v602 = vadd.f32 %v593, %v600
        %v603 = vld [vmem:[%s1 + $0x15] sm:$0x1]
        %v604 = vlaneseq
        %v605 = vshrl.u32 %v604, 7
        %v606 = vsub.s32 0, %v605
        %v607 = vrot.slane %v603, %v606
        %v608 = vmul.f32 %v558, %v607
        %v609 = vmul.f32 %v559, %v607
        %v610 = vadd.f32 %v601, %v608
        %v611 = vadd.f32 %v602, %v609
        %v612 = vld [vmem:[%s491] sm:$0x3]
        %v613 = vld [vmem:[%s491 + $0x2] sm:$0x3]
        %v614 = vld [vmem:[%s491 + $0x4] sm:$0x3]
        %v615 = vld [vmem:[%s491 + $0x6] sm:$0x3]
        %v616 = vunpack.c.l.bf16 %v612
        %v617 = vunpack.c.l.bf16 %v613
        %v618 = vunpack.c.l.bf16 %v614
        %v619 = vunpack.c.l.bf16 %v615
        %v620 = vld [vmem:[%s501] sm:$0x3]
        %v621 = vld [vmem:[%s501 + $0x2] sm:$0x3]
        %v622 = vld [vmem:[%s501 + $0x4] sm:$0x3]
        %v623 = vunpack.c.l.bf16 %v620
        %v624 = vunpack.c.l.bf16 %v621
        %v625 = vunpack.c.l.bf16 %v622
        %v626 = vld [vmem:[%s1 + $0x2] sm:$0x1]
        %v627 = vlaneseq
        %v628 = vshrl.u32 %v627, 7
        %v629 = vsub.s32 0, %v628
        %v630 = vrot.slane %v626, %v629
        %v631 = vmul.f32 %v616, %v630
        %v632 = vmul.f32 %v617, %v630
        %v635 = vrot.slane %v631, 5
        %v636 = vrot.slane %v635, 4
        %v637 = vrot.slane %v632, 5
        %v638 = vrot.slane %v637, 4
        %v641 = vadd.f32 %v610, %v636
        %v642 = vadd.f32 %v611, %v638
        %v643 = vld [vmem:[%s1 + $0x7] sm:$0x1]
        %v644 = vlaneseq
        %v645 = vshrl.u32 %v644, 7
        %v646 = vsub.s32 0, %v645
        %v647 = vrot.slane %v643, %v646
        %v648 = vmul.f32 %v623, %v647
        %v649 = vmul.f32 %v624, %v647
        %v652 = vrot.slane %v648, 5
        %v653 = vrot.slane %v652, 4
        %v654 = vrot.slane %v649, 5
        %v655 = vrot.slane %v654, 4
        %v658 = vadd.f32 %v641, %v653
        %v659 = vadd.f32 %v642, %v655
        %v660 = vld [vmem:[%s1 + $0xc] sm:$0x1]
        %v661 = vlaneseq
        %v662 = vshrl.u32 %v661, 7
        %v663 = vsub.s32 0, %v662
        %v664 = vrot.slane %v660, %v663
        %v665 = vmul.f32 %v617, %v664
        %v666 = vmul.f32 %v618, %v664
        %v669 = vrot.slane %v665, 5
        %v670 = vrot.slane %v669, 4
        %v671 = vrot.slane %v666, 5
        %v672 = vrot.slane %v671, 4
        %v675 = vadd.f32 %v658, %v670
        %v676 = vadd.f32 %v659, %v672
        %v677 = vld [vmem:[%s1 + $0x11] sm:$0x1]
        %v678 = vlaneseq
        %v679 = vshrl.u32 %v678, 7
        %v680 = vsub.s32 0, %v679
        %v681 = vrot.slane %v677, %v680
        %v682 = vmul.f32 %v624, %v681
        %v683 = vmul.f32 %v625, %v681
        %v686 = vrot.slane %v682, 5
        %v687 = vrot.slane %v686, 4
        %v688 = vrot.slane %v683, 5
        %v689 = vrot.slane %v688, 4
        %v692 = vadd.f32 %v675, %v687
        %v693 = vadd.f32 %v676, %v689
        %v694 = vld [vmem:[%s1 + $0x16] sm:$0x1]
        %v695 = vlaneseq
        %v696 = vshrl.u32 %v695, 7
        %v697 = vsub.s32 0, %v696
        %v698 = vrot.slane %v694, %v697
        %v699 = vmul.f32 %v618, %v698
        %v700 = vmul.f32 %v619, %v698
        %v703 = vrot.slane %v699, 5
        %v704 = vrot.slane %v703, 4
        %v705 = vrot.slane %v700, 5
        %v706 = vrot.slane %v705, 4
        %v709 = vadd.f32 %v692, %v704
        %v710 = vadd.f32 %v693, %v706
        %v711 = vld [vmem:[%s551] sm:$0x3]
        %v712 = vld [vmem:[%s551 + $0x2] sm:$0x3]
        %v713 = vld [vmem:[%s551 + $0x4] sm:$0x3]
        %v714 = vld [vmem:[%s551 + $0x6] sm:$0x3]
        %v715 = vunpack.c.l.bf16 %v711
        %v716 = vunpack.c.l.bf16 %v712
        %v717 = vunpack.c.l.bf16 %v713
        %v718 = vunpack.c.l.bf16 %v714
        %v719 = vld [vmem:[%s560] sm:$0x3]
        %v720 = vld [vmem:[%s560 + $0x2] sm:$0x3]
        %v721 = vld [vmem:[%s560 + $0x4] sm:$0x3]
        %v722 = vunpack.c.l.bf16 %v719
        %v723 = vunpack.c.l.bf16 %v720
        %v724 = vunpack.c.l.bf16 %v721
        %v725 = vld [vmem:[%s1 + $0x3] sm:$0x1]
        %v726 = vlaneseq
        %v727 = vshrl.u32 %v726, 7
        %v728 = vsub.s32 0, %v727
        %v729 = vrot.slane %v725, %v728
        %v730 = vmul.f32 %v715, %v729
        %v731 = vmul.f32 %v716, %v729
        %v734 = vrot.slane %v730, 5
        %v735 = vrot.slane %v734, 4
        %v736 = vrot.slane %v731, 5
        %v737 = vrot.slane %v736, 4
        %v740 = vadd.f32 %v709, %v735
        %v741 = vadd.f32 %v710, %v737
        %v742 = vld [vmem:[%s1 + $0x8] sm:$0x1]
        %v743 = vlaneseq
        %v744 = vshrl.u32 %v743, 7
        %v745 = vsub.s32 0, %v744
        %v746 = vrot.slane %v742, %v745
        %v747 = vmul.f32 %v722, %v746
        %v748 = vmul.f32 %v723, %v746
        %v751 = vrot.slane %v747, 5
        %v752 = vrot.slane %v751, 4
        %v753 = vrot.slane %v748, 5
        %v754 = vrot.slane %v753, 4
        %v757 = vadd.f32 %v740, %v752
        %v758 = vadd.f32 %v741, %v754
        %v759 = vld [vmem:[%s1 + $0xd] sm:$0x1]
        %v760 = vlaneseq
        %v761 = vshrl.u32 %v760, 7
        %v762 = vsub.s32 0, %v761
        %v763 = vrot.slane %v759, %v762
        %v764 = vmul.f32 %v716, %v763
        %v765 = vmul.f32 %v717, %v763
        %v768 = vrot.slane %v764, 5
        %v769 = vrot.slane %v768, 4
        %v770 = vrot.slane %v765, 5
        %v771 = vrot.slane %v770, 4
        %v774 = vadd.f32 %v757, %v769
        %v775 = vadd.f32 %v758, %v771
        %v776 = vld [vmem:[%s1 + $0x12] sm:$0x1]
        %v777 = vlaneseq
        %v778 = vshrl.u32 %v777, 7
        %v779 = vsub.s32 0, %v778
        %v780 = vrot.slane %v776, %v779
        %v781 = vmul.f32 %v723, %v780
        %v782 = vmul.f32 %v724, %v780
        %v785 = vrot.slane %v781, 5
        %v786 = vrot.slane %v785, 4
        %v787 = vrot.slane %v782, 5
        %v788 = vrot.slane %v787, 4
        %v791 = vadd.f32 %v774, %v786
        %v792 = vadd.f32 %v775, %v788
        %v793 = vld [vmem:[%s1 + $0x17] sm:$0x1]
        %v794 = vlaneseq
        %v795 = vshrl.u32 %v794, 7
        %v796 = vsub.s32 0, %v795
        %v797 = vrot.slane %v793, %v796
        %v798 = vmul.f32 %v717, %v797
        %v799 = vmul.f32 %v718, %v797
        %v802 = vrot.slane %v798, 5
        %v803 = vrot.slane %v802, 4
        %v804 = vrot.slane %v799, 5
        %v805 = vrot.slane %v804, 4
        %v808 = vadd.f32 %v791, %v803
        %v809 = vadd.f32 %v792, %v805
        %v810 = vld [vmem:[%s491] sm:$0x2]
        %v811 = vld [vmem:[%s491 + $0x2] sm:$0x2]
        %v812 = vld [vmem:[%s491 + $0x4] sm:$0x2]
        %v813 = vld [vmem:[%s491 + $0x6] sm:$0x2]
        %v814 = vunpack.c.l.bf16 %v810
        %v815 = vunpack.c.l.bf16 %v811
        %v816 = vunpack.c.l.bf16 %v812
        %v817 = vunpack.c.l.bf16 %v813
        %v818 = vld [vmem:[%s501] sm:$0x2]
        %v819 = vld [vmem:[%s501 + $0x2] sm:$0x2]
        %v820 = vld [vmem:[%s501 + $0x4] sm:$0x2]
        %v821 = vunpack.c.l.bf16 %v818
        %v822 = vunpack.c.l.bf16 %v819
        %v823 = vunpack.c.l.bf16 %v820
        %v824 = vld [vmem:[%s1 + $0x4] sm:$0x1]
        %v825 = vlaneseq
        %v826 = vshrl.u32 %v825, 7
        %v827 = vsub.s32 0, %v826
        %v828 = vrot.slane %v824, %v827
        %v829 = vmul.f32 %v814, %v828
        %v830 = vmul.f32 %v815, %v828
        %v833 = vrot.slane %v829, 6
        %v834 = vrot.slane %v833, 4
        %v835 = vrot.slane %v830, 6
        %v836 = vrot.slane %v835, 4
        %v839 = vadd.f32 %v808, %v834
        %v840 = vadd.f32 %v809, %v836
        %v841 = vld [vmem:[%s1 + $0x9] sm:$0x1]
        %v842 = vlaneseq
        %v843 = vshrl.u32 %v842, 7
        %v844 = vsub.s32 0, %v843
        %v845 = vrot.slane %v841, %v844
        %v846 = vmul.f32 %v821, %v845
        %v847 = vmul.f32 %v822, %v845
        %v850 = vrot.slane %v846, 6
        %v851 = vrot.slane %v850, 4
        %v852 = vrot.slane %v847, 6
        %v853 = vrot.slane %v852, 4
        %v856 = vadd.f32 %v839, %v851
        %v857 = vadd.f32 %v840, %v853
        %v858 = vld [vmem:[%s1 + $0xe] sm:$0x1]
        %v859 = vlaneseq
        %v860 = vshrl.u32 %v859, 7
        %v861 = vsub.s32 0, %v860
        %v862 = vrot.slane %v858, %v861
        %v863 = vmul.f32 %v815, %v862
        %v864 = vmul.f32 %v816, %v862
        %v867 = vrot.slane %v863, 6
        %v868 = vrot.slane %v867, 4
        %v869 = vrot.slane %v864, 6
        %v870 = vrot.slane %v869, 4
        %v873 = vadd.f32 %v856, %v868
        %v874 = vadd.f32 %v857, %v870
        %v875 = vld [vmem:[%s1 + $0x13] sm:$0x1]
        %v876 = vlaneseq
        %v877 = vshrl.u32 %v876, 7
        %v878 = vsub.s32 0, %v877
        %v879 = vrot.slane %v875, %v878
        %v880 = vmul.f32 %v822, %v879
        %v881 = vmul.f32 %v823, %v879
        %v884 = vrot.slane %v880, 6
        %v885 = vrot.slane %v884, 4
        %v886 = vrot.slane %v881, 6
        %v887 = vrot.slane %v886, 4
        %v890 = vadd.f32 %v873, %v885
        %v891 = vadd.f32 %v874, %v887
        %v892 = vld [vmem:[%s1 + $0x18] sm:$0x1]
        %v893 = vlaneseq
        %v894 = vshrl.u32 %v893, 7
        %v895 = vsub.s32 0, %v894
        %v896 = vrot.slane %v892, %v895
        %v897 = vmul.f32 %v816, %v896
        %v898 = vmul.f32 %v817, %v896
        %v901 = vrot.slane %v897, 6
        %v902 = vrot.slane %v901, 4
        %v903 = vrot.slane %v898, 6
        %v904 = vrot.slane %v903, 4
        %v907 = vadd.f32 %v890, %v902
        %v908 = vadd.f32 %v891, %v904
        %v909 = vld [vmem:[%s2] sm:$0x1]
        %v911 = vlaneseq
        %v912 = vshrl.u32 %v911, 7
        %v913 = vsub.s32 0, %v912
        %v914 = vrot.slane %v909, %v913
        %v916 = vadd.f32 %v907, %v914
        %v917 = vadd.f32 %v908, %v914
        %v918 = vadd.f32 %v916, 3.0
        %v919 = vadd.f32 %v917, 3.0
        %v920 = vmax.f32 %v918, 0.0
        %v921 = vmax.f32 %v919, 0.0
        %v922 = vmin.f32 %v920, 6.0
        %v923 = vmin.f32 %v921, 6.0
        %v924 = vmul.f32 %v916, %v922
        %v925 = vmul.f32 %v917, %v923
        %v926 = vmul.f32 %v924, 0.16666667
        %v927 = vmul.f32 %v925, 0.16666667
        %928 = vst [vmem:[#allocation2] sm:$0x3] %v926
        %929 = vst [vmem:[#allocation2 + $0x2] sm:$0x3] %v927
        %v930 = vld [vmem:[#allocation2] sm:$0xf]
        %vm931 = vcmask 1043456
        %v932 = vsel %vm931, %v930, 0.0
        %v933 = vrot.slane %v932, 4
        %v934 = vadd.f32 %v932, %v933
        %v935 = vrot.slane %v934, 2
        %v936 = vadd.f32 %v934, %v935
        %v937 = vrot.slane %v936, 1
        %v938 = vadd.f32 %v936, %v937
        %v939 = vmul.f32 %v938, 0.25
        %v940 = vpack.c.bf16 %v939, %v939
        %v941 = vld [vmem:[%s3] sm:$0xf]
        %v942 = vld [vmem:[%s3 + $0x4] sm:$0xf]
        %v943 = vld [vmem:[%s3 + $0x8] sm:$0xf]
        %v944 = vld [vmem:[%s3 + $0xc] sm:$0xf]
        %v945 = vld [vmem:[%s3 + $0x10] sm:$0xf]
        %v946 = vld [vmem:[%s3 + $0x14] sm:$0xf]
        %v947 = vld [vmem:[%s3 + $0x18] sm:$0xf]
        %v948 = vld [vmem:[%s3 + $0x1c] sm:$0xf]
        %v949 = vld [vmem:[%s3 + $0x20] sm:$0xf]
        %v950 = vld [vmem:[%s3 + $0x24] sm:$0xf]
        %v951 = vld [vmem:[%s3 + $0x28] sm:$0xf]
        %v952 = vld [vmem:[%s3 + $0x2c] sm:$0xf]
        %v953 = vld [vmem:[%s3 + $0x30] sm:$0xf]
        %v954 = vld [vmem:[%s3 + $0x34] sm:$0xf]
        %v955 = vld [vmem:[%s3 + $0x38] sm:$0xf]
        %v956 = vld [vmem:[%s3 + $0x3c] sm:$0xf]
        %v957 = vld [vmem:[%s4] sm:$0x1]
        %v974 = vunpack.c.l.b16 %v941
        %v975 = vunpack.c.l.b16 %v942
        %v976 = vunpack.c.l.b16 %v943
        %v977 = vunpack.c.l.b16 %v944
        %v978 = vunpack.c.l.b16 %v945
        %v979 = vunpack.c.l.b16 %v946
        %v980 = vunpack.c.l.b16 %v947
        %v981 = vunpack.c.l.b16 %v948
        %v982 = vunpack.c.l.b16 %v949
        %v983 = vunpack.c.l.b16 %v950
        %v984 = vunpack.c.l.b16 %v951
        %v985 = vunpack.c.l.b16 %v952
        %v986 = vunpack.c.l.b16 %v953
        %v987 = vunpack.c.l.b16 %v954
        %v988 = vunpack.c.l.b16 %v955
        %v989 = vunpack.c.l.b16 %v956
        %v990 = vpack.c.b16 %v975, %v974
        %v991 = vpack.c.b16 %v977, %v976
        %v992 = vpack.c.b16 %v979, %v978
        %v993 = vpack.c.b16 %v981, %v980
        %v994 = vpack.c.b16 %v983, %v982
        %v995 = vpack.c.b16 %v985, %v984
        %v996 = vpack.c.b16 %v987, %v986
        %v997 = vpack.c.b16 %v989, %v988
        %1006 = vmatprep.subr.bf16.mxu0 0
        %1007 = vmatpush1.bf16.msra.mxu0 %v990
        %1008 = vmatprep.subr.bf16.mxu0 0
        %1009 = vmatpush1.bf16.msra.mxu0 %v991
        %1010 = vmatprep.subr.bf16.mxu0 0
        %1011 = vmatpush1.bf16.msra.mxu0 %v992
        %1012 = vmatprep.subr.bf16.mxu0 0
        %1013 = vmatpush1.bf16.msra.mxu0 %v993
        %1014 = vmatprep.subr.bf16.mxu0 0
        %1015 = vmatpush1.bf16.msra.mxu0 %v994
        %1016 = vmatprep.subr.bf16.mxu0 0
        %1017 = vmatpush1.bf16.msra.mxu0 %v995
        %1018 = vmatprep.subr.bf16.mxu0 0
        %1019 = vmatpush1.bf16.msra.mxu0 %v996
        %1020 = vmatprep.subr.bf16.mxu0 0
        %1021 = vmatpush1.bf16.msra.mxu0 %v997
        %1022 = vmatprep.subr.bf16.mxu0 0
        %1023 = vmatpush1.bf16.msra.mxu0 0
        %1024 = vmatprep.subr.bf16.mxu0 0
        %1025 = vmatpush1.bf16.msra.mxu0 0
        %1026 = vmatprep.subr.bf16.mxu0 0
        %1027 = vmatpush1.bf16.msra.mxu0 0
        %1028 = vmatprep.subr.bf16.mxu0 0
        %1029 = vmatpush1.bf16.msra.mxu0 0
        %1030 = vmatprep.subr.bf16.mxu0 0
        %1031 = vmatpush1.bf16.msra.mxu0 0
        %1032 = vmatprep.subr.bf16.mxu0 0
        %1033 = vmatpush1.bf16.msra.mxu0 0
        %1034 = vmatprep.subr.bf16.mxu0 0
        %1035 = vmatpush1.bf16.msra.mxu0 0
        %1036 = vmatprep.subr.bf16.mxu0 0
        %1037 = vmatpush1.bf16.msra.mxu0 0
        %1038 = vmatprep.mubr.bf16.mxu0 0
        %1039 = vmatmul.mubr.bf16.gmra.mrb[0].mxu0 %v940
        %v1040 = vpop.f32.mrb[0].mxu0
        %v1041 = vadd.f32 %v957, %v1040
        %v1042 = vpop.f32.mrb[0].mxu0
        %v1043 = vpop.f32.mrb[0].mxu0
        %v1044 = vpop.f32.mrb[0].mxu0
        %1045 = vdwg.mxu0
        %v1046 = vmax.f32 %v1041, 0.0
        %v1047 = vpack.c.bf16 %v1046, %v1046
        %v1048 = vld [vmem:[%s5] sm:$0xf]
        %v1049 = vld [vmem:[%s5 + $0x4] sm:$0xf]
        %v1050 = vld [vmem:[%s5 + $0x8] sm:$0xf]
        %v1051 = vld [vmem:[%s5 + $0xc] sm:$0xf]
        %v1052 = vld [vmem:[%s5 + $0x10] sm:$0xf]
        %v1053 = vld [vmem:[%s5 + $0x14] sm:$0xf]
        %v1054 = vld [vmem:[%s5 + $0x18] sm:$0xf]
        %v1055 = vld [vmem:[%s5 + $0x1c] sm:$0xf]
        %v1056 = vld [vmem:[%s5 + $0x20] sm:$0xf]
        %v1057 = vld [vmem:[%s5 + $0x24] sm:$0xf]
        %v1058 = vld [vmem:[%s5 + $0x28] sm:$0xf]
        %v1059 = vld [vmem:[%s5 + $0x2c] sm:$0xf]
        %v1060 = vld [vmem:[%s5 + $0x30] sm:$0xf]
        %v1061 = vld [vmem:[%s5 + $0x34] sm:$0xf]
        %v1062 = vld [vmem:[%s5 + $0x38] sm:$0xf]
        %v1063 = vld [vmem:[%s5 + $0x3c] sm:$0xf]
        %v1064 = vld [vmem:[%s6] sm:$0x1]
        %v1081 = vunpack.c.l.b16 %v1048
        %v1082 = vunpack.c.l.b16 %v1049
        %v1083 = vunpack.c.l.b16 %v1050
        %v1084 = vunpack.c.l.b16 %v1051
        %v1085 = vunpack.c.l.b16 %v1052
        %v1086 = vunpack.c.l.b16 %v1053
        %v1087 = vunpack.c.l.b16 %v1054
        %v1088 = vunpack.c.l.b16 %v1055
        %v1089 = vunpack.c.l.b16 %v1056
        %v1090 = vunpack.c.l.b16 %v1057
        %v1091 = vunpack.c.l.b16 %v1058
        %v1092 = vunpack.c.l.b16 %v1059
        %v1093 = vunpack.c.l.b16 %v1060
        %v1094 = vunpack.c.l.b16 %v1061
        %v1095 = vunpack.c.l.b16 %v1062
        %v1096 = vunpack.c.l.b16 %v1063
        %v1097 = vpack.c.b16 %v1082, %v1081
        %v1098 = vpack.c.b16 %v1084, %v1083
        %v1099 = vpack.c.b16 %v1086, %v1085
        %v1100 = vpack.c.b16 %v1088, %v1087
        %v1101 = vpack.c.b16 %v1090, %v1089
        %v1102 = vpack.c.b16 %v1092, %v1091
        %v1103 = vpack.c.b16 %v1094, %v1093
        %v1104 = vpack.c.b16 %v1096, %v1095
        %1113 = vmatprep.subr.bf16.mxu0 0
        %1114 = vmatpush1.bf16.msra.mxu0 %v1097
        %1115 = vmatprep.subr.bf16.mxu0 0
        %1116 = vmatpush1.bf16.msra.mxu0 %v1098
        %1117 = vmatprep.subr.bf16.mxu0 0
        %1118 = vmatpush1.bf16.msra.mxu0 %v1099
        %1119 = vmatprep.subr.bf16.mxu0 0
        %1120 = vmatpush1.bf16.msra.mxu0 %v1100
        %1121 = vmatprep.subr.bf16.mxu0 0
        %1122 = vmatpush1.bf16.msra.mxu0 %v1101
        %1123 = vmatprep.subr.bf16.mxu0 0
        %1124 = vmatpush1.bf16.msra.mxu0 %v1102
        %1125 = vmatprep.subr.bf16.mxu0 0
        %1126 = vmatpush1.bf16.msra.mxu0 %v1103
        %1127 = vmatprep.subr.bf16.mxu0 0
        %1128 = vmatpush1.bf16.msra.mxu0 %v1104
        %1129 = vmatprep.subr.bf16.mxu0 0
        %1130 = vmatpush1.bf16.msra.mxu0 0
        %1131 = vmatprep.subr.bf16.mxu0 0
        %1132 = vmatpush1.bf16.msra.mxu0 0
        %1133 = vmatprep.subr.bf16.mxu0 0
        %1134 = vmatpush1.bf16.msra.mxu0 0
        %1135 = vmatprep.subr.bf16.mxu0 0
        %1136 = vmatpush1.bf16.msra.mxu0 0
        %1137 = vmatprep.subr.bf16.mxu0 0
        %1138 = vmatpush1.bf16.msra.mxu0 0
        %1139 = vmatprep.subr.bf16.mxu0 0
        %1140 = vmatpush1.bf16.msra.mxu0 0
        %1141 = vmatprep.subr.bf16.mxu0 0
        %1142 = vmatpush1.bf16.msra.mxu0 0
        %1143 = vmatprep.subr.bf16.mxu0 0
        %1144 = vmatpush1.bf16.msra.mxu0 0
        %1145 = vmatprep.mubr.bf16.mxu0 0
        %1146 = vmatmul.mubr.bf16.gmra.mrb[0].mxu0 %v1047
        %v1147 = vpop.f32.mrb[0].mxu0
        %v1148 = vadd.f32 %v1064, %v1147
        %v1149 = vpop.f32.mrb[0].mxu0
        %v1150 = vpop.f32.mrb[0].mxu0
        %v1151 = vpop.f32.mrb[0].mxu0
        %1152 = vdwg.mxu0
        %v1153 = vadd.f32 %v1148, 3.0
        %v1154 = vmax.f32 %v1153, 0.0
        %v1155 = vmin.f32 %v1154, 6.0
        %v1156 = vmul.f32 %v1155, 0.16666667
        %v1157 = vlaneseq
        %v1158 = vshrl.u32 %v1157, 7
        %v1159 = vsub.s32 0, %v1158
        %v1160 = vrot.slane %v1156, %v1159
        %v1161 = vmul.f32 %v930, %v1160
        %v1162 = vpack.c.bf16 %v1161, %v1161
        %v1163 = vld [vmem:[%s7] sm:$0xf]
        %v1164 = vld [vmem:[%s7 + $0x4] sm:$0xf]
        %v1165 = vld [vmem:[%s7 + $0x8] sm:$0xf]
        %v1166 = vld [vmem:[%s7 + $0xc] sm:$0xf]
        %v1167 = vld [vmem:[%s7 + $0x10] sm:$0xf]
        %v1168 = vld [vmem:[%s7 + $0x14] sm:$0xf]
        %v1169 = vld [vmem:[%s7 + $0x18] sm:$0xf]
        %v1170 = vld [vmem:[%s7 + $0x1c] sm:$0xf]
        %v1171 = vld [vmem:[%s7 + $0x20] sm:$0xf]
        %v1172 = vld [vmem:[%s7 + $0x24] sm:$0xf]
        %v1173 = vld [vmem:[%s7 + $0x28] sm:$0xf]
        %v1174 = vld [vmem:[%s7 + $0x2c] sm:$0xf]
        %v1175 = vld [vmem:[%s7 + $0x30] sm:$0xf]
        %v1176 = vld [vmem:[%s7 + $0x34] sm:$0xf]
        %v1177 = vld [vmem:[%s7 + $0x38] sm:$0xf]
        %v1178 = vld [vmem:[%s7 + $0x3c] sm:$0xf]
        %v1179 = vld [vmem:[%s8] sm:$0x1]
        %v1181 = vlaneseq
        %v1182 = vshrl.u32 %v1181, 7
        %v1183 = vsub.s32 0, %v1182
        %v1184 = vrot.slane %v1179, %v1183
        %v1202 = vunpack.c.l.b16 %v1163
        %v1203 = vunpack.c.l.b16 %v1164
        %v1204 = vunpack.c.l.b16 %v1165
        %v1205 = vunpack.c.l.b16 %v1166
        %v1206 = vunpack.c.l.b16 %v1167
        %v1207 = vunpack.c.l.b16 %v1168
        %v1208 = vunpack.c.l.b16 %v1169
        %v1209 = vunpack.c.l.b16 %v1170
        %v1210 = vunpack.c.l.b16 %v1171
        %v1211 = vunpack.c.l.b16 %v1172
        %v1212 = vunpack.c.l.b16 %v1173
        %v1213 = vunpack.c.l.b16 %v1174
        %v1214 = vunpack.c.l.b16 %v1175
        %v1215 = vunpack.c.l.b16 %v1176
        %v1216 = vunpack.c.l.b16 %v1177
        %v1217 = vunpack.c.l.b16 %v1178
        %v1218 = vpack.c.b16 %v1203, %v1202
        %v1219 = vpack.c.b16 %v1205, %v1204
        %v1220 = vpack.c.b16 %v1207, %v1206
        %v1221 = vpack.c.b16 %v1209, %v1208
        %v1222 = vpack.c.b16 %v1211, %v1210
        %v1223 = vpack.c.b16 %v1213, %v1212
        %v1224 = vpack.c.b16 %v1215, %v1214
        %v1225 = vpack.c.b16 %v1217, %v1216
        %1234 = vmatprep.subr.bf16.mxu0 0
        %1235 = vmatpush1.bf16.msra.mxu0 %v1218
        %1236 = vmatprep.subr.bf16.mxu0 0
        %1237 = vmatpush1.bf16.msra.mxu0 %v1219
        %1238 = vmatprep.subr.bf16.mxu0 0
        %1239 = vmatpush1.bf16.msra.mxu0 %v1220
        %1240 = vmatprep.subr.bf16.mxu0 0
        %1241 = vmatpush1.bf16.msra.mxu0 %v1221
        %1242 = vmatprep.subr.bf16.mxu0 0
        %1243 = vmatpush1.bf16.msra.mxu0 %v1222
        %1244 = vmatprep.subr.bf16.mxu0 0
        %1245 = vmatpush1.bf16.msra.mxu0 %v1223
        %1246 = vmatprep.subr.bf16.mxu0 0
        %1247 = vmatpush1.bf16.msra.mxu0 %v1224
        %1248 = vmatprep.subr.bf16.mxu0 0
        %1249 = vmatpush1.bf16.msra.mxu0 %v1225
        %1250 = vmatprep.subr.bf16.mxu0 0
        %1251 = vmatpush1.bf16.msra.mxu0 0
        %1252 = vmatprep.subr.bf16.mxu0 0
        %1253 = vmatpush1.bf16.msra.mxu0 0
        %1254 = vmatprep.subr.bf16.mxu0 0
        %1255 = vmatpush1.bf16.msra.mxu0 0
        %1256 = vmatprep.subr.bf16.mxu0 0
        %1257 = vmatpush1.bf16.msra.mxu0 0
        %1258 = vmatprep.subr.bf16.mxu0 0
        %1259 = vmatpush1.bf16.msra.mxu0 0
        %1260 = vmatprep.subr.bf16.mxu0 0
        %1261 = vmatpush1.bf16.msra.mxu0 0
        %1262 = vmatprep.subr.bf16.mxu0 0
        %1263 = vmatpush1.bf16.msra.mxu0 0
        %1264 = vmatprep.subr.bf16.mxu0 0
        %1265 = vmatpush1.bf16.msra.mxu0 0
        %1266 = vmatprep.mubr.bf16.mxu0 0
        %1267 = vmatmul.mubr.bf16.gmra.mrb[0].mxu0 %v1162
        %v1268 = vpop.f32.mrb[0].mxu0
        %v1269 = vadd.f32 %v1184, %v1268
        %v1270 = vpop.f32.mrb[0].mxu0
        %v1271 = vpop.f32.mrb[0].mxu0
        %v1272 = vpop.f32.mrb[0].mxu0
        %1273 = vdwg.mxu0
        %v1274 = vpack.c.bf16 %v1269, %v1269
        %v1275 = vld [vmem:[%s9] sm:$0xff]
        %v1276 = vld [vmem:[%s9 + $0x8] sm:$0xff]
        %v1277 = vld [vmem:[%s9 + $0x10] sm:$0xff]
        %v1278 = vld [vmem:[%s9 + $0x18] sm:$0xff]
        %v1279 = vld [vmem:[%s9 + $0x20] sm:$0xff]
        %v1280 = vld [vmem:[%s9 + $0x28] sm:$0xff]
        %v1281 = vld [vmem:[%s9 + $0x30] sm:$0xff]
        %v1282 = vld [vmem:[%s9 + $0x38] sm:$0xff]
        %v1283 = vld [vmem:[%s9 + $0x40] sm:$0xff]
        %v1284 = vld [vmem:[%s9 + $0x48] sm:$0xff]
        %v1285 = vld [vmem:[%s9 + $0x50] sm:$0xff]
        %v1286 = vld [vmem:[%s9 + $0x58] sm:$0xff]
        %v1287 = vld [vmem:[%s9 + $0x60] sm:$0xff]
        %v1288 = vld [vmem:[%s9 + $0x68] sm:$0xff]
        %v1289 = vld [vmem:[%s9 + $0x70] sm:$0xff]
        %v1290 = vld [vmem:[%s9 + $0x78] sm:$0xff]
        %v1291 = vld [vmem:[%s10] sm:$0x3]
        %v1293 = vlaneseq
        %v1294 = vshrl.u32 %v1293, 7
        %v1295 = vsub.s32 0, %v1294
        %v1296 = vrot.slane %v1291, %v1295
        %v1297 = vlaneseq
        %v1298 = vshrl.u32 %v1297, 7
        %v1299 = vsub.s32 1, %v1298
        %v1300 = vrot.slane %v1291, %v1299
        %v1319 = vunpack.c.l.b16 %v1275
        %v1320 = vunpack.c.h.b16 %v1275
        %v1321 = vunpack.c.l.b16 %v1276
        %v1322 = vunpack.c.h.b16 %v1276
        %v1323 = vunpack.c.l.b16 %v1277
        %v1324 = vunpack.c.h.b16 %v1277
        %v1325 = vunpack.c.l.b16 %v1278
        %v1326 = vunpack.c.h.b16 %v1278
        %v1327 = vunpack.c.l.b16 %v1279
        %v1328 = vunpack.c.h.b16 %v1279
        %v1329 = vunpack.c.l.b16 %v1280
        %v1330 = vunpack.c.h.b16 %v1280
        %v1331 = vunpack.c.l.b16 %v1281
        %v1332 = vunpack.c.h.b16 %v1281
        %v1333 = vunpack.c.l.b16 %v1282
        %v1334 = vunpack.c.h.b16 %v1282
        %v1335 = vunpack.c.l.b16 %v1283
        %v1336 = vunpack.c.h.b16 %v1283
        %v1337 = vunpack.c.l.b16 %v1284
        %v1338 = vunpack.c.h.b16 %v1284
        %v1339 = vunpack.c.l.b16 %v1285
        %v1340 = vunpack.c.h.b16 %v1285
        %v1341 = vunpack.c.l.b16 %v1286
        %v1342 = vunpack.c.h.b16 %v1286
        %v1343 = vunpack.c.l.b16 %v1287
        %v1344 = vunpack.c.h.b16 %v1287
        %v1345 = vunpack.c.l.b16 %v1288
        %v1346 = vunpack.c.h.b16 %v1288
        %v1347 = vunpack.c.l.b16 %v1289
        %v1348 = vunpack.c.h.b16 %v1289
        %v1349 = vunpack.c.l.b16 %v1290
        %v1350 = vunpack.c.h.b16 %v1290
        %v1351 = vpack.c.b16 %v1321, %v1319
        %v1352 = vpack.c.b16 %v1322, %v1320
        %v1353 = vpack.c.b16 %v1325, %v1323
        %v1354 = vpack.c.b16 %v1326, %v1324
        %v1355 = vpack.c.b16 %v1329, %v1327
        %v1356 = vpack.c.b16 %v1330, %v1328
        %v1357 = vpack.c.b16 %v1333, %v1331
        %v1358 = vpack.c.b16 %v1334, %v1332
        %v1359 = vpack.c.b16 %v1337, %v1335
        %v1360 = vpack.c.b16 %v1338, %v1336
        %v1361 = vpack.c.b16 %v1341, %v1339
        %v1362 = vpack.c.b16 %v1342, %v1340
        %v1363 = vpack.c.b16 %v1345, %v1343
        %v1364 = vpack.c.b16 %v1346, %v1344
        %v1365 = vpack.c.b16 %v1349, %v1347
        %v1366 = vpack.c.b16 %v1350, %v1348
        %1383 = vmatprep.subr.bf16.mxu0 %v1352
        %1384 = vmatpush1.bf16.msra.mxu0 %v1351
        %1385 = vmatprep.subr.bf16.mxu0 %v1354
        %1386 = vmatpush1.bf16.msra.mxu0 %v1353
        %1387 = vmatprep.subr.bf16.mxu0 %v1356
        %1388 = vmatpush1.bf16.msra.mxu0 %v1355
        %1389 = vmatprep.subr.bf16.mxu0 %v1358
        %1390 = vmatpush1.bf16.msra.mxu0 %v1357
        %1391 = vmatprep.subr.bf16.mxu0 %v1360
        %1392 = vmatpush1.bf16.msra.mxu0 %v1359
        %1393 = vmatprep.subr.bf16.mxu0 %v1362
        %1394 = vmatpush1.bf16.msra.mxu0 %v1361
        %1395 = vmatprep.subr.bf16.mxu0 %v1364
        %1396 = vmatpush1.bf16.msra.mxu0 %v1363
        %1397 = vmatprep.subr.bf16.mxu0 %v1366
        %1398 = vmatpush1.bf16.msra.mxu0 %v1365
        %1399 = vmatprep.subr.bf16.mxu0 0
        %1400 = vmatpush1.bf16.msra.mxu0 0
        %1401 = vmatprep.subr.bf16.mxu0 0
        %1402 = vmatpush1.bf16.msra.mxu0 0
        %1403 = vmatprep.subr.bf16.mxu0 0
        %1404 = vmatpush1.bf16.msra.mxu0 0
        %1405 = vmatprep.subr.bf16.mxu0 0
        %1406 = vmatpush1.bf16.msra.mxu0 0
        %1407 = vmatprep.subr.bf16.mxu0 0
        %1408 = vmatpush1.bf16.msra.mxu0 0
        %1409 = vmatprep.subr.bf16.mxu0 0
        %1410 = vmatpush1.bf16.msra.mxu0 0
        %1411 = vmatprep.subr.bf16.mxu0 0
        %1412 = vmatpush1.bf16.msra.mxu0 0
        %1413 = vmatprep.subr.bf16.mxu0 0
        %1414 = vmatpush1.bf16.msra.mxu0 0
        %1415 = vmatprep.mubr.bf16.mxu0 0
        %1416 = vmatmul.mubr.bf16.gmra.mrb[0].mxu0 %v1274
        %v1417 = vpop.f32.mrb[0].mxu0
        %v1418 = vadd.f32 %v1296, %v1417
        %v1419 = vpop.f32.mrb[0].mxu0
        %v1420 = vadd.f32 %v1300, %v1419
        %v1421 = vpop.f32.mrb[0].mxu0
        %v1422 = vpop.f32.mrb[0].mxu0
        %1423 = vdwg.mxu0
        %v1424 = vadd.f32 %v1418, 3.0
        %v1425 = vadd.f32 %v1420, 3.0
        %v1426 = vmax.f32 %v1424, 0.0
        %v1427 = vmax.f32 %v1425, 0.0
        %v1428 = vmin.f32 %v1426, 6.0
        %v1429 = vmin.f32 %v1427, 6.0
        %v1430 = vmul.f32 %v1418, %v1428
        %v1431 = vmul.f32 %v1420, %v1429
        %v1432 = vmul.f32 %v1430, 0.16666667
        %v1433 = vmul.f32 %v1431, 0.16666667
        %v1434 = vsel %vm931, %v1432, 0.0
        %v1435 = vrot.slane %v1434, 4
        %v1436 = vadd.f32 %v1434, %v1435
        %v1437 = vrot.slane %v1436, 2
        %v1438 = vadd.f32 %v1436, %v1437
        %v1439 = vrot.slane %v1438, 1
        %v1440 = vadd.f32 %v1438, %v1439
        %v1441 = vsel %vm931, %v1433, 0.0
        %v1442 = vrot.slane %v1441, 4
        %v1443 = vadd.f32 %v1441, %v1442
        %v1444 = vrot.slane %v1443, 2
        %v1445 = vadd.f32 %v1443, %v1444
        %v1446 = vrot.slane %v1445, 1
        %v1447 = vadd.f32 %v1445, %v1446
        %v1448 = vmul.f32 %v1440, 0.25
        %v1449 = vmul.f32 %v1447, 0.25
        %v1450 = vpack.c.bf16 %v1448, %v1448
        %v1451 = vpack.c.bf16 %v1449, %v1449
        %v1452 = vld [vmem:[%s11] sm:$0xf]
        %v1453 = vld [vmem:[%s11 + $0x4] sm:$0xf]
        %v1454 = vld [vmem:[%s11 + $0x8] sm:$0xf]
        %v1455 = vld [vmem:[%s11 + $0xc] sm:$0xf]
        %v1456 = vld [vmem:[%s11 + $0x10] sm:$0xf]
        %v1457 = vld [vmem:[%s11 + $0x14] sm:$0xf]
        %v1458 = vld [vmem:[%s11 + $0x18] sm:$0xf]
        %v1459 = vld [vmem:[%s11 + $0x1c] sm:$0xf]
        %v1460 = vld [vmem:[%s11 + $0x20] sm:$0xf]
        %v1461 = vld [vmem:[%s11 + $0x24] sm:$0xf]
        %v1462 = vld [vmem:[%s11 + $0x28] sm:$0xf]
        %v1463 = vld [vmem:[%s11 + $0x2c] sm:$0xf]
        %v1464 = vld [vmem:[%s11 + $0x30] sm:$0xf]
        %v1465 = vld [vmem:[%s11 + $0x34] sm:$0xf]
        %v1466 = vld [vmem:[%s11 + $0x38] sm:$0xf]
        %v1467 = vld [vmem:[%s11 + $0x3c] sm:$0xf]
        %v1468 = vld [vmem:[%s11 + $0x40] sm:$0xf]
        %v1469 = vld [vmem:[%s11 + $0x44] sm:$0xf]
        %v1470 = vld [vmem:[%s11 + $0x48] sm:$0xf]
        %v1471 = vld [vmem:[%s11 + $0x4c] sm:$0xf]
        %v1472 = vld [vmem:[%s11 + $0x50] sm:$0xf]
        %v1473 = vld [vmem:[%s11 + $0x54] sm:$0xf]
        %v1474 = vld [vmem:[%s11 + $0x58] sm:$0xf]
        %v1475 = vld [vmem:[%s11 + $0x5c] sm:$0xf]
        %v1476 = vld [vmem:[%s11 + $0x60] sm:$0xf]
        %v1477 = vld [vmem:[%s11 + $0x64] sm:$0xf]
        %v1478 = vld [vmem:[%s11 + $0x68] sm:$0xf]
        %v1479 = vld [vmem:[%s11 + $0x6c] sm:$0xf]
        %v1480 = vld [vmem:[%s11 + $0x70] sm:$0xf]
        %v1481 = vld [vmem:[%s11 + $0x74] sm:$0xf]
        %v1482 = vld [vmem:[%s11 + $0x78] sm:$0xf]
        %v1483 = vld [vmem:[%s11 + $0x7c] sm:$0xf]
        %v1484 = vld [vmem:[%s12] sm:$0x1]
        %v1517 = vunpack.c.l.b16 %v1452
        %v1518 = vunpack.c.l.b16 %v1453
        %v1519 = vunpack.c.l.b16 %v1454
        %v1520 = vunpack.c.l.b16 %v1455
        %v1521 = vunpack.c.l.b16 %v1456
        %v1522 = vunpack.c.l.b16 %v1457
        %v1523 = vunpack.c.l.b16 %v1458
        %v1524 = vunpack.c.l.b16 %v1459
        %v1525 = vunpack.c.l.b16 %v1460
        %v1526 = vunpack.c.l.b16 %v1461
        %v1527 = vunpack.c.l.b16 %v1462
        %v1528 = vunpack.c.l.b16 %v1463
        %v1529 = vunpack.c.l.b16 %v1464
        %v1530 = vunpack.c.l.b16 %v1465
        %v1531 = vunpack.c.l.b16 %v1466
        %v1532 = vunpack.c.l.b16 %v1467
        %v1533 = vunpack.c.l.b16 %v1468
        %v1534 = vunpack.c.l.b16 %v1469
        %v1535 = vunpack.c.l.b16 %v1470
        %v1536 = vunpack.c.l.b16 %v1471
        %v1537 = vunpack.c.l.b16 %v1472
        %v1538 = vunpack.c.l.b16 %v1473
        %v1539 = vunpack.c.l.b16 %v1474
        %v1540 = vunpack.c.l.b16 %v1475
        %v1541 = vunpack.c.l.b16 %v1476
        %v1542 = vunpack.c.l.b16 %v1477
        %v1543 = vunpack.c.l.b16 %v1478
        %v1544 = vunpack.c.l.b16 %v1479
        %v1545 = vunpack.c.l.b16 %v1480
        %v1546 = vunpack.c.l.b16 %v1481
        %v1547 = vunpack.c.l.b16 %v1482
        %v1548 = vunpack.c.l.b16 %v1483
        %v1549 = vpack.c.b16 %v1518, %v1517
        %v1550 = vpack.c.b16 %v1520, %v1519
        %v1551 = vpack.c.b16 %v1522, %v1521
        %v1552 = vpack.c.b16 %v1524, %v1523
        %v1553 = vpack.c.b16 %v1526, %v1525
        %v1554 = vpack.c.b16 %v1528, %v1527
        %v1555 = vpack.c.b16 %v1530, %v1529
        %v1556 = vpack.c.b16 %v1532, %v1531
        %v1557 = vpack.c.b16 %v1534, %v1533
        %v1558 = vpack.c.b16 %v1536, %v1535
        %v1559 = vpack.c.b16 %v1538, %v1537
        %v1560 = vpack.c.b16 %v1540, %v1539
        %v1561 = vpack.c.b16 %v1542, %v1541
        %v1562 = vpack.c.b16 %v1544, %v1543
        %v1563 = vpack.c.b16 %v1546, %v1545
        %v1564 = vpack.c.b16 %v1548, %v1547
        %1581 = vmatprep.subr.bf16.mxu0 0
        %1582 = vmatpush1.bf16.msra.mxu0 %v1549
        %1583 = vmatprep.subr.bf16.mxu0 0
        %1584 = vmatpush1.bf16.msra.mxu0 %v1550
        %1585 = vmatprep.subr.bf16.mxu0 0
        %1586 = vmatpush1.bf16.msra.mxu0 %v1551
        %1587 = vmatprep.subr.bf16.mxu0 0
        %1588 = vmatpush1.bf16.msra.mxu0 %v1552
        %1589 = vmatprep.subr.bf16.mxu0 0
        %1590 = vmatpush1.bf16.msra.mxu0 %v1553
        %1591 = vmatprep.subr.bf16.mxu0 0
        %1592 = vmatpush1.bf16.msra.mxu0 %v1554
        %1593 = vmatprep.subr.bf16.mxu0 0
        %1594 = vmatpush1.bf16.msra.mxu0 %v1555
        %1595 = vmatprep.subr.bf16.mxu0 0
        %1596 = vmatpush1.bf16.msra.mxu0 %v1556
        %1597 = vmatprep.subr.bf16.mxu0 0
        %1598 = vmatpush1.bf16.msra.mxu0 %v1557
        %1599 = vmatprep.subr.bf16.mxu0 0
        %1600 = vmatpush1.bf16.msra.mxu0 %v1558
        %1601 = vmatprep.subr.bf16.mxu0 0
        %1602 = vmatpush1.bf16.msra.mxu0 %v1559
        %1603 = vmatprep.subr.bf16.mxu0 0
        %1604 = vmatpush1.bf16.msra.mxu0 %v1560
        %1605 = vmatprep.subr.bf16.mxu0 0
        %1606 = vmatpush1.bf16.msra.mxu0 %v1561
        %1607 = vmatprep.subr.bf16.mxu0 0
        %1608 = vmatpush1.bf16.msra.mxu0 %v1562
        %1609 = vmatprep.subr.bf16.mxu0 0
        %1610 = vmatpush1.bf16.msra.mxu0 %v1563
        %1611 = vmatprep.subr.bf16.mxu0 0
        %1612 = vmatpush1.bf16.msra.mxu0 %v1564
        %1613 = vmatprep.mubr.bf16.mxu0 %v1451
        %1614 = vmatmul.mubr.bf16.gmra.mrb[0].mxu0 %v1450
        %v1615 = vpop.f32.mrb[0].mxu0
        %v1616 = vadd.f32 %v1484, %v1615
        %v1617 = vpop.f32.mrb[0].mxu0
        %v1618 = vpop.f32.mrb[0].mxu0
        %v1619 = vpop.f32.mrb[0].mxu0
        %1620 = vdwg.mxu0
        %v1621 = vadd.f32 %v1616, 3.0
        %v1622 = vmax.f32 %v1621, 0.0
        %v1623 = vmin.f32 %v1622, 6.0
        %v1624 = vmul.f32 %v1616, %v1623
        %v1625 = vmul.f32 %v1624, 0.16666667
        %v1626 = vpack.c.bf16 %v1625, %v1625
        %v1627 = vld [vmem:[%s13] sm:$0xf]
        %v1628 = vld [vmem:[%s13 + $0x4] sm:$0xf]
        %v1629 = vld [vmem:[%s13 + $0x8] sm:$0xf]
        %v1630 = vld [vmem:[%s13 + $0xc] sm:$0xf]
        %v1631 = vld [vmem:[%s13 + $0x10] sm:$0xf]
        %v1632 = vld [vmem:[%s13 + $0x14] sm:$0xf]
        %v1633 = vld [vmem:[%s13 + $0x18] sm:$0xf]
        %v1634 = vld [vmem:[%s13 + $0x1c] sm:$0xf]
        %v1635 = vld [vmem:[%s13 + $0x20] sm:$0xf]
        %v1636 = vld [vmem:[%s13 + $0x24] sm:$0xf]
        %v1637 = vld [vmem:[%s13 + $0x28] sm:$0xf]
        %v1638 = vld [vmem:[%s13 + $0x2c] sm:$0xf]
        %v1639 = vld [vmem:[%s13 + $0x30] sm:$0xf]
        %v1640 = vld [vmem:[%s13 + $0x34] sm:$0xf]
        %v1641 = vld [vmem:[%s13 + $0x38] sm:$0xf]
        %v1642 = vld [vmem:[%s13 + $0x3c] sm:$0xf]
        %v1643 = vld [vmem:[%s14] sm:$0x1]
        %v1660 = vunpack.c.l.b16 %v1627
        %v1661 = vunpack.c.l.b16 %v1628
        %v1662 = vunpack.c.l.b16 %v1629
        %v1663 = vunpack.c.l.b16 %v1630
        %v1664 = vunpack.c.l.b16 %v1631
        %v1665 = vunpack.c.l.b16 %v1632
        %v1666 = vunpack.c.l.b16 %v1633
        %v1667 = vunpack.c.l.b16 %v1634
        %v1668 = vunpack.c.l.b16 %v1635
        %v1669 = vunpack.c.l.b16 %v1636
        %v1670 = vunpack.c.l.b16 %v1637
        %v1671 = vunpack.c.l.b16 %v1638
        %v1672 = vunpack.c.l.b16 %v1639
        %v1673 = vunpack.c.l.b16 %v1640
        %v1674 = vunpack.c.l.b16 %v1641
        %v1675 = vunpack.c.l.b16 %v1642
        %v1676 = vpack.c.b16 %v1661, %v1660
        %v1677 = vpack.c.b16 %v1663, %v1662
        %v1678 = vpack.c.b16 %v1665, %v1664
        %v1679 = vpack.c.b16 %v1667, %v1666
        %v1680 = vpack.c.b16 %v1669, %v1668
        %v1681 = vpack.c.b16 %v1671, %v1670
        %v1682 = vpack.c.b16 %v1673, %v1672
        %v1683 = vpack.c.b16 %v1675, %v1674
        %1692 = vmatprep.subr.bf16.mxu0 0
        %1693 = vmatpush1.bf16.msra.mxu0 %v1676
        %1694 = vmatprep.subr.bf16.mxu0 0
        %1695 = vmatpush1.bf16.msra.mxu0 %v1677
        %1696 = vmatprep.subr.bf16.mxu0 0
        %1697 = vmatpush1.bf16.msra.mxu0 %v1678
        %1698 = vmatprep.subr.bf16.mxu0 0
        %1699 = vmatpush1.bf16.msra.mxu0 %v1679
        %1700 = vmatprep.subr.bf16.mxu0 0
        %1701 = vmatpush1.bf16.msra.mxu0 %v1680
        %1702 = vmatprep.subr.bf16.mxu0 0
        %1703 = vmatpush1.bf16.msra.mxu0 %v1681
        %1704 = vmatprep.subr.bf16.mxu0 0
        %1705 = vmatpush1.bf16.msra.mxu0 %v1682
        %1706 = vmatprep.subr.bf16.mxu0 0
        %1707 = vmatpush1.bf16.msra.mxu0 %v1683
        %1708 = vmatprep.subr.bf16.mxu0 0
        %1709 = vmatpush1.bf16.msra.mxu0 0
        %1710 = vmatprep.subr.bf16.mxu0 0
        %1711 = vmatpush1.bf16.msra.mxu0 0
        %1712 = vmatprep.subr.bf16.mxu0 0
        %1713 = vmatpush1.bf16.msra.mxu0 0
        %1714 = vmatprep.subr.bf16.mxu0 0
        %1715 = vmatpush1.bf16.msra.mxu0 0
        %1716 = vmatprep.subr.bf16.mxu0 0
        %1717 = vmatpush1.bf16.msra.mxu0 0
        %1718 = vmatprep.subr.bf16.mxu0 0
        %1719 = vmatpush1.bf16.msra.mxu0 0
        %1720 = vmatprep.subr.bf16.mxu0 0
        %1721 = vmatpush1.bf16.msra.mxu0 0
        %1722 = vmatprep.subr.bf16.mxu0 0
        %1723 = vmatpush1.bf16.msra.mxu0 0
        %1724 = vmatprep.mubr.bf16.mxu0 0
        %1725 = vmatmul.mubr.bf16.gmra.mrb[0].mxu0 %v1626
        %v1726 = vpop.f32.mrb[0].mxu0
        %v1727 = vadd.f32 %v1643, %v1726
        %v1728 = vpop.f32.mrb[0].mxu0
        %v1729 = vpop.f32.mrb[0].mxu0
        %v1730 = vpop.f32.mrb[0].mxu0
        %1731 = vdwg.mxu0
        %1732 = vst [vmem:[%s486] sm:$0x1] %v1727
        %s1733 = sand.u32 %s357, 1
        %s1734 = scalar_lea.sflag [#allocation4], %s1733
        %s1735 = sand.u32 %s357, 1
        %s1736 = scalar_lea.vmem [#allocation3], %s1735
        // Predicated region
        $region81: #{mobilenet_v3_forward.7} parent=79 // pred_check
          %p1737 = pneg %p367
        $region82: #{mobilenet_v3_forward.7} parent=79 // pred_check_branch
          %1739 = sbr.rel (%p1737) target = $region84
        $region83: #{mobilenet_v3_forward.7} parent=79 // pred_region
          %s1741 = ssub.s32 16, 16
          %1742 = vsyncadd %s1734, %s1741
          %s1743 = smul.addr %s29, 16
          %s1744 = scalar_lea.hbm %s15, %s1743
          %s1746 = sshll.u32 %s1736, 4
          %s1747 = int_to_ptr.vmem [resolvable:$true] %s1746
          %1749 = dma.vmem_to_hbm [thread:$0]  %s1747, 16, %s1744, %s1734
        $region84: #{mobilenet_v3_forward.7} parent=79 // pred_fallthru
          _
      $region80: #{mobilenet_v3_forward.7} parent=5 // pred_fallthru
        _
      %p1750 = scmp.le.s32.totalorder 2, %s24
      // Predicated region
      $region85: #{mobilenet_v3_forward.7} parent=5 // pred_check
        %p1751 = pneg %p1750
      $region86: #{mobilenet_v3_forward.7} parent=5 // pred_check_branch
        %1753 = sbr.rel (%p1751) target = $region88
      $region87: #{mobilenet_v3_forward.7} parent=5 // pred_region
        %s1754 = ssub.s32 %s24, 2
        // Predicated region
        $region89: #{mobilenet_v3_forward.7} parent=87 // pred_check
          %p1755 = pneg %p373
        $region90: #{mobilenet_v3_forward.7} parent=87 // pred_check_branch
          %1757 = sbr.rel (%p1755) target = $region92
        $region91: #{mobilenet_v3_forward.7} parent=87 // pred_region
          %s1758 = sand.u32 %s358, 1
          %s1759 = scalar_lea.sflag [#allocation4], %s1758
          %s1760 = sand.u32 %s358, 1
          %s1761 = scalar_lea.vmem [#allocation3], %s1760
          %1762 = dma.done %s1759, 16
        $region92: #{mobilenet_v3_forward.7} parent=87 // pred_fallthru
          _
      $region88: #{mobilenet_v3_forward.7} parent=5 // pred_fallthru
        _
    $region6: #{mobilenet_v3_forward.7} parent=1 // loop_footer
      %s28 = sadd.s32 1, %s24
    $region7: #{mobilenet_v3_forward.7} parent=1 // loop_footer_branch
      %23 = sbr.rel target = $region3
    $region8: #{mobilenet_v3_forward.7} parent=1 // loop_exit
      _
    %1763 = vsyncpa [#allocation4], 1
    %s1764 = scalar_lea.sflag [#allocation4], 1
    %1765 = vsyncpa %s1764, 1

</llo_original>
